<compile_context>
chip_gen: v7x
topology: tpu7x:2x2x1
jax: 0.10.0
libtpu: 0.0.40
codegen_flags: <defaults>
</compile_context>

<pallas_src>
import functools
from math import sqrt

import numpy as np
import jax
import jax.numpy as jnp
from jax.experimental import pallas as pl
from jax.experimental.pallas import tpu as pltpu

_MASK_VALUE = -1e30  # large finite negative: exp underflows to 0, never produces NaN


def _attention_step(q_ref, k_ref, v_ref, o_ref, qs_ref, m_ref, l_ref, acc_ref,
                    *, is_first, is_last, diag, causal,
                    num_heads, e_dim, d_dim, scale, compute_dtype):
    """One (q-tile, kv-tile) online-softmax step, all H heads.

    Block views (leading grid-block dim of 1, heads folded into lanes):
      q_ref (1, bq, H*E)  k_ref (1, bk, H*E)  v_ref (1, bk, H*D)  o_ref (1, bq, H*D)
    Scratch (persists across the kv steps of one q tile):
      qs_ref  (bq, H*E) compute dtype  -- scale*q, cast once per q tile
      m_ref   (H, bq, 1) f32           -- running max   (kept sublane-oriented; the
      l_ref   (H, bq, 1) f32           -- running denom  1->128 lane pad is the price
                                          of avoiding per-step lane<->sublane relayouts)
      acc_ref (bq, H*D) f32            -- running numerator, lane-dense
    """
    block_q = q_ref.shape[1]
    block_k = k_ref.shape[1]

    @pl.when(is_first)
    def _init():
        m_ref[...] = jnp.full(m_ref.shape, _MASK_VALUE, m_ref.dtype)
        l_ref[...] = jnp.zeros(l_ref.shape, l_ref.dtype)
        acc_ref[...] = jnp.zeros(acc_ref.shape, acc_ref.dtype)
        # Fold the softmax scale into q once per q tile (hoisted off the kv loop)
        # and cast to the MXU compute dtype.
        qs_ref[...] = (q_ref[0] * scale).astype(qs_ref.dtype)

    def _compute(masked):
        if masked:
            # Diagonal tile only: block_q == block_k and the q/kv tile offsets are
            # equal there, so the global causal mask reduces to the local one.
            mask = (jax.lax.broadcasted_iota(jnp.int32, (block_q, block_k), 1)
                    > jax.lax.broadcasted_iota(jnp.int32, (block_q, block_k), 0))
        # H is small & static -> unrolled; each head is a well-shaped 2D MXU matmul
        # in compute_dtype (bf16 by default) with f32 accumulation.
        # TODO(synk): for H >= 8 with large tiles, bound the unroll (fori_loop) to
        #             limit live (bq, bk) intermediates / vreg pressure.
        for h in range(num_heads):
            q_h = qs_ref[:, h * e_dim:(h + 1) * e_dim]                     # (bq, E)
            k_h = k_ref[0, :, h * e_dim:(h + 1) * e_dim].astype(compute_dtype)
            v_h = v_ref[0, :, h * d_dim:(h + 1) * d_dim].astype(compute_dtype)

            # scores[l, s] = sum_e (scale*q)[l, e] * k[s, e]
            s = jax.lax.dot_general(q_h, k_h, (((1,), (1,)), ((), ())),
                                    preferred_element_type=jnp.float32)    # (bq, bk)
            if masked:
                s = jnp.where(mask, _MASK_VALUE, s)

            m_prev = m_ref[h]                                              # (bq, 1)
            m_new = jnp.maximum(m_prev, jnp.max(s, axis=-1, keepdims=True))
            alpha = jnp.exp(m_prev - m_new)
            p = jnp.exp(s - m_new)                                         # (bq, bk)

            l_ref[h] = alpha * l_ref[h] + jnp.sum(p, axis=-1, keepdims=True)
            acc_h = acc_ref[:, h * d_dim:(h + 1) * d_dim]                  # (bq, D)
            acc_ref[:, h * d_dim:(h + 1) * d_dim] = (
                alpha * acc_h
                + jax.lax.dot_general(p.astype(compute_dtype), v_h,
                                      (((1,), (0,)), ((), ())),
                                      preferred_element_type=jnp.float32))
            m_ref[h] = m_new

    if causal:
        # Only the diagonal tile pays for iota/compare/select mask work.
        pl.when(diag)(lambda: _compute(True))
        pl.when(jnp.logical_not(diag))(lambda: _compute(False))
    else:
        _compute(False)

    @pl.when(is_last)
    def _finalize():
        pieces = []
        for h in range(num_heads):
            l_h = l_ref[h]                                                 # (bq, 1)
            if compute_dtype == jnp.float32:
                inv_l = 1.0 / l_h                                          # exact path
            else:
                inv_l = pl.reciprocal(l_h, approx=True)                    # EUP, ~free
            pieces.append(acc_ref[:, h * d_dim:(h + 1) * d_dim] * inv_l)
        # Single lane-dense (bq, H*D) store -> unmasked vst on the output block.
        o_ref[0] = jnp.concatenate(pieces, axis=-1).astype(o_ref.dtype)


def _causal_flash_kernel(q_tbl_ref, kv_tbl_ref, q_ref, k_ref, v_ref, o_ref,
                         qs_ref, m_ref, l_ref, acc_ref, **statics):
    t = pl.program_id(1)
    qi = q_tbl_ref[t]
    kv = kv_tbl_ref[t]
    diag = kv == qi        # diagonal tile is also the last kv step of this q tile
    _attention_step(q_ref, k_ref, v_ref, o_ref, qs_ref, m_ref, l_ref, acc_ref,
                    is_first=(kv == 0), is_last=diag, diag=diag, causal=True,
                    **statics)


def _dense_flash_kernel(q_ref, k_ref, v_ref, o_ref,
                        qs_ref, m_ref, l_ref, acc_ref, **statics):
    kv = pl.program_id(2)
    _attention_step(q_ref, k_ref, v_ref, o_ref, qs_ref, m_ref, l_ref, acc_ref,
                    is_first=(kv == 0), is_last=(kv == pl.num_programs(2) - 1),
                    diag=None, causal=False, **statics)


def full_attention(queries, keys, values, *, scale=None, mask_flag=True,
                   block_q=256, block_k=256, compute_dtype=None,
                   kv_buffer_count=None):
    """queries (B, L, H, E), keys (B, S, H, E), values (B, S, H, D) -> (B, L, H, D).

    Tile guidance: 256 is a safe default across v5e/v6e/v7x; v6e (1.4 TB/s HBM,
    128 MiB VMEM) benefits from block 512 when L/S allow, v7x (64 MiB VMEM) should
    keep block_k at 256.  kv_buffer_count=3 deepens the K/V pipeline (pl.Buffered)
    if K/V DMA is exposed (most likely on v5e).
    """
    B, L, H, E = queries.shape
    Bk, S, Hk, Ek = keys.shape
    Bv, Sv, Hv, D = values.shape
    assert (B, H, E) == (Bk, Hk, Ek) and (B, S, H) == (Bv, Sv, Hv)
    scale = float(scale) if scale is not None else 1.0 / sqrt(E)

    if compute_dtype is None:
        # bf16 MXU path with f32 accumulation when callers pass f32; otherwise keep
        # the input dtype (bf16 stays bf16).
        compute_dtype = jnp.bfloat16 if queries.dtype == jnp.float32 else queries.dtype
    compute_dtype = np.dtype(compute_dtype)

    block_q = max(8, min(block_q, L))
    block_k = max(8, min(block_k, S))
    if mask_flag:
        assert L == S, "causal (mask_flag=True) path requires L == S"
        block_q = block_k = min(block_q, block_k)
    assert L % block_q == 0, (L, block_q)
    assert S % block_k == 0, (S, block_k)
    n_q, n_kv = L // block_q, S // block_k

    # Fold H into the minor (lane) dim: free contiguous reshapes, no HBM round trip.
    q3 = queries.reshape(B, L, H * E)
    k3 = keys.reshape(B, S, H * E)
    v3 = values.reshape(B, S, H * D)

    kernel_statics = dict(num_heads=H, e_dim=E, d_dim=D, scale=scale,
                          compute_dtype=compute_dtype)

    scratch_shapes = [
        pltpu.VMEM((block_q, H * E), compute_dtype),   # scale*q (once per q tile)
        pltpu.VMEM((H, block_q, 1), jnp.float32),      # running max m
        pltpu.VMEM((H, block_q, 1), jnp.float32),      # running denom l
        pltpu.VMEM((block_q, H * D), jnp.float32),     # running numerator (lane-dense)
    ]

    # Explicit VMEM budget: double-buffered pipeline blocks + scratch + headroom.
    in_bytes = queries.dtype.itemsize
    blocks_bytes = ((block_q + block_k) * H * E + (block_q + block_k) * H * D) * in_bytes
    scratch_bytes = (block_q * H * E * compute_dtype.itemsize
                     + 2 * H * block_q * 128 * 4          # m/l incl. 1->128 lane pad
                     + block_q * H * D * 4)
    vmem_limit = int(min(100 * 2 ** 20,
                         max(32 * 2 ** 20,
                             2 * blocks_bytes + scratch_bytes + 8 * 2 ** 20)))

    kv_mode = pl.Buffered(kv_buffer_count) if kv_buffer_count else None

    def _kv_spec(shape, index_map):
        if kv_mode is None:
            return pl.BlockSpec(shape, index_map)
        return pl.BlockSpec(shape, index_map, pipeline_mode=kv_mode)

    if mask_flag:
        # Flattened lower-triangular schedule: only the n_q*(n_q+1)/2 visible
        # (q-tile, kv-tile) pairs are visited; the output index map returns the same
        # q block across its consecutive kv steps, preserving the accumulator pattern.
        q_list, kv_list = [], []
        for qi in range(n_q):
            for kv in range(qi + 1):
                q_list.append(qi)
                kv_list.append(kv)
        num_steps = len(q_list)
        q_tbl = jnp.asarray(q_list, jnp.int32)
        kv_tbl = jnp.asarray(kv_list, jnp.int32)

        grid_spec = pltpu.PrefetchScalarGridSpec(
            num_scalar_prefetch=2,
            grid=(B, num_steps),
            in_specs=[
                pl.BlockSpec((1, block_q, H * E), lambda b, t, qt, kt: (b, qt[t], 0)),
                _kv_spec((1, block_k, H * E), lambda b, t, qt, kt: (b, kt[t], 0)),
                _kv_spec((1, block_k, H * D), lambda b, t, qt, kt: (b, kt[t], 0)),
            ],
            out_specs=pl.BlockSpec((1, block_q, H * D),
                                   lambda b, t, qt, kt: (b, qt[t], 0)),
            scratch_shapes=scratch_shapes,
        )
        out3 = pl.pallas_call(
            functools.partial(_causal_flash_kernel, **kernel_statics),
            out_shape=jax.ShapeDtypeStruct((B, L, H * D), queries.dtype),
            grid_spec=grid_spec,
            compiler_params=pltpu.CompilerParams(
                dimension_semantics=("parallel", "arbitrary"),
                vmem_limit_bytes=vmem_limit),
        )(q_tbl, kv_tbl, q3, k3, v3)
    else:
        grid_spec = pltpu.PrefetchScalarGridSpec(
            num_scalar_prefetch=0,
            grid=(B, n_q, n_kv),                       # KV (reduction) axis last
            in_specs=[
                pl.BlockSpec((1, block_q, H * E), lambda b, qi, kv: (b, qi, 0)),
                _kv_spec((1, block_k, H * E), lambda b, qi, kv: (b, kv, 0)),
                _kv_spec((1, block_k, H * D), lambda b, qi, kv: (b, kv, 0)),
            ],
            out_specs=pl.BlockSpec((1, block_q, H * D),
                                   lambda b, qi, kv: (b, qi, 0)),
            scratch_shapes=scratch_shapes,
        )
        out3 = pl.pallas_call(
            functools.partial(_dense_flash_kernel, **kernel_statics),
            out_shape=jax.ShapeDtypeStruct((B, L, H * D), queries.dtype),
            grid_spec=grid_spec,
            compiler_params=pltpu.CompilerParams(
                dimension_semantics=("parallel", "parallel", "arbitrary"),
                vmem_limit_bytes=vmem_limit),
        )(q3, k3, v3)

    return out3.reshape(B, L, H, D)


def _reference_full_attention(q, k, v, *, scale=None, mask_flag=True):
    B, L, H, E = q.shape
    scale = scale if scale is not None else 1.0 / sqrt(E)
    scores = jnp.einsum('blhe,bshe->bhls', q, k, precision=jax.lax.Precision.HIGHEST)
    if mask_flag:
        Lq, S = scores.shape[-2], scores.shape[-1]
        mask = jnp.triu(jnp.ones((Lq, S), dtype=bool), k=1)
        scores = jnp.where(mask[None, None], -jnp.inf, scores)
    a = jax.nn.softmax(scale * scores, axis=-1)
    return jnp.einsum('bhls,bshd->blhd', a, v, precision=jax.lax.Precision.HIGHEST)


if __name__ == "__main__":
    # Small but tiling-exercising shapes: 2 q tiles / lower-triangular 3-step causal
    # schedule per batch at block 128; trailing lane dims H*E = H*D = 256.
    B, L, S, H, E, D = 2, 256, 256, 4, 64, 64
    key = jax.random.PRNGKey(0)
    kq, kk, kv_ = jax.random.split(key, 3)
    queries = jax.random.normal(kq, (B, L, H, E), dtype=jnp.float32)
    keys_ = jax.random.normal(kk, (B, S, H, E), dtype=jnp.float32)
    values = jax.random.normal(kv_, (B, S, H, D), dtype=jnp.float32)

    ref_c = _reference_full_attention(queries, keys_, values, mask_flag=True)
    ref_nc = _reference_full_attention(queries, keys_, values, mask_flag=False)

    # Causal path (mask_flag=True, attn_mask=None), default bf16 MXU compute.
    out_c = jax.block_until_ready(
        full_attention(queries, keys_, values, mask_flag=True,
                       block_q=128, block_k=128))
    assert out_c.shape == (B, L, H, D)
    err_c = float(jnp.max(jnp.abs(out_c - ref_c)))
    assert jnp.allclose(out_c, ref_c, atol=4e-2, rtol=4e-2), err_c

    # Non-causal path (mask_flag=False), default bf16 MXU compute.
    out_nc = jax.block_until_ready(
        full_attention(queries, keys_, values, mask_flag=False,
                       block_q=128, block_k=128))
    err_nc = float(jnp.max(jnp.abs(out_nc - ref_nc)))
    assert jnp.allclose(out_nc, ref_nc, atol=4e-2, rtol=4e-2), err_nc

    # Causal path, full-f32 compute (exercises the exact-reciprocal branch).
    out_c32 = jax.block_until_ready(
        full_attention(queries, keys_, values, mask_flag=True,
                       block_q=128, block_k=128, compute_dtype=jnp.float32))
    err_c32 = float(jnp.max(jnp.abs(out_c32 - ref_c)))
    assert jnp.allclose(out_c32, ref_c, atol=2e-2, rtol=2e-2), err_c32

    print("KERNEL_OK")
</pallas_src>

<mosaic_0001>
module attributes {stable_mosaic.version = 11 : i64} {
  func.func @_causal_flash_kernel(%arg0: i32, %arg1: i32, %arg2: memref<3xi32, #tpu.memory_space<smem>>, %arg3: memref<3xi32, #tpu.memory_space<smem>>, %arg4: memref<1x128x256xf32, #tpu.memory_space<vmem>>, %arg5: memref<1x128x256xf32, #tpu.memory_space<vmem>>, %arg6: memref<1x128x256xf32, #tpu.memory_space<vmem>>, %arg7: memref<1x128x256xf32, #tpu.memory_space<vmem>>, %arg8: memref<128x256xbf16, #tpu.memory_space<vmem>>, %arg9: memref<4x128x1xf32, #tpu.memory_space<vmem>>, %arg10: memref<4x128x1xf32, #tpu.memory_space<vmem>>, %arg11: memref<128x256xf32, #tpu.memory_space<vmem>>) attributes {dimension_semantics = [#tpu.dimension_semantics<parallel>, #tpu.dimension_semantics<arbitrary>], iteration_bounds = array<i64: 2, 3>, scalar_prefetch = 2 : i64, scratch_operands = 4 : i64, tpu.core_type = #tpu.core_type<tc>, window_params = [{transform_indices = @transform_0, window_bounds = array<i64: 1, 128, 256>}, {transform_indices = @transform_1, window_bounds = array<i64: 1, 128, 256>}, {transform_indices = @transform_2, window_bounds = array<i64: 1, 128, 256>}, {transform_indices = @transform_3, window_bounds = array<i64: 1, 128, 256>}]} {
    %0 = arith.index_cast %arg1 : i32 to index
    %1 = memref.load %arg2[%0] : memref<3xi32, #tpu.memory_space<smem>>
    %2 = arith.index_cast %arg1 : i32 to index
    %3 = memref.load %arg3[%2] : memref<3xi32, #tpu.memory_space<smem>>
    %4 = arith.cmpi eq, %3, %1 : i32
    %c0_i32 = arith.constant 0 : i32
    %5 = arith.cmpi eq, %3, %c0_i32 : i32
    %6 = arith.extui %5 : i1 to i32
    %c0_i32_0 = arith.constant 0 : i32
    %7 = arith.cmpi ne, %6, %c0_i32_0 : i32
    scf.if %7 {
      %cst = arith.constant -1.000000e+30 : f32
      %15 = vector.broadcast %cst : f32 to vector<4x128x1xf32>
      %c0 = arith.constant 0 : index
      %c0_4 = arith.constant 0 : index
      %c0_5 = arith.constant 0 : index
      %16 = vector.load %arg9[%c0, %c0_4, %c0_5] : memref<4x128x1xf32, #tpu.memory_space<vmem>>, vector<4x128x1xf32>
      tpu.vector_store %arg9[%c0, %c0_4, %c0_5], %15 {strides = array<i32>} : memref<4x128x1xf32, #tpu.memory_space<vmem>>, vector<4x128x1xf32>,
      %cst_6 = arith.constant 0.000000e+00 : f32
      %17 = vector.broadcast %cst_6 : f32 to vector<4x128x1xf32>
      %c0_7 = arith.constant 0 : index
      %c0_8 = arith.constant 0 : index
      %c0_9 = arith.constant 0 : index
      %18 = vector.load %arg10[%c0_7, %c0_8, %c0_9] : memref<4x128x1xf32, #tpu.memory_space<vmem>>, vector<4x128x1xf32>
      tpu.vector_store %arg10[%c0_7, %c0_8, %c0_9], %17 {strides = array<i32>} : memref<4x128x1xf32, #tpu.memory_space<vmem>>, vector<4x128x1xf32>,
      %cst_10 = arith.constant 0.000000e+00 : f32
      %19 = vector.broadcast %cst_10 : f32 to vector<128x256xf32>
      %c0_11 = arith.constant 0 : index
      %c0_12 = arith.constant 0 : index
      %20 = vector.load %arg11[%c0_11, %c0_12] : memref<128x256xf32, #tpu.memory_space<vmem>>, vector<128x256xf32>
      tpu.vector_store %arg11[%c0_11, %c0_12], %19 {strides = array<i32>} : memref<128x256xf32, #tpu.memory_space<vmem>>, vector<128x256xf32>,
      %c0_13 = arith.constant 0 : index
      %c0_14 = arith.constant 0 : index
      %c0_15 = arith.constant 0 : index
      %21 = vector.load %arg4[%c0_13, %c0_14, %c0_15] : memref<1x128x256xf32, #tpu.memory_space<vmem>>, vector<1x128x256xf32>
      %22 = vector.shape_cast %21 : vector<1x128x256xf32> to vector<128x256xf32>
      %cst_16 = arith.constant 1.250000e-01 : f32
      %23 = vector.broadcast %cst_16 : f32 to vector<128x256xf32>
      %24 = arith.mulf %22, %23 : vector<128x256xf32>
      %25 = arith.truncf %24 : vector<128x256xf32> to vector<128x256xbf16>
      %c0_17 = arith.constant 0 : index
      %c0_18 = arith.constant 0 : index
      %26 = vector.load %arg8[%c0_17, %c0_18] : memref<128x256xbf16, #tpu.memory_space<vmem>>, vector<128x256xbf16>
      tpu.vector_store %arg8[%c0_17, %c0_18], %25 {strides = array<i32>} : memref<128x256xbf16, #tpu.memory_space<vmem>>, vector<128x256xbf16>,
    } else {
    }
    %8 = arith.extui %4 : i1 to i32
    %c0_i32_1 = arith.constant 0 : i32
    %9 = arith.cmpi ne, %8, %c0_i32_1 : i32
    scf.if %9 {
      %15 = tpu.iota {dimensions = array<i32: 1>} : vector<128x128xi32>
      %16 = tpu.iota {dimensions = array<i32: 0>} : vector<128x128xi32>
      %17 = arith.cmpi sgt, %15, %16 : vector<128x128xi32>
      %c0 = arith.constant 0 : index
      %c0_4 = arith.constant 0 : index
      %18 = vector.load %arg8[%c0, %c0_4] : memref<128x256xbf16, #tpu.memory_space<vmem>>, vector<128x64xbf16>
      %c0_5 = arith.constant 0 : index
      %c0_6 = arith.constant 0 : index
      %c0_7 = arith.constant 0 : index
      %19 = vector.load %arg5[%c0_5, %c0_6, %c0_7] : memref<1x128x256xf32, #tpu.memory_space<vmem>>, vector<1x128x64xf32>
      %20 = vector.shape_cast %19 : vector<1x128x64xf32> to vector<128x64xf32>
      %21 = arith.truncf %20 : vector<128x64xf32> to vector<128x64xbf16>
      %c0_8 = arith.constant 0 : index
      %c0_9 = arith.constant 0 : index
      %c0_10 = arith.constant 0 : index
      %22 = vector.load %arg6[%c0_8, %c0_9, %c0_10] : memref<1x128x256xf32, #tpu.memory_space<vmem>>, vector<1x128x64xf32>
      %23 = vector.shape_cast %22 : vector<1x128x64xf32> to vector<128x64xf32>
      %24 = arith.truncf %23 : vector<128x64xf32> to vector<128x64xbf16>
      %cst = arith.constant dense<0.000000e+00> : vector<128x128xf32>
      %25 = tpu.matmul %18, %21, %cst {dimension_numbers = #tpu.dot_dimension_numbers<[1], [1], [0], [0], [0, 0, 1, 0], [], []>} : vector<128x64xbf16>, vector<128x64xbf16>, vector<128x128xf32> -> vector<128x128xf32>
      %cst_11 = arith.constant -1.000000e+30 : f32
      %26 = vector.broadcast %cst_11 : f32 to vector<128x128xf32>
      %27 = arith.select %17, %26, %25 : vector<128x128xi1>, vector<128x128xf32>
      %c0_12 = arith.constant 0 : index
      %c0_13 = arith.constant 0 : index
      %c0_14 = arith.constant 0 : index
      %28 = vector.load %arg9[%c0_12, %c0_13, %c0_14] : memref<4x128x1xf32, #tpu.memory_space<vmem>>, vector<1x128x1xf32>
      %29 = vector.shape_cast %28 : vector<1x128x1xf32> to vector<128x1xf32>
      %cst_15 = arith.constant dense<0xFF800000> : vector<128xf32>
      %30 = vector.multi_reduction <maximumf>, %27, %cst_15 [1] : vector<128x128xf32> to vector<128xf32>
      %31 = vector.shape_cast %30 : vector<128xf32> to vector<128x1xf32>
      %32 = arith.maximumf %29, %31 : vector<128x1xf32>
      %33 = arith.subf %29, %32 : vector<128x1xf32>
      %34 = math.exp %33 : vector<128x1xf32>
      %35 = vector.broadcast %32 : vector<128x1xf32> to vector<128x128xf32>
      %36 = arith.subf %27, %35 : vector<128x128xf32>
      %37 = math.exp %36 : vector<128x128xf32>
      %c0_16 = arith.constant 0 : index
      %c0_17 = arith.constant 0 : index
      %c0_18 = arith.constant 0 : index
      %38 = vector.load %arg10[%c0_16, %c0_17, %c0_18] : memref<4x128x1xf32, #tpu.memory_space<vmem>>, vector<1x128x1xf32>
      %39 = vector.shape_cast %38 : vector<1x128x1xf32> to vector<128x1xf32>
      %40 = arith.mulf %34, %39 : vector<128x1xf32>
      %cst_19 = arith.constant dense<0.000000e+00> : vector<128xf32>
      %41 = vector.multi_reduction <add>, %37, %cst_19 [1] : vector<128x128xf32> to vector<128xf32>
      %42 = vector.shape_cast %41 : vector<128xf32> to vector<128x1xf32>
      %43 = arith.addf %40, %42 : vector<128x1xf32>
      %c0_20 = arith.constant 0 : index
      %c0_21 = arith.constant 0 : index
      %c0_22 = arith.constant 0 : index
      %44 = vector.load %arg10[%c0_20, %c0_21, %c0_22] : memref<4x128x1xf32, #tpu.memory_space<vmem>>, vector<1x128x1xf32>
      %45 = vector.shape_cast %44 : vector<1x128x1xf32> to vector<128x1xf32>
      %46 = vector.shape_cast %43 : vector<128x1xf32> to vector<1x128x1xf32>
      tpu.vector_store %arg10[%c0_20, %c0_21, %c0_22], %46 {strides = array<i32>} : memref<4x128x1xf32, #tpu.memory_space<vmem>>, vector<1x128x1xf32>,
      %c0_23 = arith.constant 0 : index
      %c0_24 = arith.constant 0 : index
      %47 = vector.load %arg11[%c0_23, %c0_24] : memref<128x256xf32, #tpu.memory_space<vmem>>, vector<128x64xf32>
      %48 = vector.broadcast %34 : vector<128x1xf32> to vector<128x64xf32>
      %49 = arith.mulf %48, %47 : vector<128x64xf32>
      %50 = arith.truncf %37 : vector<128x128xf32> to vector<128x128xbf16>
      %cst_25 = arith.constant dense<0.000000e+00> : vector<128x64xf32>
      %51 = tpu.matmul %50, %24, %cst_25 {dimension_numbers = #tpu.dot_dimension_numbers<[1], [0], [0], [1], [0, 0, 1, 1], [], []>} : vector<128x128xbf16>, vector<128x64xbf16>, vector<128x64xf32> -> vector<128x64xf32>
      %52 = arith.addf %49, %51 : vector<128x64xf32>
      %c0_26 = arith.constant 0 : index
      %c0_27 = arith.constant 0 : index
      %53 = vector.load %arg11[%c0_26, %c0_27] : memref<128x256xf32, #tpu.memory_space<vmem>>, vector<128x64xf32>
      tpu.vector_store %arg11[%c0_26, %c0_27], %52 {strides = array<i32>} : memref<128x256xf32, #tpu.memory_space<vmem>>, vector<128x64xf32>,
      %c0_28 = arith.constant 0 : index
      %c0_29 = arith.constant 0 : index
      %c0_30 = arith.constant 0 : index
      %54 = vector.load %arg9[%c0_28, %c0_29, %c0_30] : memref<4x128x1xf32, #tpu.memory_space<vmem>>, vector<1x128x1xf32>
      %55 = vector.shape_cast %54 : vector<1x128x1xf32> to vector<128x1xf32>
      %56 = vector.shape_cast %32 : vector<128x1xf32> to vector<1x128x1xf32>
      tpu.vector_store %arg9[%c0_28, %c0_29, %c0_30], %56 {strides = array<i32>} : memref<4x128x1xf32, #tpu.memory_space<vmem>>, vector<1x128x1xf32>,
      %c0_31 = arith.constant 0 : index
      %c64 = arith.constant 64 : index
      %57 = vector.load %arg8[%c0_31, %c64] : memref<128x256xbf16, #tpu.memory_space<vmem>>, vector<128x64xbf16>
      %c0_32 = arith.constant 0 : index
      %c0_33 = arith.constant 0 : index
      %c64_34 = arith.constant 64 : index
      %58 = vector.load %arg5[%c0_32, %c0_33, %c64_34] : memref<1x128x256xf32, #tpu.memory_space<vmem>>, vector<1x128x64xf32>
      %59 = vector.shape_cast %58 : vector<1x128x64xf32> to vector<128x64xf32>
      %60 = arith.truncf %59 : vector<128x64xf32> to vector<128x64xbf16>
      %c0_35 = arith.constant 0 : index
      %c0_36 = arith.constant 0 : index
      %c64_37 = arith.constant 64 : index
      %61 = vector.load %arg6[%c0_35, %c0_36, %c64_37] : memref<1x128x256xf32, #tpu.memory_space<vmem>>, vector<1x128x64xf32>
      %62 = vector.shape_cast %61 : vector<1x128x64xf32> to vector<128x64xf32>
      %63 = arith.truncf %62 : vector<128x64xf32> to vector<128x64xbf16>
      %cst_38 = arith.constant dense<0.000000e+00> : vector<128x128xf32>
      %64 = tpu.matmul %57, %60, %cst_38 {dimension_numbers = #tpu.dot_dimension_numbers<[1], [1], [0], [0], [0, 0, 1, 0], [], []>} : vector<128x64xbf16>, vector<128x64xbf16>, vector<128x128xf32> -> vector<128x128xf32>
      %cst_39 = arith.constant -1.000000e+30 : f32
      %65 = vector.broadcast %cst_39 : f32 to vector<128x128xf32>
      %66 = arith.select %17, %65, %64 : vector<128x128xi1>, vector<128x128xf32>
      %c1 = arith.constant 1 : index
      %c0_40 = arith.constant 0 : index
      %c0_41 = arith.constant 0 : index
      %67 = vector.load %arg9[%c1, %c0_40, %c0_41] : memref<4x128x1xf32, #tpu.memory_space<vmem>>, vector<1x128x1xf32>
      %68 = vector.shape_cast %67 : vector<1x128x1xf32> to vector<128x1xf32>
      %cst_42 = arith.constant dense<0xFF800000> : vector<128xf32>
      %69 = vector.multi_reduction <maximumf>, %66, %cst_42 [1] : vector<128x128xf32> to vector<128xf32>
      %70 = vector.shape_cast %69 : vector<128xf32> to vector<128x1xf32>
      %71 = arith.maximumf %68, %70 : vector<128x1xf32>
      %72 = arith.subf %68, %71 : vector<128x1xf32>
      %73 = math.exp %72 : vector<128x1xf32>
      %74 = vector.broadcast %71 : vector<128x1xf32> to vector<128x128xf32>
      %75 = arith.subf %66, %74 : vector<128x128xf32>
      %76 = math.exp %75 : vector<128x128xf32>
      %c1_43 = arith.constant 1 : index
      %c0_44 = arith.constant 0 : index
      %c0_45 = arith.constant 0 : index
      %77 = vector.load %arg10[%c1_43, %c0_44, %c0_45] : memref<4x128x1xf32, #tpu.memory_space<vmem>>, vector<1x128x1xf32>
      %78 = vector.shape_cast %77 : vector<1x128x1xf32> to vector<128x1xf32>
      %79 = arith.mulf %73, %78 : vector<128x1xf32>
      %cst_46 = arith.constant dense<0.000000e+00> : vector<128xf32>
      %80 = vector.multi_reduction <add>, %76, %cst_46 [1] : vector<128x128xf32> to vector<128xf32>
      %81 = vector.shape_cast %80 : vector<128xf32> to vector<128x1xf32>
      %82 = arith.addf %79, %81 : vector<128x1xf32>
      %c1_47 = arith.constant 1 : index
      %c0_48 = arith.constant 0 : index
      %c0_49 = arith.constant 0 : index
      %83 = vector.load %arg10[%c1_47, %c0_48, %c0_49] : memref<4x128x1xf32, #tpu.memory_space<vmem>>, vector<1x128x1xf32>
      %84 = vector.shape_cast %83 : vector<1x128x1xf32> to vector<128x1xf32>
      %85 = vector.shape_cast %82 : vector<128x1xf32> to vector<1x128x1xf32>
      tpu.vector_store %arg10[%c1_47, %c0_48, %c0_49], %85 {strides = array<i32>} : memref<4x128x1xf32, #tpu.memory_space<vmem>>, vector<1x128x1xf32>,
      %c0_50 = arith.constant 0 : index
      %c64_51 = arith.constant 64 : index
      %86 = vector.load %arg11[%c0_50, %c64_51] : memref<128x256xf32, #tpu.memory_space<vmem>>, vector<128x64xf32>
      %87 = vector.broadcast %73 : vector<128x1xf32> to vector<128x64xf32>
      %88 = arith.mulf %87, %86 : vector<128x64xf32>
      %89 = arith.truncf %76 : vector<128x128xf32> to vector<128x128xbf16>
      %cst_52 = arith.constant dense<0.000000e+00> : vector<128x64xf32>
      %90 = tpu.matmul %89, %63, %cst_52 {dimension_numbers = #tpu.dot_dimension_numbers<[1], [0], [0], [1], [0, 0, 1, 1], [], []>} : vector<128x128xbf16>, vector<128x64xbf16>, vector<128x64xf32> -> vector<128x64xf32>
      %91 = arith.addf %88, %90 : vector<128x64xf32>
      %c0_53 = arith.constant 0 : index
      %c64_54 = arith.constant 64 : index
      %92 = vector.load %arg11[%c0_53, %c64_54] : memref<128x256xf32, #tpu.memory_space<vmem>>, vector<128x64xf32>
      tpu.vector_store %arg11[%c0_53, %c64_54], %91 {strides = array<i32>} : memref<128x256xf32, #tpu.memory_space<vmem>>, vector<128x64xf32>,
      %c1_55 = arith.constant 1 : index
      %c0_56 = arith.constant 0 : index
      %c0_57 = arith.constant 0 : index
      %93 = vector.load %arg9[%c1_55, %c0_56, %c0_57] : memref<4x128x1xf32, #tpu.memory_space<vmem>>, vector<1x128x1xf32>
      %94 = vector.shape_cast %93 : vector<1x128x1xf32> to vector<128x1xf32>
      %95 = vector.shape_cast %71 : vector<128x1xf32> to vector<1x128x1xf32>
      tpu.vector_store %arg9[%c1_55, %c0_56, %c0_57], %95 {strides = array<i32>} : memref<4x128x1xf32, #tpu.memory_space<vmem>>, vector<1x128x1xf32>,
      %c0_58 = arith.constant 0 : index
      %c128 = arith.constant 128 : index
      %96 = vector.load %arg8[%c0_58, %c128] : memref<128x256xbf16, #tpu.memory_space<vmem>>, vector<128x64xbf16>
      %c0_59 = arith.constant 0 : index
      %c0_60 = arith.constant 0 : index
      %c128_61 = arith.constant 128 : index
      %97 = vector.load %arg5[%c0_59, %c0_60, %c128_61] : memref<1x128x256xf32, #tpu.memory_space<vmem>>, vector<1x128x64xf32>
      %98 = vector.shape_cast %97 : vector<1x128x64xf32> to vector<128x64xf32>
      %99 = arith.truncf %98 : vector<128x64xf32> to vector<128x64xbf16>
      %c0_62 = arith.constant 0 : index
      %c0_63 = arith.constant 0 : index
      %c128_64 = arith.constant 128 : index
      %100 = vector.load %arg6[%c0_62, %c0_63, %c128_64] : memref<1x128x256xf32, #tpu.memory_space<vmem>>, vector<1x128x64xf32>
      %101 = vector.shape_cast %100 : vector<1x128x64xf32> to vector<128x64xf32>
      %102 = arith.truncf %101 : vector<128x64xf32> to vector<128x64xbf16>
      %cst_65 = arith.constant dense<0.000000e+00> : vector<128x128xf32>
      %103 = tpu.matmul %96, %99, %cst_65 {dimension_numbers = #tpu.dot_dimension_numbers<[1], [1], [0], [0], [0, 0, 1, 0], [], []>} : vector<128x64xbf16>, vector<128x64xbf16>, vector<128x128xf32> -> vector<128x128xf32>
      %cst_66 = arith.constant -1.000000e+30 : f32
      %104 = vector.broadcast %cst_66 : f32 to vector<128x128xf32>
      %105 = arith.select %17, %104, %103 : vector<128x128xi1>, vector<128x128xf32>
      %c2 = arith.constant 2 : index
      %c0_67 = arith.constant 0 : index
      %c0_68 = arith.constant 0 : index
      %106 = vector.load %arg9[%c2, %c0_67, %c0_68] : memref<4x128x1xf32, #tpu.memory_space<vmem>>, vector<1x128x1xf32>
      %107 = vector.shape_cast %106 : vector<1x128x1xf32> to vector<128x1xf32>
      %cst_69 = arith.constant dense<0xFF800000> : vector<128xf32>
      %108 = vector.multi_reduction <maximumf>, %105, %cst_69 [1] : vector<128x128xf32> to vector<128xf32>
      %109 = vector.shape_cast %108 : vector<128xf32> to vector<128x1xf32>
      %110 = arith.maximumf %107, %109 : vector<128x1xf32>
      %111 = arith.subf %107, %110 : vector<128x1xf32>
      %112 = math.exp %111 : vector<128x1xf32>
      %113 = vector.broadcast %110 : vector<128x1xf32> to vector<128x128xf32>
      %114 = arith.subf %105, %113 : vector<128x128xf32>
      %115 = math.exp %114 : vector<128x128xf32>
      %c2_70 = arith.constant 2 : index
      %c0_71 = arith.constant 0 : index
      %c0_72 = arith.constant 0 : index
      %116 = vector.load %arg10[%c2_70, %c0_71, %c0_72] : memref<4x128x1xf32, #tpu.memory_space<vmem>>, vector<1x128x1xf32>
      %117 = vector.shape_cast %116 : vector<1x128x1xf32> to vector<128x1xf32>
      %118 = arith.mulf %112, %117 : vector<128x1xf32>
      %cst_73 = arith.constant dense<0.000000e+00> : vector<128xf32>
      %119 = vector.multi_reduction <add>, %115, %cst_73 [1] : vector<128x128xf32> to vector<128xf32>
      %120 = vector.shape_cast %119 : vector<128xf32> to vector<128x1xf32>
      %121 = arith.addf %118, %120 : vector<128x1xf32>
      %c2_74 = arith.constant 2 : index
      %c0_75 = arith.constant 0 : index
      %c0_76 = arith.constant 0 : index
      %122 = vector.load %arg10[%c2_74, %c0_75, %c0_76] : memref<4x128x1xf32, #tpu.memory_space<vmem>>, vector<1x128x1xf32>
      %123 = vector.shape_cast %122 : vector<1x128x1xf32> to vector<128x1xf32>
      %124 = vector.shape_cast %121 : vector<128x1xf32> to vector<1x128x1xf32>
      tpu.vector_store %arg10[%c2_74, %c0_75, %c0_76], %124 {strides = array<i32>} : memref<4x128x1xf32, #tpu.memory_space<vmem>>, vector<1x128x1xf32>,
      %c0_77 = arith.constant 0 : index
      %c128_78 = arith.constant 128 : index
      %125 = vector.load %arg11[%c0_77, %c128_78] : memref<128x256xf32, #tpu.memory_space<vmem>>, vector<128x64xf32>
      %126 = vector.broadcast %112 : vector<128x1xf32> to vector<128x64xf32>
      %127 = arith.mulf %126, %125 : vector<128x64xf32>
      %128 = arith.truncf %115 : vector<128x128xf32> to vector<128x128xbf16>
      %cst_79 = arith.constant dense<0.000000e+00> : vector<128x64xf32>
      %129 = tpu.matmul %128, %102, %cst_79 {dimension_numbers = #tpu.dot_dimension_numbers<[1], [0], [0], [1], [0, 0, 1, 1], [], []>} : vector<128x128xbf16>, vector<128x64xbf16>, vector<128x64xf32> -> vector<128x64xf32>
      %130 = arith.addf %127, %129 : vector<128x64xf32>
      %c0_80 = arith.constant 0 : index
      %c128_81 = arith.constant 128 : index
      %131 = vector.load %arg11[%c0_80, %c128_81] : memref<128x256xf32, #tpu.memory_space<vmem>>, vector<128x64xf32>
      tpu.vector_store %arg11[%c0_80, %c128_81], %130 {strides = array<i32>} : memref<128x256xf32, #tpu.memory_space<vmem>>, vector<128x64xf32>,
      %c2_82 = arith.constant 2 : index
      %c0_83 = arith.constant 0 : index
      %c0_84 = arith.constant 0 : index
      %132 = vector.load %arg9[%c2_82, %c0_83, %c0_84] : memref<4x128x1xf32, #tpu.memory_space<vmem>>, vector<1x128x1xf32>
      %133 = vector.shape_cast %132 : vector<1x128x1xf32> to vector<128x1xf32>
      %134 = vector.shape_cast %110 : vector<128x1xf32> to vector<1x128x1xf32>
      tpu.vector_store %arg9[%c2_82, %c0_83, %c0_84], %134 {strides = array<i32>} : memref<4x128x1xf32, #tpu.memory_space<vmem>>, vector<1x128x1xf32>,
      %c0_85 = arith.constant 0 : index
      %c192 = arith.constant 192 : index
      %135 = vector.load %arg8[%c0_85, %c192] : memref<128x256xbf16, #tpu.memory_space<vmem>>, vector<128x64xbf16>
      %c0_86 = arith.constant 0 : index
      %c0_87 = arith.constant 0 : index
      %c192_88 = arith.constant 192 : index
      %136 = vector.load %arg5[%c0_86, %c0_87, %c192_88] : memref<1x128x256xf32, #tpu.memory_space<vmem>>, vector<1x128x64xf32>
      %137 = vector.shape_cast %136 : vector<1x128x64xf32> to vector<128x64xf32>
      %138 = arith.truncf %137 : vector<128x64xf32> to vector<128x64xbf16>
      %c0_89 = arith.constant 0 : index
      %c0_90 = arith.constant 0 : index
      %c192_91 = arith.constant 192 : index
      %139 = vector.load %arg6[%c0_89, %c0_90, %c192_91] : memref<1x128x256xf32, #tpu.memory_space<vmem>>, vector<1x128x64xf32>
      %140 = vector.shape_cast %139 : vector<1x128x64xf32> to vector<128x64xf32>
      %141 = arith.truncf %140 : vector<128x64xf32> to vector<128x64xbf16>
      %cst_92 = arith.constant dense<0.000000e+00> : vector<128x128xf32>
      %142 = tpu.matmul %135, %138, %cst_92 {dimension_numbers = #tpu.dot_dimension_numbers<[1], [1], [0], [0], [0, 0, 1, 0], [], []>} : vector<128x64xbf16>, vector<128x64xbf16>, vector<128x128xf32> -> vector<128x128xf32>
      %cst_93 = arith.constant -1.000000e+30 : f32
      %143 = vector.broadcast %cst_93 : f32 to vector<128x128xf32>
      %144 = arith.select %17, %143, %142 : vector<128x128xi1>, vector<128x128xf32>
      %c3 = arith.constant 3 : index
      %c0_94 = arith.constant 0 : index
      %c0_95 = arith.constant 0 : index
      %145 = vector.load %arg9[%c3, %c0_94, %c0_95] : memref<4x128x1xf32, #tpu.memory_space<vmem>>, vector<1x128x1xf32>
      %146 = vector.shape_cast %145 : vector<1x128x1xf32> to vector<128x1xf32>
      %cst_96 = arith.constant dense<0xFF800000> : vector<128xf32>
      %147 = vector.multi_reduction <maximumf>, %144, %cst_96 [1] : vector<128x128xf32> to vector<128xf32>
      %148 = vector.shape_cast %147 : vector<128xf32> to vector<128x1xf32>
      %149 = arith.maximumf %146, %148 : vector<128x1xf32>
      %150 = arith.subf %146, %149 : vector<128x1xf32>
      %151 = math.exp %150 : vector<128x1xf32>
      %152 = vector.broadcast %149 : vector<128x1xf32> to vector<128x128xf32>
      %153 = arith.subf %144, %152 : vector<128x128xf32>
      %154 = math.exp %153 : vector<128x128xf32>
      %c3_97 = arith.constant 3 : index
      %c0_98 = arith.constant 0 : index
      %c0_99 = arith.constant 0 : index
      %155 = vector.load %arg10[%c3_97, %c0_98, %c0_99] : memref<4x128x1xf32, #tpu.memory_space<vmem>>, vector<1x128x1xf32>
      %156 = vector.shape_cast %155 : vector<1x128x1xf32> to vector<128x1xf32>
      %157 = arith.mulf %151, %156 : vector<128x1xf32>
      %cst_100 = arith.constant dense<0.000000e+00> : vector<128xf32>
      %158 = vector.multi_reduction <add>, %154, %cst_100 [1] : vector<128x128xf32> to vector<128xf32>
      %159 = vector.shape_cast %158 : vector<128xf32> to vector<128x1xf32>
      %160 = arith.addf %157, %159 : vector<128x1xf32>
      %c3_101 = arith.constant 3 : index
      %c0_102 = arith.constant 0 : index
      %c0_103 = arith.constant 0 : index
      %161 = vector.load %arg10[%c3_101, %c0_102, %c0_103] : memref<4x128x1xf32, #tpu.memory_space<vmem>>, vector<1x128x1xf32>
      %162 = vector.shape_cast %161 : vector<1x128x1xf32> to vector<128x1xf32>
      %163 = vector.shape_cast %160 : vector<128x1xf32> to vector<1x128x1xf32>
      tpu.vector_store %arg10[%c3_101, %c0_102, %c0_103], %163 {strides = array<i32>} : memref<4x128x1xf32, #tpu.memory_space<vmem>>, vector<1x128x1xf32>,
      %c0_104 = arith.constant 0 : index
      %c192_105 = arith.constant 192 : index
      %164 = vector.load %arg11[%c0_104, %c192_105] : memref<128x256xf32, #tpu.memory_space<vmem>>, vector<128x64xf32>
      %165 = vector.broadcast %151 : vector<128x1xf32> to vector<128x64xf32>
      %166 = arith.mulf %165, %164 : vector<128x64xf32>
      %167 = arith.truncf %154 : vector<128x128xf32> to vector<128x128xbf16>
      %cst_106 = arith.constant dense<0.000000e+00> : vector<128x64xf32>
      %168 = tpu.matmul %167, %141, %cst_106 {dimension_numbers = #tpu.dot_dimension_numbers<[1], [0], [0], [1], [0, 0, 1, 1], [], []>} : vector<128x128xbf16>, vector<128x64xbf16>, vector<128x64xf32> -> vector<128x64xf32>
      %169 = arith.addf %166, %168 : vector<128x64xf32>
      %c0_107 = arith.constant 0 : index
      %c192_108 = arith.constant 192 : index
      %170 = vector.load %arg11[%c0_107, %c192_108] : memref<128x256xf32, #tpu.memory_space<vmem>>, vector<128x64xf32>
      tpu.vector_store %arg11[%c0_107, %c192_108], %169 {strides = array<i32>} : memref<128x256xf32, #tpu.memory_space<vmem>>, vector<128x64xf32>,
      %c3_109 = arith.constant 3 : index
      %c0_110 = arith.constant 0 : index
      %c0_111 = arith.constant 0 : index
      %171 = vector.load %arg9[%c3_109, %c0_110, %c0_111] : memref<4x128x1xf32, #tpu.memory_space<vmem>>, vector<1x128x1xf32>
      %172 = vector.shape_cast %171 : vector<1x128x1xf32> to vector<128x1xf32>
      %173 = vector.shape_cast %149 : vector<128x1xf32> to vector<1x128x1xf32>
      tpu.vector_store %arg9[%c3_109, %c0_110, %c0_111], %173 {strides = array<i32>} : memref<4x128x1xf32, #tpu.memory_space<vmem>>, vector<1x128x1xf32>,
    } else {
    }
    %true = arith.constant true
    %10 = arith.xori %4, %true : i1
    %11 = arith.extui %10 : i1 to i32
    %c0_i32_2 = arith.constant 0 : i32
    %12 = arith.cmpi ne, %11, %c0_i32_2 : i32
    scf.if %12 {
      %c0 = arith.constant 0 : index
      %c0_4 = arith.constant 0 : index
      %15 = vector.load %arg8[%c0, %c0_4] : memref<128x256xbf16, #tpu.memory_space<vmem>>, vector<128x64xbf16>
      %c0_5 = arith.constant 0 : index
      %c0_6 = arith.constant 0 : index
      %c0_7 = arith.constant 0 : index
      %16 = vector.load %arg5[%c0_5, %c0_6, %c0_7] : memref<1x128x256xf32, #tpu.memory_space<vmem>>, vector<1x128x64xf32>
      %17 = vector.shape_cast %16 : vector<1x128x64xf32> to vector<128x64xf32>
      %18 = arith.truncf %17 : vector<128x64xf32> to vector<128x64xbf16>
      %c0_8 = arith.constant 0 : index
      %c0_9 = arith.constant 0 : index
      %c0_10 = arith.constant 0 : index
      %19 = vector.load %arg6[%c0_8, %c0_9, %c0_10] : memref<1x128x256xf32, #tpu.memory_space<vmem>>, vector<1x128x64xf32>
      %20 = vector.shape_cast %19 : vector<1x128x64xf32> to vector<128x64xf32>
      %21 = arith.truncf %20 : vector<128x64xf32> to vector<128x64xbf16>
      %cst = arith.constant dense<0.000000e+00> : vector<128x128xf32>
      %22 = tpu.matmul %15, %18, %cst {dimension_numbers = #tpu.dot_dimension_numbers<[1], [1], [0], [0], [0, 0, 1, 0], [], []>} : vector<128x64xbf16>, vector<128x64xbf16>, vector<128x128xf32> -> vector<128x128xf32>
      %c0_11 = arith.constant 0 : index
      %c0_12 = arith.constant 0 : index
      %c0_13 = arith.constant 0 : index
      %23 = vector.load %arg9[%c0_11, %c0_12, %c0_13] : memref<4x128x1xf32, #tpu.memory_space<vmem>>, vector<1x128x1xf32>
      %24 = vector.shape_cast %23 : vector<1x128x1xf32> to vector<128x1xf32>
      %cst_14 = arith.constant dense<0xFF800000> : vector<128xf32>
      %25 = vector.multi_reduction <maximumf>, %22, %cst_14 [1] : vector<128x128xf32> to vector<128xf32>
      %26 = vector.shape_cast %25 : vector<128xf32> to vector<128x1xf32>
      %27 = arith.maximumf %24, %26 : vector<128x1xf32>
      %28 = arith.subf %24, %27 : vector<128x1xf32>
      %29 = math.exp %28 : vector<128x1xf32>
      %30 = vector.broadcast %27 : vector<128x1xf32> to vector<128x128xf32>
      %31 = arith.subf %22, %30 : vector<128x128xf32>
      %32 = math.exp %31 : vector<128x128xf32>
      %c0_15 = arith.constant 0 : index
      %c0_16 = arith.constant 0 : index
      %c0_17 = arith.constant 0 : index
      %33 = vector.load %arg10[%c0_15, %c0_16, %c0_17] : memref<4x128x1xf32, #tpu.memory_space<vmem>>, vector<1x128x1xf32>
      %34 = vector.shape_cast %33 : vector<1x128x1xf32> to vector<128x1xf32>
      %35 = arith.mulf %29, %34 : vector<128x1xf32>
      %cst_18 = arith.constant dense<0.000000e+00> : vector<128xf32>
      %36 = vector.multi_reduction <add>, %32, %cst_18 [1] : vector<128x128xf32> to vector<128xf32>
      %37 = vector.shape_cast %36 : vector<128xf32> to vector<128x1xf32>
      %38 = arith.addf %35, %37 : vector<128x1xf32>
      %c0_19 = arith.constant 0 : index
      %c0_20 = arith.constant 0 : index
      %c0_21 = arith.constant 0 : index
      %39 = vector.load %arg10[%c0_19, %c0_20, %c0_21] : memref<4x128x1xf32, #tpu.memory_space<vmem>>, vector<1x128x1xf32>
      %40 = vector.shape_cast %39 : vector<1x128x1xf32> to vector<128x1xf32>
      %41 = vector.shape_cast %38 : vector<128x1xf32> to vector<1x128x1xf32>
      tpu.vector_store %arg10[%c0_19, %c0_20, %c0_21], %41 {strides = array<i32>} : memref<4x128x1xf32, #tpu.memory_space<vmem>>, vector<1x128x1xf32>,
      %c0_22 = arith.constant 0 : index
      %c0_23 = arith.constant 0 : index
      %42 = vector.load %arg11[%c0_22, %c0_23] : memref<128x256xf32, #tpu.memory_space<vmem>>, vector<128x64xf32>
      %43 = vector.broadcast %29 : vector<128x1xf32> to vector<128x64xf32>
      %44 = arith.mulf %43, %42 : vector<128x64xf32>
      %45 = arith.truncf %32 : vector<128x128xf32> to vector<128x128xbf16>
      %cst_24 = arith.constant dense<0.000000e+00> : vector<128x64xf32>
      %46 = tpu.matmul %45, %21, %cst_24 {dimension_numbers = #tpu.dot_dimension_numbers<[1], [0], [0], [1], [0, 0, 1, 1], [], []>} : vector<128x128xbf16>, vector<128x64xbf16>, vector<128x64xf32> -> vector<128x64xf32>
      %47 = arith.addf %44, %46 : vector<128x64xf32>
      %c0_25 = arith.constant 0 : index
      %c0_26 = arith.constant 0 : index
      %48 = vector.load %arg11[%c0_25, %c0_26] : memref<128x256xf32, #tpu.memory_space<vmem>>, vector<128x64xf32>
      tpu.vector_store %arg11[%c0_25, %c0_26], %47 {strides = array<i32>} : memref<128x256xf32, #tpu.memory_space<vmem>>, vector<128x64xf32>,
      %c0_27 = arith.constant 0 : index
      %c0_28 = arith.constant 0 : index
      %c0_29 = arith.constant 0 : index
      %49 = vector.load %arg9[%c0_27, %c0_28, %c0_29] : memref<4x128x1xf32, #tpu.memory_space<vmem>>, vector<1x128x1xf32>
      %50 = vector.shape_cast %49 : vector<1x128x1xf32> to vector<128x1xf32>
      %51 = vector.shape_cast %27 : vector<128x1xf32> to vector<1x128x1xf32>
      tpu.vector_store %arg9[%c0_27, %c0_28, %c0_29], %51 {strides = array<i32>} : memref<4x128x1xf32, #tpu.memory_space<vmem>>, vector<1x128x1xf32>,
      %c0_30 = arith.constant 0 : index
      %c64 = arith.constant 64 : index
      %52 = vector.load %arg8[%c0_30, %c64] : memref<128x256xbf16, #tpu.memory_space<vmem>>, vector<128x64xbf16>
      %c0_31 = arith.constant 0 : index
      %c0_32 = arith.constant 0 : index
      %c64_33 = arith.constant 64 : index
      %53 = vector.load %arg5[%c0_31, %c0_32, %c64_33] : memref<1x128x256xf32, #tpu.memory_space<vmem>>, vector<1x128x64xf32>
      %54 = vector.shape_cast %53 : vector<1x128x64xf32> to vector<128x64xf32>
      %55 = arith.truncf %54 : vector<128x64xf32> to vector<128x64xbf16>
      %c0_34 = arith.constant 0 : index
      %c0_35 = arith.constant 0 : index
      %c64_36 = arith.constant 64 : index
      %56 = vector.load %arg6[%c0_34, %c0_35, %c64_36] : memref<1x128x256xf32, #tpu.memory_space<vmem>>, vector<1x128x64xf32>
      %57 = vector.shape_cast %56 : vector<1x128x64xf32> to vector<128x64xf32>
      %58 = arith.truncf %57 : vector<128x64xf32> to vector<128x64xbf16>
      %cst_37 = arith.constant dense<0.000000e+00> : vector<128x128xf32>
      %59 = tpu.matmul %52, %55, %cst_37 {dimension_numbers = #tpu.dot_dimension_numbers<[1], [1], [0], [0], [0, 0, 1, 0], [], []>} : vector<128x64xbf16>, vector<128x64xbf16>, vector<128x128xf32> -> vector<128x128xf32>
      %c1 = arith.constant 1 : index
      %c0_38 = arith.constant 0 : index
      %c0_39 = arith.constant 0 : index
      %60 = vector.load %arg9[%c1, %c0_38, %c0_39] : memref<4x128x1xf32, #tpu.memory_space<vmem>>, vector<1x128x1xf32>
      %61 = vector.shape_cast %60 : vector<1x128x1xf32> to vector<128x1xf32>
      %cst_40 = arith.constant dense<0xFF800000> : vector<128xf32>
      %62 = vector.multi_reduction <maximumf>, %59, %cst_40 [1] : vector<128x128xf32> to vector<128xf32>
      %63 = vector.shape_cast %62 : vector<128xf32> to vector<128x1xf32>
      %64 = arith.maximumf %61, %63 : vector<128x1xf32>
      %65 = arith.subf %61, %64 : vector<128x1xf32>
      %66 = math.exp %65 : vector<128x1xf32>
      %67 = vector.broadcast %64 : vector<128x1xf32> to vector<128x128xf32>
      %68 = arith.subf %59, %67 : vector<128x128xf32>
      %69 = math.exp %68 : vector<128x128xf32>
      %c1_41 = arith.constant 1 : index
      %c0_42 = arith.constant 0 : index
      %c0_43 = arith.constant 0 : index
      %70 = vector.load %arg10[%c1_41, %c0_42, %c0_43] : memref<4x128x1xf32, #tpu.memory_space<vmem>>, vector<1x128x1xf32>
      %71 = vector.shape_cast %70 : vector<1x128x1xf32> to vector<128x1xf32>
      %72 = arith.mulf %66, %71 : vector<128x1xf32>
      %cst_44 = arith.constant dense<0.000000e+00> : vector<128xf32>
      %73 = vector.multi_reduction <add>, %69, %cst_44 [1] : vector<128x128xf32> to vector<128xf32>
      %74 = vector.shape_cast %73 : vector<128xf32> to vector<128x1xf32>
      %75 = arith.addf %72, %74 : vector<128x1xf32>
      %c1_45 = arith.constant 1 : index
      %c0_46 = arith.constant 0 : index
      %c0_47 = arith.constant 0 : index
      %76 = vector.load %arg10[%c1_45, %c0_46, %c0_47] : memref<4x128x1xf32, #tpu.memory_space<vmem>>, vector<1x128x1xf32>
      %77 = vector.shape_cast %76 : vector<1x128x1xf32> to vector<128x1xf32>
      %78 = vector.shape_cast %75 : vector<128x1xf32> to vector<1x128x1xf32>
      tpu.vector_store %arg10[%c1_45, %c0_46, %c0_47], %78 {strides = array<i32>} : memref<4x128x1xf32, #tpu.memory_space<vmem>>, vector<1x128x1xf32>,
      %c0_48 = arith.constant 0 : index
      %c64_49 = arith.constant 64 : index
      %79 = vector.load %arg11[%c0_48, %c64_49] : memref<128x256xf32, #tpu.memory_space<vmem>>, vector<128x64xf32>
      %80 = vector.broadcast %66 : vector<128x1xf32> to vector<128x64xf32>
      %81 = arith.mulf %80, %79 : vector<128x64xf32>
      %82 = arith.truncf %69 : vector<128x128xf32> to vector<128x128xbf16>
      %cst_50 = arith.constant dense<0.000000e+00> : vector<128x64xf32>
      %83 = tpu.matmul %82, %58, %cst_50 {dimension_numbers = #tpu.dot_dimension_numbers<[1], [0], [0], [1], [0, 0, 1, 1], [], []>} : vector<128x128xbf16>, vector<128x64xbf16>, vector<128x64xf32> -> vector<128x64xf32>
      %84 = arith.addf %81, %83 : vector<128x64xf32>
      %c0_51 = arith.constant 0 : index
      %c64_52 = arith.constant 64 : index
      %85 = vector.load %arg11[%c0_51, %c64_52] : memref<128x256xf32, #tpu.memory_space<vmem>>, vector<128x64xf32>
      tpu.vector_store %arg11[%c0_51, %c64_52], %84 {strides = array<i32>} : memref<128x256xf32, #tpu.memory_space<vmem>>, vector<128x64xf32>,
      %c1_53 = arith.constant 1 : index
      %c0_54 = arith.constant 0 : index
      %c0_55 = arith.constant 0 : index
      %86 = vector.load %arg9[%c1_53, %c0_54, %c0_55] : memref<4x128x1xf32, #tpu.memory_space<vmem>>, vector<1x128x1xf32>
      %87 = vector.shape_cast %86 : vector<1x128x1xf32> to vector<128x1xf32>
      %88 = vector.shape_cast %64 : vector<128x1xf32> to vector<1x128x1xf32>
      tpu.vector_store %arg9[%c1_53, %c0_54, %c0_55], %88 {strides = array<i32>} : memref<4x128x1xf32, #tpu.memory_space<vmem>>, vector<1x128x1xf32>,
      %c0_56 = arith.constant 0 : index
      %c128 = arith.constant 128 : index
      %89 = vector.load %arg8[%c0_56, %c128] : memref<128x256xbf16, #tpu.memory_space<vmem>>, vector<128x64xbf16>
      %c0_57 = arith.constant 0 : index
      %c0_58 = arith.constant 0 : index
      %c128_59 = arith.constant 128 : index
      %90 = vector.load %arg5[%c0_57, %c0_58, %c128_59] : memref<1x128x256xf32, #tpu.memory_space<vmem>>, vector<1x128x64xf32>
      %91 = vector.shape_cast %90 : vector<1x128x64xf32> to vector<128x64xf32>
      %92 = arith.truncf %91 : vector<128x64xf32> to vector<128x64xbf16>
      %c0_60 = arith.constant 0 : index
      %c0_61 = arith.constant 0 : index
      %c128_62 = arith.constant 128 : index
      %93 = vector.load %arg6[%c0_60, %c0_61, %c128_62] : memref<1x128x256xf32, #tpu.memory_space<vmem>>, vector<1x128x64xf32>
      %94 = vector.shape_cast %93 : vector<1x128x64xf32> to vector<128x64xf32>
      %95 = arith.truncf %94 : vector<128x64xf32> to vector<128x64xbf16>
      %cst_63 = arith.constant dense<0.000000e+00> : vector<128x128xf32>
      %96 = tpu.matmul %89, %92, %cst_63 {dimension_numbers = #tpu.dot_dimension_numbers<[1], [1], [0], [0], [0, 0, 1, 0], [], []>} : vector<128x64xbf16>, vector<128x64xbf16>, vector<128x128xf32> -> vector<128x128xf32>
      %c2 = arith.constant 2 : index
      %c0_64 = arith.constant 0 : index
      %c0_65 = arith.constant 0 : index
      %97 = vector.load %arg9[%c2, %c0_64, %c0_65] : memref<4x128x1xf32, #tpu.memory_space<vmem>>, vector<1x128x1xf32>
      %98 = vector.shape_cast %97 : vector<1x128x1xf32> to vector<128x1xf32>
      %cst_66 = arith.constant dense<0xFF800000> : vector<128xf32>
      %99 = vector.multi_reduction <maximumf>, %96, %cst_66 [1] : vector<128x128xf32> to vector<128xf32>
      %100 = vector.shape_cast %99 : vector<128xf32> to vector<128x1xf32>
      %101 = arith.maximumf %98, %100 : vector<128x1xf32>
      %102 = arith.subf %98, %101 : vector<128x1xf32>
      %103 = math.exp %102 : vector<128x1xf32>
      %104 = vector.broadcast %101 : vector<128x1xf32> to vector<128x128xf32>
      %105 = arith.subf %96, %104 : vector<128x128xf32>
      %106 = math.exp %105 : vector<128x128xf32>
      %c2_67 = arith.constant 2 : index
      %c0_68 = arith.constant 0 : index
      %c0_69 = arith.constant 0 : index
      %107 = vector.load %arg10[%c2_67, %c0_68, %c0_69] : memref<4x128x1xf32, #tpu.memory_space<vmem>>, vector<1x128x1xf32>
      %108 = vector.shape_cast %107 : vector<1x128x1xf32> to vector<128x1xf32>
      %109 = arith.mulf %103, %108 : vector<128x1xf32>
      %cst_70 = arith.constant dense<0.000000e+00> : vector<128xf32>
      %110 = vector.multi_reduction <add>, %106, %cst_70 [1] : vector<128x128xf32> to vector<128xf32>
      %111 = vector.shape_cast %110 : vector<128xf32> to vector<128x1xf32>
      %112 = arith.addf %109, %111 : vector<128x1xf32>
      %c2_71 = arith.constant 2 : index
      %c0_72 = arith.constant 0 : index
      %c0_73 = arith.constant 0 : index
      %113 = vector.load %arg10[%c2_71, %c0_72, %c0_73] : memref<4x128x1xf32, #tpu.memory_space<vmem>>, vector<1x128x1xf32>
      %114 = vector.shape_cast %113 : vector<1x128x1xf32> to vector<128x1xf32>
      %115 = vector.shape_cast %112 : vector<128x1xf32> to vector<1x128x1xf32>
      tpu.vector_store %arg10[%c2_71, %c0_72, %c0_73], %115 {strides = array<i32>} : memref<4x128x1xf32, #tpu.memory_space<vmem>>, vector<1x128x1xf32>,
      %c0_74 = arith.constant 0 : index
      %c128_75 = arith.constant 128 : index
      %116 = vector.load %arg11[%c0_74, %c128_75] : memref<128x256xf32, #tpu.memory_space<vmem>>, vector<128x64xf32>
      %117 = vector.broadcast %103 : vector<128x1xf32> to vector<128x64xf32>
      %118 = arith.mulf %117, %116 : vector<128x64xf32>
      %119 = arith.truncf %106 : vector<128x128xf32> to vector<128x128xbf16>
      %cst_76 = arith.constant dense<0.000000e+00> : vector<128x64xf32>
      %120 = tpu.matmul %119, %95, %cst_76 {dimension_numbers = #tpu.dot_dimension_numbers<[1], [0], [0], [1], [0, 0, 1, 1], [], []>} : vector<128x128xbf16>, vector<128x64xbf16>, vector<128x64xf32> -> vector<128x64xf32>
      %121 = arith.addf %118, %120 : vector<128x64xf32>
      %c0_77 = arith.constant 0 : index
      %c128_78 = arith.constant 128 : index
      %122 = vector.load %arg11[%c0_77, %c128_78] : memref<128x256xf32, #tpu.memory_space<vmem>>, vector<128x64xf32>
      tpu.vector_store %arg11[%c0_77, %c128_78], %121 {strides = array<i32>} : memref<128x256xf32, #tpu.memory_space<vmem>>, vector<128x64xf32>,
      %c2_79 = arith.constant 2 : index
      %c0_80 = arith.constant 0 : index
      %c0_81 = arith.constant 0 : index
      %123 = vector.load %arg9[%c2_79, %c0_80, %c0_81] : memref<4x128x1xf32, #tpu.memory_space<vmem>>, vector<1x128x1xf32>
      %124 = vector.shape_cast %123 : vector<1x128x1xf32> to vector<128x1xf32>
      %125 = vector.shape_cast %101 : vector<128x1xf32> to vector<1x128x1xf32>
      tpu.vector_store %arg9[%c2_79, %c0_80, %c0_81], %125 {strides = array<i32>} : memref<4x128x1xf32, #tpu.memory_space<vmem>>, vector<1x128x1xf32>,
      %c0_82 = arith.constant 0 : index
      %c192 = arith.constant 192 : index
      %126 = vector.load %arg8[%c0_82, %c192] : memref<128x256xbf16, #tpu.memory_space<vmem>>, vector<128x64xbf16>
      %c0_83 = arith.constant 0 : index
      %c0_84 = arith.constant 0 : index
      %c192_85 = arith.constant 192 : index
      %127 = vector.load %arg5[%c0_83, %c0_84, %c192_85] : memref<1x128x256xf32, #tpu.memory_space<vmem>>, vector<1x128x64xf32>
      %128 = vector.shape_cast %127 : vector<1x128x64xf32> to vector<128x64xf32>
      %129 = arith.truncf %128 : vector<128x64xf32> to vector<128x64xbf16>
      %c0_86 = arith.constant 0 : index
      %c0_87 = arith.constant 0 : index
      %c192_88 = arith.constant 192 : index
      %130 = vector.load %arg6[%c0_86, %c0_87, %c192_88] : memref<1x128x256xf32, #tpu.memory_space<vmem>>, vector<1x128x64xf32>
      %131 = vector.shape_cast %130 : vector<1x128x64xf32> to vector<128x64xf32>
      %132 = arith.truncf %131 : vector<128x64xf32> to vector<128x64xbf16>
      %cst_89 = arith.constant dense<0.000000e+00> : vector<128x128xf32>
      %133 = tpu.matmul %126, %129, %cst_89 {dimension_numbers = #tpu.dot_dimension_numbers<[1], [1], [0], [0], [0, 0, 1, 0], [], []>} : vector<128x64xbf16>, vector<128x64xbf16>, vector<128x128xf32> -> vector<128x128xf32>
      %c3 = arith.constant 3 : index
      %c0_90 = arith.constant 0 : index
      %c0_91 = arith.constant 0 : index
      %134 = vector.load %arg9[%c3, %c0_90, %c0_91] : memref<4x128x1xf32, #tpu.memory_space<vmem>>, vector<1x128x1xf32>
      %135 = vector.shape_cast %134 : vector<1x128x1xf32> to vector<128x1xf32>
      %cst_92 = arith.constant dense<0xFF800000> : vector<128xf32>
      %136 = vector.multi_reduction <maximumf>, %133, %cst_92 [1] : vector<128x128xf32> to vector<128xf32>
      %137 = vector.shape_cast %136 : vector<128xf32> to vector<128x1xf32>
      %138 = arith.maximumf %135, %137 : vector<128x1xf32>
      %139 = arith.subf %135, %138 : vector<128x1xf32>
      %140 = math.exp %139 : vector<128x1xf32>
      %141 = vector.broadcast %138 : vector<128x1xf32> to vector<128x128xf32>
      %142 = arith.subf %133, %141 : vector<128x128xf32>
      %143 = math.exp %142 : vector<128x128xf32>
      %c3_93 = arith.constant 3 : index
      %c0_94 = arith.constant 0 : index
      %c0_95 = arith.constant 0 : index
      %144 = vector.load %arg10[%c3_93, %c0_94, %c0_95] : memref<4x128x1xf32, #tpu.memory_space<vmem>>, vector<1x128x1xf32>
      %145 = vector.shape_cast %144 : vector<1x128x1xf32> to vector<128x1xf32>
      %146 = arith.mulf %140, %145 : vector<128x1xf32>
      %cst_96 = arith.constant dense<0.000000e+00> : vector<128xf32>
      %147 = vector.multi_reduction <add>, %143, %cst_96 [1] : vector<128x128xf32> to vector<128xf32>
      %148 = vector.shape_cast %147 : vector<128xf32> to vector<128x1xf32>
      %149 = arith.addf %146, %148 : vector<128x1xf32>
      %c3_97 = arith.constant 3 : index
      %c0_98 = arith.constant 0 : index
      %c0_99 = arith.constant 0 : index
      %150 = vector.load %arg10[%c3_97, %c0_98, %c0_99] : memref<4x128x1xf32, #tpu.memory_space<vmem>>, vector<1x128x1xf32>
      %151 = vector.shape_cast %150 : vector<1x128x1xf32> to vector<128x1xf32>
      %152 = vector.shape_cast %149 : vector<128x1xf32> to vector<1x128x1xf32>
      tpu.vector_store %arg10[%c3_97, %c0_98, %c0_99], %152 {strides = array<i32>} : memref<4x128x1xf32, #tpu.memory_space<vmem>>, vector<1x128x1xf32>,
      %c0_100 = arith.constant 0 : index
      %c192_101 = arith.constant 192 : index
      %153 = vector.load %arg11[%c0_100, %c192_101] : memref<128x256xf32, #tpu.memory_space<vmem>>, vector<128x64xf32>
      %154 = vector.broadcast %140 : vector<128x1xf32> to vector<128x64xf32>
      %155 = arith.mulf %154, %153 : vector<128x64xf32>
      %156 = arith.truncf %143 : vector<128x128xf32> to vector<128x128xbf16>
      %cst_102 = arith.constant dense<0.000000e+00> : vector<128x64xf32>
      %157 = tpu.matmul %156, %132, %cst_102 {dimension_numbers = #tpu.dot_dimension_numbers<[1], [0], [0], [1], [0, 0, 1, 1], [], []>} : vector<128x128xbf16>, vector<128x64xbf16>, vector<128x64xf32> -> vector<128x64xf32>
      %158 = arith.addf %155, %157 : vector<128x64xf32>
      %c0_103 = arith.constant 0 : index
      %c192_104 = arith.constant 192 : index
      %159 = vector.load %arg11[%c0_103, %c192_104] : memref<128x256xf32, #tpu.memory_space<vmem>>, vector<128x64xf32>
      tpu.vector_store %arg11[%c0_103, %c192_104], %158 {strides = array<i32>} : memref<128x256xf32, #tpu.memory_space<vmem>>, vector<128x64xf32>,
      %c3_105 = arith.constant 3 : index
      %c0_106 = arith.constant 0 : index
      %c0_107 = arith.constant 0 : index
      %160 = vector.load %arg9[%c3_105, %c0_106, %c0_107] : memref<4x128x1xf32, #tpu.memory_space<vmem>>, vector<1x128x1xf32>
      %161 = vector.shape_cast %160 : vector<1x128x1xf32> to vector<128x1xf32>
      %162 = vector.shape_cast %138 : vector<128x1xf32> to vector<1x128x1xf32>
      tpu.vector_store %arg9[%c3_105, %c0_106, %c0_107], %162 {strides = array<i32>} : memref<4x128x1xf32, #tpu.memory_space<vmem>>, vector<1x128x1xf32>,
    } else {
    }
    %13 = arith.extui %4 : i1 to i32
    %c0_i32_3 = arith.constant 0 : i32
    %14 = arith.cmpi ne, %13, %c0_i32_3 : i32
    scf.if %14 {
      %c0 = arith.constant 0 : index
      %c0_4 = arith.constant 0 : index
      %c0_5 = arith.constant 0 : index
      %15 = vector.load %arg10[%c0, %c0_4, %c0_5] : memref<4x128x1xf32, #tpu.memory_space<vmem>>, vector<1x128x1xf32>
      %16 = vector.shape_cast %15 : vector<1x128x1xf32> to vector<128x1xf32>
      %17 = tpu.reciprocal %16 {approx = true} : vector<128x1xf32> -> vector<128x1xf32>
      %c0_6 = arith.constant 0 : index
      %c0_7 = arith.constant 0 : index
      %18 = vector.load %arg11[%c0_6, %c0_7] : memref<128x256xf32, #tpu.memory_space<vmem>>, vector<128x64xf32>
      %19 = vector.broadcast %17 : vector<128x1xf32> to vector<128x64xf32>
      %20 = arith.mulf %18, %19 : vector<128x64xf32>
      %c1 = arith.constant 1 : index
      %c0_8 = arith.constant 0 : index
      %c0_9 = arith.constant 0 : index
      %21 = vector.load %arg10[%c1, %c0_8, %c0_9] : memref<4x128x1xf32, #tpu.memory_space<vmem>>, vector<1x128x1xf32>
      %22 = vector.shape_cast %21 : vector<1x128x1xf32> to vector<128x1xf32>
      %23 = tpu.reciprocal %22 {approx = true} : vector<128x1xf32> -> vector<128x1xf32>
      %c0_10 = arith.constant 0 : index
      %c64 = arith.constant 64 : index
      %24 = vector.load %arg11[%c0_10, %c64] : memref<128x256xf32, #tpu.memory_space<vmem>>, vector<128x64xf32>
      %25 = vector.broadcast %23 : vector<128x1xf32> to vector<128x64xf32>
      %26 = arith.mulf %24, %25 : vector<128x64xf32>
      %c2 = arith.constant 2 : index
      %c0_11 = arith.constant 0 : index
      %c0_12 = arith.constant 0 : index
      %27 = vector.load %arg10[%c2, %c0_11, %c0_12] : memref<4x128x1xf32, #tpu.memory_space<vmem>>, vector<1x128x1xf32>
      %28 = vector.shape_cast %27 : vector<1x128x1xf32> to vector<128x1xf32>
      %29 = tpu.reciprocal %28 {approx = true} : vector<128x1xf32> -> vector<128x1xf32>
      %c0_13 = arith.constant 0 : index
      %c128 = arith.constant 128 : index
      %30 = vector.load %arg11[%c0_13, %c128] : memref<128x256xf32, #tpu.memory_space<vmem>>, vector<128x64xf32>
      %31 = vector.broadcast %29 : vector<128x1xf32> to vector<128x64xf32>
      %32 = arith.mulf %30, %31 : vector<128x64xf32>
      %c3 = arith.constant 3 : index
      %c0_14 = arith.constant 0 : index
      %c0_15 = arith.constant 0 : index
      %33 = vector.load %arg10[%c3, %c0_14, %c0_15] : memref<4x128x1xf32, #tpu.memory_space<vmem>>, vector<1x128x1xf32>
      %34 = vector.shape_cast %33 : vector<1x128x1xf32> to vector<128x1xf32>
      %35 = tpu.reciprocal %34 {approx = true} : vector<128x1xf32> -> vector<128x1xf32>
      %c0_16 = arith.constant 0 : index
      %c192 = arith.constant 192 : index
      %36 = vector.load %arg11[%c0_16, %c192] : memref<128x256xf32, #tpu.memory_space<vmem>>, vector<128x64xf32>
      %37 = vector.broadcast %35 : vector<128x1xf32> to vector<128x64xf32>
      %38 = arith.mulf %36, %37 : vector<128x64xf32>
      %39 = tpu.concatenate %20, %26, %32, %38 in 1 : vector<128x64xf32>, vector<128x64xf32>, vector<128x64xf32>, vector<128x64xf32> -> vector<128x256xf32>
      %c0_17 = arith.constant 0 : index
      %c0_18 = arith.constant 0 : index
      %c0_19 = arith.constant 0 : index
      %40 = vector.load %arg7[%c0_17, %c0_18, %c0_19] : memref<1x128x256xf32, #tpu.memory_space<vmem>>, vector<1x128x256xf32>
      %41 = vector.shape_cast %40 : vector<1x128x256xf32> to vector<128x256xf32>
      %42 = vector.shape_cast %39 : vector<128x256xf32> to vector<1x128x256xf32>
      tpu.vector_store %arg7[%c0_17, %c0_18, %c0_19], %42 {strides = array<i32>} : memref<1x128x256xf32, #tpu.memory_space<vmem>>, vector<1x128x256xf32>,
    } else {
    }
    return
  }
  func.func @transform_0(%arg0: i32, %arg1: i32, %arg2: memref<3xi32, #tpu.memory_space<smem>>, %arg3: memref<3xi32, #tpu.memory_space<smem>>) -> (i32, i32, i32) {
    %0 = arith.index_cast %arg1 : i32 to index
    %1 = memref.load %arg2[%0] : memref<3xi32, #tpu.memory_space<smem>>
    %c0_i32 = arith.constant 0 : i32
    %c0_i32_0 = arith.constant 0 : i32
    return %arg0, %1, %c0_i32 : i32, i32, i32
  }
  func.func @transform_1(%arg0: i32, %arg1: i32, %arg2: memref<3xi32, #tpu.memory_space<smem>>, %arg3: memref<3xi32, #tpu.memory_space<smem>>) -> (i32, i32, i32) {
    %0 = arith.index_cast %arg1 : i32 to index
    %1 = memref.load %arg3[%0] : memref<3xi32, #tpu.memory_space<smem>>
    %c0_i32 = arith.constant 0 : i32
    %c0_i32_0 = arith.constant 0 : i32
    return %arg0, %1, %c0_i32 : i32, i32, i32
  }
  func.func @transform_2(%arg0: i32, %arg1: i32, %arg2: memref<3xi32, #tpu.memory_space<smem>>, %arg3: memref<3xi32, #tpu.memory_space<smem>>) -> (i32, i32, i32) {
    %0 = arith.index_cast %arg1 : i32 to index
    %1 = memref.load %arg3[%0] : memref<3xi32, #tpu.memory_space<smem>>
    %c0_i32 = arith.constant 0 : i32
    %c0_i32_0 = arith.constant 0 : i32
    return %arg0, %1, %c0_i32 : i32, i32, i32
  }
  func.func @transform_3(%arg0: i32, %arg1: i32, %arg2: memref<3xi32, #tpu.memory_space<smem>>, %arg3: memref<3xi32, #tpu.memory_space<smem>>) -> (i32, i32, i32) {
    %0 = arith.index_cast %arg1 : i32 to index
    %1 = memref.load %arg2[%0] : memref<3xi32, #tpu.memory_space<smem>>
    %c0_i32 = arith.constant 0 : i32
    %c0_i32_0 = arith.constant 0 : i32
    return %arg0, %1, %c0_i32 : i32, i32, i32
  }
}

</mosaic_0001>

<llo_original>
// kernel: tpu_custom_call.1
$region0: #{tpu_custom_call.1}
  #allocation0 [shape = 'u32[]', space=smem, size = 0x4, offset = 0x4, fixed_abs, tag = 'smem constant byte address 0x4 - core index']
  #allocation1 [shape = 'u32[144,128]{1,0:T(1,128)}', space=vmem, size = 0x12000, scoped, tag = 'internal scratch']
  #allocation2 [shape = 'bf16[128,256]{1,0:T(16,128)(2,1)}', space=vmem, size = 0x10000, scoped, tag = 'scratch operand']
  #allocation3 [shape = 'f32[4,128,1]{2,1,0:T(8,128)}', space=vmem, size = 0x40000, scoped, tag = 'scratch operand']
  #allocation4 [shape = 'f32[4,128,1]{2,1,0:T(8,128)}', space=vmem, size = 0x40000, scoped, tag = 'scratch operand']
  #allocation5 [shape = 'f32[128,256]{1,0:T(8,128)}', space=vmem, size = 0x20000, scoped, tag = 'scratch operand']
  #allocation6 [shape = 's32[1]{0}', space=sflag, size = 0x4, scoped, tag = 'scoped memory for tpu_custom_call.1']
  #allocation7 [shape = 'u8[512]{0}', space=smem, size = 0x200, scoped, tag = 'prefetched SMEM operand 0']
  #allocation8 [shape = 'u8[512]{0}', space=smem, size = 0x200, scoped, tag = 'prefetched SMEM operand 1']
  %s0 = inlined_call_operand.hbm [shape: s32[3], index: 0, kind: input, shape index: {}]
  %s1 = inlined_call_operand.vmem [shape: s32[3], index: 1, kind: input, shape index: {}]
  %s2 = inlined_call_operand.hbm [shape: f32[2,256,256], index: 2, kind: input, shape index: {}]
  %s3 = inlined_call_operand.hbm [shape: f32[2,256,256], index: 3, kind: input, shape index: {}]
  %s4 = inlined_call_operand.hbm [shape: f32[2,256,256], index: 4, kind: input, shape index: {}]
  %s5 = inlined_call_operand.hbm [shape: f32[2,256,256], index: 5, kind: output, shape index: {}]
  %s6 = sld [smem:[#allocation0]]
  $region73: #{tpu_custom_call.1} parent=0
    _
  %s8 = ssub.s32 1, %s6
  %s9 = scalar_select 0, %s8, %s6
  %11 = dma.hbm_to_smem %s0, 16, [#allocation7], [#allocation6]
  %s12 = sshll.u32 %s1, 4
  %s13 = int_to_ptr.vmem [resolvable:$true] %s12
  %15 = dma.vmem_to_smem %s13, 16, [#allocation8], [#allocation6]
  %16 = dma.done [#allocation6], 32
  %17 = sfence
  $region1: #{tpu_custom_call.1} parent=0
    #allocation9 [shape = 'u8[262144]{0}', space=vmem, size = 0x40000, scoped, tag = 'input window, operand 2']
    #allocation10 [shape = 's32[2]{0}', space=sflag, size = 0x8, scoped, tag = 'scoped memory for tpu_custom_call.1']
    #allocation11 [shape = 's32[2]{0}', space=sflag, size = 0x8, scoped, tag = 'scoped memory for tpu_custom_call.1']
    #allocation12 [shape = 'u8[262144]{0}', space=vmem, size = 0x40000, scoped, tag = 'input window, operand 3']
    #allocation13 [shape = 's32[2]{0}', space=sflag, size = 0x8, scoped, tag = 'scoped memory for tpu_custom_call.1']
    #allocation14 [shape = 'u8[262144]{0}', space=vmem, size = 0x40000, scoped, tag = 'input window, operand 4']
    #allocation15 [shape = 'u8[262144]{0}', space=vmem, size = 0x40000, scoped, tag = 'output window, operand 0']
    %18 = vsyncpa [#allocation10], 0
    %s19 = scalar_lea.sflag [#allocation10], 1
    %20 = vsyncpa %s19, 0
    %21 = vsyncpa [#allocation13], 0
    %s22 = scalar_lea.sflag [#allocation13], 1
    %23 = vsyncpa %s22, 0
    %24 = vsyncpa [#allocation11], 0
    %s25 = scalar_lea.sflag [#allocation11], 1
    %26 = vsyncpa %s25, 0
    loop: start=0, step=1, limit=8
    $region2: #{tpu_custom_call.1} parent=1 // loop_pre_header
      _
    $region3: #{tpu_custom_call.1} parent=1 // loop_header
      %s28 = sphi 0, %s32
      %p29 = scmp.ge.s32.totalorder %s28, 8
      %s35 = sphi 0, %s47
      %s36 = sphi 0, %s43
      %s37 = sphi 0, %s35
      %s38 = sphi 0, %s36
      %s39 = sphi 0, %s37
      %s40 = sphi 0, %s38
      %s54 = sphi 0, %s56
      %s57 = sphi 0, %s54
      %s58 = sphi 0, %s57
      %s74 = sphi 0, %s58
      %s84 = sphi 0, %s86
      %s87 = sphi 0, %s84
      %s88 = sphi 0, %s87
      %s104 = sphi 0, %s88
      %s114 = sphi 0, %s116
      %s117 = sphi 0, %s114
      %s118 = sphi 0, %s117
      %s134 = sphi 0, %s118
      %s144 = sphi 0, %s146
      %s147 = sphi 0, %s144
      %s148 = sphi 0, %s147
      %s164 = sphi 0, %s148
    $region4: #{tpu_custom_call.1} parent=1 // loop_header_branch
      %31 = sbr.rel (%p29) target = $region8
    $region5: #{tpu_custom_call.1} parent=1 // loop_body
      %s33 = ssub.s32 %s28, 1
      %s34 = ssub.s32 %s28, 2
      %s41 = sadd.s32 1, %s36
      %p42 = scmp.ge.s32.totalorder %s41, 3
      %s43 = scalar_select %p42, 0, %s41
      %s44 = sadd.s32 1, %s35
      %s45 = scalar_select %p42, %s44, %s35
      %p46 = scmp.ge.s32.totalorder %s45, 2
      %s47 = scalar_select %p46, 0, %s45
      %s48 = sld [smem:[#allocation7 + %s36]]
      %s49 = sld [smem:[#allocation7 + %s43]]
      %s50 = ssub.s32 %s35, %s47
      %s51 = ssub.s32 %s48, %s49
      %s52 = sor.u32 %s50, %s51
      %p53 = scmp.eq.s32.totalorder %s52, 0
      %s55 = sadd.s32 %s54, 1
      %s56 = scalar_select %p53, %s54, %s55
      %p59 = pneg %p53
      %p60 = scmp.eq.s32.totalorder %s28, 5
      %p61 = por %p59, %p60
      %p62 = scmp.ne.s32.totalorder %s54, %s57
      %p63 = scmp.eq.s32.totalorder %s28, 0
      %p64 = por %p62, %p63
      %p65 = scmp.ne.s32.totalorder %s54, %s57
      %p66 = scmp.eq.s32.totalorder %s33, 5
      %p67 = por %p65, %p66
      %p68 = scmp.ne.s32.totalorder %s57, %s58
      %p69 = scmp.eq.s32.totalorder %s33, 0
      %p70 = por %p68, %p69
      %p71 = scmp.ne.s32.totalorder %s57, %s58
      %p72 = scmp.eq.s32.totalorder %s34, 5
      %p73 = por %p71, %p72
      %p75 = scmp.ne.s32.totalorder %s58, %s74
      %p76 = scmp.eq.s32.totalorder %s34, 0
      %p77 = por %p75, %p76
      %s78 = sld [smem:[#allocation8 + %s36]]
      %s79 = sld [smem:[#allocation8 + %s43]]
      %s80 = ssub.s32 %s35, %s47
      %s81 = ssub.s32 %s78, %s79
      %s82 = sor.u32 %s80, %s81
      %p83 = scmp.eq.s32.totalorder %s82, 0
      %s85 = sadd.s32 %s84, 1
      %s86 = scalar_select %p83, %s84, %s85
      %p89 = pneg %p83
      %p90 = scmp.eq.s32.totalorder %s28, 5
      %p91 = por %p89, %p90
      %p92 = scmp.ne.s32.totalorder %s84, %s87
      %p93 = scmp.eq.s32.totalorder %s28, 0
      %p94 = por %p92, %p93
      %p95 = scmp.ne.s32.totalorder %s84, %s87
      %p96 = scmp.eq.s32.totalorder %s33, 5
      %p97 = por %p95, %p96
      %p98 = scmp.ne.s32.totalorder %s87, %s88
      %p99 = scmp.eq.s32.totalorder %s33, 0
      %p100 = por %p98, %p99
      %p101 = scmp.ne.s32.totalorder %s87, %s88
      %p102 = scmp.eq.s32.totalorder %s34, 5
      %p103 = por %p101, %p102
      %p105 = scmp.ne.s32.totalorder %s88, %s104
      %p106 = scmp.eq.s32.totalorder %s34, 0
      %p107 = por %p105, %p106
      %s108 = sld [smem:[#allocation8 + %s36]]
      %s109 = sld [smem:[#allocation8 + %s43]]
      %s110 = ssub.s32 %s35, %s47
      %s111 = ssub.s32 %s108, %s109
      %s112 = sor.u32 %s110, %s111
      %p113 = scmp.eq.s32.totalorder %s112, 0
      %s115 = sadd.s32 %s114, 1
      %s116 = scalar_select %p113, %s114, %s115
      %p119 = pneg %p113
      %p120 = scmp.eq.s32.totalorder %s28, 5
      %p121 = por %p119, %p120
      %p122 = scmp.ne.s32.totalorder %s114, %s117
      %p123 = scmp.eq.s32.totalorder %s28, 0
      %p124 = por %p122, %p123
      %p125 = scmp.ne.s32.totalorder %s114, %s117
      %p126 = scmp.eq.s32.totalorder %s33, 5
      %p127 = por %p125, %p126
      %p128 = scmp.ne.s32.totalorder %s117, %s118
      %p129 = scmp.eq.s32.totalorder %s33, 0
      %p130 = por %p128, %p129
      %p131 = scmp.ne.s32.totalorder %s117, %s118
      %p132 = scmp.eq.s32.totalorder %s34, 5
      %p133 = por %p131, %p132
      %p135 = scmp.ne.s32.totalorder %s118, %s134
      %p136 = scmp.eq.s32.totalorder %s34, 0
      %p137 = por %p135, %p136
      %s138 = sld [smem:[#allocation7 + %s36]]
      %s139 = sld [smem:[#allocation7 + %s43]]
      %s140 = ssub.s32 %s35, %s47
      %s141 = ssub.s32 %s138, %s139
      %s142 = sor.u32 %s140, %s141
      %p143 = scmp.eq.s32.totalorder %s142, 0
      %s145 = sadd.s32 %s144, 1
      %s146 = scalar_select %p143, %s144, %s145
      %p149 = pneg %p143
      %p150 = scmp.eq.s32.totalorder %s28, 5
      %p151 = por %p149, %p150
      %p152 = scmp.ne.s32.totalorder %s144, %s147
      %p153 = scmp.eq.s32.totalorder %s28, 0
      %p154 = por %p152, %p153
      %p155 = scmp.ne.s32.totalorder %s144, %s147
      %p156 = scmp.eq.s32.totalorder %s33, 5
      %p157 = por %p155, %p156
      %p158 = scmp.ne.s32.totalorder %s147, %s148
      %p159 = scmp.eq.s32.totalorder %s33, 0
      %p160 = por %p158, %p159
      %p161 = scmp.ne.s32.totalorder %s147, %s148
      %p162 = scmp.eq.s32.totalorder %s34, 5
      %p163 = por %p161, %p162
      %p165 = scmp.ne.s32.totalorder %s148, %s164
      %p166 = scmp.eq.s32.totalorder %s34, 0
      %p167 = por %p165, %p166
      %p168 = scmp.le.s32.totalorder 1, %s28
      %p169 = scmp.lt.s32.totalorder %s28, 7
      %p170 = pnand %p168, %p169
      %p171 = pneg %p170
      // Predicated region
      $region9: #{tpu_custom_call.1} parent=5 // pred_check
        _
      $region10: #{tpu_custom_call.1} parent=5 // pred_check_branch
        %173 = sbr.rel (%p170) target = $region12
      $region11: #{tpu_custom_call.1} parent=5 // pred_region
        %s174 = ssub.s32 %s28, 1
      $region12: #{tpu_custom_call.1} parent=5 // pred_fallthru
        _
      %p175 = scmp.lt.s32.totalorder %s28, 6
      // Predicated region
      $region13: #{tpu_custom_call.1} parent=5 // pred_check
        %p176 = pneg %p175
      $region14: #{tpu_custom_call.1} parent=5 // pred_check_branch
        %178 = sbr.rel (%p176) target = $region16
      $region15: #{tpu_custom_call.1} parent=5 // pred_region
        // Predicated region
        $region17: #{tpu_custom_call.1} parent=15 // pred_check
          %p179 = pneg %p64
        $region18: #{tpu_custom_call.1} parent=15 // pred_check_branch
          %181 = sbr.rel (%p179) target = $region20
        $region19: #{tpu_custom_call.1} parent=15 // pred_region
          %s182 = sand.u32 %s54, 1
          %s183 = scalar_lea.sflag [#allocation10], %s182
          %s184 = sand.u32 %s54, 1
          %s185 = smul.addr %s184, 256
          %s186 = scalar_lea.vmem [#allocation9], %s185
          %s187 = sld [smem:[#allocation7 + %s36]]
          %s188 = smul.u32 16, %s187
          %s190 = ssub.s32 4096, 4096
          %191 = vsyncadd %s183, %s190
          %s192 = smul.addr %s188, 2
          %s193 = smul.addr %s35, 64
          %s194 = sadd.s32 %s192, %s193
          %s195 = smul.addr %s194, 128
          %s196 = scalar_lea.hbm %s2, %s195
          %s197 = sshll.u32 %s186, 4
          %s198 = int_to_ptr.vmem [resolvable:$true] %s197
          %203 = dma.hbm_to_vmem [thread:$0]  %s196, 4096, %s198, %s183, 256, 256, 16
        $region20: #{tpu_custom_call.1} parent=15 // pred_fallthru
          _
        // Predicated region
        $region21: #{tpu_custom_call.1} parent=15 // pred_check
          %p204 = pneg %p94
        $region22: #{tpu_custom_call.1} parent=15 // pred_check_branch
          %206 = sbr.rel (%p204) target = $region24
        $region23: #{tpu_custom_call.1} parent=15 // pred_region
          %s207 = sand.u32 %s28, 1
          %s208 = scalar_lea.sflag [#allocation13], %s207
          %s209 = sand.u32 %s84, 1
          %s210 = smul.addr %s209, 256
          %s211 = scalar_lea.vmem [#allocation12], %s210
          %s212 = sld [smem:[#allocation8 + %s36]]
          %s213 = smul.u32 16, %s212
          %s215 = ssub.s32 4096, 4096
          %216 = vsyncadd %s208, %s215
          %s217 = smul.addr %s213, 2
          %s218 = smul.addr %s35, 64
          %s219 = sadd.s32 %s217, %s218
          %s220 = smul.addr %s219, 128
          %s221 = scalar_lea.hbm %s3, %s220
          %s222 = sshll.u32 %s211, 4
          %s223 = int_to_ptr.vmem [resolvable:$true] %s222
          %228 = dma.hbm_to_vmem [thread:$0]  %s221, 4096, %s223, %s208, 256, 256, 16
        $region24: #{tpu_custom_call.1} parent=15 // pred_fallthru
          _
        // Predicated region
        $region25: #{tpu_custom_call.1} parent=15 // pred_check
          %p229 = pneg %p124
        $region26: #{tpu_custom_call.1} parent=15 // pred_check_branch
          %231 = sbr.rel (%p229) target = $region28
        $region27: #{tpu_custom_call.1} parent=15 // pred_region
          %s232 = sand.u32 %s28, 1
          %s233 = scalar_lea.sflag [#allocation13], %s232
          %s234 = sand.u32 %s114, 1
          %s235 = smul.addr %s234, 256
          %s236 = scalar_lea.vmem [#allocation14], %s235
          %s237 = sld [smem:[#allocation8 + %s36]]
          %s238 = smul.u32 16, %s237
          %s240 = ssub.s32 4096, 4096
          %241 = vsyncadd %s233, %s240
          %s242 = smul.addr %s238, 2
          %s243 = smul.addr %s35, 64
          %s244 = sadd.s32 %s242, %s243
          %s245 = smul.addr %s244, 128
          %s246 = scalar_lea.hbm %s4, %s245
          %s247 = sshll.u32 %s236, 4
          %s248 = int_to_ptr.vmem [resolvable:$true] %s247
          %253 = dma.hbm_to_vmem [thread:$0]  %s246, 4096, %s248, %s233, 256, 256, 16
        $region28: #{tpu_custom_call.1} parent=15 // pred_fallthru
          _
      $region16: #{tpu_custom_call.1} parent=5 // pred_fallthru
        _
      %p254 = scmp.le.s32.totalorder 1, %s28
      %p255 = scmp.lt.s32.totalorder %s28, 7
      %p256 = pnand %p254, %p255
      %p257 = pneg %p256
      // Predicated region
      $region29: #{tpu_custom_call.1} parent=5 // pred_check
        _
      $region30: #{tpu_custom_call.1} parent=5 // pred_check_branch
        %259 = sbr.rel (%p256) target = $region32
      $region31: #{tpu_custom_call.1} parent=5 // pred_region
        %s260 = ssub.s32 %s28, 1
        %s261 = sand.u32 %s57, 1
        %s262 = scalar_lea.sflag [#allocation10], %s261
        %s263 = sand.u32 %s57, 1
        %s264 = smul.addr %s263, 256
        %s265 = scalar_lea.vmem [#allocation9], %s264
        // Predicated region
        $region33: #{tpu_custom_call.1} parent=31 // pred_check
          %p266 = pneg %p70
        $region34: #{tpu_custom_call.1} parent=31 // pred_check_branch
          %268 = sbr.rel (%p266) target = $region36
        $region35: #{tpu_custom_call.1} parent=31 // pred_region
          %269 = dma.done %s262, 4096
        $region36: #{tpu_custom_call.1} parent=31 // pred_fallthru
          _
        %s270 = sand.u32 %s33, 1
        %s271 = scalar_lea.sflag [#allocation13], %s270
        %s272 = sand.u32 %s87, 1
        %s273 = smul.addr %s272, 256
        %s274 = scalar_lea.vmem [#allocation12], %s273
        // Predicated region
        $region37: #{tpu_custom_call.1} parent=31 // pred_check
          %p275 = pneg %p100
        $region38: #{tpu_custom_call.1} parent=31 // pred_check_branch
          %277 = sbr.rel (%p275) target = $region40
        $region39: #{tpu_custom_call.1} parent=31 // pred_region
          %278 = dma.done %s271, 4096
        $region40: #{tpu_custom_call.1} parent=31 // pred_fallthru
          _
        %s279 = sand.u32 %s33, 1
        %s280 = scalar_lea.sflag [#allocation13], %s279
        %s281 = sand.u32 %s117, 1
        %s282 = smul.addr %s281, 256
        %s283 = scalar_lea.vmem [#allocation14], %s282
        // Predicated region
        $region41: #{tpu_custom_call.1} parent=31 // pred_check
          %p284 = pneg %p130
        $region42: #{tpu_custom_call.1} parent=31 // pred_check_branch
          %286 = sbr.rel (%p284) target = $region44
        $region43: #{tpu_custom_call.1} parent=31 // pred_region
          %287 = dma.done %s280, 4096
        $region44: #{tpu_custom_call.1} parent=31 // pred_fallthru
          _
        %s288 = sand.u32 %s57, 1
        %s289 = scalar_lea.sflag [#allocation10], %s288
        %s290 = sand.u32 %s57, 1
        %s291 = smul.addr %s290, 256
        %s292 = scalar_lea.vmem [#allocation9], %s291
        %p293 = pneg %p70
        %p294 = pneg %p67
        %s295 = sand.u32 %s33, 1
        %s296 = scalar_lea.sflag [#allocation13], %s295
        %s297 = sand.u32 %s87, 1
        %s298 = smul.addr %s297, 256
        %s299 = scalar_lea.vmem [#allocation12], %s298
        %p300 = pneg %p100
        %p301 = pneg %p97
        %s302 = sand.u32 %s33, 1
        %s303 = scalar_lea.sflag [#allocation13], %s302
        %s304 = sand.u32 %s117, 1
        %s305 = smul.addr %s304, 256
        %s306 = scalar_lea.vmem [#allocation14], %s305
        %p307 = pneg %p130
        %p308 = pneg %p127
        %p309 = pneg %p160
        %p310 = pneg %p157
        %s311 = sand.u32 %s147, 1
        %s312 = scalar_lea.sflag [#allocation11], %s311
        %s313 = sand.u32 %s147, 1
        %s314 = smul.addr %s313, 256
        %s315 = scalar_lea.vmem [#allocation15], %s314
        %s316 = sld [smem:[#allocation7 + %s38]]
        %s317 = smul.u32 16, %s316
        %s318 = sld [smem:[#allocation8 + %s38]]
        %s319 = smul.u32 16, %s318
        %s320 = sld [smem:[#allocation8 + %s38]]
        %s321 = smul.u32 16, %s320
        %s322 = sld [smem:[#allocation7 + %s38]]
        %s323 = smul.u32 16, %s322
        %s325 = sld [smem:[#allocation7 + %s38]]
        %s326 = sld [smem:[#allocation8 + %s38]]
        %p327 = scmp.eq.s32.totalorder %s326, %s325
        %p328 = scmp.eq.s32.totalorder %s326, 0
        // Predicated region
        $region45: #{tpu_custom_call.1} parent=31 // pred_check
          %p329 = pneg %p328
        $region46: #{tpu_custom_call.1} parent=31 // pred_check_branch
          %331 = sbr.rel (%p329) target = $region48
        $region47: #{tpu_custom_call.1} parent=31 // pred_region
          %vm332 = vcmask 7168
          %333 = vst.msk [vmem:[#allocation3] sm:$0xff] %vm332, -1e+30
          %334 = vst.msk [vmem:[#allocation3 + $0x8] sm:$0xff] %vm332, -1e+30
          %335 = vst.msk [vmem:[#allocation3 + $0x10] sm:$0xff] %vm332, -1e+30
          %336 = vst.msk [vmem:[#allocation3 + $0x18] sm:$0xff] %vm332, -1e+30
          %337 = vst.msk [vmem:[#allocation3 + $0x20] sm:$0xff] %vm332, -1e+30
          %338 = vst.msk [vmem:[#allocation3 + $0x28] sm:$0xff] %vm332, -1e+30
          %339 = vst.msk [vmem:[#allocation3 + $0x30] sm:$0xff] %vm332, -1e+30
          %340 = vst.msk [vmem:[#allocation3 + $0x38] sm:$0xff] %vm332, -1e+30
          %341 = vst.msk [vmem:[#allocation3 + $0x40] sm:$0xff] %vm332, -1e+30
          %342 = vst.msk [vmem:[#allocation3 + $0x48] sm:$0xff] %vm332, -1e+30
          %343 = vst.msk [vmem:[#allocation3 + $0x50] sm:$0xff] %vm332, -1e+30
          %344 = vst.msk [vmem:[#allocation3 + $0x58] sm:$0xff] %vm332, -1e+30
          %345 = vst.msk [vmem:[#allocation3 + $0x60] sm:$0xff] %vm332, -1e+30
          %346 = vst.msk [vmem:[#allocation3 + $0x68] sm:$0xff] %vm332, -1e+30
          %347 = vst.msk [vmem:[#allocation3 + $0x70] sm:$0xff] %vm332, -1e+30
          %348 = vst.msk [vmem:[#allocation3 + $0x78] sm:$0xff] %vm332, -1e+30
          %349 = vst.msk [vmem:[#allocation3 + $0x80] sm:$0xff] %vm332, -1e+30
          %350 = vst.msk [vmem:[#allocation3 + $0x88] sm:$0xff] %vm332, -1e+30
          %351 = vst.msk [vmem:[#allocation3 + $0x90] sm:$0xff] %vm332, -1e+30
          %352 = vst.msk [vmem:[#allocation3 + $0x98] sm:$0xff] %vm332, -1e+30
          %353 = vst.msk [vmem:[#allocation3 + $0xa0] sm:$0xff] %vm332, -1e+30
          %354 = vst.msk [vmem:[#allocation3 + $0xa8] sm:$0xff] %vm332, -1e+30
          %355 = vst.msk [vmem:[#allocation3 + $0xb0] sm:$0xff] %vm332, -1e+30
          %356 = vst.msk [vmem:[#allocation3 + $0xb8] sm:$0xff] %vm332, -1e+30
          %357 = vst.msk [vmem:[#allocation3 + $0xc0] sm:$0xff] %vm332, -1e+30
          %358 = vst.msk [vmem:[#allocation3 + $0xc8] sm:$0xff] %vm332, -1e+30
          %359 = vst.msk [vmem:[#allocation3 + $0xd0] sm:$0xff] %vm332, -1e+30
          %360 = vst.msk [vmem:[#allocation3 + $0xd8] sm:$0xff] %vm332, -1e+30
          %361 = vst.msk [vmem:[#allocation3 + $0xe0] sm:$0xff] %vm332, -1e+30
          %362 = vst.msk [vmem:[#allocation3 + $0xe8] sm:$0xff] %vm332, -1e+30
          %363 = vst.msk [vmem:[#allocation3 + $0xf0] sm:$0xff] %vm332, -1e+30
          %364 = vst.msk [vmem:[#allocation3 + $0xf8] sm:$0xff] %vm332, -1e+30
          %365 = vst.msk [vmem:[#allocation3 + $0x100] sm:$0xff] %vm332, -1e+30
          %366 = vst.msk [vmem:[#allocation3 + $0x108] sm:$0xff] %vm332, -1e+30
          %367 = vst.msk [vmem:[#allocation3 + $0x110] sm:$0xff] %vm332, -1e+30
          %368 = vst.msk [vmem:[#allocation3 + $0x118] sm:$0xff] %vm332, -1e+30
          %369 = vst.msk [vmem:[#allocation3 + $0x120] sm:$0xff] %vm332, -1e+30
          %370 = vst.msk [vmem:[#allocation3 + $0x128] sm:$0xff] %vm332, -1e+30
          %371 = vst.msk [vmem:[#allocation3 + $0x130] sm:$0xff] %vm332, -1e+30
          %372 = vst.msk [vmem:[#allocation3 + $0x138] sm:$0xff] %vm332, -1e+30
          %373 = vst.msk [vmem:[#allocation3 + $0x140] sm:$0xff] %vm332, -1e+30
          %374 = vst.msk [vmem:[#allocation3 + $0x148] sm:$0xff] %vm332, -1e+30
          %375 = vst.msk [vmem:[#allocation3 + $0x150] sm:$0xff] %vm332, -1e+30
          %376 = vst.msk [vmem:[#allocation3 + $0x158] sm:$0xff] %vm332, -1e+30
          %377 = vst.msk [vmem:[#allocation3 + $0x160] sm:$0xff] %vm332, -1e+30
          %378 = vst.msk [vmem:[#allocation3 + $0x168] sm:$0xff] %vm332, -1e+30
          %379 = vst.msk [vmem:[#allocation3 + $0x170] sm:$0xff] %vm332, -1e+30
          %380 = vst.msk [vmem:[#allocation3 + $0x178] sm:$0xff] %vm332, -1e+30
          %381 = vst.msk [vmem:[#allocation3 + $0x180] sm:$0xff] %vm332, -1e+30
          %382 = vst.msk [vmem:[#allocation3 + $0x188] sm:$0xff] %vm332, -1e+30
          %383 = vst.msk [vmem:[#allocation3 + $0x190] sm:$0xff] %vm332, -1e+30
          %384 = vst.msk [vmem:[#allocation3 + $0x198] sm:$0xff] %vm332, -1e+30
          %385 = vst.msk [vmem:[#allocation3 + $0x1a0] sm:$0xff] %vm332, -1e+30
          %386 = vst.msk [vmem:[#allocation3 + $0x1a8] sm:$0xff] %vm332, -1e+30
          %387 = vst.msk [vmem:[#allocation3 + $0x1b0] sm:$0xff] %vm332, -1e+30
          %388 = vst.msk [vmem:[#allocation3 + $0x1b8] sm:$0xff] %vm332, -1e+30
          %389 = vst.msk [vmem:[#allocation3 + $0x1c0] sm:$0xff] %vm332, -1e+30
          %390 = vst.msk [vmem:[#allocation3 + $0x1c8] sm:$0xff] %vm332, -1e+30
          %391 = vst.msk [vmem:[#allocation3 + $0x1d0] sm:$0xff] %vm332, -1e+30
          %392 = vst.msk [vmem:[#allocation3 + $0x1d8] sm:$0xff] %vm332, -1e+30
          %393 = vst.msk [vmem:[#allocation3 + $0x1e0] sm:$0xff] %vm332, -1e+30
          %394 = vst.msk [vmem:[#allocation3 + $0x1e8] sm:$0xff] %vm332, -1e+30
          %395 = vst.msk [vmem:[#allocation3 + $0x1f0] sm:$0xff] %vm332, -1e+30
          %396 = vst.msk [vmem:[#allocation3 + $0x1f8] sm:$0xff] %vm332, -1e+30
          %397 = vst.msk [vmem:[#allocation4] sm:$0xff] %vm332, 0.0
          %398 = vst.msk [vmem:[#allocation4 + $0x8] sm:$0xff] %vm332, 0.0
          %399 = vst.msk [vmem:[#allocation4 + $0x10] sm:$0xff] %vm332, 0.0
          %400 = vst.msk [vmem:[#allocation4 + $0x18] sm:$0xff] %vm332, 0.0
          %401 = vst.msk [vmem:[#allocation4 + $0x20] sm:$0xff] %vm332, 0.0
          %402 = vst.msk [vmem:[#allocation4 + $0x28] sm:$0xff] %vm332, 0.0
          %403 = vst.msk [vmem:[#allocation4 + $0x30] sm:$0xff] %vm332, 0.0
          %404 = vst.msk [vmem:[#allocation4 + $0x38] sm:$0xff] %vm332, 0.0
          %405 = vst.msk [vmem:[#allocation4 + $0x40] sm:$0xff] %vm332, 0.0
          %406 = vst.msk [vmem:[#allocation4 + $0x48] sm:$0xff] %vm332, 0.0
          %407 = vst.msk [vmem:[#allocation4 + $0x50] sm:$0xff] %vm332, 0.0
          %408 = vst.msk [vmem:[#allocation4 + $0x58] sm:$0xff] %vm332, 0.0
          %409 = vst.msk [vmem:[#allocation4 + $0x60] sm:$0xff] %vm332, 0.0
          %410 = vst.msk [vmem:[#allocation4 + $0x68] sm:$0xff] %vm332, 0.0
          %411 = vst.msk [vmem:[#allocation4 + $0x70] sm:$0xff] %vm332, 0.0
          %412 = vst.msk [vmem:[#allocation4 + $0x78] sm:$0xff] %vm332, 0.0
          %413 = vst.msk [vmem:[#allocation4 + $0x80] sm:$0xff] %vm332, 0.0
          %414 = vst.msk [vmem:[#allocation4 + $0x88] sm:$0xff] %vm332, 0.0
          %415 = vst.msk [vmem:[#allocation4 + $0x90] sm:$0xff] %vm332, 0.0
          %416 = vst.msk [vmem:[#allocation4 + $0x98] sm:$0xff] %vm332, 0.0
          %417 = vst.msk [vmem:[#allocation4 + $0xa0] sm:$0xff] %vm332, 0.0
          %418 = vst.msk [vmem:[#allocation4 + $0xa8] sm:$0xff] %vm332, 0.0
          %419 = vst.msk [vmem:[#allocation4 + $0xb0] sm:$0xff] %vm332, 0.0
          %420 = vst.msk [vmem:[#allocation4 + $0xb8] sm:$0xff] %vm332, 0.0
          %421 = vst.msk [vmem:[#allocation4 + $0xc0] sm:$0xff] %vm332, 0.0
          %422 = vst.msk [vmem:[#allocation4 + $0xc8] sm:$0xff] %vm332, 0.0
          %423 = vst.msk [vmem:[#allocation4 + $0xd0] sm:$0xff] %vm332, 0.0
          %424 = vst.msk [vmem:[#allocation4 + $0xd8] sm:$0xff] %vm332, 0.0
          %425 = vst.msk [vmem:[#allocation4 + $0xe0] sm:$0xff] %vm332, 0.0
          %426 = vst.msk [vmem:[#allocation4 + $0xe8] sm:$0xff] %vm332, 0.0
          %427 = vst.msk [vmem:[#allocation4 + $0xf0] sm:$0xff] %vm332, 0.0
          %428 = vst.msk [vmem:[#allocation4 + $0xf8] sm:$0xff] %vm332, 0.0
          %429 = vst.msk [vmem:[#allocation4 + $0x100] sm:$0xff] %vm332, 0.0
          %430 = vst.msk [vmem:[#allocation4 + $0x108] sm:$0xff] %vm332, 0.0
          %431 = vst.msk [vmem:[#allocation4 + $0x110] sm:$0xff] %vm332, 0.0
          %432 = vst.msk [vmem:[#allocation4 + $0x118] sm:$0xff] %vm332, 0.0
          %433 = vst.msk [vmem:[#allocation4 + $0x120] sm:$0xff] %vm332, 0.0
          %434 = vst.msk [vmem:[#allocation4 + $0x128] sm:$0xff] %vm332, 0.0
          %435 = vst.msk [vmem:[#allocation4 + $0x130] sm:$0xff] %vm332, 0.0
          %436 = vst.msk [vmem:[#allocation4 + $0x138] sm:$0xff] %vm332, 0.0
          %437 = vst.msk [vmem:[#allocation4 + $0x140] sm:$0xff] %vm332, 0.0
          %438 = vst.msk [vmem:[#allocation4 + $0x148] sm:$0xff] %vm332, 0.0
          %439 = vst.msk [vmem:[#allocation4 + $0x150] sm:$0xff] %vm332, 0.0
          %440 = vst.msk [vmem:[#allocation4 + $0x158] sm:$0xff] %vm332, 0.0
          %441 = vst.msk [vmem:[#allocation4 + $0x160] sm:$0xff] %vm332, 0.0
          %442 = vst.msk [vmem:[#allocation4 + $0x168] sm:$0xff] %vm332, 0.0
          %443 = vst.msk [vmem:[#allocation4 + $0x170] sm:$0xff] %vm332, 0.0
          %444 = vst.msk [vmem:[#allocation4 + $0x178] sm:$0xff] %vm332, 0.0
          %445 = vst.msk [vmem:[#allocation4 + $0x180] sm:$0xff] %vm332, 0.0
          %446 = vst.msk [vmem:[#allocation4 + $0x188] sm:$0xff] %vm332, 0.0
          %447 = vst.msk [vmem:[#allocation4 + $0x190] sm:$0xff] %vm332, 0.0
          %448 = vst.msk [vmem:[#allocation4 + $0x198] sm:$0xff] %vm332, 0.0
          %449 = vst.msk [vmem:[#allocation4 + $0x1a0] sm:$0xff] %vm332, 0.0
          %450 = vst.msk [vmem:[#allocation4 + $0x1a8] sm:$0xff] %vm332, 0.0
          %451 = vst.msk [vmem:[#allocation4 + $0x1b0] sm:$0xff] %vm332, 0.0
          %452 = vst.msk [vmem:[#allocation4 + $0x1b8] sm:$0xff] %vm332, 0.0
          %453 = vst.msk [vmem:[#allocation4 + $0x1c0] sm:$0xff] %vm332, 0.0
          %454 = vst.msk [vmem:[#allocation4 + $0x1c8] sm:$0xff] %vm332, 0.0
          %455 = vst.msk [vmem:[#allocation4 + $0x1d0] sm:$0xff] %vm332, 0.0
          %456 = vst.msk [vmem:[#allocation4 + $0x1d8] sm:$0xff] %vm332, 0.0
          %457 = vst.msk [vmem:[#allocation4 + $0x1e0] sm:$0xff] %vm332, 0.0
          %458 = vst.msk [vmem:[#allocation4 + $0x1e8] sm:$0xff] %vm332, 0.0
          %459 = vst.msk [vmem:[#allocation4 + $0x1f0] sm:$0xff] %vm332, 0.0
          %460 = vst.msk [vmem:[#allocation4 + $0x1f8] sm:$0xff] %vm332, 0.0
          %461 = vst [vmem:[#allocation5] sm:$0xff] 0.0
          %462 = vst [vmem:[#allocation5 + $0x8] sm:$0xff] 0.0
          %463 = vst [vmem:[#allocation5 + $0x10] sm:$0xff] 0.0
          %464 = vst [vmem:[#allocation5 + $0x18] sm:$0xff] 0.0
          %465 = vst [vmem:[#allocation5 + $0x20] sm:$0xff] 0.0
          %466 = vst [vmem:[#allocation5 + $0x28] sm:$0xff] 0.0
          %467 = vst [vmem:[#allocation5 + $0x30] sm:$0xff] 0.0
          %468 = vst [vmem:[#allocation5 + $0x38] sm:$0xff] 0.0
          %469 = vst [vmem:[#allocation5 + $0x40] sm:$0xff] 0.0
          %470 = vst [vmem:[#allocation5 + $0x48] sm:$0xff] 0.0
          %471 = vst [vmem:[#allocation5 + $0x50] sm:$0xff] 0.0
          %472 = vst [vmem:[#allocation5 + $0x58] sm:$0xff] 0.0
          %473 = vst [vmem:[#allocation5 + $0x60] sm:$0xff] 0.0
          %474 = vst [vmem:[#allocation5 + $0x68] sm:$0xff] 0.0
          %475 = vst [vmem:[#allocation5 + $0x70] sm:$0xff] 0.0
          %476 = vst [vmem:[#allocation5 + $0x78] sm:$0xff] 0.0
          %477 = vst [vmem:[#allocation5 + $0x80] sm:$0xff] 0.0
          %478 = vst [vmem:[#allocation5 + $0x88] sm:$0xff] 0.0
          %479 = vst [vmem:[#allocation5 + $0x90] sm:$0xff] 0.0
          %480 = vst [vmem:[#allocation5 + $0x98] sm:$0xff] 0.0
          %481 = vst [vmem:[#allocation5 + $0xa0] sm:$0xff] 0.0
          %482 = vst [vmem:[#allocation5 + $0xa8] sm:$0xff] 0.0
          %483 = vst [vmem:[#allocation5 + $0xb0] sm:$0xff] 0.0
          %484 = vst [vmem:[#allocation5 + $0xb8] sm:$0xff] 0.0
          %485 = vst [vmem:[#allocation5 + $0xc0] sm:$0xff] 0.0
          %486 = vst [vmem:[#allocation5 + $0xc8] sm:$0xff] 0.0
          %487 = vst [vmem:[#allocation5 + $0xd0] sm:$0xff] 0.0
          %488 = vst [vmem:[#allocation5 + $0xd8] sm:$0xff] 0.0
          %489 = vst [vmem:[#allocation5 + $0xe0] sm:$0xff] 0.0
          %490 = vst [vmem:[#allocation5 + $0xe8] sm:$0xff] 0.0
          %491 = vst [vmem:[#allocation5 + $0xf0] sm:$0xff] 0.0
          %492 = vst [vmem:[#allocation5 + $0xf8] sm:$0xff] 0.0
          %v493 = vld [vmem:[%s265] sm:$0xff]
          %v494 = vld [vmem:[%s265 + $0x8] sm:$0xff]
          %v495 = vld [vmem:[%s265 + $0x10] sm:$0xff]
          %v496 = vld [vmem:[%s265 + $0x18] sm:$0xff]
          %v497 = vld [vmem:[%s265 + $0x20] sm:$0xff]
          %v498 = vld [vmem:[%s265 + $0x28] sm:$0xff]
          %v499 = vld [vmem:[%s265 + $0x30] sm:$0xff]
          %v500 = vld [vmem:[%s265 + $0x38] sm:$0xff]
          %v501 = vld [vmem:[%s265 + $0x40] sm:$0xff]
          %v502 = vld [vmem:[%s265 + $0x48] sm:$0xff]
          %v503 = vld [vmem:[%s265 + $0x50] sm:$0xff]
          %v504 = vld [vmem:[%s265 + $0x58] sm:$0xff]
          %v505 = vld [vmem:[%s265 + $0x60] sm:$0xff]
          %v506 = vld [vmem:[%s265 + $0x68] sm:$0xff]
          %v507 = vld [vmem:[%s265 + $0x70] sm:$0xff]
          %v508 = vld [vmem:[%s265 + $0x78] sm:$0xff]
          %v509 = vld [vmem:[%s265 + $0x80] sm:$0xff]
          %v510 = vld [vmem:[%s265 + $0x88] sm:$0xff]
          %v511 = vld [vmem:[%s265 + $0x90] sm:$0xff]
          %v512 = vld [vmem:[%s265 + $0x98] sm:$0xff]
          %v513 = vld [vmem:[%s265 + $0xa0] sm:$0xff]
          %v514 = vld [vmem:[%s265 + $0xa8] sm:$0xff]
          %v515 = vld [vmem:[%s265 + $0xb0] sm:$0xff]
          %v516 = vld [vmem:[%s265 + $0xb8] sm:$0xff]
          %v517 = vld [vmem:[%s265 + $0xc0] sm:$0xff]
          %v518 = vld [vmem:[%s265 + $0xc8] sm:$0xff]
          %v519 = vld [vmem:[%s265 + $0xd0] sm:$0xff]
          %v520 = vld [vmem:[%s265 + $0xd8] sm:$0xff]
          %v521 = vld [vmem:[%s265 + $0xe0] sm:$0xff]
          %v522 = vld [vmem:[%s265 + $0xe8] sm:$0xff]
          %v523 = vld [vmem:[%s265 + $0xf0] sm:$0xff]
          %v524 = vld [vmem:[%s265 + $0xf8] sm:$0xff]
          %v525 = vmul.f32 %v493, 0.125
          %v526 = vmul.f32 %v494, 0.125
          %v527 = vmul.f32 %v495, 0.125
          %v528 = vmul.f32 %v496, 0.125
          %v529 = vmul.f32 %v497, 0.125
          %v530 = vmul.f32 %v498, 0.125
          %v531 = vmul.f32 %v499, 0.125
          %v532 = vmul.f32 %v500, 0.125
          %v533 = vmul.f32 %v501, 0.125
          %v534 = vmul.f32 %v502, 0.125
          %v535 = vmul.f32 %v503, 0.125
          %v536 = vmul.f32 %v504, 0.125
          %v537 = vmul.f32 %v505, 0.125
          %v538 = vmul.f32 %v506, 0.125
          %v539 = vmul.f32 %v507, 0.125
          %v540 = vmul.f32 %v508, 0.125
          %v541 = vmul.f32 %v509, 0.125
          %v542 = vmul.f32 %v510, 0.125
          %v543 = vmul.f32 %v511, 0.125
          %v544 = vmul.f32 %v512, 0.125
          %v545 = vmul.f32 %v513, 0.125
          %v546 = vmul.f32 %v514, 0.125
          %v547 = vmul.f32 %v515, 0.125
          %v548 = vmul.f32 %v516, 0.125
          %v549 = vmul.f32 %v517, 0.125
          %v550 = vmul.f32 %v518, 0.125
          %v551 = vmul.f32 %v519, 0.125
          %v552 = vmul.f32 %v520, 0.125
          %v553 = vmul.f32 %v521, 0.125
          %v554 = vmul.f32 %v522, 0.125
          %v555 = vmul.f32 %v523, 0.125
          %v556 = vmul.f32 %v524, 0.125
          %v557 = vpack.c.bf16 %v527, %v525
          %v558 = vpack.c.bf16 %v528, %v526
          %v559 = vpack.c.bf16 %v531, %v529
          %v560 = vpack.c.bf16 %v532, %v530
          %v561 = vpack.c.bf16 %v535, %v533
          %v562 = vpack.c.bf16 %v536, %v534
          %v563 = vpack.c.bf16 %v539, %v537
          %v564 = vpack.c.bf16 %v540, %v538
          %v565 = vpack.c.bf16 %v543, %v541
          %v566 = vpack.c.bf16 %v544, %v542
          %v567 = vpack.c.bf16 %v547, %v545
          %v568 = vpack.c.bf16 %v548, %v546
          %v569 = vpack.c.bf16 %v551, %v549
          %v570 = vpack.c.bf16 %v552, %v550
          %v571 = vpack.c.bf16 %v555, %v553
          %v572 = vpack.c.bf16 %v556, %v554
          %573 = vst [vmem:[#allocation2] sm:$0xff] %v557
          %574 = vst [vmem:[#allocation2 + $0x8] sm:$0xff] %v558
          %575 = vst [vmem:[#allocation2 + $0x10] sm:$0xff] %v559
          %576 = vst [vmem:[#allocation2 + $0x18] sm:$0xff] %v560
          %577 = vst [vmem:[#allocation2 + $0x20] sm:$0xff] %v561
          %578 = vst [vmem:[#allocation2 + $0x28] sm:$0xff] %v562
          %579 = vst [vmem:[#allocation2 + $0x30] sm:$0xff] %v563
          %580 = vst [vmem:[#allocation2 + $0x38] sm:$0xff] %v564
          %581 = vst [vmem:[#allocation2 + $0x40] sm:$0xff] %v565
          %582 = vst [vmem:[#allocation2 + $0x48] sm:$0xff] %v566
          %583 = vst [vmem:[#allocation2 + $0x50] sm:$0xff] %v567
          %584 = vst [vmem:[#allocation2 + $0x58] sm:$0xff] %v568
          %585 = vst [vmem:[#allocation2 + $0x60] sm:$0xff] %v569
          %586 = vst [vmem:[#allocation2 + $0x68] sm:$0xff] %v570
          %587 = vst [vmem:[#allocation2 + $0x70] sm:$0xff] %v571
          %588 = vst [vmem:[#allocation2 + $0x78] sm:$0xff] %v572
        $region48: #{tpu_custom_call.1} parent=31 // pred_fallthru
          _
        // Predicated region
        $region49: #{tpu_custom_call.1} parent=31 // pred_check
          %p589 = pneg %p327
        $region50: #{tpu_custom_call.1} parent=31 // pred_check_branch
          %591 = sbr.rel (%p589) target = $region52
        $region51: #{tpu_custom_call.1} parent=31 // pred_region
          %v592 = vlaneseq
          %v593 = vand.u32 %v592, 127
          %v594 = vlaneseq
          %v595 = vshrl.u32 %v594, 7
          %v596 = vadd.s32 %v595, 8
          %v597 = vadd.s32 %v595, 16
          %v598 = vadd.s32 %v595, 24
          %v599 = vadd.s32 %v595, 32
          %v600 = vadd.s32 %v595, 40
          %v601 = vadd.s32 %v595, 48
          %v602 = vadd.s32 %v595, 56
          %v603 = vadd.s32 %v595, 64
          %v604 = vadd.s32 %v595, 72
          %v605 = vadd.s32 %v595, 80
          %v606 = vadd.s32 %v595, 88
          %v607 = vadd.s32 %v595, 96
          %v608 = vadd.s32 %v595, 104
          %v609 = vadd.s32 %v595, 112
          %v610 = vadd.s32 %v595, 120
          %vm611 = vcmp.gt.s32.totalorder %v593, %v595
          %vm612 = vcmp.gt.s32.totalorder %v593, %v596
          %vm613 = vcmp.gt.s32.totalorder %v593, %v597
          %vm614 = vcmp.gt.s32.totalorder %v593, %v598
          %vm615 = vcmp.gt.s32.totalorder %v593, %v599
          %vm616 = vcmp.gt.s32.totalorder %v593, %v600
          %vm617 = vcmp.gt.s32.totalorder %v593, %v601
          %vm618 = vcmp.gt.s32.totalorder %v593, %v602
          %vm619 = vcmp.gt.s32.totalorder %v593, %v603
          %vm620 = vcmp.gt.s32.totalorder %v593, %v604
          %vm621 = vcmp.gt.s32.totalorder %v593, %v605
          %vm622 = vcmp.gt.s32.totalorder %v593, %v606
          %vm623 = vcmp.gt.s32.totalorder %v593, %v607
          %vm624 = vcmp.gt.s32.totalorder %v593, %v608
          %vm625 = vcmp.gt.s32.totalorder %v593, %v609
          %vm626 = vcmp.gt.s32.totalorder %v593, %v610
          %v627 = vld [vmem:[#allocation2] sm:$0xff]
          %v628 = vld [vmem:[#allocation2 + $0x10] sm:$0xff]
          %v629 = vld [vmem:[#allocation2 + $0x20] sm:$0xff]
          %v630 = vld [vmem:[#allocation2 + $0x30] sm:$0xff]
          %v631 = vld [vmem:[#allocation2 + $0x40] sm:$0xff]
          %v632 = vld [vmem:[#allocation2 + $0x50] sm:$0xff]
          %v633 = vld [vmem:[#allocation2 + $0x60] sm:$0xff]
          %v634 = vld [vmem:[#allocation2 + $0x70] sm:$0xff]
          %v635 = vld [vmem:[%s274] sm:$0xff]
          %v636 = vld [vmem:[%s274 + $0x10] sm:$0xff]
          %v637 = vld [vmem:[%s274 + $0x20] sm:$0xff]
          %v638 = vld [vmem:[%s274 + $0x30] sm:$0xff]
          %v639 = vld [vmem:[%s274 + $0x40] sm:$0xff]
          %v640 = vld [vmem:[%s274 + $0x50] sm:$0xff]
          %v641 = vld [vmem:[%s274 + $0x60] sm:$0xff]
          %v642 = vld [vmem:[%s274 + $0x70] sm:$0xff]
          %v643 = vld [vmem:[%s274 + $0x80] sm:$0xff]
          %v644 = vld [vmem:[%s274 + $0x90] sm:$0xff]
          %v645 = vld [vmem:[%s274 + $0xa0] sm:$0xff]
          %v646 = vld [vmem:[%s274 + $0xb0] sm:$0xff]
          %v647 = vld [vmem:[%s274 + $0xc0] sm:$0xff]
          %v648 = vld [vmem:[%s274 + $0xd0] sm:$0xff]
          %v649 = vld [vmem:[%s274 + $0xe0] sm:$0xff]
          %v650 = vld [vmem:[%s274 + $0xf0] sm:$0xff]
          %v651 = vpack.c.bf16 %v636, %v635
          %v652 = vpack.c.bf16 %v638, %v637
          %v653 = vpack.c.bf16 %v640, %v639
          %v654 = vpack.c.bf16 %v642, %v641
          %v655 = vpack.c.bf16 %v644, %v643
          %v656 = vpack.c.bf16 %v646, %v645
          %v657 = vpack.c.bf16 %v648, %v647
          %v658 = vpack.c.bf16 %v650, %v649
          %v659 = vld [vmem:[%s283] sm:$0xff]
          %v660 = vld [vmem:[%s283 + $0x10] sm:$0xff]
          %v661 = vld [vmem:[%s283 + $0x20] sm:$0xff]
          %v662 = vld [vmem:[%s283 + $0x30] sm:$0xff]
          %v663 = vld [vmem:[%s283 + $0x40] sm:$0xff]
          %v664 = vld [vmem:[%s283 + $0x50] sm:$0xff]
          %v665 = vld [vmem:[%s283 + $0x60] sm:$0xff]
          %v666 = vld [vmem:[%s283 + $0x70] sm:$0xff]
          %v667 = vld [vmem:[%s283 + $0x80] sm:$0xff]
          %v668 = vld [vmem:[%s283 + $0x90] sm:$0xff]
          %v669 = vld [vmem:[%s283 + $0xa0] sm:$0xff]
          %v670 = vld [vmem:[%s283 + $0xb0] sm:$0xff]
          %v671 = vld [vmem:[%s283 + $0xc0] sm:$0xff]
          %v672 = vld [vmem:[%s283 + $0xd0] sm:$0xff]
          %v673 = vld [vmem:[%s283 + $0xe0] sm:$0xff]
          %v674 = vld [vmem:[%s283 + $0xf0] sm:$0xff]
          %v675 = vpack.c.bf16 %v660, %v659
          %v676 = vpack.c.bf16 %v662, %v661
          %v677 = vpack.c.bf16 %v664, %v663
          %v678 = vpack.c.bf16 %v666, %v665
          %v679 = vpack.c.bf16 %v668, %v667
          %v680 = vpack.c.bf16 %v670, %v669
          %v681 = vpack.c.bf16 %v672, %v671
          %v682 = vpack.c.bf16 %v674, %v673
          %vm683 = vcmask 523264
          %v685 = vsel %vm683, %v627, 0
          %v688 = vsel %vm683, %v628, 0
          %v691 = vsel %vm683, %v629, 0
          %v694 = vsel %vm683, %v630, 0
          %v697 = vsel %vm683, %v631, 0
          %v700 = vsel %vm683, %v632, 0
          %v703 = vsel %vm683, %v633, 0
          %v706 = vsel %vm683, %v634, 0
          %v709 = vsel %vm683, %v651, 0
          %v712 = vsel %vm683, %v652, 0
          %v715 = vsel %vm683, %v653, 0
          %v718 = vsel %vm683, %v654, 0
          %v721 = vsel %vm683, %v655, 0
          %v724 = vsel %vm683, %v656, 0
          %v727 = vsel %vm683, %v657, 0
          %v730 = vsel %vm683, %v658, 0
          %732 = vmatprep.subr.bf16.mxu0 0
          %733 = vmatpush1.bf16.xpose.msra.mxu0 %v709
          %734 = vmatprep.subr.bf16.mxu0 0
          %735 = vmatpush1.bf16.xpose.msra.mxu0 %v712
          %736 = vmatprep.subr.bf16.mxu0 0
          %737 = vmatpush1.bf16.xpose.msra.mxu0 %v715
          %738 = vmatprep.subr.bf16.mxu0 0
          %739 = vmatpush1.bf16.xpose.msra.mxu0 %v718
          %740 = vmatprep.subr.bf16.mxu0 0
          %741 = vmatpush1.bf16.xpose.msra.mxu0 %v721
          %742 = vmatprep.subr.bf16.mxu0 0
          %743 = vmatpush1.bf16.xpose.msra.mxu0 %v724
          %744 = vmatprep.subr.bf16.mxu0 0
          %745 = vmatpush1.bf16.xpose.msra.mxu0 %v727
          %746 = vmatprep.subr.bf16.mxu0 0
          %747 = vmatpush1.bf16.xpose.msra.mxu0 %v730
          %748 = vmatprep.subr.bf16.mxu0 0
          %749 = vmatpush1.bf16.xpose.msra.mxu0 0
          %750 = vmatprep.subr.bf16.mxu0 0
          %751 = vmatpush1.bf16.xpose.msra.mxu0 0
          %752 = vmatprep.subr.bf16.mxu0 0
          %753 = vmatpush1.bf16.xpose.msra.mxu0 0
          %754 = vmatprep.subr.bf16.mxu0 0
          %755 = vmatpush1.bf16.xpose.msra.mxu0 0
          %756 = vmatprep.subr.bf16.mxu0 0
          %757 = vmatpush1.bf16.xpose.msra.mxu0 0
          %758 = vmatprep.subr.bf16.mxu0 0
          %759 = vmatpush1.bf16.xpose.msra.mxu0 0
          %760 = vmatprep.subr.bf16.mxu0 0
          %761 = vmatpush1.bf16.xpose.msra.mxu0 0
          %762 = vmatprep.subr.bf16.mxu0 0
          %763 = vmatpush1.bf16.xpose.msra.mxu0 0
          %764 = vmatprep.mubr.bf16.mxu0 0
          %765 = vmatmul.mubr.bf16.gmra.mrb[0].mxu0 %v685
          %v766 = vpop.f32.mrb[0].mxu0
          %v767 = vadd.f32 0.0, %v766
          %v768 = vpop.f32.mrb[0].mxu0
          %v769 = vpop.f32.mrb[0].mxu0
          %v770 = vadd.f32 0.0, %v769
          %v771 = vpop.f32.mrb[0].mxu0
          %772 = vmatprep.mubr.bf16.mxu0 0
          %773 = vmatmul.mubr.bf16.gmra.mrb[0].mxu0 %v688
          %v774 = vpop.f32.mrb[0].mxu0
          %v775 = vadd.f32 0.0, %v774
          %v776 = vpop.f32.mrb[0].mxu0
          %v777 = vpop.f32.mrb[0].mxu0
          %v778 = vadd.f32 0.0, %v777
          %v779 = vpop.f32.mrb[0].mxu0
          %780 = vmatprep.mubr.bf16.mxu0 0
          %781 = vmatmul.mubr.bf16.gmra.mrb[0].mxu0 %v691
          %v782 = vpop.f32.mrb[0].mxu0
          %v783 = vadd.f32 0.0, %v782
          %v784 = vpop.f32.mrb[0].mxu0
          %v785 = vpop.f32.mrb[0].mxu0
          %v786 = vadd.f32 0.0, %v785
          %v787 = vpop.f32.mrb[0].mxu0
          %788 = vmatprep.mubr.bf16.mxu0 0
          %789 = vmatmul.mubr.bf16.gmra.mrb[0].mxu0 %v694
          %v790 = vpop.f32.mrb[0].mxu0
          %v791 = vadd.f32 0.0, %v790
          %v792 = vpop.f32.mrb[0].mxu0
          %v793 = vpop.f32.mrb[0].mxu0
          %v794 = vadd.f32 0.0, %v793
          %v795 = vpop.f32.mrb[0].mxu0
          %796 = vmatprep.mubr.bf16.mxu0 0
          %797 = vmatmul.mubr.bf16.gmra.mrb[0].mxu0 %v697
          %v798 = vpop.f32.mrb[0].mxu0
          %v799 = vadd.f32 0.0, %v798
          %v800 = vpop.f32.mrb[0].mxu0
          %v801 = vpop.f32.mrb[0].mxu0
          %v802 = vadd.f32 0.0, %v801
          %v803 = vpop.f32.mrb[0].mxu0
          %804 = vmatprep.mubr.bf16.mxu0 0
          %805 = vmatmul.mubr.bf16.gmra.mrb[0].mxu0 %v700
          %v806 = vpop.f32.mrb[0].mxu0
          %v807 = vadd.f32 0.0, %v806
          %v808 = vpop.f32.mrb[0].mxu0
          %v809 = vpop.f32.mrb[0].mxu0
          %v810 = vadd.f32 0.0, %v809
          %v811 = vpop.f32.mrb[0].mxu0
          %812 = vmatprep.mubr.bf16.mxu0 0
          %813 = vmatmul.mubr.bf16.gmra.mrb[0].mxu0 %v703
          %v814 = vpop.f32.mrb[0].mxu0
          %v815 = vadd.f32 0.0, %v814
          %v816 = vpop.f32.mrb[0].mxu0
          %v817 = vpop.f32.mrb[0].mxu0
          %v818 = vadd.f32 0.0, %v817
          %v819 = vpop.f32.mrb[0].mxu0
          %820 = vmatprep.mubr.bf16.mxu0 0
          %821 = vmatmul.mubr.bf16.gmra.mrb[0].mxu0 %v706
          %v822 = vpop.f32.mrb[0].mxu0
          %v823 = vadd.f32 0.0, %v822
          %v824 = vpop.f32.mrb[0].mxu0
          %v825 = vpop.f32.mrb[0].mxu0
          %v826 = vadd.f32 0.0, %v825
          %v827 = vpop.f32.mrb[0].mxu0
          %828 = vdwg.mxu0
          %v829 = vsel %vm611, -1e+30, %v767
          %v830 = vsel %vm612, -1e+30, %v770
          %v831 = vsel %vm613, -1e+30, %v775
          %v832 = vsel %vm614, -1e+30, %v778
          %v833 = vsel %vm615, -1e+30, %v783
          %v834 = vsel %vm616, -1e+30, %v786
          %v835 = vsel %vm617, -1e+30, %v791
          %v836 = vsel %vm618, -1e+30, %v794
          %v837 = vsel %vm619, -1e+30, %v799
          %v838 = vsel %vm620, -1e+30, %v802
          %v839 = vsel %vm621, -1e+30, %v807
          %v840 = vsel %vm622, -1e+30, %v810
          %v841 = vsel %vm623, -1e+30, %v815
          %v842 = vsel %vm624, -1e+30, %v818
          %v843 = vsel %vm625, -1e+30, %v823
          %v844 = vsel %vm626, -1e+30, %v826
          %v845 = vld [vmem:[#allocation3] sm:$0xff]
          %v846 = vld [vmem:[#allocation3 + $0x8] sm:$0xff]
          %v847 = vld [vmem:[#allocation3 + $0x10] sm:$0xff]
          %v848 = vld [vmem:[#allocation3 + $0x18] sm:$0xff]
          %v849 = vld [vmem:[#allocation3 + $0x20] sm:$0xff]
          %v850 = vld [vmem:[#allocation3 + $0x28] sm:$0xff]
          %v851 = vld [vmem:[#allocation3 + $0x30] sm:$0xff]
          %v852 = vld [vmem:[#allocation3 + $0x38] sm:$0xff]
          %v853 = vld [vmem:[#allocation3 + $0x40] sm:$0xff]
          %v854 = vld [vmem:[#allocation3 + $0x48] sm:$0xff]
          %v855 = vld [vmem:[#allocation3 + $0x50] sm:$0xff]
          %v856 = vld [vmem:[#allocation3 + $0x58] sm:$0xff]
          %v857 = vld [vmem:[#allocation3 + $0x60] sm:$0xff]
          %v858 = vld [vmem:[#allocation3 + $0x68] sm:$0xff]
          %v859 = vld [vmem:[#allocation3 + $0x70] sm:$0xff]
          %v860 = vld [vmem:[#allocation3 + $0x78] sm:$0xff]
          %861 = vmax.xlane.f32.xlu0 %v829
          %v862 = vpop.xlane.xlu0 %861
          %863 = vmax.xlane.f32.xlu0 %v830
          %v864 = vpop.xlane.xlu0 %863
          %865 = vmax.xlane.f32.xlu0 %v831
          %v866 = vpop.xlane.xlu0 %865
          %867 = vmax.xlane.f32.xlu0 %v832
          %v868 = vpop.xlane.xlu0 %867
          %869 = vmax.xlane.f32.xlu0 %v833
          %v870 = vpop.xlane.xlu0 %869
          %871 = vmax.xlane.f32.xlu0 %v834
          %v872 = vpop.xlane.xlu0 %871
          %873 = vmax.xlane.f32.xlu0 %v835
          %v874 = vpop.xlane.xlu0 %873
          %875 = vmax.xlane.f32.xlu0 %v836
          %v876 = vpop.xlane.xlu0 %875
          %877 = vmax.xlane.f32.xlu0 %v837
          %v878 = vpop.xlane.xlu0 %877
          %879 = vmax.xlane.f32.xlu0 %v838
          %v880 = vpop.xlane.xlu0 %879
          %881 = vmax.xlane.f32.xlu0 %v839
          %v882 = vpop.xlane.xlu0 %881
          %883 = vmax.xlane.f32.xlu0 %v840
          %v884 = vpop.xlane.xlu0 %883
          %885 = vmax.xlane.f32.xlu0 %v841
          %v886 = vpop.xlane.xlu0 %885
          %887 = vmax.xlane.f32.xlu0 %v842
          %v888 = vpop.xlane.xlu0 %887
          %889 = vmax.xlane.f32.xlu0 %v843
          %v890 = vpop.xlane.xlu0 %889
          %891 = vmax.xlane.f32.xlu0 %v844
          %v892 = vpop.xlane.xlu0 %891
          %v893 = vmax.f32 %v845, %v862
          %v894 = vmax.f32 %v846, %v864
          %v895 = vmax.f32 %v847, %v866
          %v896 = vmax.f32 %v848, %v868
          %v897 = vmax.f32 %v849, %v870
          %v898 = vmax.f32 %v850, %v872
          %v899 = vmax.f32 %v851, %v874
          %v900 = vmax.f32 %v852, %v876
          %v901 = vmax.f32 %v853, %v878
          %v902 = vmax.f32 %v854, %v880
          %v903 = vmax.f32 %v855, %v882
          %v904 = vmax.f32 %v856, %v884
          %v905 = vmax.f32 %v857, %v886
          %v906 = vmax.f32 %v858, %v888
          %v907 = vmax.f32 %v859, %v890
          %v908 = vmax.f32 %v860, %v892
          %v909 = vsub.f32 %v845, %v893
          %v910 = vsub.f32 %v846, %v894
          %v911 = vsub.f32 %v847, %v895
          %v912 = vsub.f32 %v848, %v896
          %v913 = vsub.f32 %v849, %v897
          %v914 = vsub.f32 %v850, %v898
          %v915 = vsub.f32 %v851, %v899
          %v916 = vsub.f32 %v852, %v900
          %v917 = vsub.f32 %v853, %v901
          %v918 = vsub.f32 %v854, %v902
          %v919 = vsub.f32 %v855, %v903
          %v920 = vsub.f32 %v856, %v904
          %v921 = vsub.f32 %v857, %v905
          %v922 = vsub.f32 %v858, %v906
          %v923 = vsub.f32 %v859, %v907
          %v924 = vsub.f32 %v860, %v908
          %v925 = vmul.f32 %v909, 1.442695
          %v926 = vpow.pop %v925
          %v927 = vmul.f32 %v910, 1.442695
          %v928 = vpow.pop %v927
          %v929 = vmul.f32 %v911, 1.442695
          %v930 = vpow.pop %v929
          %v931 = vmul.f32 %v912, 1.442695
          %v932 = vpow.pop %v931
          %v933 = vmul.f32 %v913, 1.442695
          %v934 = vpow.pop %v933
          %v935 = vmul.f32 %v914, 1.442695
          %v936 = vpow.pop %v935
          %v937 = vmul.f32 %v915, 1.442695
          %v938 = vpow.pop %v937
          %v939 = vmul.f32 %v916, 1.442695
          %v940 = vpow.pop %v939
          %v941 = vmul.f32 %v917, 1.442695
          %v942 = vpow.pop %v941
          %v943 = vmul.f32 %v918, 1.442695
          %v944 = vpow.pop %v943
          %v945 = vmul.f32 %v919, 1.442695
          %v946 = vpow.pop %v945
          %v947 = vmul.f32 %v920, 1.442695
          %v948 = vpow.pop %v947
          %v949 = vmul.f32 %v921, 1.442695
          %v950 = vpow.pop %v949
          %v951 = vmul.f32 %v922, 1.442695
          %v952 = vpow.pop %v951
          %v953 = vmul.f32 %v923, 1.442695
          %v954 = vpow.pop %v953
          %v955 = vmul.f32 %v924, 1.442695
          %v956 = vpow.pop %v955
          %958 = vset.pattern.permute.xlu0 0
          %959 = vperm.xlu0 %958, %v893
          %v960 = vpop.permute.xlu0 %959
          %963 = vset.pattern.permute.xlu0 0
          %964 = vperm.xlu0 %963, %v894
          %v965 = vpop.permute.xlu0 %964
          %968 = vset.pattern.permute.xlu0 0
          %969 = vperm.xlu0 %968, %v895
          %v970 = vpop.permute.xlu0 %969
          %973 = vset.pattern.permute.xlu0 0
          %974 = vperm.xlu0 %973, %v896
          %v975 = vpop.permute.xlu0 %974
          %978 = vset.pattern.permute.xlu0 0
          %979 = vperm.xlu0 %978, %v897
          %v980 = vpop.permute.xlu0 %979
          %983 = vset.pattern.permute.xlu0 0
          %984 = vperm.xlu0 %983, %v898
          %v985 = vpop.permute.xlu0 %984
          %988 = vset.pattern.permute.xlu0 0
          %989 = vperm.xlu0 %988, %v899
          %v990 = vpop.permute.xlu0 %989
          %993 = vset.pattern.permute.xlu0 0
          %994 = vperm.xlu0 %993, %v900
          %v995 = vpop.permute.xlu0 %994
          %998 = vset.pattern.permute.xlu0 0
          %999 = vperm.xlu0 %998, %v901
          %v1000 = vpop.permute.xlu0 %999
          %1003 = vset.pattern.permute.xlu0 0
          %1004 = vperm.xlu0 %1003, %v902
          %v1005 = vpop.permute.xlu0 %1004
          %1008 = vset.pattern.permute.xlu0 0
          %1009 = vperm.xlu0 %1008, %v903
          %v1010 = vpop.permute.xlu0 %1009
          %1013 = vset.pattern.permute.xlu0 0
          %1014 = vperm.xlu0 %1013, %v904
          %v1015 = vpop.permute.xlu0 %1014
          %1018 = vset.pattern.permute.xlu0 0
          %1019 = vperm.xlu0 %1018, %v905
          %v1020 = vpop.permute.xlu0 %1019
          %1023 = vset.pattern.permute.xlu0 0
          %1024 = vperm.xlu0 %1023, %v906
          %v1025 = vpop.permute.xlu0 %1024
          %1028 = vset.pattern.permute.xlu0 0
          %1029 = vperm.xlu0 %1028, %v907
          %v1030 = vpop.permute.xlu0 %1029
          %1033 = vset.pattern.permute.xlu0 0
          %1034 = vperm.xlu0 %1033, %v908
          %v1035 = vpop.permute.xlu0 %1034
          %v1037 = vsub.f32 %v829, %v960
          %v1038 = vsub.f32 %v830, %v965
          %v1039 = vsub.f32 %v831, %v970
          %v1040 = vsub.f32 %v832, %v975
          %v1041 = vsub.f32 %v833, %v980
          %v1042 = vsub.f32 %v834, %v985
          %v1043 = vsub.f32 %v835, %v990
          %v1044 = vsub.f32 %v836, %v995
          %v1045 = vsub.f32 %v837, %v1000
          %v1046 = vsub.f32 %v838, %v1005
          %v1047 = vsub.f32 %v839, %v1010
          %v1048 = vsub.f32 %v840, %v1015
          %v1049 = vsub.f32 %v841, %v1020
          %v1050 = vsub.f32 %v842, %v1025
          %v1051 = vsub.f32 %v843, %v1030
          %v1052 = vsub.f32 %v844, %v1035
          %v1053 = vmul.f32 %v1037, 1.442695
          %v1054 = vpow.pop %v1053
          %v1055 = vmul.f32 %v1038, 1.442695
          %v1056 = vpow.pop %v1055
          %v1057 = vmul.f32 %v1039, 1.442695
          %v1058 = vpow.pop %v1057
          %v1059 = vmul.f32 %v1040, 1.442695
          %v1060 = vpow.pop %v1059
          %v1061 = vmul.f32 %v1041, 1.442695
          %v1062 = vpow.pop %v1061
          %v1063 = vmul.f32 %v1042, 1.442695
          %v1064 = vpow.pop %v1063
          %v1065 = vmul.f32 %v1043, 1.442695
          %v1066 = vpow.pop %v1065
          %v1067 = vmul.f32 %v1044, 1.442695
          %v1068 = vpow.pop %v1067
          %v1069 = vmul.f32 %v1045, 1.442695
          %v1070 = vpow.pop %v1069
          %v1071 = vmul.f32 %v1046, 1.442695
          %v1072 = vpow.pop %v1071
          %v1073 = vmul.f32 %v1047, 1.442695
          %v1074 = vpow.pop %v1073
          %v1075 = vmul.f32 %v1048, 1.442695
          %v1076 = vpow.pop %v1075
          %v1077 = vmul.f32 %v1049, 1.442695
          %v1078 = vpow.pop %v1077
          %v1079 = vmul.f32 %v1050, 1.442695
          %v1080 = vpow.pop %v1079
          %v1081 = vmul.f32 %v1051, 1.442695
          %v1082 = vpow.pop %v1081
          %v1083 = vmul.f32 %v1052, 1.442695
          %v1084 = vpow.pop %v1083
          %v1085 = vld [vmem:[#allocation4] sm:$0xff]
          %v1086 = vld [vmem:[#allocation4 + $0x8] sm:$0xff]
          %v1087 = vld [vmem:[#allocation4 + $0x10] sm:$0xff]
          %v1088 = vld [vmem:[#allocation4 + $0x18] sm:$0xff]
          %v1089 = vld [vmem:[#allocation4 + $0x20] sm:$0xff]
          %v1090 = vld [vmem:[#allocation4 + $0x28] sm:$0xff]
          %v1091 = vld [vmem:[#allocation4 + $0x30] sm:$0xff]
          %v1092 = vld [vmem:[#allocation4 + $0x38] sm:$0xff]
          %v1093 = vld [vmem:[#allocation4 + $0x40] sm:$0xff]
          %v1094 = vld [vmem:[#allocation4 + $0x48] sm:$0xff]
          %v1095 = vld [vmem:[#allocation4 + $0x50] sm:$0xff]
          %v1096 = vld [vmem:[#allocation4 + $0x58] sm:$0xff]
          %v1097 = vld [vmem:[#allocation4 + $0x60] sm:$0xff]
          %v1098 = vld [vmem:[#allocation4 + $0x68] sm:$0xff]
          %v1099 = vld [vmem:[#allocation4 + $0x70] sm:$0xff]
          %v1100 = vld [vmem:[#allocation4 + $0x78] sm:$0xff]
          %v1101 = vmul.f32 %v926, %v1085
          %v1102 = vmul.f32 %v928, %v1086
          %v1103 = vmul.f32 %v930, %v1087
          %v1104 = vmul.f32 %v932, %v1088
          %v1105 = vmul.f32 %v934, %v1089
          %v1106 = vmul.f32 %v936, %v1090
          %v1107 = vmul.f32 %v938, %v1091
          %v1108 = vmul.f32 %v940, %v1092
          %v1109 = vmul.f32 %v942, %v1093
          %v1110 = vmul.f32 %v944, %v1094
          %v1111 = vmul.f32 %v946, %v1095
          %v1112 = vmul.f32 %v948, %v1096
          %v1113 = vmul.f32 %v950, %v1097
          %v1114 = vmul.f32 %v952, %v1098
          %v1115 = vmul.f32 %v954, %v1099
          %v1116 = vmul.f32 %v956, %v1100
          %1117 = vadd.xlane.f32.xlu0 %v1054
          %v1118 = vpop.xlane.xlu0 %1117
          %1119 = vadd.xlane.f32.xlu0 %v1056
          %v1120 = vpop.xlane.xlu0 %1119
          %1121 = vadd.xlane.f32.xlu0 %v1058
          %v1122 = vpop.xlane.xlu0 %1121
          %1123 = vadd.xlane.f32.xlu0 %v1060
          %v1124 = vpop.xlane.xlu0 %1123
          %1125 = vadd.xlane.f32.xlu0 %v1062
          %v1126 = vpop.xlane.xlu0 %1125
          %1127 = vadd.xlane.f32.xlu0 %v1064
          %v1128 = vpop.xlane.xlu0 %1127
          %1129 = vadd.xlane.f32.xlu0 %v1066
          %v1130 = vpop.xlane.xlu0 %1129
          %1131 = vadd.xlane.f32.xlu0 %v1068
          %v1132 = vpop.xlane.xlu0 %1131
          %1133 = vadd.xlane.f32.xlu0 %v1070
          %v1134 = vpop.xlane.xlu0 %1133
          %1135 = vadd.xlane.f32.xlu0 %v1072
          %v1136 = vpop.xlane.xlu0 %1135
          %1137 = vadd.xlane.f32.xlu0 %v1074
          %v1138 = vpop.xlane.xlu0 %1137
          %1139 = vadd.xlane.f32.xlu0 %v1076
          %v1140 = vpop.xlane.xlu0 %1139
          %1141 = vadd.xlane.f32.xlu0 %v1078
          %v1142 = vpop.xlane.xlu0 %1141
          %1143 = vadd.xlane.f32.xlu0 %v1080
          %v1144 = vpop.xlane.xlu0 %1143
          %1145 = vadd.xlane.f32.xlu0 %v1082
          %v1146 = vpop.xlane.xlu0 %1145
          %1147 = vadd.xlane.f32.xlu0 %v1084
          %v1148 = vpop.xlane.xlu0 %1147
          %v1149 = vadd.f32 %v1101, %v1118
          %v1150 = vadd.f32 %v1102, %v1120
          %v1151 = vadd.f32 %v1103, %v1122
          %v1152 = vadd.f32 %v1104, %v1124
          %v1153 = vadd.f32 %v1105, %v1126
          %v1154 = vadd.f32 %v1106, %v1128
          %v1155 = vadd.f32 %v1107, %v1130
          %v1156 = vadd.f32 %v1108, %v1132
          %v1157 = vadd.f32 %v1109, %v1134
          %v1158 = vadd.f32 %v1110, %v1136
          %v1159 = vadd.f32 %v1111, %v1138
          %v1160 = vadd.f32 %v1112, %v1140
          %v1161 = vadd.f32 %v1113, %v1142
          %v1162 = vadd.f32 %v1114, %v1144
          %v1163 = vadd.f32 %v1115, %v1146
          %v1164 = vadd.f32 %v1116, %v1148
          %vm1165 = vcmask 7168
          %1166 = vst.msk [vmem:[#allocation4] sm:$0xff] %vm1165, %v1149
          %1167 = vst.msk [vmem:[#allocation4 + $0x8] sm:$0xff] %vm1165, %v1150
          %1168 = vst.msk [vmem:[#allocation4 + $0x10] sm:$0xff] %vm1165, %v1151
          %1169 = vst.msk [vmem:[#allocation4 + $0x18] sm:$0xff] %vm1165, %v1152
          %1170 = vst.msk [vmem:[#allocation4 + $0x20] sm:$0xff] %vm1165, %v1153
          %1171 = vst.msk [vmem:[#allocation4 + $0x28] sm:$0xff] %vm1165, %v1154
          %1172 = vst.msk [vmem:[#allocation4 + $0x30] sm:$0xff] %vm1165, %v1155
          %1173 = vst.msk [vmem:[#allocation4 + $0x38] sm:$0xff] %vm1165, %v1156
          %1174 = vst.msk [vmem:[#allocation4 + $0x40] sm:$0xff] %vm1165, %v1157
          %1175 = vst.msk [vmem:[#allocation4 + $0x48] sm:$0xff] %vm1165, %v1158
          %1176 = vst.msk [vmem:[#allocation4 + $0x50] sm:$0xff] %vm1165, %v1159
          %1177 = vst.msk [vmem:[#allocation4 + $0x58] sm:$0xff] %vm1165, %v1160
          %1178 = vst.msk [vmem:[#allocation4 + $0x60] sm:$0xff] %vm1165, %v1161
          %1179 = vst.msk [vmem:[#allocation4 + $0x68] sm:$0xff] %vm1165, %v1162
          %1180 = vst.msk [vmem:[#allocation4 + $0x70] sm:$0xff] %vm1165, %v1163
          %1181 = vst.msk [vmem:[#allocation4 + $0x78] sm:$0xff] %vm1165, %v1164
          %v1182 = vld [vmem:[#allocation5] sm:$0xff]
          %v1183 = vld [vmem:[#allocation5 + $0x10] sm:$0xff]
          %v1184 = vld [vmem:[#allocation5 + $0x20] sm:$0xff]
          %v1185 = vld [vmem:[#allocation5 + $0x30] sm:$0xff]
          %v1186 = vld [vmem:[#allocation5 + $0x40] sm:$0xff]
          %v1187 = vld [vmem:[#allocation5 + $0x50] sm:$0xff]
          %v1188 = vld [vmem:[#allocation5 + $0x60] sm:$0xff]
          %v1189 = vld [vmem:[#allocation5 + $0x70] sm:$0xff]
          %v1190 = vld [vmem:[#allocation5 + $0x80] sm:$0xff]
          %v1191 = vld [vmem:[#allocation5 + $0x90] sm:$0xff]
          %v1192 = vld [vmem:[#allocation5 + $0xa0] sm:$0xff]
          %v1193 = vld [vmem:[#allocation5 + $0xb0] sm:$0xff]
          %v1194 = vld [vmem:[#allocation5 + $0xc0] sm:$0xff]
          %v1195 = vld [vmem:[#allocation5 + $0xd0] sm:$0xff]
          %v1196 = vld [vmem:[#allocation5 + $0xe0] sm:$0xff]
          %v1197 = vld [vmem:[#allocation5 + $0xf0] sm:$0xff]
          %1199 = vset.pattern.permute.xlu0 0
          %1200 = vperm.xlu0 %1199, %v926
          %v1201 = vpop.permute.xlu0 %1200
          %1204 = vset.pattern.permute.xlu0 0
          %1205 = vperm.xlu0 %1204, %v928
          %v1206 = vpop.permute.xlu0 %1205
          %1209 = vset.pattern.permute.xlu0 0
          %1210 = vperm.xlu0 %1209, %v930
          %v1211 = vpop.permute.xlu0 %1210
          %1214 = vset.pattern.permute.xlu0 0
          %1215 = vperm.xlu0 %1214, %v932
          %v1216 = vpop.permute.xlu0 %1215
          %1219 = vset.pattern.permute.xlu0 0
          %1220 = vperm.xlu0 %1219, %v934
          %v1221 = vpop.permute.xlu0 %1220
          %1224 = vset.pattern.permute.xlu0 0
          %1225 = vperm.xlu0 %1224, %v936
          %v1226 = vpop.permute.xlu0 %1225
          %1229 = vset.pattern.permute.xlu0 0
          %1230 = vperm.xlu0 %1229, %v938
          %v1231 = vpop.permute.xlu0 %1230
          %1234 = vset.pattern.permute.xlu0 0
          %1235 = vperm.xlu0 %1234, %v940
          %v1236 = vpop.permute.xlu0 %1235
          %1239 = vset.pattern.permute.xlu0 0
          %1240 = vperm.xlu0 %1239, %v942
          %v1241 = vpop.permute.xlu0 %1240
          %1244 = vset.pattern.permute.xlu0 0
          %1245 = vperm.xlu0 %1244, %v944
          %v1246 = vpop.permute.xlu0 %1245
          %1249 = vset.pattern.permute.xlu0 0
          %1250 = vperm.xlu0 %1249, %v946
          %v1251 = vpop.permute.xlu0 %1250
          %1254 = vset.pattern.permute.xlu0 0
          %1255 = vperm.xlu0 %1254, %v948
          %v1256 = vpop.permute.xlu0 %1255
          %1259 = vset.pattern.permute.xlu0 0
          %1260 = vperm.xlu0 %1259, %v950
          %v1261 = vpop.permute.xlu0 %1260
          %1264 = vset.pattern.permute.xlu0 0
          %1265 = vperm.xlu0 %1264, %v952
          %v1266 = vpop.permute.xlu0 %1265
          %1269 = vset.pattern.permute.xlu0 0
          %1270 = vperm.xlu0 %1269, %v954
          %v1271 = vpop.permute.xlu0 %1270
          %1274 = vset.pattern.permute.xlu0 0
          %1275 = vperm.xlu0 %1274, %v956
          %v1276 = vpop.permute.xlu0 %1275
          %v1278 = vmul.f32 %v1201, %v1182
          %v1279 = vmul.f32 %v1206, %v1183
          %v1280 = vmul.f32 %v1211, %v1184
          %v1281 = vmul.f32 %v1216, %v1185
          %v1282 = vmul.f32 %v1221, %v1186
          %v1283 = vmul.f32 %v1226, %v1187
          %v1284 = vmul.f32 %v1231, %v1188
          %v1285 = vmul.f32 %v1236, %v1189
          %v1286 = vmul.f32 %v1241, %v1190
          %v1287 = vmul.f32 %v1246, %v1191
          %v1288 = vmul.f32 %v1251, %v1192
          %v1289 = vmul.f32 %v1256, %v1193
          %v1290 = vmul.f32 %v1261, %v1194
          %v1291 = vmul.f32 %v1266, %v1195
          %v1292 = vmul.f32 %v1271, %v1196
          %v1293 = vmul.f32 %v1276, %v1197
          %v1294 = vpack.c.bf16 %v1056, %v1054
          %v1295 = vpack.c.bf16 %v1060, %v1058
          %v1296 = vpack.c.bf16 %v1064, %v1062
          %v1297 = vpack.c.bf16 %v1068, %v1066
          %v1298 = vpack.c.bf16 %v1072, %v1070
          %v1299 = vpack.c.bf16 %v1076, %v1074
          %v1300 = vpack.c.bf16 %v1080, %v1078
          %v1301 = vpack.c.bf16 %v1084, %v1082
          %1302 = vmatprep.subr.bf16.mxu0 0
          %1303 = vmatpush1.bf16.msra.mxu0 %v675
          %1304 = vmatprep.subr.bf16.mxu0 0
          %1305 = vmatpush1.bf16.msra.mxu0 %v676
          %1306 = vmatprep.subr.bf16.mxu0 0
          %1307 = vmatpush1.bf16.msra.mxu0 %v677
          %1308 = vmatprep.subr.bf16.mxu0 0
          %1309 = vmatpush1.bf16.msra.mxu0 %v678
          %1310 = vmatprep.subr.bf16.mxu0 0
          %1311 = vmatpush1.bf16.msra.mxu0 %v679
          %1312 = vmatprep.subr.bf16.mxu0 0
          %1313 = vmatpush1.bf16.msra.mxu0 %v680
          %1314 = vmatprep.subr.bf16.mxu0 0
          %1315 = vmatpush1.bf16.msra.mxu0 %v681
          %1316 = vmatprep.subr.bf16.mxu0 0
          %1317 = vmatpush1.bf16.msra.mxu0 %v682
          %1318 = vmatprep.subr.bf16.mxu0 0
          %1319 = vmatpush1.bf16.msra.mxu0 0
          %1320 = vmatprep.subr.bf16.mxu0 0
          %1321 = vmatpush1.bf16.msra.mxu0 0
          %1322 = vmatprep.subr.bf16.mxu0 0
          %1323 = vmatpush1.bf16.msra.mxu0 0
          %1324 = vmatprep.subr.bf16.mxu0 0
          %1325 = vmatpush1.bf16.msra.mxu0 0
          %1326 = vmatprep.subr.bf16.mxu0 0
          %1327 = vmatpush1.bf16.msra.mxu0 0
          %1328 = vmatprep.subr.bf16.mxu0 0
          %1329 = vmatpush1.bf16.msra.mxu0 0
          %1330 = vmatprep.subr.bf16.mxu0 0
          %1331 = vmatpush1.bf16.msra.mxu0 0
          %1332 = vmatprep.subr.bf16.mxu0 0
          %1333 = vmatpush1.bf16.msra.mxu0 0
          %1334 = vmatprep.mubr.bf16.mxu0 0
          %1335 = vmatmul.mubr.bf16.gmra.mrb[0].mxu0 %v1294
          %v1336 = vpop.f32.mrb[0].mxu0
          %v1337 = vadd.f32 0.0, %v1336
          %v1338 = vpop.f32.mrb[0].mxu0
          %v1339 = vpop.f32.mrb[0].mxu0
          %v1340 = vadd.f32 0.0, %v1339
          %v1341 = vpop.f32.mrb[0].mxu0
          %1342 = vmatprep.mubr.bf16.mxu0 0
          %1343 = vmatmul.mubr.bf16.gmra.mrb[0].mxu0 %v1295
          %v1344 = vpop.f32.mrb[0].mxu0
          %v1345 = vadd.f32 0.0, %v1344
          %v1346 = vpop.f32.mrb[0].mxu0
          %v1347 = vpop.f32.mrb[0].mxu0
          %v1348 = vadd.f32 0.0, %v1347
          %v1349 = vpop.f32.mrb[0].mxu0
          %1350 = vmatprep.mubr.bf16.mxu0 0
          %1351 = vmatmul.mubr.bf16.gmra.mrb[0].mxu0 %v1296
          %v1352 = vpop.f32.mrb[0].mxu0
          %v1353 = vadd.f32 0.0, %v1352
          %v1354 = vpop.f32.mrb[0].mxu0
          %v1355 = vpop.f32.mrb[0].mxu0
          %v1356 = vadd.f32 0.0, %v1355
          %v1357 = vpop.f32.mrb[0].mxu0
          %1358 = vmatprep.mubr.bf16.mxu0 0
          %1359 = vmatmul.mubr.bf16.gmra.mrb[0].mxu0 %v1297
          %v1360 = vpop.f32.mrb[0].mxu0
          %v1361 = vadd.f32 0.0, %v1360
          %v1362 = vpop.f32.mrb[0].mxu0
          %v1363 = vpop.f32.mrb[0].mxu0
          %v1364 = vadd.f32 0.0, %v1363
          %v1365 = vpop.f32.mrb[0].mxu0
          %1366 = vmatprep.mubr.bf16.mxu0 0
          %1367 = vmatmul.mubr.bf16.gmra.mrb[0].mxu0 %v1298
          %v1368 = vpop.f32.mrb[0].mxu0
          %v1369 = vadd.f32 0.0, %v1368
          %v1370 = vpop.f32.mrb[0].mxu0
          %v1371 = vpop.f32.mrb[0].mxu0
          %v1372 = vadd.f32 0.0, %v1371
          %v1373 = vpop.f32.mrb[0].mxu0
          %1374 = vmatprep.mubr.bf16.mxu0 0
          %1375 = vmatmul.mubr.bf16.gmra.mrb[0].mxu0 %v1299
          %v1376 = vpop.f32.mrb[0].mxu0
          %v1377 = vadd.f32 0.0, %v1376
          %v1378 = vpop.f32.mrb[0].mxu0
          %v1379 = vpop.f32.mrb[0].mxu0
          %v1380 = vadd.f32 0.0, %v1379
          %v1381 = vpop.f32.mrb[0].mxu0
          %1382 = vmatprep.mubr.bf16.mxu0 0
          %1383 = vmatmul.mubr.bf16.gmra.mrb[0].mxu0 %v1300
          %v1384 = vpop.f32.mrb[0].mxu0
          %v1385 = vadd.f32 0.0, %v1384
          %v1386 = vpop.f32.mrb[0].mxu0
          %v1387 = vpop.f32.mrb[0].mxu0
          %v1388 = vadd.f32 0.0, %v1387
          %v1389 = vpop.f32.mrb[0].mxu0
          %1390 = vmatprep.mubr.bf16.mxu0 0
          %1391 = vmatmul.mubr.bf16.gmra.mrb[0].mxu0 %v1301
          %v1392 = vpop.f32.mrb[0].mxu0
          %v1393 = vadd.f32 0.0, %v1392
          %v1394 = vpop.f32.mrb[0].mxu0
          %v1395 = vpop.f32.mrb[0].mxu0
          %v1396 = vadd.f32 0.0, %v1395
          %v1397 = vpop.f32.mrb[0].mxu0
          %1398 = vdwg.mxu0
          %v1399 = vadd.f32 %v1278, %v1337
          %v1400 = vadd.f32 %v1279, %v1340
          %v1401 = vadd.f32 %v1280, %v1345
          %v1402 = vadd.f32 %v1281, %v1348
          %v1403 = vadd.f32 %v1282, %v1353
          %v1404 = vadd.f32 %v1283, %v1356
          %v1405 = vadd.f32 %v1284, %v1361
          %v1406 = vadd.f32 %v1285, %v1364
          %v1407 = vadd.f32 %v1286, %v1369
          %v1408 = vadd.f32 %v1287, %v1372
          %v1409 = vadd.f32 %v1288, %v1377
          %v1410 = vadd.f32 %v1289, %v1380
          %v1411 = vadd.f32 %v1290, %v1385
          %v1412 = vadd.f32 %v1291, %v1388
          %v1413 = vadd.f32 %v1292, %v1393
          %v1414 = vadd.f32 %v1293, %v1396
          %1415 = vst.msk [vmem:[#allocation5] sm:$0xff] %vm683, %v1399
          %1416 = vst.msk [vmem:[#allocation5 + $0x10] sm:$0xff] %vm683, %v1400
          %1417 = vst.msk [vmem:[#allocation5 + $0x20] sm:$0xff] %vm683, %v1401
          %1418 = vst.msk [vmem:[#allocation5 + $0x30] sm:$0xff] %vm683, %v1402
          %1419 = vst.msk [vmem:[#allocation5 + $0x40] sm:$0xff] %vm683, %v1403
          %1420 = vst.msk [vmem:[#allocation5 + $0x50] sm:$0xff] %vm683, %v1404
          %1421 = vst.msk [vmem:[#allocation5 + $0x60] sm:$0xff] %vm683, %v1405
          %1422 = vst.msk [vmem:[#allocation5 + $0x70] sm:$0xff] %vm683, %v1406
          %1423 = vst.msk [vmem:[#allocation5 + $0x80] sm:$0xff] %vm683, %v1407
          %1424 = vst.msk [vmem:[#allocation5 + $0x90] sm:$0xff] %vm683, %v1408
          %1425 = vst.msk [vmem:[#allocation5 + $0xa0] sm:$0xff] %vm683, %v1409
          %1426 = vst.msk [vmem:[#allocation5 + $0xb0] sm:$0xff] %vm683, %v1410
          %1427 = vst.msk [vmem:[#allocation5 + $0xc0] sm:$0xff] %vm683, %v1411
          %1428 = vst.msk [vmem:[#allocation5 + $0xd0] sm:$0xff] %vm683, %v1412
          %1429 = vst.msk [vmem:[#allocation5 + $0xe0] sm:$0xff] %vm683, %v1413
          %1430 = vst.msk [vmem:[#allocation5 + $0xf0] sm:$0xff] %vm683, %v1414
          %1431 = vst.msk [vmem:[#allocation3] sm:$0xff] %vm1165, %v893
          %1432 = vst.msk [vmem:[#allocation3 + $0x8] sm:$0xff] %vm1165, %v894
          %1433 = vst.msk [vmem:[#allocation3 + $0x10] sm:$0xff] %vm1165, %v895
          %1434 = vst.msk [vmem:[#allocation3 + $0x18] sm:$0xff] %vm1165, %v896
          %1435 = vst.msk [vmem:[#allocation3 + $0x20] sm:$0xff] %vm1165, %v897
          %1436 = vst.msk [vmem:[#allocation3 + $0x28] sm:$0xff] %vm1165, %v898
          %1437 = vst.msk [vmem:[#allocation3 + $0x30] sm:$0xff] %vm1165, %v899
          %1438 = vst.msk [vmem:[#allocation3 + $0x38] sm:$0xff] %vm1165, %v900
          %1439 = vst.msk [vmem:[#allocation3 + $0x40] sm:$0xff] %vm1165, %v901
          %1440 = vst.msk [vmem:[#allocation3 + $0x48] sm:$0xff] %vm1165, %v902
          %1441 = vst.msk [vmem:[#allocation3 + $0x50] sm:$0xff] %vm1165, %v903
          %1442 = vst.msk [vmem:[#allocation3 + $0x58] sm:$0xff] %vm1165, %v904
          %1443 = vst.msk [vmem:[#allocation3 + $0x60] sm:$0xff] %vm1165, %v905
          %1444 = vst.msk [vmem:[#allocation3 + $0x68] sm:$0xff] %vm1165, %v906
          %1445 = vst.msk [vmem:[#allocation3 + $0x70] sm:$0xff] %vm1165, %v907
          %1446 = vst.msk [vmem:[#allocation3 + $0x78] sm:$0xff] %vm1165, %v908
          %v1447 = vld [vmem:[#allocation2] sm:$0xff]
          %v1448 = vld [vmem:[#allocation2 + $0x10] sm:$0xff]
          %v1449 = vld [vmem:[#allocation2 + $0x20] sm:$0xff]
          %v1450 = vld [vmem:[#allocation2 + $0x30] sm:$0xff]
          %v1451 = vld [vmem:[#allocation2 + $0x40] sm:$0xff]
          %v1452 = vld [vmem:[#allocation2 + $0x50] sm:$0xff]
          %v1453 = vld [vmem:[#allocation2 + $0x60] sm:$0xff]
          %v1454 = vld [vmem:[#allocation2 + $0x70] sm:$0xff]
          %v1455 = vld [vmem:[%s274] sm:$0xff]
          %v1456 = vld [vmem:[%s274 + $0x10] sm:$0xff]
          %v1457 = vld [vmem:[%s274 + $0x20] sm:$0xff]
          %v1458 = vld [vmem:[%s274 + $0x30] sm:$0xff]
          %v1459 = vld [vmem:[%s274 + $0x40] sm:$0xff]
          %v1460 = vld [vmem:[%s274 + $0x50] sm:$0xff]
          %v1461 = vld [vmem:[%s274 + $0x60] sm:$0xff]
          %v1462 = vld [vmem:[%s274 + $0x70] sm:$0xff]
          %v1463 = vld [vmem:[%s274 + $0x80] sm:$0xff]
          %v1464 = vld [vmem:[%s274 + $0x90] sm:$0xff]
          %v1465 = vld [vmem:[%s274 + $0xa0] sm:$0xff]
          %v1466 = vld [vmem:[%s274 + $0xb0] sm:$0xff]
          %v1467 = vld [vmem:[%s274 + $0xc0] sm:$0xff]
          %v1468 = vld [vmem:[%s274 + $0xd0] sm:$0xff]
          %v1469 = vld [vmem:[%s274 + $0xe0] sm:$0xff]
          %v1470 = vld [vmem:[%s274 + $0xf0] sm:$0xff]
          %v1471 = vpack.c.bf16 %v1456, %v1455
          %v1472 = vpack.c.bf16 %v1458, %v1457
          %v1473 = vpack.c.bf16 %v1460, %v1459
          %v1474 = vpack.c.bf16 %v1462, %v1461
          %v1475 = vpack.c.bf16 %v1464, %v1463
          %v1476 = vpack.c.bf16 %v1466, %v1465
          %v1477 = vpack.c.bf16 %v1468, %v1467
          %v1478 = vpack.c.bf16 %v1470, %v1469
          %v1479 = vld [vmem:[%s283] sm:$0xff]
          %v1480 = vld [vmem:[%s283 + $0x10] sm:$0xff]
          %v1481 = vld [vmem:[%s283 + $0x20] sm:$0xff]
          %v1482 = vld [vmem:[%s283 + $0x30] sm:$0xff]
          %v1483 = vld [vmem:[%s283 + $0x40] sm:$0xff]
          %v1484 = vld [vmem:[%s283 + $0x50] sm:$0xff]
          %v1485 = vld [vmem:[%s283 + $0x60] sm:$0xff]
          %v1486 = vld [vmem:[%s283 + $0x70] sm:$0xff]
          %v1487 = vld [vmem:[%s283 + $0x80] sm:$0xff]
          %v1488 = vld [vmem:[%s283 + $0x90] sm:$0xff]
          %v1489 = vld [vmem:[%s283 + $0xa0] sm:$0xff]
          %v1490 = vld [vmem:[%s283 + $0xb0] sm:$0xff]
          %v1491 = vld [vmem:[%s283 + $0xc0] sm:$0xff]
          %v1492 = vld [vmem:[%s283 + $0xd0] sm:$0xff]
          %v1493 = vld [vmem:[%s283 + $0xe0] sm:$0xff]
          %v1494 = vld [vmem:[%s283 + $0xf0] sm:$0xff]
          %v1495 = vpack.c.bf16 %v1480, %v1479
          %v1496 = vpack.c.bf16 %v1482, %v1481
          %v1497 = vpack.c.bf16 %v1484, %v1483
          %v1498 = vpack.c.bf16 %v1486, %v1485
          %v1499 = vpack.c.bf16 %v1488, %v1487
          %v1500 = vpack.c.bf16 %v1490, %v1489
          %v1501 = vpack.c.bf16 %v1492, %v1491
          %v1502 = vpack.c.bf16 %v1494, %v1493
          %1511 = vrot.lane.b32.xlu0 %v1447, 64
          %v1512 = vpop.permute.xlu0 %1511
          %1513 = vrot.lane.b32.xlu0 %v1448, 64
          %v1514 = vpop.permute.xlu0 %1513
          %1515 = vrot.lane.b32.xlu0 %v1449, 64
          %v1516 = vpop.permute.xlu0 %1515
          %1517 = vrot.lane.b32.xlu0 %v1450, 64
          %v1518 = vpop.permute.xlu0 %1517
          %1519 = vrot.lane.b32.xlu0 %v1451, 64
          %v1520 = vpop.permute.xlu0 %1519
          %1521 = vrot.lane.b32.xlu0 %v1452, 64
          %v1522 = vpop.permute.xlu0 %1521
          %1523 = vrot.lane.b32.xlu0 %v1453, 64
          %v1524 = vpop.permute.xlu0 %1523
          %1525 = vrot.lane.b32.xlu0 %v1454, 64
          %v1526 = vpop.permute.xlu0 %1525
          %1535 = vrot.lane.b32.xlu0 %v1471, 64
          %v1536 = vpop.permute.xlu0 %1535
          %1537 = vrot.lane.b32.xlu0 %v1472, 64
          %v1538 = vpop.permute.xlu0 %1537
          %1539 = vrot.lane.b32.xlu0 %v1473, 64
          %v1540 = vpop.permute.xlu0 %1539
          %1541 = vrot.lane.b32.xlu0 %v1474, 64
          %v1542 = vpop.permute.xlu0 %1541
          %1543 = vrot.lane.b32.xlu0 %v1475, 64
          %v1544 = vpop.permute.xlu0 %1543
          %1545 = vrot.lane.b32.xlu0 %v1476, 64
          %v1546 = vpop.permute.xlu0 %1545
          %1547 = vrot.lane.b32.xlu0 %v1477, 64
          %v1548 = vpop.permute.xlu0 %1547
          %1549 = vrot.lane.b32.xlu0 %v1478, 64
          %v1550 = vpop.permute.xlu0 %1549
          %v1552 = vsel %vm683, %v1512, 0
          %v1555 = vsel %vm683, %v1514, 0
          %v1558 = vsel %vm683, %v1516, 0
          %v1561 = vsel %vm683, %v1518, 0
          %v1564 = vsel %vm683, %v1520, 0
          %v1567 = vsel %vm683, %v1522, 0
          %v1570 = vsel %vm683, %v1524, 0
          %v1573 = vsel %vm683, %v1526, 0
          %v1576 = vsel %vm683, %v1536, 0
          %v1579 = vsel %vm683, %v1538, 0
          %v1582 = vsel %vm683, %v1540, 0
          %v1585 = vsel %vm683, %v1542, 0
          %v1588 = vsel %vm683, %v1544, 0
          %v1591 = vsel %vm683, %v1546, 0
          %v1594 = vsel %vm683, %v1548, 0
          %v1597 = vsel %vm683, %v1550, 0
          %1599 = vmatprep.subr.bf16.mxu0 0
          %1600 = vmatpush1.bf16.xpose.msra.mxu0 %v1576
          %1601 = vmatprep.subr.bf16.mxu0 0
          %1602 = vmatpush1.bf16.xpose.msra.mxu0 %v1579
          %1603 = vmatprep.subr.bf16.mxu0 0
          %1604 = vmatpush1.bf16.xpose.msra.mxu0 %v1582
          %1605 = vmatprep.subr.bf16.mxu0 0
          %1606 = vmatpush1.bf16.xpose.msra.mxu0 %v1585
          %1607 = vmatprep.subr.bf16.mxu0 0
          %1608 = vmatpush1.bf16.xpose.msra.mxu0 %v1588
          %1609 = vmatprep.subr.bf16.mxu0 0
          %1610 = vmatpush1.bf16.xpose.msra.mxu0 %v1591
          %1611 = vmatprep.subr.bf16.mxu0 0
          %1612 = vmatpush1.bf16.xpose.msra.mxu0 %v1594
          %1613 = vmatprep.subr.bf16.mxu0 0
          %1614 = vmatpush1.bf16.xpose.msra.mxu0 %v1597
          %1615 = vmatprep.subr.bf16.mxu0 0
          %1616 = vmatpush1.bf16.xpose.msra.mxu0 0
          %1617 = vmatprep.subr.bf16.mxu0 0
          %1618 = vmatpush1.bf16.xpose.msra.mxu0 0
          %1619 = vmatprep.subr.bf16.mxu0 0
          %1620 = vmatpush1.bf16.xpose.msra.mxu0 0
          %1621 = vmatprep.subr.bf16.mxu0 0
          %1622 = vmatpush1.bf16.xpose.msra.mxu0 0
          %1623 = vmatprep.subr.bf16.mxu0 0
          %1624 = vmatpush1.bf16.xpose.msra.mxu0 0
          %1625 = vmatprep.subr.bf16.mxu0 0
          %1626 = vmatpush1.bf16.xpose.msra.mxu0 0
          %1627 = vmatprep.subr.bf16.mxu0 0
          %1628 = vmatpush1.bf16.xpose.msra.mxu0 0
          %1629 = vmatprep.subr.bf16.mxu0 0
          %1630 = vmatpush1.bf16.xpose.msra.mxu0 0
          %1631 = vmatprep.mubr.bf16.mxu0 0
          %1632 = vmatmul.mubr.bf16.gmra.mrb[0].mxu0 %v1552
          %v1633 = vpop.f32.mrb[0].mxu0
          %v1634 = vadd.f32 0.0, %v1633
          %v1635 = vpop.f32.mrb[0].mxu0
          %v1636 = vpop.f32.mrb[0].mxu0
          %v1637 = vadd.f32 0.0, %v1636
          %v1638 = vpop.f32.mrb[0].mxu0
          %1639 = vmatprep.mubr.bf16.mxu0 0
          %1640 = vmatmul.mubr.bf16.gmra.mrb[0].mxu0 %v1555
          %v1641 = vpop.f32.mrb[0].mxu0
          %v1642 = vadd.f32 0.0, %v1641
          %v1643 = vpop.f32.mrb[0].mxu0
          %v1644 = vpop.f32.mrb[0].mxu0
          %v1645 = vadd.f32 0.0, %v1644
          %v1646 = vpop.f32.mrb[0].mxu0
          %1647 = vmatprep.mubr.bf16.mxu0 0
          %1648 = vmatmul.mubr.bf16.gmra.mrb[0].mxu0 %v1558
          %v1649 = vpop.f32.mrb[0].mxu0
          %v1650 = vadd.f32 0.0, %v1649
          %v1651 = vpop.f32.mrb[0].mxu0
          %v1652 = vpop.f32.mrb[0].mxu0
          %v1653 = vadd.f32 0.0, %v1652
          %v1654 = vpop.f32.mrb[0].mxu0
          %1655 = vmatprep.mubr.bf16.mxu0 0
          %1656 = vmatmul.mubr.bf16.gmra.mrb[0].mxu0 %v1561
          %v1657 = vpop.f32.mrb[0].mxu0
          %v1658 = vadd.f32 0.0, %v1657
          %v1659 = vpop.f32.mrb[0].mxu0
          %v1660 = vpop.f32.mrb[0].mxu0
          %v1661 = vadd.f32 0.0, %v1660
          %v1662 = vpop.f32.mrb[0].mxu0
          %1663 = vmatprep.mubr.bf16.mxu0 0
          %1664 = vmatmul.mubr.bf16.gmra.mrb[0].mxu0 %v1564
          %v1665 = vpop.f32.mrb[0].mxu0
          %v1666 = vadd.f32 0.0, %v1665
          %v1667 = vpop.f32.mrb[0].mxu0
          %v1668 = vpop.f32.mrb[0].mxu0
          %v1669 = vadd.f32 0.0, %v1668
          %v1670 = vpop.f32.mrb[0].mxu0
          %1671 = vmatprep.mubr.bf16.mxu0 0
          %1672 = vmatmul.mubr.bf16.gmra.mrb[0].mxu0 %v1567
          %v1673 = vpop.f32.mrb[0].mxu0
          %v1674 = vadd.f32 0.0, %v1673
          %v1675 = vpop.f32.mrb[0].mxu0
          %v1676 = vpop.f32.mrb[0].mxu0
          %v1677 = vadd.f32 0.0, %v1676
          %v1678 = vpop.f32.mrb[0].mxu0
          %1679 = vmatprep.mubr.bf16.mxu0 0
          %1680 = vmatmul.mubr.bf16.gmra.mrb[0].mxu0 %v1570
          %v1681 = vpop.f32.mrb[0].mxu0
          %v1682 = vadd.f32 0.0, %v1681
          %v1683 = vpop.f32.mrb[0].mxu0
          %v1684 = vpop.f32.mrb[0].mxu0
          %v1685 = vadd.f32 0.0, %v1684
          %v1686 = vpop.f32.mrb[0].mxu0
          %1687 = vmatprep.mubr.bf16.mxu0 0
          %1688 = vmatmul.mubr.bf16.gmra.mrb[0].mxu0 %v1573
          %v1689 = vpop.f32.mrb[0].mxu0
          %v1690 = vadd.f32 0.0, %v1689
          %v1691 = vpop.f32.mrb[0].mxu0
          %v1692 = vpop.f32.mrb[0].mxu0
          %v1693 = vadd.f32 0.0, %v1692
          %v1694 = vpop.f32.mrb[0].mxu0
          %1695 = vdwg.mxu0
          %v1696 = vsel %vm611, -1e+30, %v1634
          %v1697 = vsel %vm612, -1e+30, %v1637
          %v1698 = vsel %vm613, -1e+30, %v1642
          %v1699 = vsel %vm614, -1e+30, %v1645
          %v1700 = vsel %vm615, -1e+30, %v1650
          %v1701 = vsel %vm616, -1e+30, %v1653
          %v1702 = vsel %vm617, -1e+30, %v1658
          %v1703 = vsel %vm618, -1e+30, %v1661
          %v1704 = vsel %vm619, -1e+30, %v1666
          %v1705 = vsel %vm620, -1e+30, %v1669
          %v1706 = vsel %vm621, -1e+30, %v1674
          %v1707 = vsel %vm622, -1e+30, %v1677
          %v1708 = vsel %vm623, -1e+30, %v1682
          %v1709 = vsel %vm624, -1e+30, %v1685
          %v1710 = vsel %vm625, -1e+30, %v1690
          %v1711 = vsel %vm626, -1e+30, %v1693
          %s1712 = scalar_lea.vmem [#allocation3], 128
          %v1713 = vld [vmem:[%s1712] sm:$0xff]
          %v1714 = vld [vmem:[%s1712 + $0x8] sm:$0xff]
          %v1715 = vld [vmem:[%s1712 + $0x10] sm:$0xff]
          %v1716 = vld [vmem:[%s1712 + $0x18] sm:$0xff]
          %v1717 = vld [vmem:[%s1712 + $0x20] sm:$0xff]
          %v1718 = vld [vmem:[%s1712 + $0x28] sm:$0xff]
          %v1719 = vld [vmem:[%s1712 + $0x30] sm:$0xff]
          %v1720 = vld [vmem:[%s1712 + $0x38] sm:$0xff]
          %v1721 = vld [vmem:[%s1712 + $0x40] sm:$0xff]
          %v1722 = vld [vmem:[%s1712 + $0x48] sm:$0xff]
          %v1723 = vld [vmem:[%s1712 + $0x50] sm:$0xff]
          %v1724 = vld [vmem:[%s1712 + $0x58] sm:$0xff]
          %v1725 = vld [vmem:[%s1712 + $0x60] sm:$0xff]
          %v1726 = vld [vmem:[%s1712 + $0x68] sm:$0xff]
          %v1727 = vld [vmem:[%s1712 + $0x70] sm:$0xff]
          %v1728 = vld [vmem:[%s1712 + $0x78] sm:$0xff]
          %1729 = vmax.xlane.f32.xlu0 %v1696
          %v1730 = vpop.xlane.xlu0 %1729
          %1731 = vmax.xlane.f32.xlu0 %v1697
          %v1732 = vpop.xlane.xlu0 %1731
          %1733 = vmax.xlane.f32.xlu0 %v1698
          %v1734 = vpop.xlane.xlu0 %1733
          %1735 = vmax.xlane.f32.xlu0 %v1699
          %v1736 = vpop.xlane.xlu0 %1735
          %1737 = vmax.xlane.f32.xlu0 %v1700
          %v1738 = vpop.xlane.xlu0 %1737
          %1739 = vmax.xlane.f32.xlu0 %v1701
          %v1740 = vpop.xlane.xlu0 %1739
          %1741 = vmax.xlane.f32.xlu0 %v1702
          %v1742 = vpop.xlane.xlu0 %1741
          %1743 = vmax.xlane.f32.xlu0 %v1703
          %v1744 = vpop.xlane.xlu0 %1743
          %1745 = vmax.xlane.f32.xlu0 %v1704
          %v1746 = vpop.xlane.xlu0 %1745
          %1747 = vmax.xlane.f32.xlu0 %v1705
          %v1748 = vpop.xlane.xlu0 %1747
          %1749 = vmax.xlane.f32.xlu0 %v1706
          %v1750 = vpop.xlane.xlu0 %1749
          %1751 = vmax.xlane.f32.xlu0 %v1707
          %v1752 = vpop.xlane.xlu0 %1751
          %1753 = vmax.xlane.f32.xlu0 %v1708
          %v1754 = vpop.xlane.xlu0 %1753
          %1755 = vmax.xlane.f32.xlu0 %v1709
          %v1756 = vpop.xlane.xlu0 %1755
          %1757 = vmax.xlane.f32.xlu0 %v1710
          %v1758 = vpop.xlane.xlu0 %1757
          %1759 = vmax.xlane.f32.xlu0 %v1711
          %v1760 = vpop.xlane.xlu0 %1759
          %v1761 = vmax.f32 %v1713, %v1730
          %v1762 = vmax.f32 %v1714, %v1732
          %v1763 = vmax.f32 %v1715, %v1734
          %v1764 = vmax.f32 %v1716, %v1736
          %v1765 = vmax.f32 %v1717, %v1738
          %v1766 = vmax.f32 %v1718, %v1740
          %v1767 = vmax.f32 %v1719, %v1742
          %v1768 = vmax.f32 %v1720, %v1744
          %v1769 = vmax.f32 %v1721, %v1746
          %v1770 = vmax.f32 %v1722, %v1748
          %v1771 = vmax.f32 %v1723, %v1750
          %v1772 = vmax.f32 %v1724, %v1752
          %v1773 = vmax.f32 %v1725, %v1754
          %v1774 = vmax.f32 %v1726, %v1756
          %v1775 = vmax.f32 %v1727, %v1758
          %v1776 = vmax.f32 %v1728, %v1760
          %v1777 = vsub.f32 %v1713, %v1761
          %v1778 = vsub.f32 %v1714, %v1762
          %v1779 = vsub.f32 %v1715, %v1763
          %v1780 = vsub.f32 %v1716, %v1764
          %v1781 = vsub.f32 %v1717, %v1765
          %v1782 = vsub.f32 %v1718, %v1766
          %v1783 = vsub.f32 %v1719, %v1767
          %v1784 = vsub.f32 %v1720, %v1768
          %v1785 = vsub.f32 %v1721, %v1769
          %v1786 = vsub.f32 %v1722, %v1770
          %v1787 = vsub.f32 %v1723, %v1771
          %v1788 = vsub.f32 %v1724, %v1772
          %v1789 = vsub.f32 %v1725, %v1773
          %v1790 = vsub.f32 %v1726, %v1774
          %v1791 = vsub.f32 %v1727, %v1775
          %v1792 = vsub.f32 %v1728, %v1776
          %v1793 = vmul.f32 %v1777, 1.442695
          %v1794 = vpow.pop %v1793
          %v1795 = vmul.f32 %v1778, 1.442695
          %v1796 = vpow.pop %v1795
          %v1797 = vmul.f32 %v1779, 1.442695
          %v1798 = vpow.pop %v1797
          %v1799 = vmul.f32 %v1780, 1.442695
          %v1800 = vpow.pop %v1799
          %v1801 = vmul.f32 %v1781, 1.442695
          %v1802 = vpow.pop %v1801
          %v1803 = vmul.f32 %v1782, 1.442695
          %v1804 = vpow.pop %v1803
          %v1805 = vmul.f32 %v1783, 1.442695
          %v1806 = vpow.pop %v1805
          %v1807 = vmul.f32 %v1784, 1.442695
          %v1808 = vpow.pop %v1807
          %v1809 = vmul.f32 %v1785, 1.442695
          %v1810 = vpow.pop %v1809
          %v1811 = vmul.f32 %v1786, 1.442695
          %v1812 = vpow.pop %v1811
          %v1813 = vmul.f32 %v1787, 1.442695
          %v1814 = vpow.pop %v1813
          %v1815 = vmul.f32 %v1788, 1.442695
          %v1816 = vpow.pop %v1815
          %v1817 = vmul.f32 %v1789, 1.442695
          %v1818 = vpow.pop %v1817
          %v1819 = vmul.f32 %v1790, 1.442695
          %v1820 = vpow.pop %v1819
          %v1821 = vmul.f32 %v1791, 1.442695
          %v1822 = vpow.pop %v1821
          %v1823 = vmul.f32 %v1792, 1.442695
          %v1824 = vpow.pop %v1823
          %1826 = vset.pattern.permute.xlu0 0
          %1827 = vperm.xlu0 %1826, %v1761
          %v1828 = vpop.permute.xlu0 %1827
          %1831 = vset.pattern.permute.xlu0 0
          %1832 = vperm.xlu0 %1831, %v1762
          %v1833 = vpop.permute.xlu0 %1832
          %1836 = vset.pattern.permute.xlu0 0
          %1837 = vperm.xlu0 %1836, %v1763
          %v1838 = vpop.permute.xlu0 %1837
          %1841 = vset.pattern.permute.xlu0 0
          %1842 = vperm.xlu0 %1841, %v1764
          %v1843 = vpop.permute.xlu0 %1842
          %1846 = vset.pattern.permute.xlu0 0
          %1847 = vperm.xlu0 %1846, %v1765
          %v1848 = vpop.permute.xlu0 %1847
          %1851 = vset.pattern.permute.xlu0 0
          %1852 = vperm.xlu0 %1851, %v1766
          %v1853 = vpop.permute.xlu0 %1852
          %1856 = vset.pattern.permute.xlu0 0
          %1857 = vperm.xlu0 %1856, %v1767
          %v1858 = vpop.permute.xlu0 %1857
          %1861 = vset.pattern.permute.xlu0 0
          %1862 = vperm.xlu0 %1861, %v1768
          %v1863 = vpop.permute.xlu0 %1862
          %1866 = vset.pattern.permute.xlu0 0
          %1867 = vperm.xlu0 %1866, %v1769
          %v1868 = vpop.permute.xlu0 %1867
          %1871 = vset.pattern.permute.xlu0 0
          %1872 = vperm.xlu0 %1871, %v1770
          %v1873 = vpop.permute.xlu0 %1872
          %1876 = vset.pattern.permute.xlu0 0
          %1877 = vperm.xlu0 %1876, %v1771
          %v1878 = vpop.permute.xlu0 %1877
          %1881 = vset.pattern.permute.xlu0 0
          %1882 = vperm.xlu0 %1881, %v1772
          %v1883 = vpop.permute.xlu0 %1882
          %1886 = vset.pattern.permute.xlu0 0
          %1887 = vperm.xlu0 %1886, %v1773
          %v1888 = vpop.permute.xlu0 %1887
          %1891 = vset.pattern.permute.xlu0 0
          %1892 = vperm.xlu0 %1891, %v1774
          %v1893 = vpop.permute.xlu0 %1892
          %1896 = vset.pattern.permute.xlu0 0
          %1897 = vperm.xlu0 %1896, %v1775
          %v1898 = vpop.permute.xlu0 %1897
          %1901 = vset.pattern.permute.xlu0 0
          %1902 = vperm.xlu0 %1901, %v1776
          %v1903 = vpop.permute.xlu0 %1902
          %v1905 = vsub.f32 %v1696, %v1828
          %v1906 = vsub.f32 %v1697, %v1833
          %v1907 = vsub.f32 %v1698, %v1838
          %v1908 = vsub.f32 %v1699, %v1843
          %v1909 = vsub.f32 %v1700, %v1848
          %v1910 = vsub.f32 %v1701, %v1853
          %v1911 = vsub.f32 %v1702, %v1858
          %v1912 = vsub.f32 %v1703, %v1863
          %v1913 = vsub.f32 %v1704, %v1868
          %v1914 = vsub.f32 %v1705, %v1873
          %v1915 = vsub.f32 %v1706, %v1878
          %v1916 = vsub.f32 %v1707, %v1883
          %v1917 = vsub.f32 %v1708, %v1888
          %v1918 = vsub.f32 %v1709, %v1893
          %v1919 = vsub.f32 %v1710, %v1898
          %v1920 = vsub.f32 %v1711, %v1903
          %v1921 = vmul.f32 %v1905, 1.442695
          %v1922 = vpow.pop %v1921
          %v1923 = vmul.f32 %v1906, 1.442695
          %v1924 = vpow.pop %v1923
          %v1925 = vmul.f32 %v1907, 1.442695
          %v1926 = vpow.pop %v1925
          %v1927 = vmul.f32 %v1908, 1.442695
          %v1928 = vpow.pop %v1927
          %v1929 = vmul.f32 %v1909, 1.442695
          %v1930 = vpow.pop %v1929
          %v1931 = vmul.f32 %v1910, 1.442695
          %v1932 = vpow.pop %v1931
          %v1933 = vmul.f32 %v1911, 1.442695
          %v1934 = vpow.pop %v1933
          %v1935 = vmul.f32 %v1912, 1.442695
          %v1936 = vpow.pop %v1935
          %v1937 = vmul.f32 %v1913, 1.442695
          %v1938 = vpow.pop %v1937
          %v1939 = vmul.f32 %v1914, 1.442695
          %v1940 = vpow.pop %v1939
          %v1941 = vmul.f32 %v1915, 1.442695
          %v1942 = vpow.pop %v1941
          %v1943 = vmul.f32 %v1916, 1.442695
          %v1944 = vpow.pop %v1943
          %v1945 = vmul.f32 %v1917, 1.442695
          %v1946 = vpow.pop %v1945
          %v1947 = vmul.f32 %v1918, 1.442695
          %v1948 = vpow.pop %v1947
          %v1949 = vmul.f32 %v1919, 1.442695
          %v1950 = vpow.pop %v1949
          %v1951 = vmul.f32 %v1920, 1.442695
          %v1952 = vpow.pop %v1951
          %s1953 = scalar_lea.vmem [#allocation4], 128
          %v1954 = vld [vmem:[%s1953] sm:$0xff]
          %v1955 = vld [vmem:[%s1953 + $0x8] sm:$0xff]
          %v1956 = vld [vmem:[%s1953 + $0x10] sm:$0xff]
          %v1957 = vld [vmem:[%s1953 + $0x18] sm:$0xff]
          %v1958 = vld [vmem:[%s1953 + $0x20] sm:$0xff]
          %v1959 = vld [vmem:[%s1953 + $0x28] sm:$0xff]
          %v1960 = vld [vmem:[%s1953 + $0x30] sm:$0xff]
          %v1961 = vld [vmem:[%s1953 + $0x38] sm:$0xff]
          %v1962 = vld [vmem:[%s1953 + $0x40] sm:$0xff]
          %v1963 = vld [vmem:[%s1953 + $0x48] sm:$0xff]
          %v1964 = vld [vmem:[%s1953 + $0x50] sm:$0xff]
          %v1965 = vld [vmem:[%s1953 + $0x58] sm:$0xff]
          %v1966 = vld [vmem:[%s1953 + $0x60] sm:$0xff]
          %v1967 = vld [vmem:[%s1953 + $0x68] sm:$0xff]
          %v1968 = vld [vmem:[%s1953 + $0x70] sm:$0xff]
          %v1969 = vld [vmem:[%s1953 + $0x78] sm:$0xff]
          %v1970 = vmul.f32 %v1794, %v1954
          %v1971 = vmul.f32 %v1796, %v1955
          %v1972 = vmul.f32 %v1798, %v1956
          %v1973 = vmul.f32 %v1800, %v1957
          %v1974 = vmul.f32 %v1802, %v1958
          %v1975 = vmul.f32 %v1804, %v1959
          %v1976 = vmul.f32 %v1806, %v1960
          %v1977 = vmul.f32 %v1808, %v1961
          %v1978 = vmul.f32 %v1810, %v1962
          %v1979 = vmul.f32 %v1812, %v1963
          %v1980 = vmul.f32 %v1814, %v1964
          %v1981 = vmul.f32 %v1816, %v1965
          %v1982 = vmul.f32 %v1818, %v1966
          %v1983 = vmul.f32 %v1820, %v1967
          %v1984 = vmul.f32 %v1822, %v1968
          %v1985 = vmul.f32 %v1824, %v1969
          %1986 = vadd.xlane.f32.xlu0 %v1922
          %v1987 = vpop.xlane.xlu0 %1986
          %1988 = vadd.xlane.f32.xlu0 %v1924
          %v1989 = vpop.xlane.xlu0 %1988
          %1990 = vadd.xlane.f32.xlu0 %v1926
          %v1991 = vpop.xlane.xlu0 %1990
          %1992 = vadd.xlane.f32.xlu0 %v1928
          %v1993 = vpop.xlane.xlu0 %1992
          %1994 = vadd.xlane.f32.xlu0 %v1930
          %v1995 = vpop.xlane.xlu0 %1994
          %1996 = vadd.xlane.f32.xlu0 %v1932
          %v1997 = vpop.xlane.xlu0 %1996
          %1998 = vadd.xlane.f32.xlu0 %v1934
          %v1999 = vpop.xlane.xlu0 %1998
          %2000 = vadd.xlane.f32.xlu0 %v1936
          %v2001 = vpop.xlane.xlu0 %2000
          %2002 = vadd.xlane.f32.xlu0 %v1938
          %v2003 = vpop.xlane.xlu0 %2002
          %2004 = vadd.xlane.f32.xlu0 %v1940
          %v2005 = vpop.xlane.xlu0 %2004
          %2006 = vadd.xlane.f32.xlu0 %v1942
          %v2007 = vpop.xlane.xlu0 %2006
          %2008 = vadd.xlane.f32.xlu0 %v1944
          %v2009 = vpop.xlane.xlu0 %2008
          %2010 = vadd.xlane.f32.xlu0 %v1946
          %v2011 = vpop.xlane.xlu0 %2010
          %2012 = vadd.xlane.f32.xlu0 %v1948
          %v2013 = vpop.xlane.xlu0 %2012
          %2014 = vadd.xlane.f32.xlu0 %v1950
          %v2015 = vpop.xlane.xlu0 %2014
          %2016 = vadd.xlane.f32.xlu0 %v1952
          %v2017 = vpop.xlane.xlu0 %2016
          %v2018 = vadd.f32 %v1970, %v1987
          %v2019 = vadd.f32 %v1971, %v1989
          %v2020 = vadd.f32 %v1972, %v1991
          %v2021 = vadd.f32 %v1973, %v1993
          %v2022 = vadd.f32 %v1974, %v1995
          %v2023 = vadd.f32 %v1975, %v1997
          %v2024 = vadd.f32 %v1976, %v1999
          %v2025 = vadd.f32 %v1977, %v2001
          %v2026 = vadd.f32 %v1978, %v2003
          %v2027 = vadd.f32 %v1979, %v2005
          %v2028 = vadd.f32 %v1980, %v2007
          %v2029 = vadd.f32 %v1981, %v2009
          %v2030 = vadd.f32 %v1982, %v2011
          %v2031 = vadd.f32 %v1983, %v2013
          %v2032 = vadd.f32 %v1984, %v2015
          %v2033 = vadd.f32 %v1985, %v2017
          %2034 = vst.msk [vmem:[%s1953] sm:$0xff] %vm1165, %v2018
          %2035 = vst.msk [vmem:[%s1953 + $0x8] sm:$0xff] %vm1165, %v2019
          %2036 = vst.msk [vmem:[%s1953 + $0x10] sm:$0xff] %vm1165, %v2020
          %2037 = vst.msk [vmem:[%s1953 + $0x18] sm:$0xff] %vm1165, %v2021
          %2038 = vst.msk [vmem:[%s1953 + $0x20] sm:$0xff] %vm1165, %v2022
          %2039 = vst.msk [vmem:[%s1953 + $0x28] sm:$0xff] %vm1165, %v2023
          %2040 = vst.msk [vmem:[%s1953 + $0x30] sm:$0xff] %vm1165, %v2024
          %2041 = vst.msk [vmem:[%s1953 + $0x38] sm:$0xff] %vm1165, %v2025
          %2042 = vst.msk [vmem:[%s1953 + $0x40] sm:$0xff] %vm1165, %v2026
          %2043 = vst.msk [vmem:[%s1953 + $0x48] sm:$0xff] %vm1165, %v2027
          %2044 = vst.msk [vmem:[%s1953 + $0x50] sm:$0xff] %vm1165, %v2028
          %2045 = vst.msk [vmem:[%s1953 + $0x58] sm:$0xff] %vm1165, %v2029
          %2046 = vst.msk [vmem:[%s1953 + $0x60] sm:$0xff] %vm1165, %v2030
          %2047 = vst.msk [vmem:[%s1953 + $0x68] sm:$0xff] %vm1165, %v2031
          %2048 = vst.msk [vmem:[%s1953 + $0x70] sm:$0xff] %vm1165, %v2032
          %2049 = vst.msk [vmem:[%s1953 + $0x78] sm:$0xff] %vm1165, %v2033
          %v2050 = vld [vmem:[#allocation5] sm:$0xff]
          %v2051 = vld [vmem:[#allocation5 + $0x10] sm:$0xff]
          %v2052 = vld [vmem:[#allocation5 + $0x20] sm:$0xff]
          %v2053 = vld [vmem:[#allocation5 + $0x30] sm:$0xff]
          %v2054 = vld [vmem:[#allocation5 + $0x40] sm:$0xff]
          %v2055 = vld [vmem:[#allocation5 + $0x50] sm:$0xff]
          %v2056 = vld [vmem:[#allocation5 + $0x60] sm:$0xff]
          %v2057 = vld [vmem:[#allocation5 + $0x70] sm:$0xff]
          %v2058 = vld [vmem:[#allocation5 + $0x80] sm:$0xff]
          %v2059 = vld [vmem:[#allocation5 + $0x90] sm:$0xff]
          %v2060 = vld [vmem:[#allocation5 + $0xa0] sm:$0xff]
          %v2061 = vld [vmem:[#allocation5 + $0xb0] sm:$0xff]
          %v2062 = vld [vmem:[#allocation5 + $0xc0] sm:$0xff]
          %v2063 = vld [vmem:[#allocation5 + $0xd0] sm:$0xff]
          %v2064 = vld [vmem:[#allocation5 + $0xe0] sm:$0xff]
          %v2065 = vld [vmem:[#allocation5 + $0xf0] sm:$0xff]
          %2067 = vset.pattern.permute.xlu0 0
          %2068 = vperm.xlu0 %2067, %v1794
          %v2069 = vpop.permute.xlu0 %2068
          %2072 = vset.pattern.permute.xlu0 0
          %2073 = vperm.xlu0 %2072, %v1796
          %v2074 = vpop.permute.xlu0 %2073
          %2077 = vset.pattern.permute.xlu0 0
          %2078 = vperm.xlu0 %2077, %v1798
          %v2079 = vpop.permute.xlu0 %2078
          %2082 = vset.pattern.permute.xlu0 0
          %2083 = vperm.xlu0 %2082, %v1800
          %v2084 = vpop.permute.xlu0 %2083
          %2087 = vset.pattern.permute.xlu0 0
          %2088 = vperm.xlu0 %2087, %v1802
          %v2089 = vpop.permute.xlu0 %2088
          %2092 = vset.pattern.permute.xlu0 0
          %2093 = vperm.xlu0 %2092, %v1804
          %v2094 = vpop.permute.xlu0 %2093
          %2097 = vset.pattern.permute.xlu0 0
          %2098 = vperm.xlu0 %2097, %v1806
          %v2099 = vpop.permute.xlu0 %2098
          %2102 = vset.pattern.permute.xlu0 0
          %2103 = vperm.xlu0 %2102, %v1808
          %v2104 = vpop.permute.xlu0 %2103
          %2107 = vset.pattern.permute.xlu0 0
          %2108 = vperm.xlu0 %2107, %v1810
          %v2109 = vpop.permute.xlu0 %2108
          %2112 = vset.pattern.permute.xlu0 0
          %2113 = vperm.xlu0 %2112, %v1812
          %v2114 = vpop.permute.xlu0 %2113
          %2117 = vset.pattern.permute.xlu0 0
          %2118 = vperm.xlu0 %2117, %v1814
          %v2119 = vpop.permute.xlu0 %2118
          %2122 = vset.pattern.permute.xlu0 0
          %2123 = vperm.xlu0 %2122, %v1816
          %v2124 = vpop.permute.xlu0 %2123
          %2127 = vset.pattern.permute.xlu0 0
          %2128 = vperm.xlu0 %2127, %v1818
          %v2129 = vpop.permute.xlu0 %2128
          %2132 = vset.pattern.permute.xlu0 0
          %2133 = vperm.xlu0 %2132, %v1820
          %v2134 = vpop.permute.xlu0 %2133
          %2137 = vset.pattern.permute.xlu0 0
          %2138 = vperm.xlu0 %2137, %v1822
          %v2139 = vpop.permute.xlu0 %2138
          %2142 = vset.pattern.permute.xlu0 0
          %2143 = vperm.xlu0 %2142, %v1824
          %v2144 = vpop.permute.xlu0 %2143
          %v2146 = vmul.f32 %v2069, %v2050
          %v2147 = vmul.f32 %v2074, %v2051
          %v2148 = vmul.f32 %v2079, %v2052
          %v2149 = vmul.f32 %v2084, %v2053
          %v2150 = vmul.f32 %v2089, %v2054
          %v2151 = vmul.f32 %v2094, %v2055
          %v2152 = vmul.f32 %v2099, %v2056
          %v2153 = vmul.f32 %v2104, %v2057
          %v2154 = vmul.f32 %v2109, %v2058
          %v2155 = vmul.f32 %v2114, %v2059
          %v2156 = vmul.f32 %v2119, %v2060
          %v2157 = vmul.f32 %v2124, %v2061
          %v2158 = vmul.f32 %v2129, %v2062
          %v2159 = vmul.f32 %v2134, %v2063
          %v2160 = vmul.f32 %v2139, %v2064
          %v2161 = vmul.f32 %v2144, %v2065
          %v2162 = vpack.c.bf16 %v1924, %v1922
          %v2163 = vpack.c.bf16 %v1928, %v1926
          %v2164 = vpack.c.bf16 %v1932, %v1930
          %v2165 = vpack.c.bf16 %v1936, %v1934
          %v2166 = vpack.c.bf16 %v1940, %v1938
          %v2167 = vpack.c.bf16 %v1944, %v1942
          %v2168 = vpack.c.bf16 %v1948, %v1946
          %v2169 = vpack.c.bf16 %v1952, %v1950
          %2178 = vrot.lane.b32.xlu0 %v1495, 64
          %v2179 = vpop.permute.xlu0 %2178
          %2180 = vrot.lane.b32.xlu0 %v1496, 64
          %v2181 = vpop.permute.xlu0 %2180
          %2182 = vrot.lane.b32.xlu0 %v1497, 64
          %v2183 = vpop.permute.xlu0 %2182
          %2184 = vrot.lane.b32.xlu0 %v1498, 64
          %v2185 = vpop.permute.xlu0 %2184
          %2186 = vrot.lane.b32.xlu0 %v1499, 64
          %v2187 = vpop.permute.xlu0 %2186
          %2188 = vrot.lane.b32.xlu0 %v1500, 64
          %v2189 = vpop.permute.xlu0 %2188
          %2190 = vrot.lane.b32.xlu0 %v1501, 64
          %v2191 = vpop.permute.xlu0 %2190
          %2192 = vrot.lane.b32.xlu0 %v1502, 64
          %v2193 = vpop.permute.xlu0 %2192
          %2202 = vmatprep.subr.bf16.mxu0 0
          %2203 = vmatpush1.bf16.msra.mxu0 %v2179
          %2204 = vmatprep.subr.bf16.mxu0 0
          %2205 = vmatpush1.bf16.msra.mxu0 %v2181
          %2206 = vmatprep.subr.bf16.mxu0 0
          %2207 = vmatpush1.bf16.msra.mxu0 %v2183
          %2208 = vmatprep.subr.bf16.mxu0 0
          %2209 = vmatpush1.bf16.msra.mxu0 %v2185
          %2210 = vmatprep.subr.bf16.mxu0 0
          %2211 = vmatpush1.bf16.msra.mxu0 %v2187
          %2212 = vmatprep.subr.bf16.mxu0 0
          %2213 = vmatpush1.bf16.msra.mxu0 %v2189
          %2214 = vmatprep.subr.bf16.mxu0 0
          %2215 = vmatpush1.bf16.msra.mxu0 %v2191
          %2216 = vmatprep.subr.bf16.mxu0 0
          %2217 = vmatpush1.bf16.msra.mxu0 %v2193
          %2218 = vmatprep.subr.bf16.mxu0 0
          %2219 = vmatpush1.bf16.msra.mxu0 0
          %2220 = vmatprep.subr.bf16.mxu0 0
          %2221 = vmatpush1.bf16.msra.mxu0 0
          %2222 = vmatprep.subr.bf16.mxu0 0
          %2223 = vmatpush1.bf16.msra.mxu0 0
          %2224 = vmatprep.subr.bf16.mxu0 0
          %2225 = vmatpush1.bf16.msra.mxu0 0
          %2226 = vmatprep.subr.bf16.mxu0 0
          %2227 = vmatpush1.bf16.msra.mxu0 0
          %2228 = vmatprep.subr.bf16.mxu0 0
          %2229 = vmatpush1.bf16.msra.mxu0 0
          %2230 = vmatprep.subr.bf16.mxu0 0
          %2231 = vmatpush1.bf16.msra.mxu0 0
          %2232 = vmatprep.subr.bf16.mxu0 0
          %2233 = vmatpush1.bf16.msra.mxu0 0
          %2234 = vmatprep.mubr.bf16.mxu0 0
          %2235 = vmatmul.mubr.bf16.gmra.mrb[0].mxu0 %v2162
          %v2236 = vpop.f32.mrb[0].mxu0
          %v2237 = vadd.f32 0.0, %v2236
          %v2238 = vpop.f32.mrb[0].mxu0
          %v2239 = vpop.f32.mrb[0].mxu0
          %v2240 = vadd.f32 0.0, %v2239
          %v2241 = vpop.f32.mrb[0].mxu0
          %2242 = vmatprep.mubr.bf16.mxu0 0
          %2243 = vmatmul.mubr.bf16.gmra.mrb[0].mxu0 %v2163
          %v2244 = vpop.f32.mrb[0].mxu0
          %v2245 = vadd.f32 0.0, %v2244
          %v2246 = vpop.f32.mrb[0].mxu0
          %v2247 = vpop.f32.mrb[0].mxu0
          %v2248 = vadd.f32 0.0, %v2247
          %v2249 = vpop.f32.mrb[0].mxu0
          %2250 = vmatprep.mubr.bf16.mxu0 0
          %2251 = vmatmul.mubr.bf16.gmra.mrb[0].mxu0 %v2164
          %v2252 = vpop.f32.mrb[0].mxu0
          %v2253 = vadd.f32 0.0, %v2252
          %v2254 = vpop.f32.mrb[0].mxu0
          %v2255 = vpop.f32.mrb[0].mxu0
          %v2256 = vadd.f32 0.0, %v2255
          %v2257 = vpop.f32.mrb[0].mxu0
          %2258 = vmatprep.mubr.bf16.mxu0 0
          %2259 = vmatmul.mubr.bf16.gmra.mrb[0].mxu0 %v2165
          %v2260 = vpop.f32.mrb[0].mxu0
          %v2261 = vadd.f32 0.0, %v2260
          %v2262 = vpop.f32.mrb[0].mxu0
          %v2263 = vpop.f32.mrb[0].mxu0
          %v2264 = vadd.f32 0.0, %v2263
          %v2265 = vpop.f32.mrb[0].mxu0
          %2266 = vmatprep.mubr.bf16.mxu0 0
          %2267 = vmatmul.mubr.bf16.gmra.mrb[0].mxu0 %v2166
          %v2268 = vpop.f32.mrb[0].mxu0
          %v2269 = vadd.f32 0.0, %v2268
          %v2270 = vpop.f32.mrb[0].mxu0
          %v2271 = vpop.f32.mrb[0].mxu0
          %v2272 = vadd.f32 0.0, %v2271
          %v2273 = vpop.f32.mrb[0].mxu0
          %2274 = vmatprep.mubr.bf16.mxu0 0
          %2275 = vmatmul.mubr.bf16.gmra.mrb[0].mxu0 %v2167
          %v2276 = vpop.f32.mrb[0].mxu0
          %v2277 = vadd.f32 0.0, %v2276
          %v2278 = vpop.f32.mrb[0].mxu0
          %v2279 = vpop.f32.mrb[0].mxu0
          %v2280 = vadd.f32 0.0, %v2279
          %v2281 = vpop.f32.mrb[0].mxu0
          %2282 = vmatprep.mubr.bf16.mxu0 0
          %2283 = vmatmul.mubr.bf16.gmra.mrb[0].mxu0 %v2168
          %v2284 = vpop.f32.mrb[0].mxu0
          %v2285 = vadd.f32 0.0, %v2284
          %v2286 = vpop.f32.mrb[0].mxu0
          %v2287 = vpop.f32.mrb[0].mxu0
          %v2288 = vadd.f32 0.0, %v2287
          %v2289 = vpop.f32.mrb[0].mxu0
          %2290 = vmatprep.mubr.bf16.mxu0 0
          %2291 = vmatmul.mubr.bf16.gmra.mrb[0].mxu0 %v2169
          %v2292 = vpop.f32.mrb[0].mxu0
          %v2293 = vadd.f32 0.0, %v2292
          %v2294 = vpop.f32.mrb[0].mxu0
          %v2295 = vpop.f32.mrb[0].mxu0
          %v2296 = vadd.f32 0.0, %v2295
          %v2297 = vpop.f32.mrb[0].mxu0
          %2298 = vdwg.mxu0
          %2315 = vrot.lane.b32.xlu0 %v2237, 64
          %v2316 = vpop.permute.xlu0 %2315
          %2317 = vrot.lane.b32.xlu0 %v2240, 64
          %v2318 = vpop.permute.xlu0 %2317
          %2319 = vrot.lane.b32.xlu0 %v2245, 64
          %v2320 = vpop.permute.xlu0 %2319
          %2321 = vrot.lane.b32.xlu0 %v2248, 64
          %v2322 = vpop.permute.xlu0 %2321
          %2323 = vrot.lane.b32.xlu0 %v2253, 64
          %v2324 = vpop.permute.xlu0 %2323
          %2325 = vrot.lane.b32.xlu0 %v2256, 64
          %v2326 = vpop.permute.xlu0 %2325
          %2327 = vrot.lane.b32.xlu0 %v2261, 64
          %v2328 = vpop.permute.xlu0 %2327
          %2329 = vrot.lane.b32.xlu0 %v2264, 64
          %v2330 = vpop.permute.xlu0 %2329
          %2331 = vrot.lane.b32.xlu0 %v2269, 64
          %v2332 = vpop.permute.xlu0 %2331
          %2333 = vrot.lane.b32.xlu0 %v2272, 64
          %v2334 = vpop.permute.xlu0 %2333
          %2335 = vrot.lane.b32.xlu0 %v2277, 64
          %v2336 = vpop.permute.xlu0 %2335
          %2337 = vrot.lane.b32.xlu0 %v2280, 64
          %v2338 = vpop.permute.xlu0 %2337
          %2339 = vrot.lane.b32.xlu0 %v2285, 64
          %v2340 = vpop.permute.xlu0 %2339
          %2341 = vrot.lane.b32.xlu0 %v2288, 64
          %v2342 = vpop.permute.xlu0 %2341
          %2343 = vrot.lane.b32.xlu0 %v2293, 64
          %v2344 = vpop.permute.xlu0 %2343
          %2345 = vrot.lane.b32.xlu0 %v2296, 64
          %v2346 = vpop.permute.xlu0 %2345
          %v2363 = vadd.f32 %v2146, %v2316
          %v2364 = vadd.f32 %v2147, %v2318
          %v2365 = vadd.f32 %v2148, %v2320
          %v2366 = vadd.f32 %v2149, %v2322
          %v2367 = vadd.f32 %v2150, %v2324
          %v2368 = vadd.f32 %v2151, %v2326
          %v2369 = vadd.f32 %v2152, %v2328
          %v2370 = vadd.f32 %v2153, %v2330
          %v2371 = vadd.f32 %v2154, %v2332
          %v2372 = vadd.f32 %v2155, %v2334
          %v2373 = vadd.f32 %v2156, %v2336
          %v2374 = vadd.f32 %v2157, %v2338
          %v2375 = vadd.f32 %v2158, %v2340
          %v2376 = vadd.f32 %v2159, %v2342
          %v2377 = vadd.f32 %v2160, %v2344
          %v2378 = vadd.f32 %v2161, %v2346
          %vm2379 = vcmask 1048064
          %2380 = vst.msk [vmem:[#allocation5] sm:$0xff] %vm2379, %v2363
          %2381 = vst.msk [vmem:[#allocation5 + $0x10] sm:$0xff] %vm2379, %v2364
          %2382 = vst.msk [vmem:[#allocation5 + $0x20] sm:$0xff] %vm2379, %v2365
          %2383 = vst.msk [vmem:[#allocation5 + $0x30] sm:$0xff] %vm2379, %v2366
          %2384 = vst.msk [vmem:[#allocation5 + $0x40] sm:$0xff] %vm2379, %v2367
          %2385 = vst.msk [vmem:[#allocation5 + $0x50] sm:$0xff] %vm2379, %v2368
          %2386 = vst.msk [vmem:[#allocation5 + $0x60] sm:$0xff] %vm2379, %v2369
          %2387 = vst.msk [vmem:[#allocation5 + $0x70] sm:$0xff] %vm2379, %v2370
          %2388 = vst.msk [vmem:[#allocation5 + $0x80] sm:$0xff] %vm2379, %v2371
          %2389 = vst.msk [vmem:[#allocation5 + $0x90] sm:$0xff] %vm2379, %v2372
          %2390 = vst.msk [vmem:[#allocation5 + $0xa0] sm:$0xff] %vm2379, %v2373
          %2391 = vst.msk [vmem:[#allocation5 + $0xb0] sm:$0xff] %vm2379, %v2374
          %2392 = vst.msk [vmem:[#allocation5 + $0xc0] sm:$0xff] %vm2379, %v2375
          %2393 = vst.msk [vmem:[#allocation5 + $0xd0] sm:$0xff] %vm2379, %v2376
          %2394 = vst.msk [vmem:[#allocation5 + $0xe0] sm:$0xff] %vm2379, %v2377
          %2395 = vst.msk [vmem:[#allocation5 + $0xf0] sm:$0xff] %vm2379, %v2378
          %2396 = vst.msk [vmem:[%s1712] sm:$0xff] %vm1165, %v1761
          %2397 = vst.msk [vmem:[%s1712 + $0x8] sm:$0xff] %vm1165, %v1762
          %2398 = vst.msk [vmem:[%s1712 + $0x10] sm:$0xff] %vm1165, %v1763
          %2399 = vst.msk [vmem:[%s1712 + $0x18] sm:$0xff] %vm1165, %v1764
          %2400 = vst.msk [vmem:[%s1712 + $0x20] sm:$0xff] %vm1165, %v1765
          %2401 = vst.msk [vmem:[%s1712 + $0x28] sm:$0xff] %vm1165, %v1766
          %2402 = vst.msk [vmem:[%s1712 + $0x30] sm:$0xff] %vm1165, %v1767
          %2403 = vst.msk [vmem:[%s1712 + $0x38] sm:$0xff] %vm1165, %v1768
          %2404 = vst.msk [vmem:[%s1712 + $0x40] sm:$0xff] %vm1165, %v1769
          %2405 = vst.msk [vmem:[%s1712 + $0x48] sm:$0xff] %vm1165, %v1770
          %2406 = vst.msk [vmem:[%s1712 + $0x50] sm:$0xff] %vm1165, %v1771
          %2407 = vst.msk [vmem:[%s1712 + $0x58] sm:$0xff] %vm1165, %v1772
          %2408 = vst.msk [vmem:[%s1712 + $0x60] sm:$0xff] %vm1165, %v1773
          %2409 = vst.msk [vmem:[%s1712 + $0x68] sm:$0xff] %vm1165, %v1774
          %2410 = vst.msk [vmem:[%s1712 + $0x70] sm:$0xff] %vm1165, %v1775
          %2411 = vst.msk [vmem:[%s1712 + $0x78] sm:$0xff] %vm1165, %v1776
          %v2412 = vld [vmem:[#allocation2 + $0x8] sm:$0xff]
          %v2413 = vld [vmem:[#allocation2 + $0x18] sm:$0xff]
          %v2414 = vld [vmem:[#allocation2 + $0x28] sm:$0xff]
          %v2415 = vld [vmem:[#allocation2 + $0x38] sm:$0xff]
          %v2416 = vld [vmem:[#allocation2 + $0x48] sm:$0xff]
          %v2417 = vld [vmem:[#allocation2 + $0x58] sm:$0xff]
          %v2418 = vld [vmem:[#allocation2 + $0x68] sm:$0xff]
          %v2419 = vld [vmem:[#allocation2 + $0x78] sm:$0xff]
          %v2420 = vld [vmem:[%s274 + $0x8] sm:$0xff]
          %v2421 = vld [vmem:[%s274 + $0x18] sm:$0xff]
          %v2422 = vld [vmem:[%s274 + $0x28] sm:$0xff]
          %v2423 = vld [vmem:[%s274 + $0x38] sm:$0xff]
          %v2424 = vld [vmem:[%s274 + $0x48] sm:$0xff]
          %v2425 = vld [vmem:[%s274 + $0x58] sm:$0xff]
          %v2426 = vld [vmem:[%s274 + $0x68] sm:$0xff]
          %v2427 = vld [vmem:[%s274 + $0x78] sm:$0xff]
          %v2428 = vld [vmem:[%s274 + $0x88] sm:$0xff]
          %v2429 = vld [vmem:[%s274 + $0x98] sm:$0xff]
          %v2430 = vld [vmem:[%s274 + $0xa8] sm:$0xff]
          %v2431 = vld [vmem:[%s274 + $0xb8] sm:$0xff]
          %v2432 = vld [vmem:[%s274 + $0xc8] sm:$0xff]
          %v2433 = vld [vmem:[%s274 + $0xd8] sm:$0xff]
          %v2434 = vld [vmem:[%s274 + $0xe8] sm:$0xff]
          %v2435 = vld [vmem:[%s274 + $0xf8] sm:$0xff]
          %v2436 = vpack.c.bf16 %v2421, %v2420
          %v2437 = vpack.c.bf16 %v2423, %v2422
          %v2438 = vpack.c.bf16 %v2425, %v2424
          %v2439 = vpack.c.bf16 %v2427, %v2426
          %v2440 = vpack.c.bf16 %v2429, %v2428
          %v2441 = vpack.c.bf16 %v2431, %v2430
          %v2442 = vpack.c.bf16 %v2433, %v2432
          %v2443 = vpack.c.bf16 %v2435, %v2434
          %v2444 = vld [vmem:[%s283 + $0x8] sm:$0xff]
          %v2445 = vld [vmem:[%s283 + $0x18] sm:$0xff]
          %v2446 = vld [vmem:[%s283 + $0x28] sm:$0xff]
          %v2447 = vld [vmem:[%s283 + $0x38] sm:$0xff]
          %v2448 = vld [vmem:[%s283 + $0x48] sm:$0xff]
          %v2449 = vld [vmem:[%s283 + $0x58] sm:$0xff]
          %v2450 = vld [vmem:[%s283 + $0x68] sm:$0xff]
          %v2451 = vld [vmem:[%s283 + $0x78] sm:$0xff]
          %v2452 = vld [vmem:[%s283 + $0x88] sm:$0xff]
          %v2453 = vld [vmem:[%s283 + $0x98] sm:$0xff]
          %v2454 = vld [vmem:[%s283 + $0xa8] sm:$0xff]
          %v2455 = vld [vmem:[%s283 + $0xb8] sm:$0xff]
          %v2456 = vld [vmem:[%s283 + $0xc8] sm:$0xff]
          %v2457 = vld [vmem:[%s283 + $0xd8] sm:$0xff]
          %v2458 = vld [vmem:[%s283 + $0xe8] sm:$0xff]
          %v2459 = vld [vmem:[%s283 + $0xf8] sm:$0xff]
          %v2460 = vpack.c.bf16 %v2445, %v2444
          %v2461 = vpack.c.bf16 %v2447, %v2446
          %v2462 = vpack.c.bf16 %v2449, %v2448
          %v2463 = vpack.c.bf16 %v2451, %v2450
          %v2464 = vpack.c.bf16 %v2453, %v2452
          %v2465 = vpack.c.bf16 %v2455, %v2454
          %v2466 = vpack.c.bf16 %v2457, %v2456
          %v2467 = vpack.c.bf16 %v2459, %v2458
          %v2469 = vsel %vm683, %v2412, 0
          %v2472 = vsel %vm683, %v2413, 0
          %v2475 = vsel %vm683, %v2414, 0
          %v2478 = vsel %vm683, %v2415, 0
          %v2481 = vsel %vm683, %v2416, 0
          %v2484 = vsel %vm683, %v2417, 0
          %v2487 = vsel %vm683, %v2418, 0
          %v2490 = vsel %vm683, %v2419, 0
          %v2493 = vsel %vm683, %v2436, 0
          %v2496 = vsel %vm683, %v2437, 0
          %v2499 = vsel %vm683, %v2438, 0
          %v2502 = vsel %vm683, %v2439, 0
          %v2505 = vsel %vm683, %v2440, 0
          %v2508 = vsel %vm683, %v2441, 0
          %v2511 = vsel %vm683, %v2442, 0
          %v2514 = vsel %vm683, %v2443, 0
          %2516 = vmatprep.subr.bf16.mxu0 0
          %2517 = vmatpush1.bf16.xpose.msra.mxu0 %v2493
          %2518 = vmatprep.subr.bf16.mxu0 0
          %2519 = vmatpush1.bf16.xpose.msra.mxu0 %v2496
          %2520 = vmatprep.subr.bf16.mxu0 0
          %2521 = vmatpush1.bf16.xpose.msra.mxu0 %v2499
          %2522 = vmatprep.subr.bf16.mxu0 0
          %2523 = vmatpush1.bf16.xpose.msra.mxu0 %v2502
          %2524 = vmatprep.subr.bf16.mxu0 0
          %2525 = vmatpush1.bf16.xpose.msra.mxu0 %v2505
          %2526 = vmatprep.subr.bf16.mxu0 0
          %2527 = vmatpush1.bf16.xpose.msra.mxu0 %v2508
          %2528 = vmatprep.subr.bf16.mxu0 0
          %2529 = vmatpush1.bf16.xpose.msra.mxu0 %v2511
          %2530 = vmatprep.subr.bf16.mxu0 0
          %2531 = vmatpush1.bf16.xpose.msra.mxu0 %v2514
          %2532 = vmatprep.subr.bf16.mxu0 0
          %2533 = vmatpush1.bf16.xpose.msra.mxu0 0
          %2534 = vmatprep.subr.bf16.mxu0 0
          %2535 = vmatpush1.bf16.xpose.msra.mxu0 0
          %2536 = vmatprep.subr.bf16.mxu0 0
          %2537 = vmatpush1.bf16.xpose.msra.mxu0 0
          %2538 = vmatprep.subr.bf16.mxu0 0
          %2539 = vmatpush1.bf16.xpose.msra.mxu0 0
          %2540 = vmatprep.subr.bf16.mxu0 0
          %2541 = vmatpush1.bf16.xpose.msra.mxu0 0
          %2542 = vmatprep.subr.bf16.mxu0 0
          %2543 = vmatpush1.bf16.xpose.msra.mxu0 0
          %2544 = vmatprep.subr.bf16.mxu0 0
          %2545 = vmatpush1.bf16.xpose.msra.mxu0 0
          %2546 = vmatprep.subr.bf16.mxu0 0
          %2547 = vmatpush1.bf16.xpose.msra.mxu0 0
          %2548 = vmatprep.mubr.bf16.mxu0 0
          %2549 = vmatmul.mubr.bf16.gmra.mrb[0].mxu0 %v2469
          %v2550 = vpop.f32.mrb[0].mxu0
          %v2551 = vadd.f32 0.0, %v2550
          %v2552 = vpop.f32.mrb[0].mxu0
          %v2553 = vpop.f32.mrb[0].mxu0
          %v2554 = vadd.f32 0.0, %v2553
          %v2555 = vpop.f32.mrb[0].mxu0
          %2556 = vmatprep.mubr.bf16.mxu0 0
          %2557 = vmatmul.mubr.bf16.gmra.mrb[0].mxu0 %v2472
          %v2558 = vpop.f32.mrb[0].mxu0
          %v2559 = vadd.f32 0.0, %v2558
          %v2560 = vpop.f32.mrb[0].mxu0
          %v2561 = vpop.f32.mrb[0].mxu0
          %v2562 = vadd.f32 0.0, %v2561
          %v2563 = vpop.f32.mrb[0].mxu0
          %2564 = vmatprep.mubr.bf16.mxu0 0
          %2565 = vmatmul.mubr.bf16.gmra.mrb[0].mxu0 %v2475
          %v2566 = vpop.f32.mrb[0].mxu0
          %v2567 = vadd.f32 0.0, %v2566
          %v2568 = vpop.f32.mrb[0].mxu0
          %v2569 = vpop.f32.mrb[0].mxu0
          %v2570 = vadd.f32 0.0, %v2569
          %v2571 = vpop.f32.mrb[0].mxu0
          %2572 = vmatprep.mubr.bf16.mxu0 0
          %2573 = vmatmul.mubr.bf16.gmra.mrb[0].mxu0 %v2478
          %v2574 = vpop.f32.mrb[0].mxu0
          %v2575 = vadd.f32 0.0, %v2574
          %v2576 = vpop.f32.mrb[0].mxu0
          %v2577 = vpop.f32.mrb[0].mxu0
          %v2578 = vadd.f32 0.0, %v2577
          %v2579 = vpop.f32.mrb[0].mxu0
          %2580 = vmatprep.mubr.bf16.mxu0 0
          %2581 = vmatmul.mubr.bf16.gmra.mrb[0].mxu0 %v2481
          %v2582 = vpop.f32.mrb[0].mxu0
          %v2583 = vadd.f32 0.0, %v2582
          %v2584 = vpop.f32.mrb[0].mxu0
          %v2585 = vpop.f32.mrb[0].mxu0
          %v2586 = vadd.f32 0.0, %v2585
          %v2587 = vpop.f32.mrb[0].mxu0
          %2588 = vmatprep.mubr.bf16.mxu0 0
          %2589 = vmatmul.mubr.bf16.gmra.mrb[0].mxu0 %v2484
          %v2590 = vpop.f32.mrb[0].mxu0
          %v2591 = vadd.f32 0.0, %v2590
          %v2592 = vpop.f32.mrb[0].mxu0
          %v2593 = vpop.f32.mrb[0].mxu0
          %v2594 = vadd.f32 0.0, %v2593
          %v2595 = vpop.f32.mrb[0].mxu0
          %2596 = vmatprep.mubr.bf16.mxu0 0
          %2597 = vmatmul.mubr.bf16.gmra.mrb[0].mxu0 %v2487
          %v2598 = vpop.f32.mrb[0].mxu0
          %v2599 = vadd.f32 0.0, %v2598
          %v2600 = vpop.f32.mrb[0].mxu0
          %v2601 = vpop.f32.mrb[0].mxu0
          %v2602 = vadd.f32 0.0, %v2601
          %v2603 = vpop.f32.mrb[0].mxu0
          %2604 = vmatprep.mubr.bf16.mxu0 0
          %2605 = vmatmul.mubr.bf16.gmra.mrb[0].mxu0 %v2490
          %v2606 = vpop.f32.mrb[0].mxu0
          %v2607 = vadd.f32 0.0, %v2606
          %v2608 = vpop.f32.mrb[0].mxu0
          %v2609 = vpop.f32.mrb[0].mxu0
          %v2610 = vadd.f32 0.0, %v2609
          %v2611 = vpop.f32.mrb[0].mxu0
          %2612 = vdwg.mxu0
          %v2613 = vsel %vm611, -1e+30, %v2551
          %v2614 = vsel %vm612, -1e+30, %v2554
          %v2615 = vsel %vm613, -1e+30, %v2559
          %v2616 = vsel %vm614, -1e+30, %v2562
          %v2617 = vsel %vm615, -1e+30, %v2567
          %v2618 = vsel %vm616, -1e+30, %v2570
          %v2619 = vsel %vm617, -1e+30, %v2575
          %v2620 = vsel %vm618, -1e+30, %v2578
          %v2621 = vsel %vm619, -1e+30, %v2583
          %v2622 = vsel %vm620, -1e+30, %v2586
          %v2623 = vsel %vm621, -1e+30, %v2591
          %v2624 = vsel %vm622, -1e+30, %v2594
          %v2625 = vsel %vm623, -1e+30, %v2599
          %v2626 = vsel %vm624, -1e+30, %v2602
          %v2627 = vsel %vm625, -1e+30, %v2607
          %v2628 = vsel %vm626, -1e+30, %v2610
          %s2629 = scalar_lea.vmem [#allocation3], 256
          %v2630 = vld [vmem:[%s2629] sm:$0xff]
          %v2631 = vld [vmem:[%s2629 + $0x8] sm:$0xff]
          %v2632 = vld [vmem:[%s2629 + $0x10] sm:$0xff]
          %v2633 = vld [vmem:[%s2629 + $0x18] sm:$0xff]
          %v2634 = vld [vmem:[%s2629 + $0x20] sm:$0xff]
          %v2635 = vld [vmem:[%s2629 + $0x28] sm:$0xff]
          %v2636 = vld [vmem:[%s2629 + $0x30] sm:$0xff]
          %v2637 = vld [vmem:[%s2629 + $0x38] sm:$0xff]
          %v2638 = vld [vmem:[%s2629 + $0x40] sm:$0xff]
          %v2639 = vld [vmem:[%s2629 + $0x48] sm:$0xff]
          %v2640 = vld [vmem:[%s2629 + $0x50] sm:$0xff]
          %v2641 = vld [vmem:[%s2629 + $0x58] sm:$0xff]
          %v2642 = vld [vmem:[%s2629 + $0x60] sm:$0xff]
          %v2643 = vld [vmem:[%s2629 + $0x68] sm:$0xff]
          %v2644 = vld [vmem:[%s2629 + $0x70] sm:$0xff]
          %v2645 = vld [vmem:[%s2629 + $0x78] sm:$0xff]
          %2646 = vmax.xlane.f32.xlu0 %v2613
          %v2647 = vpop.xlane.xlu0 %2646
          %2648 = vmax.xlane.f32.xlu0 %v2614
          %v2649 = vpop.xlane.xlu0 %2648
          %2650 = vmax.xlane.f32.xlu0 %v2615
          %v2651 = vpop.xlane.xlu0 %2650
          %2652 = vmax.xlane.f32.xlu0 %v2616
          %v2653 = vpop.xlane.xlu0 %2652
          %2654 = vmax.xlane.f32.xlu0 %v2617
          %v2655 = vpop.xlane.xlu0 %2654
          %2656 = vmax.xlane.f32.xlu0 %v2618
          %v2657 = vpop.xlane.xlu0 %2656
          %2658 = vmax.xlane.f32.xlu0 %v2619
          %v2659 = vpop.xlane.xlu0 %2658
          %2660 = vmax.xlane.f32.xlu0 %v2620
          %v2661 = vpop.xlane.xlu0 %2660
          %2662 = vmax.xlane.f32.xlu0 %v2621
          %v2663 = vpop.xlane.xlu0 %2662
          %2664 = vmax.xlane.f32.xlu0 %v2622
          %v2665 = vpop.xlane.xlu0 %2664
          %2666 = vmax.xlane.f32.xlu0 %v2623
          %v2667 = vpop.xlane.xlu0 %2666
          %2668 = vmax.xlane.f32.xlu0 %v2624
          %v2669 = vpop.xlane.xlu0 %2668
          %2670 = vmax.xlane.f32.xlu0 %v2625
          %v2671 = vpop.xlane.xlu0 %2670
          %2672 = vmax.xlane.f32.xlu0 %v2626
          %v2673 = vpop.xlane.xlu0 %2672
          %2674 = vmax.xlane.f32.xlu0 %v2627
          %v2675 = vpop.xlane.xlu0 %2674
          %2676 = vmax.xlane.f32.xlu0 %v2628
          %v2677 = vpop.xlane.xlu0 %2676
          %v2678 = vmax.f32 %v2630, %v2647
          %v2679 = vmax.f32 %v2631, %v2649
          %v2680 = vmax.f32 %v2632, %v2651
          %v2681 = vmax.f32 %v2633, %v2653
          %v2682 = vmax.f32 %v2634, %v2655
          %v2683 = vmax.f32 %v2635, %v2657
          %v2684 = vmax.f32 %v2636, %v2659
          %v2685 = vmax.f32 %v2637, %v2661
          %v2686 = vmax.f32 %v2638, %v2663
          %v2687 = vmax.f32 %v2639, %v2665
          %v2688 = vmax.f32 %v2640, %v2667
          %v2689 = vmax.f32 %v2641, %v2669
          %v2690 = vmax.f32 %v2642, %v2671
          %v2691 = vmax.f32 %v2643, %v2673
          %v2692 = vmax.f32 %v2644, %v2675
          %v2693 = vmax.f32 %v2645, %v2677
          %v2694 = vsub.f32 %v2630, %v2678
          %v2695 = vsub.f32 %v2631, %v2679
          %v2696 = vsub.f32 %v2632, %v2680
          %v2697 = vsub.f32 %v2633, %v2681
          %v2698 = vsub.f32 %v2634, %v2682
          %v2699 = vsub.f32 %v2635, %v2683
          %v2700 = vsub.f32 %v2636, %v2684
          %v2701 = vsub.f32 %v2637, %v2685
          %v2702 = vsub.f32 %v2638, %v2686
          %v2703 = vsub.f32 %v2639, %v2687
          %v2704 = vsub.f32 %v2640, %v2688
          %v2705 = vsub.f32 %v2641, %v2689
          %v2706 = vsub.f32 %v2642, %v2690
          %v2707 = vsub.f32 %v2643, %v2691
          %v2708 = vsub.f32 %v2644, %v2692
          %v2709 = vsub.f32 %v2645, %v2693
          %v2710 = vmul.f32 %v2694, 1.442695
          %v2711 = vpow.pop %v2710
          %v2712 = vmul.f32 %v2695, 1.442695
          %v2713 = vpow.pop %v2712
          %v2714 = vmul.f32 %v2696, 1.442695
          %v2715 = vpow.pop %v2714
          %v2716 = vmul.f32 %v2697, 1.442695
          %v2717 = vpow.pop %v2716
          %v2718 = vmul.f32 %v2698, 1.442695
          %v2719 = vpow.pop %v2718
          %v2720 = vmul.f32 %v2699, 1.442695
          %v2721 = vpow.pop %v2720
          %v2722 = vmul.f32 %v2700, 1.442695
          %v2723 = vpow.pop %v2722
          %v2724 = vmul.f32 %v2701, 1.442695
          %v2725 = vpow.pop %v2724
          %v2726 = vmul.f32 %v2702, 1.442695
          %v2727 = vpow.pop %v2726
          %v2728 = vmul.f32 %v2703, 1.442695
          %v2729 = vpow.pop %v2728
          %v2730 = vmul.f32 %v2704, 1.442695
          %v2731 = vpow.pop %v2730
          %v2732 = vmul.f32 %v2705, 1.442695
          %v2733 = vpow.pop %v2732
          %v2734 = vmul.f32 %v2706, 1.442695
          %v2735 = vpow.pop %v2734
          %v2736 = vmul.f32 %v2707, 1.442695
          %v2737 = vpow.pop %v2736
          %v2738 = vmul.f32 %v2708, 1.442695
          %v2739 = vpow.pop %v2738
          %v2740 = vmul.f32 %v2709, 1.442695
          %v2741 = vpow.pop %v2740
          %2743 = vset.pattern.permute.xlu0 0
          %2744 = vperm.xlu0 %2743, %v2678
          %v2745 = vpop.permute.xlu0 %2744
          %2748 = vset.pattern.permute.xlu0 0
          %2749 = vperm.xlu0 %2748, %v2679
          %v2750 = vpop.permute.xlu0 %2749
          %2753 = vset.pattern.permute.xlu0 0
          %2754 = vperm.xlu0 %2753, %v2680
          %v2755 = vpop.permute.xlu0 %2754
          %2758 = vset.pattern.permute.xlu0 0
          %2759 = vperm.xlu0 %2758, %v2681
          %v2760 = vpop.permute.xlu0 %2759
          %2763 = vset.pattern.permute.xlu0 0
          %2764 = vperm.xlu0 %2763, %v2682
          %v2765 = vpop.permute.xlu0 %2764
          %2768 = vset.pattern.permute.xlu0 0
          %2769 = vperm.xlu0 %2768, %v2683
          %v2770 = vpop.permute.xlu0 %2769
          %2773 = vset.pattern.permute.xlu0 0
          %2774 = vperm.xlu0 %2773, %v2684
          %v2775 = vpop.permute.xlu0 %2774
          %2778 = vset.pattern.permute.xlu0 0
          %2779 = vperm.xlu0 %2778, %v2685
          %v2780 = vpop.permute.xlu0 %2779
          %2783 = vset.pattern.permute.xlu0 0
          %2784 = vperm.xlu0 %2783, %v2686
          %v2785 = vpop.permute.xlu0 %2784
          %2788 = vset.pattern.permute.xlu0 0
          %2789 = vperm.xlu0 %2788, %v2687
          %v2790 = vpop.permute.xlu0 %2789
          %2793 = vset.pattern.permute.xlu0 0
          %2794 = vperm.xlu0 %2793, %v2688
          %v2795 = vpop.permute.xlu0 %2794
          %2798 = vset.pattern.permute.xlu0 0
          %2799 = vperm.xlu0 %2798, %v2689
          %v2800 = vpop.permute.xlu0 %2799
          %2803 = vset.pattern.permute.xlu0 0
          %2804 = vperm.xlu0 %2803, %v2690
          %v2805 = vpop.permute.xlu0 %2804
          %2808 = vset.pattern.permute.xlu0 0
          %2809 = vperm.xlu0 %2808, %v2691
          %v2810 = vpop.permute.xlu0 %2809
          %2813 = vset.pattern.permute.xlu0 0
          %2814 = vperm.xlu0 %2813, %v2692
          %v2815 = vpop.permute.xlu0 %2814
          %2818 = vset.pattern.permute.xlu0 0
          %2819 = vperm.xlu0 %2818, %v2693
          %v2820 = vpop.permute.xlu0 %2819
          %v2822 = vsub.f32 %v2613, %v2745
          %v2823 = vsub.f32 %v2614, %v2750
          %v2824 = vsub.f32 %v2615, %v2755
          %v2825 = vsub.f32 %v2616, %v2760
          %v2826 = vsub.f32 %v2617, %v2765
          %v2827 = vsub.f32 %v2618, %v2770
          %v2828 = vsub.f32 %v2619, %v2775
          %v2829 = vsub.f32 %v2620, %v2780
          %v2830 = vsub.f32 %v2621, %v2785
          %v2831 = vsub.f32 %v2622, %v2790
          %v2832 = vsub.f32 %v2623, %v2795
          %v2833 = vsub.f32 %v2624, %v2800
          %v2834 = vsub.f32 %v2625, %v2805
          %v2835 = vsub.f32 %v2626, %v2810
          %v2836 = vsub.f32 %v2627, %v2815
          %v2837 = vsub.f32 %v2628, %v2820
          %v2838 = vmul.f32 %v2822, 1.442695
          %v2839 = vpow.pop %v2838
          %v2840 = vmul.f32 %v2823, 1.442695
          %v2841 = vpow.pop %v2840
          %v2842 = vmul.f32 %v2824, 1.442695
          %v2843 = vpow.pop %v2842
          %v2844 = vmul.f32 %v2825, 1.442695
          %v2845 = vpow.pop %v2844
          %v2846 = vmul.f32 %v2826, 1.442695
          %v2847 = vpow.pop %v2846
          %v2848 = vmul.f32 %v2827, 1.442695
          %v2849 = vpow.pop %v2848
          %v2850 = vmul.f32 %v2828, 1.442695
          %v2851 = vpow.pop %v2850
          %v2852 = vmul.f32 %v2829, 1.442695
          %v2853 = vpow.pop %v2852
          %v2854 = vmul.f32 %v2830, 1.442695
          %v2855 = vpow.pop %v2854
          %v2856 = vmul.f32 %v2831, 1.442695
          %v2857 = vpow.pop %v2856
          %v2858 = vmul.f32 %v2832, 1.442695
          %v2859 = vpow.pop %v2858
          %v2860 = vmul.f32 %v2833, 1.442695
          %v2861 = vpow.pop %v2860
          %v2862 = vmul.f32 %v2834, 1.442695
          %v2863 = vpow.pop %v2862
          %v2864 = vmul.f32 %v2835, 1.442695
          %v2865 = vpow.pop %v2864
          %v2866 = vmul.f32 %v2836, 1.442695
          %v2867 = vpow.pop %v2866
          %v2868 = vmul.f32 %v2837, 1.442695
          %v2869 = vpow.pop %v2868
          %s2870 = scalar_lea.vmem [#allocation4], 256
          %v2871 = vld [vmem:[%s2870] sm:$0xff]
          %v2872 = vld [vmem:[%s2870 + $0x8] sm:$0xff]
          %v2873 = vld [vmem:[%s2870 + $0x10] sm:$0xff]
          %v2874 = vld [vmem:[%s2870 + $0x18] sm:$0xff]
          %v2875 = vld [vmem:[%s2870 + $0x20] sm:$0xff]
          %v2876 = vld [vmem:[%s2870 + $0x28] sm:$0xff]
          %v2877 = vld [vmem:[%s2870 + $0x30] sm:$0xff]
          %v2878 = vld [vmem:[%s2870 + $0x38] sm:$0xff]
          %v2879 = vld [vmem:[%s2870 + $0x40] sm:$0xff]
          %v2880 = vld [vmem:[%s2870 + $0x48] sm:$0xff]
          %v2881 = vld [vmem:[%s2870 + $0x50] sm:$0xff]
          %v2882 = vld [vmem:[%s2870 + $0x58] sm:$0xff]
          %v2883 = vld [vmem:[%s2870 + $0x60] sm:$0xff]
          %v2884 = vld [vmem:[%s2870 + $0x68] sm:$0xff]
          %v2885 = vld [vmem:[%s2870 + $0x70] sm:$0xff]
          %v2886 = vld [vmem:[%s2870 + $0x78] sm:$0xff]
          %v2887 = vmul.f32 %v2711, %v2871
          %v2888 = vmul.f32 %v2713, %v2872
          %v2889 = vmul.f32 %v2715, %v2873
          %v2890 = vmul.f32 %v2717, %v2874
          %v2891 = vmul.f32 %v2719, %v2875
          %v2892 = vmul.f32 %v2721, %v2876
          %v2893 = vmul.f32 %v2723, %v2877
          %v2894 = vmul.f32 %v2725, %v2878
          %v2895 = vmul.f32 %v2727, %v2879
          %v2896 = vmul.f32 %v2729, %v2880
          %v2897 = vmul.f32 %v2731, %v2881
          %v2898 = vmul.f32 %v2733, %v2882
          %v2899 = vmul.f32 %v2735, %v2883
          %v2900 = vmul.f32 %v2737, %v2884
          %v2901 = vmul.f32 %v2739, %v2885
          %v2902 = vmul.f32 %v2741, %v2886
          %2903 = vadd.xlane.f32.xlu0 %v2839
          %v2904 = vpop.xlane.xlu0 %2903
          %2905 = vadd.xlane.f32.xlu0 %v2841
          %v2906 = vpop.xlane.xlu0 %2905
          %2907 = vadd.xlane.f32.xlu0 %v2843
          %v2908 = vpop.xlane.xlu0 %2907
          %2909 = vadd.xlane.f32.xlu0 %v2845
          %v2910 = vpop.xlane.xlu0 %2909
          %2911 = vadd.xlane.f32.xlu0 %v2847
          %v2912 = vpop.xlane.xlu0 %2911
          %2913 = vadd.xlane.f32.xlu0 %v2849
          %v2914 = vpop.xlane.xlu0 %2913
          %2915 = vadd.xlane.f32.xlu0 %v2851
          %v2916 = vpop.xlane.xlu0 %2915
          %2917 = vadd.xlane.f32.xlu0 %v2853
          %v2918 = vpop.xlane.xlu0 %2917
          %2919 = vadd.xlane.f32.xlu0 %v2855
          %v2920 = vpop.xlane.xlu0 %2919
          %2921 = vadd.xlane.f32.xlu0 %v2857
          %v2922 = vpop.xlane.xlu0 %2921
          %2923 = vadd.xlane.f32.xlu0 %v2859
          %v2924 = vpop.xlane.xlu0 %2923
          %2925 = vadd.xlane.f32.xlu0 %v2861
          %v2926 = vpop.xlane.xlu0 %2925
          %2927 = vadd.xlane.f32.xlu0 %v2863
          %v2928 = vpop.xlane.xlu0 %2927
          %2929 = vadd.xlane.f32.xlu0 %v2865
          %v2930 = vpop.xlane.xlu0 %2929
          %2931 = vadd.xlane.f32.xlu0 %v2867
          %v2932 = vpop.xlane.xlu0 %2931
          %2933 = vadd.xlane.f32.xlu0 %v2869
          %v2934 = vpop.xlane.xlu0 %2933
          %v2935 = vadd.f32 %v2887, %v2904
          %v2936 = vadd.f32 %v2888, %v2906
          %v2937 = vadd.f32 %v2889, %v2908
          %v2938 = vadd.f32 %v2890, %v2910
          %v2939 = vadd.f32 %v2891, %v2912
          %v2940 = vadd.f32 %v2892, %v2914
          %v2941 = vadd.f32 %v2893, %v2916
          %v2942 = vadd.f32 %v2894, %v2918
          %v2943 = vadd.f32 %v2895, %v2920
          %v2944 = vadd.f32 %v2896, %v2922
          %v2945 = vadd.f32 %v2897, %v2924
          %v2946 = vadd.f32 %v2898, %v2926
          %v2947 = vadd.f32 %v2899, %v2928
          %v2948 = vadd.f32 %v2900, %v2930
          %v2949 = vadd.f32 %v2901, %v2932
          %v2950 = vadd.f32 %v2902, %v2934
          %2951 = vst.msk [vmem:[%s2870] sm:$0xff] %vm1165, %v2935
          %2952 = vst.msk [vmem:[%s2870 + $0x8] sm:$0xff] %vm1165, %v2936
          %2953 = vst.msk [vmem:[%s2870 + $0x10] sm:$0xff] %vm1165, %v2937
          %2954 = vst.msk [vmem:[%s2870 + $0x18] sm:$0xff] %vm1165, %v2938
          %2955 = vst.msk [vmem:[%s2870 + $0x20] sm:$0xff] %vm1165, %v2939
          %2956 = vst.msk [vmem:[%s2870 + $0x28] sm:$0xff] %vm1165, %v2940
          %2957 = vst.msk [vmem:[%s2870 + $0x30] sm:$0xff] %vm1165, %v2941
          %2958 = vst.msk [vmem:[%s2870 + $0x38] sm:$0xff] %vm1165, %v2942
          %2959 = vst.msk [vmem:[%s2870 + $0x40] sm:$0xff] %vm1165, %v2943
          %2960 = vst.msk [vmem:[%s2870 + $0x48] sm:$0xff] %vm1165, %v2944
          %2961 = vst.msk [vmem:[%s2870 + $0x50] sm:$0xff] %vm1165, %v2945
          %2962 = vst.msk [vmem:[%s2870 + $0x58] sm:$0xff] %vm1165, %v2946
          %2963 = vst.msk [vmem:[%s2870 + $0x60] sm:$0xff] %vm1165, %v2947
          %2964 = vst.msk [vmem:[%s2870 + $0x68] sm:$0xff] %vm1165, %v2948
          %2965 = vst.msk [vmem:[%s2870 + $0x70] sm:$0xff] %vm1165, %v2949
          %2966 = vst.msk [vmem:[%s2870 + $0x78] sm:$0xff] %vm1165, %v2950
          %v2967 = vld [vmem:[#allocation5 + $0x8] sm:$0xff]
          %v2968 = vld [vmem:[#allocation5 + $0x18] sm:$0xff]
          %v2969 = vld [vmem:[#allocation5 + $0x28] sm:$0xff]
          %v2970 = vld [vmem:[#allocation5 + $0x38] sm:$0xff]
          %v2971 = vld [vmem:[#allocation5 + $0x48] sm:$0xff]
          %v2972 = vld [vmem:[#allocation5 + $0x58] sm:$0xff]
          %v2973 = vld [vmem:[#allocation5 + $0x68] sm:$0xff]
          %v2974 = vld [vmem:[#allocation5 + $0x78] sm:$0xff]
          %v2975 = vld [vmem:[#allocation5 + $0x88] sm:$0xff]
          %v2976 = vld [vmem:[#allocation5 + $0x98] sm:$0xff]
          %v2977 = vld [vmem:[#allocation5 + $0xa8] sm:$0xff]
          %v2978 = vld [vmem:[#allocation5 + $0xb8] sm:$0xff]
          %v2979 = vld [vmem:[#allocation5 + $0xc8] sm:$0xff]
          %v2980 = vld [vmem:[#allocation5 + $0xd8] sm:$0xff]
          %v2981 = vld [vmem:[#allocation5 + $0xe8] sm:$0xff]
          %v2982 = vld [vmem:[#allocation5 + $0xf8] sm:$0xff]
          %2984 = vset.pattern.permute.xlu0 0
          %2985 = vperm.xlu0 %2984, %v2711
          %v2986 = vpop.permute.xlu0 %2985
          %2989 = vset.pattern.permute.xlu0 0
          %2990 = vperm.xlu0 %2989, %v2713
          %v2991 = vpop.permute.xlu0 %2990
          %2994 = vset.pattern.permute.xlu0 0
          %2995 = vperm.xlu0 %2994, %v2715
          %v2996 = vpop.permute.xlu0 %2995
          %2999 = vset.pattern.permute.xlu0 0
          %3000 = vperm.xlu0 %2999, %v2717
          %v3001 = vpop.permute.xlu0 %3000
          %3004 = vset.pattern.permute.xlu0 0
          %3005 = vperm.xlu0 %3004, %v2719
          %v3006 = vpop.permute.xlu0 %3005
          %3009 = vset.pattern.permute.xlu0 0
          %3010 = vperm.xlu0 %3009, %v2721
          %v3011 = vpop.permute.xlu0 %3010
          %3014 = vset.pattern.permute.xlu0 0
          %3015 = vperm.xlu0 %3014, %v2723
          %v3016 = vpop.permute.xlu0 %3015
          %3019 = vset.pattern.permute.xlu0 0
          %3020 = vperm.xlu0 %3019, %v2725
          %v3021 = vpop.permute.xlu0 %3020
          %3024 = vset.pattern.permute.xlu0 0
          %3025 = vperm.xlu0 %3024, %v2727
          %v3026 = vpop.permute.xlu0 %3025
          %3029 = vset.pattern.permute.xlu0 0
          %3030 = vperm.xlu0 %3029, %v2729
          %v3031 = vpop.permute.xlu0 %3030
          %3034 = vset.pattern.permute.xlu0 0
          %3035 = vperm.xlu0 %3034, %v2731
          %v3036 = vpop.permute.xlu0 %3035
          %3039 = vset.pattern.permute.xlu0 0
          %3040 = vperm.xlu0 %3039, %v2733
          %v3041 = vpop.permute.xlu0 %3040
          %3044 = vset.pattern.permute.xlu0 0
          %3045 = vperm.xlu0 %3044, %v2735
          %v3046 = vpop.permute.xlu0 %3045
          %3049 = vset.pattern.permute.xlu0 0
          %3050 = vperm.xlu0 %3049, %v2737
          %v3051 = vpop.permute.xlu0 %3050
          %3054 = vset.pattern.permute.xlu0 0
          %3055 = vperm.xlu0 %3054, %v2739
          %v3056 = vpop.permute.xlu0 %3055
          %3059 = vset.pattern.permute.xlu0 0
          %3060 = vperm.xlu0 %3059, %v2741
          %v3061 = vpop.permute.xlu0 %3060
          %v3063 = vmul.f32 %v2986, %v2967
          %v3064 = vmul.f32 %v2991, %v2968
          %v3065 = vmul.f32 %v2996, %v2969
          %v3066 = vmul.f32 %v3001, %v2970
          %v3067 = vmul.f32 %v3006, %v2971
          %v3068 = vmul.f32 %v3011, %v2972
          %v3069 = vmul.f32 %v3016, %v2973
          %v3070 = vmul.f32 %v3021, %v2974
          %v3071 = vmul.f32 %v3026, %v2975
          %v3072 = vmul.f32 %v3031, %v2976
          %v3073 = vmul.f32 %v3036, %v2977
          %v3074 = vmul.f32 %v3041, %v2978
          %v3075 = vmul.f32 %v3046, %v2979
          %v3076 = vmul.f32 %v3051, %v2980
          %v3077 = vmul.f32 %v3056, %v2981
          %v3078 = vmul.f32 %v3061, %v2982
          %v3079 = vpack.c.bf16 %v2841, %v2839
          %v3080 = vpack.c.bf16 %v2845, %v2843
          %v3081 = vpack.c.bf16 %v2849, %v2847
          %v3082 = vpack.c.bf16 %v2853, %v2851
          %v3083 = vpack.c.bf16 %v2857, %v2855
          %v3084 = vpack.c.bf16 %v2861, %v2859
          %v3085 = vpack.c.bf16 %v2865, %v2863
          %v3086 = vpack.c.bf16 %v2869, %v2867
          %3087 = vmatprep.subr.bf16.mxu0 0
          %3088 = vmatpush1.bf16.msra.mxu0 %v2460
          %3089 = vmatprep.subr.bf16.mxu0 0
          %3090 = vmatpush1.bf16.msra.mxu0 %v2461
          %3091 = vmatprep.subr.bf16.mxu0 0
          %3092 = vmatpush1.bf16.msra.mxu0 %v2462
          %3093 = vmatprep.subr.bf16.mxu0 0
          %3094 = vmatpush1.bf16.msra.mxu0 %v2463
          %3095 = vmatprep.subr.bf16.mxu0 0
          %3096 = vmatpush1.bf16.msra.mxu0 %v2464
          %3097 = vmatprep.subr.bf16.mxu0 0
          %3098 = vmatpush1.bf16.msra.mxu0 %v2465
          %3099 = vmatprep.subr.bf16.mxu0 0
          %3100 = vmatpush1.bf16.msra.mxu0 %v2466
          %3101 = vmatprep.subr.bf16.mxu0 0
          %3102 = vmatpush1.bf16.msra.mxu0 %v2467
          %3103 = vmatprep.subr.bf16.mxu0 0
          %3104 = vmatpush1.bf16.msra.mxu0 0
          %3105 = vmatprep.subr.bf16.mxu0 0
          %3106 = vmatpush1.bf16.msra.mxu0 0
          %3107 = vmatprep.subr.bf16.mxu0 0
          %3108 = vmatpush1.bf16.msra.mxu0 0
          %3109 = vmatprep.subr.bf16.mxu0 0
          %3110 = vmatpush1.bf16.msra.mxu0 0
          %3111 = vmatprep.subr.bf16.mxu0 0
          %3112 = vmatpush1.bf16.msra.mxu0 0
          %3113 = vmatprep.subr.bf16.mxu0 0
          %3114 = vmatpush1.bf16.msra.mxu0 0
          %3115 = vmatprep.subr.bf16.mxu0 0
          %3116 = vmatpush1.bf16.msra.mxu0 0
          %3117 = vmatprep.subr.bf16.mxu0 0
          %3118 = vmatpush1.bf16.msra.mxu0 0
          %3119 = vmatprep.mubr.bf16.mxu0 0
          %3120 = vmatmul.mubr.bf16.gmra.mrb[0].mxu0 %v3079
          %v3121 = vpop.f32.mrb[0].mxu0
          %v3122 = vadd.f32 0.0, %v3121
          %v3123 = vpop.f32.mrb[0].mxu0
          %v3124 = vpop.f32.mrb[0].mxu0
          %v3125 = vadd.f32 0.0, %v3124
          %v3126 = vpop.f32.mrb[0].mxu0
          %3127 = vmatprep.mubr.bf16.mxu0 0
          %3128 = vmatmul.mubr.bf16.gmra.mrb[0].mxu0 %v3080
          %v3129 = vpop.f32.mrb[0].mxu0
          %v3130 = vadd.f32 0.0, %v3129
          %v3131 = vpop.f32.mrb[0].mxu0
          %v3132 = vpop.f32.mrb[0].mxu0
          %v3133 = vadd.f32 0.0, %v3132
          %v3134 = vpop.f32.mrb[0].mxu0
          %3135 = vmatprep.mubr.bf16.mxu0 0
          %3136 = vmatmul.mubr.bf16.gmra.mrb[0].mxu0 %v3081
          %v3137 = vpop.f32.mrb[0].mxu0
          %v3138 = vadd.f32 0.0, %v3137
          %v3139 = vpop.f32.mrb[0].mxu0
          %v3140 = vpop.f32.mrb[0].mxu0
          %v3141 = vadd.f32 0.0, %v3140
          %v3142 = vpop.f32.mrb[0].mxu0
          %3143 = vmatprep.mubr.bf16.mxu0 0
          %3144 = vmatmul.mubr.bf16.gmra.mrb[0].mxu0 %v3082
          %v3145 = vpop.f32.mrb[0].mxu0
          %v3146 = vadd.f32 0.0, %v3145
          %v3147 = vpop.f32.mrb[0].mxu0
          %v3148 = vpop.f32.mrb[0].mxu0
          %v3149 = vadd.f32 0.0, %v3148
          %v3150 = vpop.f32.mrb[0].mxu0
          %3151 = vmatprep.mubr.bf16.mxu0 0
          %3152 = vmatmul.mubr.bf16.gmra.mrb[0].mxu0 %v3083
          %v3153 = vpop.f32.mrb[0].mxu0
          %v3154 = vadd.f32 0.0, %v3153
          %v3155 = vpop.f32.mrb[0].mxu0
          %v3156 = vpop.f32.mrb[0].mxu0
          %v3157 = vadd.f32 0.0, %v3156
          %v3158 = vpop.f32.mrb[0].mxu0
          %3159 = vmatprep.mubr.bf16.mxu0 0
          %3160 = vmatmul.mubr.bf16.gmra.mrb[0].mxu0 %v3084
          %v3161 = vpop.f32.mrb[0].mxu0
          %v3162 = vadd.f32 0.0, %v3161
          %v3163 = vpop.f32.mrb[0].mxu0
          %v3164 = vpop.f32.mrb[0].mxu0
          %v3165 = vadd.f32 0.0, %v3164
          %v3166 = vpop.f32.mrb[0].mxu0
          %3167 = vmatprep.mubr.bf16.mxu0 0
          %3168 = vmatmul.mubr.bf16.gmra.mrb[0].mxu0 %v3085
          %v3169 = vpop.f32.mrb[0].mxu0
          %v3170 = vadd.f32 0.0, %v3169
          %v3171 = vpop.f32.mrb[0].mxu0
          %v3172 = vpop.f32.mrb[0].mxu0
          %v3173 = vadd.f32 0.0, %v3172
          %v3174 = vpop.f32.mrb[0].mxu0
          %3175 = vmatprep.mubr.bf16.mxu0 0
          %3176 = vmatmul.mubr.bf16.gmra.mrb[0].mxu0 %v3086
          %v3177 = vpop.f32.mrb[0].mxu0
          %v3178 = vadd.f32 0.0, %v3177
          %v3179 = vpop.f32.mrb[0].mxu0
          %v3180 = vpop.f32.mrb[0].mxu0
          %v3181 = vadd.f32 0.0, %v3180
          %v3182 = vpop.f32.mrb[0].mxu0
          %3183 = vdwg.mxu0
          %v3184 = vadd.f32 %v3063, %v3122
          %v3185 = vadd.f32 %v3064, %v3125
          %v3186 = vadd.f32 %v3065, %v3130
          %v3187 = vadd.f32 %v3066, %v3133
          %v3188 = vadd.f32 %v3067, %v3138
          %v3189 = vadd.f32 %v3068, %v3141
          %v3190 = vadd.f32 %v3069, %v3146
          %v3191 = vadd.f32 %v3070, %v3149
          %v3192 = vadd.f32 %v3071, %v3154
          %v3193 = vadd.f32 %v3072, %v3157
          %v3194 = vadd.f32 %v3073, %v3162
          %v3195 = vadd.f32 %v3074, %v3165
          %v3196 = vadd.f32 %v3075, %v3170
          %v3197 = vadd.f32 %v3076, %v3173
          %v3198 = vadd.f32 %v3077, %v3178
          %v3199 = vadd.f32 %v3078, %v3181
          %3200 = vst.msk [vmem:[#allocation5 + $0x8] sm:$0xff] %vm683, %v3184
          %3201 = vst.msk [vmem:[#allocation5 + $0x18] sm:$0xff] %vm683, %v3185
          %3202 = vst.msk [vmem:[#allocation5 + $0x28] sm:$0xff] %vm683, %v3186
          %3203 = vst.msk [vmem:[#allocation5 + $0x38] sm:$0xff] %vm683, %v3187
          %3204 = vst.msk [vmem:[#allocation5 + $0x48] sm:$0xff] %vm683, %v3188
          %3205 = vst.msk [vmem:[#allocation5 + $0x58] sm:$0xff] %vm683, %v3189
          %3206 = vst.msk [vmem:[#allocation5 + $0x68] sm:$0xff] %vm683, %v3190
          %3207 = vst.msk [vmem:[#allocation5 + $0x78] sm:$0xff] %vm683, %v3191
          %3208 = vst.msk [vmem:[#allocation5 + $0x88] sm:$0xff] %vm683, %v3192
          %3209 = vst.msk [vmem:[#allocation5 + $0x98] sm:$0xff] %vm683, %v3193
          %3210 = vst.msk [vmem:[#allocation5 + $0xa8] sm:$0xff] %vm683, %v3194
          %3211 = vst.msk [vmem:[#allocation5 + $0xb8] sm:$0xff] %vm683, %v3195
          %3212 = vst.msk [vmem:[#allocation5 + $0xc8] sm:$0xff] %vm683, %v3196
          %3213 = vst.msk [vmem:[#allocation5 + $0xd8] sm:$0xff] %vm683, %v3197
          %3214 = vst.msk [vmem:[#allocation5 + $0xe8] sm:$0xff] %vm683, %v3198
          %3215 = vst.msk [vmem:[#allocation5 + $0xf8] sm:$0xff] %vm683, %v3199
          %3216 = vst.msk [vmem:[%s2629] sm:$0xff] %vm1165, %v2678
          %3217 = vst.msk [vmem:[%s2629 + $0x8] sm:$0xff] %vm1165, %v2679
          %3218 = vst.msk [vmem:[%s2629 + $0x10] sm:$0xff] %vm1165, %v2680
          %3219 = vst.msk [vmem:[%s2629 + $0x18] sm:$0xff] %vm1165, %v2681
          %3220 = vst.msk [vmem:[%s2629 + $0x20] sm:$0xff] %vm1165, %v2682
          %3221 = vst.msk [vmem:[%s2629 + $0x28] sm:$0xff] %vm1165, %v2683
          %3222 = vst.msk [vmem:[%s2629 + $0x30] sm:$0xff] %vm1165, %v2684
          %3223 = vst.msk [vmem:[%s2629 + $0x38] sm:$0xff] %vm1165, %v2685
          %3224 = vst.msk [vmem:[%s2629 + $0x40] sm:$0xff] %vm1165, %v2686
          %3225 = vst.msk [vmem:[%s2629 + $0x48] sm:$0xff] %vm1165, %v2687
          %3226 = vst.msk [vmem:[%s2629 + $0x50] sm:$0xff] %vm1165, %v2688
          %3227 = vst.msk [vmem:[%s2629 + $0x58] sm:$0xff] %vm1165, %v2689
          %3228 = vst.msk [vmem:[%s2629 + $0x60] sm:$0xff] %vm1165, %v2690
          %3229 = vst.msk [vmem:[%s2629 + $0x68] sm:$0xff] %vm1165, %v2691
          %3230 = vst.msk [vmem:[%s2629 + $0x70] sm:$0xff] %vm1165, %v2692
          %3231 = vst.msk [vmem:[%s2629 + $0x78] sm:$0xff] %vm1165, %v2693
          %v3232 = vld [vmem:[#allocation2 + $0x8] sm:$0xff]
          %v3233 = vld [vmem:[#allocation2 + $0x18] sm:$0xff]
          %v3234 = vld [vmem:[#allocation2 + $0x28] sm:$0xff]
          %v3235 = vld [vmem:[#allocation2 + $0x38] sm:$0xff]
          %v3236 = vld [vmem:[#allocation2 + $0x48] sm:$0xff]
          %v3237 = vld [vmem:[#allocation2 + $0x58] sm:$0xff]
          %v3238 = vld [vmem:[#allocation2 + $0x68] sm:$0xff]
          %v3239 = vld [vmem:[#allocation2 + $0x78] sm:$0xff]
          %v3240 = vld [vmem:[%s274 + $0x8] sm:$0xff]
          %v3241 = vld [vmem:[%s274 + $0x18] sm:$0xff]
          %v3242 = vld [vmem:[%s274 + $0x28] sm:$0xff]
          %v3243 = vld [vmem:[%s274 + $0x38] sm:$0xff]
          %v3244 = vld [vmem:[%s274 + $0x48] sm:$0xff]
          %v3245 = vld [vmem:[%s274 + $0x58] sm:$0xff]
          %v3246 = vld [vmem:[%s274 + $0x68] sm:$0xff]
          %v3247 = vld [vmem:[%s274 + $0x78] sm:$0xff]
          %v3248 = vld [vmem:[%s274 + $0x88] sm:$0xff]
          %v3249 = vld [vmem:[%s274 + $0x98] sm:$0xff]
          %v3250 = vld [vmem:[%s274 + $0xa8] sm:$0xff]
          %v3251 = vld [vmem:[%s274 + $0xb8] sm:$0xff]
          %v3252 = vld [vmem:[%s274 + $0xc8] sm:$0xff]
          %v3253 = vld [vmem:[%s274 + $0xd8] sm:$0xff]
          %v3254 = vld [vmem:[%s274 + $0xe8] sm:$0xff]
          %v3255 = vld [vmem:[%s274 + $0xf8] sm:$0xff]
          %v3256 = vpack.c.bf16 %v3241, %v3240
          %v3257 = vpack.c.bf16 %v3243, %v3242
          %v3258 = vpack.c.bf16 %v3245, %v3244
          %v3259 = vpack.c.bf16 %v3247, %v3246
          %v3260 = vpack.c.bf16 %v3249, %v3248
          %v3261 = vpack.c.bf16 %v3251, %v3250
          %v3262 = vpack.c.bf16 %v3253, %v3252
          %v3263 = vpack.c.bf16 %v3255, %v3254
          %v3264 = vld [vmem:[%s283 + $0x8] sm:$0xff]
          %v3265 = vld [vmem:[%s283 + $0x18] sm:$0xff]
          %v3266 = vld [vmem:[%s283 + $0x28] sm:$0xff]
          %v3267 = vld [vmem:[%s283 + $0x38] sm:$0xff]
          %v3268 = vld [vmem:[%s283 + $0x48] sm:$0xff]
          %v3269 = vld [vmem:[%s283 + $0x58] sm:$0xff]
          %v3270 = vld [vmem:[%s283 + $0x68] sm:$0xff]
          %v3271 = vld [vmem:[%s283 + $0x78] sm:$0xff]
          %v3272 = vld [vmem:[%s283 + $0x88] sm:$0xff]
          %v3273 = vld [vmem:[%s283 + $0x98] sm:$0xff]
          %v3274 = vld [vmem:[%s283 + $0xa8] sm:$0xff]
          %v3275 = vld [vmem:[%s283 + $0xb8] sm:$0xff]
          %v3276 = vld [vmem:[%s283 + $0xc8] sm:$0xff]
          %v3277 = vld [vmem:[%s283 + $0xd8] sm:$0xff]
          %v3278 = vld [vmem:[%s283 + $0xe8] sm:$0xff]
          %v3279 = vld [vmem:[%s283 + $0xf8] sm:$0xff]
          %v3280 = vpack.c.bf16 %v3265, %v3264
          %v3281 = vpack.c.bf16 %v3267, %v3266
          %v3282 = vpack.c.bf16 %v3269, %v3268
          %v3283 = vpack.c.bf16 %v3271, %v3270
          %v3284 = vpack.c.bf16 %v3273, %v3272
          %v3285 = vpack.c.bf16 %v3275, %v3274
          %v3286 = vpack.c.bf16 %v3277, %v3276
          %v3287 = vpack.c.bf16 %v3279, %v3278
          %3296 = vrot.lane.b32.xlu0 %v3232, 64
          %v3297 = vpop.permute.xlu0 %3296
          %3298 = vrot.lane.b32.xlu0 %v3233, 64
          %v3299 = vpop.permute.xlu0 %3298
          %3300 = vrot.lane.b32.xlu0 %v3234, 64
          %v3301 = vpop.permute.xlu0 %3300
          %3302 = vrot.lane.b32.xlu0 %v3235, 64
          %v3303 = vpop.permute.xlu0 %3302
          %3304 = vrot.lane.b32.xlu0 %v3236, 64
          %v3305 = vpop.permute.xlu0 %3304
          %3306 = vrot.lane.b32.xlu0 %v3237, 64
          %v3307 = vpop.permute.xlu0 %3306
          %3308 = vrot.lane.b32.xlu0 %v3238, 64
          %v3309 = vpop.permute.xlu0 %3308
          %3310 = vrot.lane.b32.xlu0 %v3239, 64
          %v3311 = vpop.permute.xlu0 %3310
          %3320 = vrot.lane.b32.xlu0 %v3256, 64
          %v3321 = vpop.permute.xlu0 %3320
          %3322 = vrot.lane.b32.xlu0 %v3257, 64
          %v3323 = vpop.permute.xlu0 %3322
          %3324 = vrot.lane.b32.xlu0 %v3258, 64
          %v3325 = vpop.permute.xlu0 %3324
          %3326 = vrot.lane.b32.xlu0 %v3259, 64
          %v3327 = vpop.permute.xlu0 %3326
          %3328 = vrot.lane.b32.xlu0 %v3260, 64
          %v3329 = vpop.permute.xlu0 %3328
          %3330 = vrot.lane.b32.xlu0 %v3261, 64
          %v3331 = vpop.permute.xlu0 %3330
          %3332 = vrot.lane.b32.xlu0 %v3262, 64
          %v3333 = vpop.permute.xlu0 %3332
          %3334 = vrot.lane.b32.xlu0 %v3263, 64
          %v3335 = vpop.permute.xlu0 %3334
          %v3337 = vsel %vm683, %v3297, 0
          %v3340 = vsel %vm683, %v3299, 0
          %v3343 = vsel %vm683, %v3301, 0
          %v3346 = vsel %vm683, %v3303, 0
          %v3349 = vsel %vm683, %v3305, 0
          %v3352 = vsel %vm683, %v3307, 0
          %v3355 = vsel %vm683, %v3309, 0
          %v3358 = vsel %vm683, %v3311, 0
          %v3361 = vsel %vm683, %v3321, 0
          %v3364 = vsel %vm683, %v3323, 0
          %v3367 = vsel %vm683, %v3325, 0
          %v3370 = vsel %vm683, %v3327, 0
          %v3373 = vsel %vm683, %v3329, 0
          %v3376 = vsel %vm683, %v3331, 0
          %v3379 = vsel %vm683, %v3333, 0
          %v3382 = vsel %vm683, %v3335, 0
          %3384 = vmatprep.subr.bf16.mxu0 0
          %3385 = vmatpush1.bf16.xpose.msra.mxu0 %v3361
          %3386 = vmatprep.subr.bf16.mxu0 0
          %3387 = vmatpush1.bf16.xpose.msra.mxu0 %v3364
          %3388 = vmatprep.subr.bf16.mxu0 0
          %3389 = vmatpush1.bf16.xpose.msra.mxu0 %v3367
          %3390 = vmatprep.subr.bf16.mxu0 0
          %3391 = vmatpush1.bf16.xpose.msra.mxu0 %v3370
          %3392 = vmatprep.subr.bf16.mxu0 0
          %3393 = vmatpush1.bf16.xpose.msra.mxu0 %v3373
          %3394 = vmatprep.subr.bf16.mxu0 0
          %3395 = vmatpush1.bf16.xpose.msra.mxu0 %v3376
          %3396 = vmatprep.subr.bf16.mxu0 0
          %3397 = vmatpush1.bf16.xpose.msra.mxu0 %v3379
          %3398 = vmatprep.subr.bf16.mxu0 0
          %3399 = vmatpush1.bf16.xpose.msra.mxu0 %v3382
          %3400 = vmatprep.subr.bf16.mxu0 0
          %3401 = vmatpush1.bf16.xpose.msra.mxu0 0
          %3402 = vmatprep.subr.bf16.mxu0 0
          %3403 = vmatpush1.bf16.xpose.msra.mxu0 0
          %3404 = vmatprep.subr.bf16.mxu0 0
          %3405 = vmatpush1.bf16.xpose.msra.mxu0 0
          %3406 = vmatprep.subr.bf16.mxu0 0
          %3407 = vmatpush1.bf16.xpose.msra.mxu0 0
          %3408 = vmatprep.subr.bf16.mxu0 0
          %3409 = vmatpush1.bf16.xpose.msra.mxu0 0
          %3410 = vmatprep.subr.bf16.mxu0 0
          %3411 = vmatpush1.bf16.xpose.msra.mxu0 0
          %3412 = vmatprep.subr.bf16.mxu0 0
          %3413 = vmatpush1.bf16.xpose.msra.mxu0 0
          %3414 = vmatprep.subr.bf16.mxu0 0
          %3415 = vmatpush1.bf16.xpose.msra.mxu0 0
          %3416 = vmatprep.mubr.bf16.mxu0 0
          %3417 = vmatmul.mubr.bf16.gmra.mrb[0].mxu0 %v3337
          %v3418 = vpop.f32.mrb[0].mxu0
          %v3419 = vadd.f32 0.0, %v3418
          %v3420 = vpop.f32.mrb[0].mxu0
          %v3421 = vpop.f32.mrb[0].mxu0
          %v3422 = vadd.f32 0.0, %v3421
          %v3423 = vpop.f32.mrb[0].mxu0
          %3424 = vmatprep.mubr.bf16.mxu0 0
          %3425 = vmatmul.mubr.bf16.gmra.mrb[0].mxu0 %v3340
          %v3426 = vpop.f32.mrb[0].mxu0
          %v3427 = vadd.f32 0.0, %v3426
          %v3428 = vpop.f32.mrb[0].mxu0
          %v3429 = vpop.f32.mrb[0].mxu0
          %v3430 = vadd.f32 0.0, %v3429
          %v3431 = vpop.f32.mrb[0].mxu0
          %3432 = vmatprep.mubr.bf16.mxu0 0
          %3433 = vmatmul.mubr.bf16.gmra.mrb[0].mxu0 %v3343
          %v3434 = vpop.f32.mrb[0].mxu0
          %v3435 = vadd.f32 0.0, %v3434
          %v3436 = vpop.f32.mrb[0].mxu0
          %v3437 = vpop.f32.mrb[0].mxu0
          %v3438 = vadd.f32 0.0, %v3437
          %v3439 = vpop.f32.mrb[0].mxu0
          %3440 = vmatprep.mubr.bf16.mxu0 0
          %3441 = vmatmul.mubr.bf16.gmra.mrb[0].mxu0 %v3346
          %v3442 = vpop.f32.mrb[0].mxu0
          %v3443 = vadd.f32 0.0, %v3442
          %v3444 = vpop.f32.mrb[0].mxu0
          %v3445 = vpop.f32.mrb[0].mxu0
          %v3446 = vadd.f32 0.0, %v3445
          %v3447 = vpop.f32.mrb[0].mxu0
          %3448 = vmatprep.mubr.bf16.mxu0 0
          %3449 = vmatmul.mubr.bf16.gmra.mrb[0].mxu0 %v3349
          %v3450 = vpop.f32.mrb[0].mxu0
          %v3451 = vadd.f32 0.0, %v3450
          %v3452 = vpop.f32.mrb[0].mxu0
          %v3453 = vpop.f32.mrb[0].mxu0
          %v3454 = vadd.f32 0.0, %v3453
          %v3455 = vpop.f32.mrb[0].mxu0
          %3456 = vmatprep.mubr.bf16.mxu0 0
          %3457 = vmatmul.mubr.bf16.gmra.mrb[0].mxu0 %v3352
          %v3458 = vpop.f32.mrb[0].mxu0
          %v3459 = vadd.f32 0.0, %v3458
          %v3460 = vpop.f32.mrb[0].mxu0
          %v3461 = vpop.f32.mrb[0].mxu0
          %v3462 = vadd.f32 0.0, %v3461
          %v3463 = vpop.f32.mrb[0].mxu0
          %3464 = vmatprep.mubr.bf16.mxu0 0
          %3465 = vmatmul.mubr.bf16.gmra.mrb[0].mxu0 %v3355
          %v3466 = vpop.f32.mrb[0].mxu0
          %v3467 = vadd.f32 0.0, %v3466
          %v3468 = vpop.f32.mrb[0].mxu0
          %v3469 = vpop.f32.mrb[0].mxu0
          %v3470 = vadd.f32 0.0, %v3469
          %v3471 = vpop.f32.mrb[0].mxu0
          %3472 = vmatprep.mubr.bf16.mxu0 0
          %3473 = vmatmul.mubr.bf16.gmra.mrb[0].mxu0 %v3358
          %v3474 = vpop.f32.mrb[0].mxu0
          %v3475 = vadd.f32 0.0, %v3474
          %v3476 = vpop.f32.mrb[0].mxu0
          %v3477 = vpop.f32.mrb[0].mxu0
          %v3478 = vadd.f32 0.0, %v3477
          %v3479 = vpop.f32.mrb[0].mxu0
          %3480 = vdwg.mxu0
          %v3481 = vsel %vm611, -1e+30, %v3419
          %v3482 = vsel %vm612, -1e+30, %v3422
          %v3483 = vsel %vm613, -1e+30, %v3427
          %v3484 = vsel %vm614, -1e+30, %v3430
          %v3485 = vsel %vm615, -1e+30, %v3435
          %v3486 = vsel %vm616, -1e+30, %v3438
          %v3487 = vsel %vm617, -1e+30, %v3443
          %v3488 = vsel %vm618, -1e+30, %v3446
          %v3489 = vsel %vm619, -1e+30, %v3451
          %v3490 = vsel %vm620, -1e+30, %v3454
          %v3491 = vsel %vm621, -1e+30, %v3459
          %v3492 = vsel %vm622, -1e+30, %v3462
          %v3493 = vsel %vm623, -1e+30, %v3467
          %v3494 = vsel %vm624, -1e+30, %v3470
          %v3495 = vsel %vm625, -1e+30, %v3475
          %v3496 = vsel %vm626, -1e+30, %v3478
          %s3497 = scalar_lea.vmem [#allocation3], 384
          %v3498 = vld [vmem:[%s3497] sm:$0xff]
          %v3499 = vld [vmem:[%s3497 + $0x8] sm:$0xff]
          %v3500 = vld [vmem:[%s3497 + $0x10] sm:$0xff]
          %v3501 = vld [vmem:[%s3497 + $0x18] sm:$0xff]
          %v3502 = vld [vmem:[%s3497 + $0x20] sm:$0xff]
          %v3503 = vld [vmem:[%s3497 + $0x28] sm:$0xff]
          %v3504 = vld [vmem:[%s3497 + $0x30] sm:$0xff]
          %v3505 = vld [vmem:[%s3497 + $0x38] sm:$0xff]
          %v3506 = vld [vmem:[%s3497 + $0x40] sm:$0xff]
          %v3507 = vld [vmem:[%s3497 + $0x48] sm:$0xff]
          %v3508 = vld [vmem:[%s3497 + $0x50] sm:$0xff]
          %v3509 = vld [vmem:[%s3497 + $0x58] sm:$0xff]
          %v3510 = vld [vmem:[%s3497 + $0x60] sm:$0xff]
          %v3511 = vld [vmem:[%s3497 + $0x68] sm:$0xff]
          %v3512 = vld [vmem:[%s3497 + $0x70] sm:$0xff]
          %v3513 = vld [vmem:[%s3497 + $0x78] sm:$0xff]
          %3514 = vmax.xlane.f32.xlu0 %v3481
          %v3515 = vpop.xlane.xlu0 %3514
          %3516 = vmax.xlane.f32.xlu0 %v3482
          %v3517 = vpop.xlane.xlu0 %3516
          %3518 = vmax.xlane.f32.xlu0 %v3483
          %v3519 = vpop.xlane.xlu0 %3518
          %3520 = vmax.xlane.f32.xlu0 %v3484
          %v3521 = vpop.xlane.xlu0 %3520
          %3522 = vmax.xlane.f32.xlu0 %v3485
          %v3523 = vpop.xlane.xlu0 %3522
          %3524 = vmax.xlane.f32.xlu0 %v3486
          %v3525 = vpop.xlane.xlu0 %3524
          %3526 = vmax.xlane.f32.xlu0 %v3487
          %v3527 = vpop.xlane.xlu0 %3526
          %3528 = vmax.xlane.f32.xlu0 %v3488
          %v3529 = vpop.xlane.xlu0 %3528
          %3530 = vmax.xlane.f32.xlu0 %v3489
          %v3531 = vpop.xlane.xlu0 %3530
          %3532 = vmax.xlane.f32.xlu0 %v3490
          %v3533 = vpop.xlane.xlu0 %3532
          %3534 = vmax.xlane.f32.xlu0 %v3491
          %v3535 = vpop.xlane.xlu0 %3534
          %3536 = vmax.xlane.f32.xlu0 %v3492
          %v3537 = vpop.xlane.xlu0 %3536
          %3538 = vmax.xlane.f32.xlu0 %v3493
          %v3539 = vpop.xlane.xlu0 %3538
          %3540 = vmax.xlane.f32.xlu0 %v3494
          %v3541 = vpop.xlane.xlu0 %3540
          %3542 = vmax.xlane.f32.xlu0 %v3495
          %v3543 = vpop.xlane.xlu0 %3542
          %3544 = vmax.xlane.f32.xlu0 %v3496
          %v3545 = vpop.xlane.xlu0 %3544
          %v3546 = vmax.f32 %v3498, %v3515
          %v3547 = vmax.f32 %v3499, %v3517
          %v3548 = vmax.f32 %v3500, %v3519
          %v3549 = vmax.f32 %v3501, %v3521
          %v3550 = vmax.f32 %v3502, %v3523
          %v3551 = vmax.f32 %v3503, %v3525
          %v3552 = vmax.f32 %v3504, %v3527
          %v3553 = vmax.f32 %v3505, %v3529
          %v3554 = vmax.f32 %v3506, %v3531
          %v3555 = vmax.f32 %v3507, %v3533
          %v3556 = vmax.f32 %v3508, %v3535
          %v3557 = vmax.f32 %v3509, %v3537
          %v3558 = vmax.f32 %v3510, %v3539
          %v3559 = vmax.f32 %v3511, %v3541
          %v3560 = vmax.f32 %v3512, %v3543
          %v3561 = vmax.f32 %v3513, %v3545
          %v3562 = vsub.f32 %v3498, %v3546
          %v3563 = vsub.f32 %v3499, %v3547
          %v3564 = vsub.f32 %v3500, %v3548
          %v3565 = vsub.f32 %v3501, %v3549
          %v3566 = vsub.f32 %v3502, %v3550
          %v3567 = vsub.f32 %v3503, %v3551
          %v3568 = vsub.f32 %v3504, %v3552
          %v3569 = vsub.f32 %v3505, %v3553
          %v3570 = vsub.f32 %v3506, %v3554
          %v3571 = vsub.f32 %v3507, %v3555
          %v3572 = vsub.f32 %v3508, %v3556
          %v3573 = vsub.f32 %v3509, %v3557
          %v3574 = vsub.f32 %v3510, %v3558
          %v3575 = vsub.f32 %v3511, %v3559
          %v3576 = vsub.f32 %v3512, %v3560
          %v3577 = vsub.f32 %v3513, %v3561
          %v3578 = vmul.f32 %v3562, 1.442695
          %v3579 = vpow.pop %v3578
          %v3580 = vmul.f32 %v3563, 1.442695
          %v3581 = vpow.pop %v3580
          %v3582 = vmul.f32 %v3564, 1.442695
          %v3583 = vpow.pop %v3582
          %v3584 = vmul.f32 %v3565, 1.442695
          %v3585 = vpow.pop %v3584
          %v3586 = vmul.f32 %v3566, 1.442695
          %v3587 = vpow.pop %v3586
          %v3588 = vmul.f32 %v3567, 1.442695
          %v3589 = vpow.pop %v3588
          %v3590 = vmul.f32 %v3568, 1.442695
          %v3591 = vpow.pop %v3590
          %v3592 = vmul.f32 %v3569, 1.442695
          %v3593 = vpow.pop %v3592
          %v3594 = vmul.f32 %v3570, 1.442695
          %v3595 = vpow.pop %v3594
          %v3596 = vmul.f32 %v3571, 1.442695
          %v3597 = vpow.pop %v3596
          %v3598 = vmul.f32 %v3572, 1.442695
          %v3599 = vpow.pop %v3598
          %v3600 = vmul.f32 %v3573, 1.442695
          %v3601 = vpow.pop %v3600
          %v3602 = vmul.f32 %v3574, 1.442695
          %v3603 = vpow.pop %v3602
          %v3604 = vmul.f32 %v3575, 1.442695
          %v3605 = vpow.pop %v3604
          %v3606 = vmul.f32 %v3576, 1.442695
          %v3607 = vpow.pop %v3606
          %v3608 = vmul.f32 %v3577, 1.442695
          %v3609 = vpow.pop %v3608
          %3611 = vset.pattern.permute.xlu0 0
          %3612 = vperm.xlu0 %3611, %v3546
          %v3613 = vpop.permute.xlu0 %3612
          %3616 = vset.pattern.permute.xlu0 0
          %3617 = vperm.xlu0 %3616, %v3547
          %v3618 = vpop.permute.xlu0 %3617
          %3621 = vset.pattern.permute.xlu0 0
          %3622 = vperm.xlu0 %3621, %v3548
          %v3623 = vpop.permute.xlu0 %3622
          %3626 = vset.pattern.permute.xlu0 0
          %3627 = vperm.xlu0 %3626, %v3549
          %v3628 = vpop.permute.xlu0 %3627
          %3631 = vset.pattern.permute.xlu0 0
          %3632 = vperm.xlu0 %3631, %v3550
          %v3633 = vpop.permute.xlu0 %3632
          %3636 = vset.pattern.permute.xlu0 0
          %3637 = vperm.xlu0 %3636, %v3551
          %v3638 = vpop.permute.xlu0 %3637
          %3641 = vset.pattern.permute.xlu0 0
          %3642 = vperm.xlu0 %3641, %v3552
          %v3643 = vpop.permute.xlu0 %3642
          %3646 = vset.pattern.permute.xlu0 0
          %3647 = vperm.xlu0 %3646, %v3553
          %v3648 = vpop.permute.xlu0 %3647
          %3651 = vset.pattern.permute.xlu0 0
          %3652 = vperm.xlu0 %3651, %v3554
          %v3653 = vpop.permute.xlu0 %3652
          %3656 = vset.pattern.permute.xlu0 0
          %3657 = vperm.xlu0 %3656, %v3555
          %v3658 = vpop.permute.xlu0 %3657
          %3661 = vset.pattern.permute.xlu0 0
          %3662 = vperm.xlu0 %3661, %v3556
          %v3663 = vpop.permute.xlu0 %3662
          %3666 = vset.pattern.permute.xlu0 0
          %3667 = vperm.xlu0 %3666, %v3557
          %v3668 = vpop.permute.xlu0 %3667
          %3671 = vset.pattern.permute.xlu0 0
          %3672 = vperm.xlu0 %3671, %v3558
          %v3673 = vpop.permute.xlu0 %3672
          %3676 = vset.pattern.permute.xlu0 0
          %3677 = vperm.xlu0 %3676, %v3559
          %v3678 = vpop.permute.xlu0 %3677
          %3681 = vset.pattern.permute.xlu0 0
          %3682 = vperm.xlu0 %3681, %v3560
          %v3683 = vpop.permute.xlu0 %3682
          %3686 = vset.pattern.permute.xlu0 0
          %3687 = vperm.xlu0 %3686, %v3561
          %v3688 = vpop.permute.xlu0 %3687
          %v3690 = vsub.f32 %v3481, %v3613
          %v3691 = vsub.f32 %v3482, %v3618
          %v3692 = vsub.f32 %v3483, %v3623
          %v3693 = vsub.f32 %v3484, %v3628
          %v3694 = vsub.f32 %v3485, %v3633
          %v3695 = vsub.f32 %v3486, %v3638
          %v3696 = vsub.f32 %v3487, %v3643
          %v3697 = vsub.f32 %v3488, %v3648
          %v3698 = vsub.f32 %v3489, %v3653
          %v3699 = vsub.f32 %v3490, %v3658
          %v3700 = vsub.f32 %v3491, %v3663
          %v3701 = vsub.f32 %v3492, %v3668
          %v3702 = vsub.f32 %v3493, %v3673
          %v3703 = vsub.f32 %v3494, %v3678
          %v3704 = vsub.f32 %v3495, %v3683
          %v3705 = vsub.f32 %v3496, %v3688
          %v3706 = vmul.f32 %v3690, 1.442695
          %v3707 = vpow.pop %v3706
          %v3708 = vmul.f32 %v3691, 1.442695
          %v3709 = vpow.pop %v3708
          %v3710 = vmul.f32 %v3692, 1.442695
          %v3711 = vpow.pop %v3710
          %v3712 = vmul.f32 %v3693, 1.442695
          %v3713 = vpow.pop %v3712
          %v3714 = vmul.f32 %v3694, 1.442695
          %v3715 = vpow.pop %v3714
          %v3716 = vmul.f32 %v3695, 1.442695
          %v3717 = vpow.pop %v3716
          %v3718 = vmul.f32 %v3696, 1.442695
          %v3719 = vpow.pop %v3718
          %v3720 = vmul.f32 %v3697, 1.442695
          %v3721 = vpow.pop %v3720
          %v3722 = vmul.f32 %v3698, 1.442695
          %v3723 = vpow.pop %v3722
          %v3724 = vmul.f32 %v3699, 1.442695
          %v3725 = vpow.pop %v3724
          %v3726 = vmul.f32 %v3700, 1.442695
          %v3727 = vpow.pop %v3726
          %v3728 = vmul.f32 %v3701, 1.442695
          %v3729 = vpow.pop %v3728
          %v3730 = vmul.f32 %v3702, 1.442695
          %v3731 = vpow.pop %v3730
          %v3732 = vmul.f32 %v3703, 1.442695
          %v3733 = vpow.pop %v3732
          %v3734 = vmul.f32 %v3704, 1.442695
          %v3735 = vpow.pop %v3734
          %v3736 = vmul.f32 %v3705, 1.442695
          %v3737 = vpow.pop %v3736
          %s3738 = scalar_lea.vmem [#allocation4], 384
          %v3739 = vld [vmem:[%s3738] sm:$0xff]
          %v3740 = vld [vmem:[%s3738 + $0x8] sm:$0xff]
          %v3741 = vld [vmem:[%s3738 + $0x10] sm:$0xff]
          %v3742 = vld [vmem:[%s3738 + $0x18] sm:$0xff]
          %v3743 = vld [vmem:[%s3738 + $0x20] sm:$0xff]
          %v3744 = vld [vmem:[%s3738 + $0x28] sm:$0xff]
          %v3745 = vld [vmem:[%s3738 + $0x30] sm:$0xff]
          %v3746 = vld [vmem:[%s3738 + $0x38] sm:$0xff]
          %v3747 = vld [vmem:[%s3738 + $0x40] sm:$0xff]
          %v3748 = vld [vmem:[%s3738 + $0x48] sm:$0xff]
          %v3749 = vld [vmem:[%s3738 + $0x50] sm:$0xff]
          %v3750 = vld [vmem:[%s3738 + $0x58] sm:$0xff]
          %v3751 = vld [vmem:[%s3738 + $0x60] sm:$0xff]
          %v3752 = vld [vmem:[%s3738 + $0x68] sm:$0xff]
          %v3753 = vld [vmem:[%s3738 + $0x70] sm:$0xff]
          %v3754 = vld [vmem:[%s3738 + $0x78] sm:$0xff]
          %v3755 = vmul.f32 %v3579, %v3739
          %v3756 = vmul.f32 %v3581, %v3740
          %v3757 = vmul.f32 %v3583, %v3741
          %v3758 = vmul.f32 %v3585, %v3742
          %v3759 = vmul.f32 %v3587, %v3743
          %v3760 = vmul.f32 %v3589, %v3744
          %v3761 = vmul.f32 %v3591, %v3745
          %v3762 = vmul.f32 %v3593, %v3746
          %v3763 = vmul.f32 %v3595, %v3747
          %v3764 = vmul.f32 %v3597, %v3748
          %v3765 = vmul.f32 %v3599, %v3749
          %v3766 = vmul.f32 %v3601, %v3750
          %v3767 = vmul.f32 %v3603, %v3751
          %v3768 = vmul.f32 %v3605, %v3752
          %v3769 = vmul.f32 %v3607, %v3753
          %v3770 = vmul.f32 %v3609, %v3754
          %3771 = vadd.xlane.f32.xlu0 %v3707
          %v3772 = vpop.xlane.xlu0 %3771
          %3773 = vadd.xlane.f32.xlu0 %v3709
          %v3774 = vpop.xlane.xlu0 %3773
          %3775 = vadd.xlane.f32.xlu0 %v3711
          %v3776 = vpop.xlane.xlu0 %3775
          %3777 = vadd.xlane.f32.xlu0 %v3713
          %v3778 = vpop.xlane.xlu0 %3777
          %3779 = vadd.xlane.f32.xlu0 %v3715
          %v3780 = vpop.xlane.xlu0 %3779
          %3781 = vadd.xlane.f32.xlu0 %v3717
          %v3782 = vpop.xlane.xlu0 %3781
          %3783 = vadd.xlane.f32.xlu0 %v3719
          %v3784 = vpop.xlane.xlu0 %3783
          %3785 = vadd.xlane.f32.xlu0 %v3721
          %v3786 = vpop.xlane.xlu0 %3785
          %3787 = vadd.xlane.f32.xlu0 %v3723
          %v3788 = vpop.xlane.xlu0 %3787
          %3789 = vadd.xlane.f32.xlu0 %v3725
          %v3790 = vpop.xlane.xlu0 %3789
          %3791 = vadd.xlane.f32.xlu0 %v3727
          %v3792 = vpop.xlane.xlu0 %3791
          %3793 = vadd.xlane.f32.xlu0 %v3729
          %v3794 = vpop.xlane.xlu0 %3793
          %3795 = vadd.xlane.f32.xlu0 %v3731
          %v3796 = vpop.xlane.xlu0 %3795
          %3797 = vadd.xlane.f32.xlu0 %v3733
          %v3798 = vpop.xlane.xlu0 %3797
          %3799 = vadd.xlane.f32.xlu0 %v3735
          %v3800 = vpop.xlane.xlu0 %3799
          %3801 = vadd.xlane.f32.xlu0 %v3737
          %v3802 = vpop.xlane.xlu0 %3801
          %v3803 = vadd.f32 %v3755, %v3772
          %v3804 = vadd.f32 %v3756, %v3774
          %v3805 = vadd.f32 %v3757, %v3776
          %v3806 = vadd.f32 %v3758, %v3778
          %v3807 = vadd.f32 %v3759, %v3780
          %v3808 = vadd.f32 %v3760, %v3782
          %v3809 = vadd.f32 %v3761, %v3784
          %v3810 = vadd.f32 %v3762, %v3786
          %v3811 = vadd.f32 %v3763, %v3788
          %v3812 = vadd.f32 %v3764, %v3790
          %v3813 = vadd.f32 %v3765, %v3792
          %v3814 = vadd.f32 %v3766, %v3794
          %v3815 = vadd.f32 %v3767, %v3796
          %v3816 = vadd.f32 %v3768, %v3798
          %v3817 = vadd.f32 %v3769, %v3800
          %v3818 = vadd.f32 %v3770, %v3802
          %3819 = vst.msk [vmem:[%s3738] sm:$0xff] %vm1165, %v3803
          %3820 = vst.msk [vmem:[%s3738 + $0x8] sm:$0xff] %vm1165, %v3804
          %3821 = vst.msk [vmem:[%s3738 + $0x10] sm:$0xff] %vm1165, %v3805
          %3822 = vst.msk [vmem:[%s3738 + $0x18] sm:$0xff] %vm1165, %v3806
          %3823 = vst.msk [vmem:[%s3738 + $0x20] sm:$0xff] %vm1165, %v3807
          %3824 = vst.msk [vmem:[%s3738 + $0x28] sm:$0xff] %vm1165, %v3808
          %3825 = vst.msk [vmem:[%s3738 + $0x30] sm:$0xff] %vm1165, %v3809
          %3826 = vst.msk [vmem:[%s3738 + $0x38] sm:$0xff] %vm1165, %v3810
          %3827 = vst.msk [vmem:[%s3738 + $0x40] sm:$0xff] %vm1165, %v3811
          %3828 = vst.msk [vmem:[%s3738 + $0x48] sm:$0xff] %vm1165, %v3812
          %3829 = vst.msk [vmem:[%s3738 + $0x50] sm:$0xff] %vm1165, %v3813
          %3830 = vst.msk [vmem:[%s3738 + $0x58] sm:$0xff] %vm1165, %v3814
          %3831 = vst.msk [vmem:[%s3738 + $0x60] sm:$0xff] %vm1165, %v3815
          %3832 = vst.msk [vmem:[%s3738 + $0x68] sm:$0xff] %vm1165, %v3816
          %3833 = vst.msk [vmem:[%s3738 + $0x70] sm:$0xff] %vm1165, %v3817
          %3834 = vst.msk [vmem:[%s3738 + $0x78] sm:$0xff] %vm1165, %v3818
          %v3835 = vld [vmem:[#allocation5 + $0x8] sm:$0xff]
          %v3836 = vld [vmem:[#allocation5 + $0x18] sm:$0xff]
          %v3837 = vld [vmem:[#allocation5 + $0x28] sm:$0xff]
          %v3838 = vld [vmem:[#allocation5 + $0x38] sm:$0xff]
          %v3839 = vld [vmem:[#allocation5 + $0x48] sm:$0xff]
          %v3840 = vld [vmem:[#allocation5 + $0x58] sm:$0xff]
          %v3841 = vld [vmem:[#allocation5 + $0x68] sm:$0xff]
          %v3842 = vld [vmem:[#allocation5 + $0x78] sm:$0xff]
          %v3843 = vld [vmem:[#allocation5 + $0x88] sm:$0xff]
          %v3844 = vld [vmem:[#allocation5 + $0x98] sm:$0xff]
          %v3845 = vld [vmem:[#allocation5 + $0xa8] sm:$0xff]
          %v3846 = vld [vmem:[#allocation5 + $0xb8] sm:$0xff]
          %v3847 = vld [vmem:[#allocation5 + $0xc8] sm:$0xff]
          %v3848 = vld [vmem:[#allocation5 + $0xd8] sm:$0xff]
          %v3849 = vld [vmem:[#allocation5 + $0xe8] sm:$0xff]
          %v3850 = vld [vmem:[#allocation5 + $0xf8] sm:$0xff]
          %3852 = vset.pattern.permute.xlu0 0
          %3853 = vperm.xlu0 %3852, %v3579
          %v3854 = vpop.permute.xlu0 %3853
          %3857 = vset.pattern.permute.xlu0 0
          %3858 = vperm.xlu0 %3857, %v3581
          %v3859 = vpop.permute.xlu0 %3858
          %3862 = vset.pattern.permute.xlu0 0
          %3863 = vperm.xlu0 %3862, %v3583
          %v3864 = vpop.permute.xlu0 %3863
          %3867 = vset.pattern.permute.xlu0 0
          %3868 = vperm.xlu0 %3867, %v3585
          %v3869 = vpop.permute.xlu0 %3868
          %3872 = vset.pattern.permute.xlu0 0
          %3873 = vperm.xlu0 %3872, %v3587
          %v3874 = vpop.permute.xlu0 %3873
          %3877 = vset.pattern.permute.xlu0 0
          %3878 = vperm.xlu0 %3877, %v3589
          %v3879 = vpop.permute.xlu0 %3878
          %3882 = vset.pattern.permute.xlu0 0
          %3883 = vperm.xlu0 %3882, %v3591
          %v3884 = vpop.permute.xlu0 %3883
          %3887 = vset.pattern.permute.xlu0 0
          %3888 = vperm.xlu0 %3887, %v3593
          %v3889 = vpop.permute.xlu0 %3888
          %3892 = vset.pattern.permute.xlu0 0
          %3893 = vperm.xlu0 %3892, %v3595
          %v3894 = vpop.permute.xlu0 %3893
          %3897 = vset.pattern.permute.xlu0 0
          %3898 = vperm.xlu0 %3897, %v3597
          %v3899 = vpop.permute.xlu0 %3898
          %3902 = vset.pattern.permute.xlu0 0
          %3903 = vperm.xlu0 %3902, %v3599
          %v3904 = vpop.permute.xlu0 %3903
          %3907 = vset.pattern.permute.xlu0 0
          %3908 = vperm.xlu0 %3907, %v3601
          %v3909 = vpop.permute.xlu0 %3908
          %3912 = vset.pattern.permute.xlu0 0
          %3913 = vperm.xlu0 %3912, %v3603
          %v3914 = vpop.permute.xlu0 %3913
          %3917 = vset.pattern.permute.xlu0 0
          %3918 = vperm.xlu0 %3917, %v3605
          %v3919 = vpop.permute.xlu0 %3918
          %3922 = vset.pattern.permute.xlu0 0
          %3923 = vperm.xlu0 %3922, %v3607
          %v3924 = vpop.permute.xlu0 %3923
          %3927 = vset.pattern.permute.xlu0 0
          %3928 = vperm.xlu0 %3927, %v3609
          %v3929 = vpop.permute.xlu0 %3928
          %v3931 = vmul.f32 %v3854, %v3835
          %v3932 = vmul.f32 %v3859, %v3836
          %v3933 = vmul.f32 %v3864, %v3837
          %v3934 = vmul.f32 %v3869, %v3838
          %v3935 = vmul.f32 %v3874, %v3839
          %v3936 = vmul.f32 %v3879, %v3840
          %v3937 = vmul.f32 %v3884, %v3841
          %v3938 = vmul.f32 %v3889, %v3842
          %v3939 = vmul.f32 %v3894, %v3843
          %v3940 = vmul.f32 %v3899, %v3844
          %v3941 = vmul.f32 %v3904, %v3845
          %v3942 = vmul.f32 %v3909, %v3846
          %v3943 = vmul.f32 %v3914, %v3847
          %v3944 = vmul.f32 %v3919, %v3848
          %v3945 = vmul.f32 %v3924, %v3849
          %v3946 = vmul.f32 %v3929, %v3850
          %v3947 = vpack.c.bf16 %v3709, %v3707
          %v3948 = vpack.c.bf16 %v3713, %v3711
          %v3949 = vpack.c.bf16 %v3717, %v3715
          %v3950 = vpack.c.bf16 %v3721, %v3719
          %v3951 = vpack.c.bf16 %v3725, %v3723
          %v3952 = vpack.c.bf16 %v3729, %v3727
          %v3953 = vpack.c.bf16 %v3733, %v3731
          %v3954 = vpack.c.bf16 %v3737, %v3735
          %3963 = vrot.lane.b32.xlu0 %v3280, 64
          %v3964 = vpop.permute.xlu0 %3963
          %3965 = vrot.lane.b32.xlu0 %v3281, 64
          %v3966 = vpop.permute.xlu0 %3965
          %3967 = vrot.lane.b32.xlu0 %v3282, 64
          %v3968 = vpop.permute.xlu0 %3967
          %3969 = vrot.lane.b32.xlu0 %v3283, 64
          %v3970 = vpop.permute.xlu0 %3969
          %3971 = vrot.lane.b32.xlu0 %v3284, 64
          %v3972 = vpop.permute.xlu0 %3971
          %3973 = vrot.lane.b32.xlu0 %v3285, 64
          %v3974 = vpop.permute.xlu0 %3973
          %3975 = vrot.lane.b32.xlu0 %v3286, 64
          %v3976 = vpop.permute.xlu0 %3975
          %3977 = vrot.lane.b32.xlu0 %v3287, 64
          %v3978 = vpop.permute.xlu0 %3977
          %3987 = vmatprep.subr.bf16.mxu0 0
          %3988 = vmatpush1.bf16.msra.mxu0 %v3964
          %3989 = vmatprep.subr.bf16.mxu0 0
          %3990 = vmatpush1.bf16.msra.mxu0 %v3966
          %3991 = vmatprep.subr.bf16.mxu0 0
          %3992 = vmatpush1.bf16.msra.mxu0 %v3968
          %3993 = vmatprep.subr.bf16.mxu0 0
          %3994 = vmatpush1.bf16.msra.mxu0 %v3970
          %3995 = vmatprep.subr.bf16.mxu0 0
          %3996 = vmatpush1.bf16.msra.mxu0 %v3972
          %3997 = vmatprep.subr.bf16.mxu0 0
          %3998 = vmatpush1.bf16.msra.mxu0 %v3974
          %3999 = vmatprep.subr.bf16.mxu0 0
          %4000 = vmatpush1.bf16.msra.mxu0 %v3976
          %4001 = vmatprep.subr.bf16.mxu0 0
          %4002 = vmatpush1.bf16.msra.mxu0 %v3978
          %4003 = vmatprep.subr.bf16.mxu0 0
          %4004 = vmatpush1.bf16.msra.mxu0 0
          %4005 = vmatprep.subr.bf16.mxu0 0
          %4006 = vmatpush1.bf16.msra.mxu0 0
          %4007 = vmatprep.subr.bf16.mxu0 0
          %4008 = vmatpush1.bf16.msra.mxu0 0
          %4009 = vmatprep.subr.bf16.mxu0 0
          %4010 = vmatpush1.bf16.msra.mxu0 0
          %4011 = vmatprep.subr.bf16.mxu0 0
          %4012 = vmatpush1.bf16.msra.mxu0 0
          %4013 = vmatprep.subr.bf16.mxu0 0
          %4014 = vmatpush1.bf16.msra.mxu0 0
          %4015 = vmatprep.subr.bf16.mxu0 0
          %4016 = vmatpush1.bf16.msra.mxu0 0
          %4017 = vmatprep.subr.bf16.mxu0 0
          %4018 = vmatpush1.bf16.msra.mxu0 0
          %4019 = vmatprep.mubr.bf16.mxu0 0
          %4020 = vmatmul.mubr.bf16.gmra.mrb[0].mxu0 %v3947
          %v4021 = vpop.f32.mrb[0].mxu0
          %v4022 = vadd.f32 0.0, %v4021
          %v4023 = vpop.f32.mrb[0].mxu0
          %v4024 = vpop.f32.mrb[0].mxu0
          %v4025 = vadd.f32 0.0, %v4024
          %v4026 = vpop.f32.mrb[0].mxu0
          %4027 = vmatprep.mubr.bf16.mxu0 0
          %4028 = vmatmul.mubr.bf16.gmra.mrb[0].mxu0 %v3948
          %v4029 = vpop.f32.mrb[0].mxu0
          %v4030 = vadd.f32 0.0, %v4029
          %v4031 = vpop.f32.mrb[0].mxu0
          %v4032 = vpop.f32.mrb[0].mxu0
          %v4033 = vadd.f32 0.0, %v4032
          %v4034 = vpop.f32.mrb[0].mxu0
          %4035 = vmatprep.mubr.bf16.mxu0 0
          %4036 = vmatmul.mubr.bf16.gmra.mrb[0].mxu0 %v3949
          %v4037 = vpop.f32.mrb[0].mxu0
          %v4038 = vadd.f32 0.0, %v4037
          %v4039 = vpop.f32.mrb[0].mxu0
          %v4040 = vpop.f32.mrb[0].mxu0
          %v4041 = vadd.f32 0.0, %v4040
          %v4042 = vpop.f32.mrb[0].mxu0
          %4043 = vmatprep.mubr.bf16.mxu0 0
          %4044 = vmatmul.mubr.bf16.gmra.mrb[0].mxu0 %v3950
          %v4045 = vpop.f32.mrb[0].mxu0
          %v4046 = vadd.f32 0.0, %v4045
          %v4047 = vpop.f32.mrb[0].mxu0
          %v4048 = vpop.f32.mrb[0].mxu0
          %v4049 = vadd.f32 0.0, %v4048
          %v4050 = vpop.f32.mrb[0].mxu0
          %4051 = vmatprep.mubr.bf16.mxu0 0
          %4052 = vmatmul.mubr.bf16.gmra.mrb[0].mxu0 %v3951
          %v4053 = vpop.f32.mrb[0].mxu0
          %v4054 = vadd.f32 0.0, %v4053
          %v4055 = vpop.f32.mrb[0].mxu0
          %v4056 = vpop.f32.mrb[0].mxu0
          %v4057 = vadd.f32 0.0, %v4056
          %v4058 = vpop.f32.mrb[0].mxu0
          %4059 = vmatprep.mubr.bf16.mxu0 0
          %4060 = vmatmul.mubr.bf16.gmra.mrb[0].mxu0 %v3952
          %v4061 = vpop.f32.mrb[0].mxu0
          %v4062 = vadd.f32 0.0, %v4061
          %v4063 = vpop.f32.mrb[0].mxu0
          %v4064 = vpop.f32.mrb[0].mxu0
          %v4065 = vadd.f32 0.0, %v4064
          %v4066 = vpop.f32.mrb[0].mxu0
          %4067 = vmatprep.mubr.bf16.mxu0 0
          %4068 = vmatmul.mubr.bf16.gmra.mrb[0].mxu0 %v3953
          %v4069 = vpop.f32.mrb[0].mxu0
          %v4070 = vadd.f32 0.0, %v4069
          %v4071 = vpop.f32.mrb[0].mxu0
          %v4072 = vpop.f32.mrb[0].mxu0
          %v4073 = vadd.f32 0.0, %v4072
          %v4074 = vpop.f32.mrb[0].mxu0
          %4075 = vmatprep.mubr.bf16.mxu0 0
          %4076 = vmatmul.mubr.bf16.gmra.mrb[0].mxu0 %v3954
          %v4077 = vpop.f32.mrb[0].mxu0
          %v4078 = vadd.f32 0.0, %v4077
          %v4079 = vpop.f32.mrb[0].mxu0
          %v4080 = vpop.f32.mrb[0].mxu0
          %v4081 = vadd.f32 0.0, %v4080
          %v4082 = vpop.f32.mrb[0].mxu0
          %4083 = vdwg.mxu0
          %4100 = vrot.lane.b32.xlu0 %v4022, 64
          %v4101 = vpop.permute.xlu0 %4100
          %4102 = vrot.lane.b32.xlu0 %v4025, 64
          %v4103 = vpop.permute.xlu0 %4102
          %4104 = vrot.lane.b32.xlu0 %v4030, 64
          %v4105 = vpop.permute.xlu0 %4104
          %4106 = vrot.lane.b32.xlu0 %v4033, 64
          %v4107 = vpop.permute.xlu0 %4106
          %4108 = vrot.lane.b32.xlu0 %v4038, 64
          %v4109 = vpop.permute.xlu0 %4108
          %4110 = vrot.lane.b32.xlu0 %v4041, 64
          %v4111 = vpop.permute.xlu0 %4110
          %4112 = vrot.lane.b32.xlu0 %v4046, 64
          %v4113 = vpop.permute.xlu0 %4112
          %4114 = vrot.lane.b32.xlu0 %v4049, 64
          %v4115 = vpop.permute.xlu0 %4114
          %4116 = vrot.lane.b32.xlu0 %v4054, 64
          %v4117 = vpop.permute.xlu0 %4116
          %4118 = vrot.lane.b32.xlu0 %v4057, 64
          %v4119 = vpop.permute.xlu0 %4118
          %4120 = vrot.lane.b32.xlu0 %v4062, 64
          %v4121 = vpop.permute.xlu0 %4120
          %4122 = vrot.lane.b32.xlu0 %v4065, 64
          %v4123 = vpop.permute.xlu0 %4122
          %4124 = vrot.lane.b32.xlu0 %v4070, 64
          %v4125 = vpop.permute.xlu0 %4124
          %4126 = vrot.lane.b32.xlu0 %v4073, 64
          %v4127 = vpop.permute.xlu0 %4126
          %4128 = vrot.lane.b32.xlu0 %v4078, 64
          %v4129 = vpop.permute.xlu0 %4128
          %4130 = vrot.lane.b32.xlu0 %v4081, 64
          %v4131 = vpop.permute.xlu0 %4130
          %v4148 = vadd.f32 %v3931, %v4101
          %v4149 = vadd.f32 %v3932, %v4103
          %v4150 = vadd.f32 %v3933, %v4105
          %v4151 = vadd.f32 %v3934, %v4107
          %v4152 = vadd.f32 %v3935, %v4109
          %v4153 = vadd.f32 %v3936, %v4111
          %v4154 = vadd.f32 %v3937, %v4113
          %v4155 = vadd.f32 %v3938, %v4115
          %v4156 = vadd.f32 %v3939, %v4117
          %v4157 = vadd.f32 %v3940, %v4119
          %v4158 = vadd.f32 %v3941, %v4121
          %v4159 = vadd.f32 %v3942, %v4123
          %v4160 = vadd.f32 %v3943, %v4125
          %v4161 = vadd.f32 %v3944, %v4127
          %v4162 = vadd.f32 %v3945, %v4129
          %v4163 = vadd.f32 %v3946, %v4131
          %4164 = vst.msk [vmem:[#allocation5 + $0x8] sm:$0xff] %vm2379, %v4148
          %4165 = vst.msk [vmem:[#allocation5 + $0x18] sm:$0xff] %vm2379, %v4149
          %4166 = vst.msk [vmem:[#allocation5 + $0x28] sm:$0xff] %vm2379, %v4150
          %4167 = vst.msk [vmem:[#allocation5 + $0x38] sm:$0xff] %vm2379, %v4151
          %4168 = vst.msk [vmem:[#allocation5 + $0x48] sm:$0xff] %vm2379, %v4152
          %4169 = vst.msk [vmem:[#allocation5 + $0x58] sm:$0xff] %vm2379, %v4153
          %4170 = vst.msk [vmem:[#allocation5 + $0x68] sm:$0xff] %vm2379, %v4154
          %4171 = vst.msk [vmem:[#allocation5 + $0x78] sm:$0xff] %vm2379, %v4155
          %4172 = vst.msk [vmem:[#allocation5 + $0x88] sm:$0xff] %vm2379, %v4156
          %4173 = vst.msk [vmem:[#allocation5 + $0x98] sm:$0xff] %vm2379, %v4157
          %4174 = vst.msk [vmem:[#allocation5 + $0xa8] sm:$0xff] %vm2379, %v4158
          %4175 = vst.msk [vmem:[#allocation5 + $0xb8] sm:$0xff] %vm2379, %v4159
          %4176 = vst.msk [vmem:[#allocation5 + $0xc8] sm:$0xff] %vm2379, %v4160
          %4177 = vst.msk [vmem:[#allocation5 + $0xd8] sm:$0xff] %vm2379, %v4161
          %4178 = vst.msk [vmem:[#allocation5 + $0xe8] sm:$0xff] %vm2379, %v4162
          %4179 = vst.msk [vmem:[#allocation5 + $0xf8] sm:$0xff] %vm2379, %v4163
          %4180 = vst.msk [vmem:[%s3497] sm:$0xff] %vm1165, %v3546
          %4181 = vst.msk [vmem:[%s3497 + $0x8] sm:$0xff] %vm1165, %v3547
          %4182 = vst.msk [vmem:[%s3497 + $0x10] sm:$0xff] %vm1165, %v3548
          %4183 = vst.msk [vmem:[%s3497 + $0x18] sm:$0xff] %vm1165, %v3549
          %4184 = vst.msk [vmem:[%s3497 + $0x20] sm:$0xff] %vm1165, %v3550
          %4185 = vst.msk [vmem:[%s3497 + $0x28] sm:$0xff] %vm1165, %v3551
          %4186 = vst.msk [vmem:[%s3497 + $0x30] sm:$0xff] %vm1165, %v3552
          %4187 = vst.msk [vmem:[%s3497 + $0x38] sm:$0xff] %vm1165, %v3553
          %4188 = vst.msk [vmem:[%s3497 + $0x40] sm:$0xff] %vm1165, %v3554
          %4189 = vst.msk [vmem:[%s3497 + $0x48] sm:$0xff] %vm1165, %v3555
          %4190 = vst.msk [vmem:[%s3497 + $0x50] sm:$0xff] %vm1165, %v3556
          %4191 = vst.msk [vmem:[%s3497 + $0x58] sm:$0xff] %vm1165, %v3557
          %4192 = vst.msk [vmem:[%s3497 + $0x60] sm:$0xff] %vm1165, %v3558
          %4193 = vst.msk [vmem:[%s3497 + $0x68] sm:$0xff] %vm1165, %v3559
          %4194 = vst.msk [vmem:[%s3497 + $0x70] sm:$0xff] %vm1165, %v3560
          %4195 = vst.msk [vmem:[%s3497 + $0x78] sm:$0xff] %vm1165, %v3561
        $region52: #{tpu_custom_call.1} parent=31 // pred_fallthru
          _
        %p4196 = scmp.ne.s32.totalorder %s326, %s325
        // Predicated region
        $region53: #{tpu_custom_call.1} parent=31 // pred_check
          %p4197 = pneg %p4196
        $region54: #{tpu_custom_call.1} parent=31 // pred_check_branch
          %4199 = sbr.rel (%p4197) target = $region56
        $region55: #{tpu_custom_call.1} parent=31 // pred_region
          %v4200 = vld [vmem:[#allocation2] sm:$0xff]
          %v4201 = vld [vmem:[#allocation2 + $0x10] sm:$0xff]
          %v4202 = vld [vmem:[#allocation2 + $0x20] sm:$0xff]
          %v4203 = vld [vmem:[#allocation2 + $0x30] sm:$0xff]
          %v4204 = vld [vmem:[#allocation2 + $0x40] sm:$0xff]
          %v4205 = vld [vmem:[#allocation2 + $0x50] sm:$0xff]
          %v4206 = vld [vmem:[#allocation2 + $0x60] sm:$0xff]
          %v4207 = vld [vmem:[#allocation2 + $0x70] sm:$0xff]
          %v4208 = vld [vmem:[%s274] sm:$0xff]
          %v4209 = vld [vmem:[%s274 + $0x10] sm:$0xff]
          %v4210 = vld [vmem:[%s274 + $0x20] sm:$0xff]
          %v4211 = vld [vmem:[%s274 + $0x30] sm:$0xff]
          %v4212 = vld [vmem:[%s274 + $0x40] sm:$0xff]
          %v4213 = vld [vmem:[%s274 + $0x50] sm:$0xff]
          %v4214 = vld [vmem:[%s274 + $0x60] sm:$0xff]
          %v4215 = vld [vmem:[%s274 + $0x70] sm:$0xff]
          %v4216 = vld [vmem:[%s274 + $0x80] sm:$0xff]
          %v4217 = vld [vmem:[%s274 + $0x90] sm:$0xff]
          %v4218 = vld [vmem:[%s274 + $0xa0] sm:$0xff]
          %v4219 = vld [vmem:[%s274 + $0xb0] sm:$0xff]
          %v4220 = vld [vmem:[%s274 + $0xc0] sm:$0xff]
          %v4221 = vld [vmem:[%s274 + $0xd0] sm:$0xff]
          %v4222 = vld [vmem:[%s274 + $0xe0] sm:$0xff]
          %v4223 = vld [vmem:[%s274 + $0xf0] sm:$0xff]
          %v4224 = vpack.c.bf16 %v4209, %v4208
          %v4225 = vpack.c.bf16 %v4211, %v4210
          %v4226 = vpack.c.bf16 %v4213, %v4212
          %v4227 = vpack.c.bf16 %v4215, %v4214
          %v4228 = vpack.c.bf16 %v4217, %v4216
          %v4229 = vpack.c.bf16 %v4219, %v4218
          %v4230 = vpack.c.bf16 %v4221, %v4220
          %v4231 = vpack.c.bf16 %v4223, %v4222
          %v4232 = vld [vmem:[%s283] sm:$0xff]
          %v4233 = vld [vmem:[%s283 + $0x10] sm:$0xff]
          %v4234 = vld [vmem:[%s283 + $0x20] sm:$0xff]
          %v4235 = vld [vmem:[%s283 + $0x30] sm:$0xff]
          %v4236 = vld [vmem:[%s283 + $0x40] sm:$0xff]
          %v4237 = vld [vmem:[%s283 + $0x50] sm:$0xff]
          %v4238 = vld [vmem:[%s283 + $0x60] sm:$0xff]
          %v4239 = vld [vmem:[%s283 + $0x70] sm:$0xff]
          %v4240 = vld [vmem:[%s283 + $0x80] sm:$0xff]
          %v4241 = vld [vmem:[%s283 + $0x90] sm:$0xff]
          %v4242 = vld [vmem:[%s283 + $0xa0] sm:$0xff]
          %v4243 = vld [vmem:[%s283 + $0xb0] sm:$0xff]
          %v4244 = vld [vmem:[%s283 + $0xc0] sm:$0xff]
          %v4245 = vld [vmem:[%s283 + $0xd0] sm:$0xff]
          %v4246 = vld [vmem:[%s283 + $0xe0] sm:$0xff]
          %v4247 = vld [vmem:[%s283 + $0xf0] sm:$0xff]
          %v4248 = vpack.c.bf16 %v4233, %v4232
          %v4249 = vpack.c.bf16 %v4235, %v4234
          %v4250 = vpack.c.bf16 %v4237, %v4236
          %v4251 = vpack.c.bf16 %v4239, %v4238
          %v4252 = vpack.c.bf16 %v4241, %v4240
          %v4253 = vpack.c.bf16 %v4243, %v4242
          %v4254 = vpack.c.bf16 %v4245, %v4244
          %v4255 = vpack.c.bf16 %v4247, %v4246
          %vm4256 = vcmask 523264
          %v4258 = vsel %vm4256, %v4200, 0
          %v4261 = vsel %vm4256, %v4201, 0
          %v4264 = vsel %vm4256, %v4202, 0
          %v4267 = vsel %vm4256, %v4203, 0
          %v4270 = vsel %vm4256, %v4204, 0
          %v4273 = vsel %vm4256, %v4205, 0
          %v4276 = vsel %vm4256, %v4206, 0
          %v4279 = vsel %vm4256, %v4207, 0
          %v4282 = vsel %vm4256, %v4224, 0
          %v4285 = vsel %vm4256, %v4225, 0
          %v4288 = vsel %vm4256, %v4226, 0
          %v4291 = vsel %vm4256, %v4227, 0
          %v4294 = vsel %vm4256, %v4228, 0
          %v4297 = vsel %vm4256, %v4229, 0
          %v4300 = vsel %vm4256, %v4230, 0
          %v4303 = vsel %vm4256, %v4231, 0
          %4305 = vmatprep.subr.bf16.mxu0 0
          %4306 = vmatpush1.bf16.xpose.msra.mxu0 %v4282
          %4307 = vmatprep.subr.bf16.mxu0 0
          %4308 = vmatpush1.bf16.xpose.msra.mxu0 %v4285
          %4309 = vmatprep.subr.bf16.mxu0 0
          %4310 = vmatpush1.bf16.xpose.msra.mxu0 %v4288
          %4311 = vmatprep.subr.bf16.mxu0 0
          %4312 = vmatpush1.bf16.xpose.msra.mxu0 %v4291
          %4313 = vmatprep.subr.bf16.mxu0 0
          %4314 = vmatpush1.bf16.xpose.msra.mxu0 %v4294
          %4315 = vmatprep.subr.bf16.mxu0 0
          %4316 = vmatpush1.bf16.xpose.msra.mxu0 %v4297
          %4317 = vmatprep.subr.bf16.mxu0 0
          %4318 = vmatpush1.bf16.xpose.msra.mxu0 %v4300
          %4319 = vmatprep.subr.bf16.mxu0 0
          %4320 = vmatpush1.bf16.xpose.msra.mxu0 %v4303
          %4321 = vmatprep.subr.bf16.mxu0 0
          %4322 = vmatpush1.bf16.xpose.msra.mxu0 0
          %4323 = vmatprep.subr.bf16.mxu0 0
          %4324 = vmatpush1.bf16.xpose.msra.mxu0 0
          %4325 = vmatprep.subr.bf16.mxu0 0
          %4326 = vmatpush1.bf16.xpose.msra.mxu0 0
          %4327 = vmatprep.subr.bf16.mxu0 0
          %4328 = vmatpush1.bf16.xpose.msra.mxu0 0
          %4329 = vmatprep.subr.bf16.mxu0 0
          %4330 = vmatpush1.bf16.xpose.msra.mxu0 0
          %4331 = vmatprep.subr.bf16.mxu0 0
          %4332 = vmatpush1.bf16.xpose.msra.mxu0 0
          %4333 = vmatprep.subr.bf16.mxu0 0
          %4334 = vmatpush1.bf16.xpose.msra.mxu0 0
          %4335 = vmatprep.subr.bf16.mxu0 0
          %4336 = vmatpush1.bf16.xpose.msra.mxu0 0
          %4337 = vmatprep.mubr.bf16.mxu0 0
          %4338 = vmatmul.mubr.bf16.gmra.mrb[0].mxu0 %v4258
          %v4339 = vpop.f32.mrb[0].mxu0
          %v4340 = vadd.f32 0.0, %v4339
          %v4341 = vpop.f32.mrb[0].mxu0
          %v4342 = vpop.f32.mrb[0].mxu0
          %v4343 = vadd.f32 0.0, %v4342
          %v4344 = vpop.f32.mrb[0].mxu0
          %4345 = vmatprep.mubr.bf16.mxu0 0
          %4346 = vmatmul.mubr.bf16.gmra.mrb[0].mxu0 %v4261
          %v4347 = vpop.f32.mrb[0].mxu0
          %v4348 = vadd.f32 0.0, %v4347
          %v4349 = vpop.f32.mrb[0].mxu0
          %v4350 = vpop.f32.mrb[0].mxu0
          %v4351 = vadd.f32 0.0, %v4350
          %v4352 = vpop.f32.mrb[0].mxu0
          %4353 = vmatprep.mubr.bf16.mxu0 0
          %4354 = vmatmul.mubr.bf16.gmra.mrb[0].mxu0 %v4264
          %v4355 = vpop.f32.mrb[0].mxu0
          %v4356 = vadd.f32 0.0, %v4355
          %v4357 = vpop.f32.mrb[0].mxu0
          %v4358 = vpop.f32.mrb[0].mxu0
          %v4359 = vadd.f32 0.0, %v4358
          %v4360 = vpop.f32.mrb[0].mxu0
          %4361 = vmatprep.mubr.bf16.mxu0 0
          %4362 = vmatmul.mubr.bf16.gmra.mrb[0].mxu0 %v4267
          %v4363 = vpop.f32.mrb[0].mxu0
          %v4364 = vadd.f32 0.0, %v4363
          %v4365 = vpop.f32.mrb[0].mxu0
          %v4366 = vpop.f32.mrb[0].mxu0
          %v4367 = vadd.f32 0.0, %v4366
          %v4368 = vpop.f32.mrb[0].mxu0
          %4369 = vmatprep.mubr.bf16.mxu0 0
          %4370 = vmatmul.mubr.bf16.gmra.mrb[0].mxu0 %v4270
          %v4371 = vpop.f32.mrb[0].mxu0
          %v4372 = vadd.f32 0.0, %v4371
          %v4373 = vpop.f32.mrb[0].mxu0
          %v4374 = vpop.f32.mrb[0].mxu0
          %v4375 = vadd.f32 0.0, %v4374
          %v4376 = vpop.f32.mrb[0].mxu0
          %4377 = vmatprep.mubr.bf16.mxu0 0
          %4378 = vmatmul.mubr.bf16.gmra.mrb[0].mxu0 %v4273
          %v4379 = vpop.f32.mrb[0].mxu0
          %v4380 = vadd.f32 0.0, %v4379
          %v4381 = vpop.f32.mrb[0].mxu0
          %v4382 = vpop.f32.mrb[0].mxu0
          %v4383 = vadd.f32 0.0, %v4382
          %v4384 = vpop.f32.mrb[0].mxu0
          %4385 = vmatprep.mubr.bf16.mxu0 0
          %4386 = vmatmul.mubr.bf16.gmra.mrb[0].mxu0 %v4276
          %v4387 = vpop.f32.mrb[0].mxu0
          %v4388 = vadd.f32 0.0, %v4387
          %v4389 = vpop.f32.mrb[0].mxu0
          %v4390 = vpop.f32.mrb[0].mxu0
          %v4391 = vadd.f32 0.0, %v4390
          %v4392 = vpop.f32.mrb[0].mxu0
          %4393 = vmatprep.mubr.bf16.mxu0 0
          %4394 = vmatmul.mubr.bf16.gmra.mrb[0].mxu0 %v4279
          %v4395 = vpop.f32.mrb[0].mxu0
          %v4396 = vadd.f32 0.0, %v4395
          %v4397 = vpop.f32.mrb[0].mxu0
          %v4398 = vpop.f32.mrb[0].mxu0
          %v4399 = vadd.f32 0.0, %v4398
          %v4400 = vpop.f32.mrb[0].mxu0
          %4401 = vdwg.mxu0
          %v4402 = vld [vmem:[#allocation3] sm:$0xff]
          %v4403 = vld [vmem:[#allocation3 + $0x8] sm:$0xff]
          %v4404 = vld [vmem:[#allocation3 + $0x10] sm:$0xff]
          %v4405 = vld [vmem:[#allocation3 + $0x18] sm:$0xff]
          %v4406 = vld [vmem:[#allocation3 + $0x20] sm:$0xff]
          %v4407 = vld [vmem:[#allocation3 + $0x28] sm:$0xff]
          %v4408 = vld [vmem:[#allocation3 + $0x30] sm:$0xff]
          %v4409 = vld [vmem:[#allocation3 + $0x38] sm:$0xff]
          %v4410 = vld [vmem:[#allocation3 + $0x40] sm:$0xff]
          %v4411 = vld [vmem:[#allocation3 + $0x48] sm:$0xff]
          %v4412 = vld [vmem:[#allocation3 + $0x50] sm:$0xff]
          %v4413 = vld [vmem:[#allocation3 + $0x58] sm:$0xff]
          %v4414 = vld [vmem:[#allocation3 + $0x60] sm:$0xff]
          %v4415 = vld [vmem:[#allocation3 + $0x68] sm:$0xff]
          %v4416 = vld [vmem:[#allocation3 + $0x70] sm:$0xff]
          %v4417 = vld [vmem:[#allocation3 + $0x78] sm:$0xff]
          %4418 = vmax.xlane.f32.xlu0 %v4340
          %v4419 = vpop.xlane.xlu0 %4418
          %4420 = vmax.xlane.f32.xlu0 %v4343
          %v4421 = vpop.xlane.xlu0 %4420
          %4422 = vmax.xlane.f32.xlu0 %v4348
          %v4423 = vpop.xlane.xlu0 %4422
          %4424 = vmax.xlane.f32.xlu0 %v4351
          %v4425 = vpop.xlane.xlu0 %4424
          %4426 = vmax.xlane.f32.xlu0 %v4356
          %v4427 = vpop.xlane.xlu0 %4426
          %4428 = vmax.xlane.f32.xlu0 %v4359
          %v4429 = vpop.xlane.xlu0 %4428
          %4430 = vmax.xlane.f32.xlu0 %v4364
          %v4431 = vpop.xlane.xlu0 %4430
          %4432 = vmax.xlane.f32.xlu0 %v4367
          %v4433 = vpop.xlane.xlu0 %4432
          %4434 = vmax.xlane.f32.xlu0 %v4372
          %v4435 = vpop.xlane.xlu0 %4434
          %4436 = vmax.xlane.f32.xlu0 %v4375
          %v4437 = vpop.xlane.xlu0 %4436
          %4438 = vmax.xlane.f32.xlu0 %v4380
          %v4439 = vpop.xlane.xlu0 %4438
          %4440 = vmax.xlane.f32.xlu0 %v4383
          %v4441 = vpop.xlane.xlu0 %4440
          %4442 = vmax.xlane.f32.xlu0 %v4388
          %v4443 = vpop.xlane.xlu0 %4442
          %4444 = vmax.xlane.f32.xlu0 %v4391
          %v4445 = vpop.xlane.xlu0 %4444
          %4446 = vmax.xlane.f32.xlu0 %v4396
          %v4447 = vpop.xlane.xlu0 %4446
          %4448 = vmax.xlane.f32.xlu0 %v4399
          %v4449 = vpop.xlane.xlu0 %4448
          %v4450 = vmax.f32 %v4402, %v4419
          %v4451 = vmax.f32 %v4403, %v4421
          %v4452 = vmax.f32 %v4404, %v4423
          %v4453 = vmax.f32 %v4405, %v4425
          %v4454 = vmax.f32 %v4406, %v4427
          %v4455 = vmax.f32 %v4407, %v4429
          %v4456 = vmax.f32 %v4408, %v4431
          %v4457 = vmax.f32 %v4409, %v4433
          %v4458 = vmax.f32 %v4410, %v4435
          %v4459 = vmax.f32 %v4411, %v4437
          %v4460 = vmax.f32 %v4412, %v4439
          %v4461 = vmax.f32 %v4413, %v4441
          %v4462 = vmax.f32 %v4414, %v4443
          %v4463 = vmax.f32 %v4415, %v4445
          %v4464 = vmax.f32 %v4416, %v4447
          %v4465 = vmax.f32 %v4417, %v4449
          %v4466 = vsub.f32 %v4402, %v4450
          %v4467 = vsub.f32 %v4403, %v4451
          %v4468 = vsub.f32 %v4404, %v4452
          %v4469 = vsub.f32 %v4405, %v4453
          %v4470 = vsub.f32 %v4406, %v4454
          %v4471 = vsub.f32 %v4407, %v4455
          %v4472 = vsub.f32 %v4408, %v4456
          %v4473 = vsub.f32 %v4409, %v4457
          %v4474 = vsub.f32 %v4410, %v4458
          %v4475 = vsub.f32 %v4411, %v4459
          %v4476 = vsub.f32 %v4412, %v4460
          %v4477 = vsub.f32 %v4413, %v4461
          %v4478 = vsub.f32 %v4414, %v4462
          %v4479 = vsub.f32 %v4415, %v4463
          %v4480 = vsub.f32 %v4416, %v4464
          %v4481 = vsub.f32 %v4417, %v4465
          %v4482 = vmul.f32 %v4466, 1.442695
          %v4483 = vpow.pop %v4482
          %v4484 = vmul.f32 %v4467, 1.442695
          %v4485 = vpow.pop %v4484
          %v4486 = vmul.f32 %v4468, 1.442695
          %v4487 = vpow.pop %v4486
          %v4488 = vmul.f32 %v4469, 1.442695
          %v4489 = vpow.pop %v4488
          %v4490 = vmul.f32 %v4470, 1.442695
          %v4491 = vpow.pop %v4490
          %v4492 = vmul.f32 %v4471, 1.442695
          %v4493 = vpow.pop %v4492
          %v4494 = vmul.f32 %v4472, 1.442695
          %v4495 = vpow.pop %v4494
          %v4496 = vmul.f32 %v4473, 1.442695
          %v4497 = vpow.pop %v4496
          %v4498 = vmul.f32 %v4474, 1.442695
          %v4499 = vpow.pop %v4498
          %v4500 = vmul.f32 %v4475, 1.442695
          %v4501 = vpow.pop %v4500
          %v4502 = vmul.f32 %v4476, 1.442695
          %v4503 = vpow.pop %v4502
          %v4504 = vmul.f32 %v4477, 1.442695
          %v4505 = vpow.pop %v4504
          %v4506 = vmul.f32 %v4478, 1.442695
          %v4507 = vpow.pop %v4506
          %v4508 = vmul.f32 %v4479, 1.442695
          %v4509 = vpow.pop %v4508
          %v4510 = vmul.f32 %v4480, 1.442695
          %v4511 = vpow.pop %v4510
          %v4512 = vmul.f32 %v4481, 1.442695
          %v4513 = vpow.pop %v4512
          %4515 = vset.pattern.permute.xlu0 0
          %4516 = vperm.xlu0 %4515, %v4450
          %v4517 = vpop.permute.xlu0 %4516
          %4520 = vset.pattern.permute.xlu0 0
          %4521 = vperm.xlu0 %4520, %v4451
          %v4522 = vpop.permute.xlu0 %4521
          %4525 = vset.pattern.permute.xlu0 0
          %4526 = vperm.xlu0 %4525, %v4452
          %v4527 = vpop.permute.xlu0 %4526
          %4530 = vset.pattern.permute.xlu0 0
          %4531 = vperm.xlu0 %4530, %v4453
          %v4532 = vpop.permute.xlu0 %4531
          %4535 = vset.pattern.permute.xlu0 0
          %4536 = vperm.xlu0 %4535, %v4454
          %v4537 = vpop.permute.xlu0 %4536
          %4540 = vset.pattern.permute.xlu0 0
          %4541 = vperm.xlu0 %4540, %v4455
          %v4542 = vpop.permute.xlu0 %4541
          %4545 = vset.pattern.permute.xlu0 0
          %4546 = vperm.xlu0 %4545, %v4456
          %v4547 = vpop.permute.xlu0 %4546
          %4550 = vset.pattern.permute.xlu0 0
          %4551 = vperm.xlu0 %4550, %v4457
          %v4552 = vpop.permute.xlu0 %4551
          %4555 = vset.pattern.permute.xlu0 0
          %4556 = vperm.xlu0 %4555, %v4458
          %v4557 = vpop.permute.xlu0 %4556
          %4560 = vset.pattern.permute.xlu0 0
          %4561 = vperm.xlu0 %4560, %v4459
          %v4562 = vpop.permute.xlu0 %4561
          %4565 = vset.pattern.permute.xlu0 0
          %4566 = vperm.xlu0 %4565, %v4460
          %v4567 = vpop.permute.xlu0 %4566
          %4570 = vset.pattern.permute.xlu0 0
          %4571 = vperm.xlu0 %4570, %v4461
          %v4572 = vpop.permute.xlu0 %4571
          %4575 = vset.pattern.permute.xlu0 0
          %4576 = vperm.xlu0 %4575, %v4462
          %v4577 = vpop.permute.xlu0 %4576
          %4580 = vset.pattern.permute.xlu0 0
          %4581 = vperm.xlu0 %4580, %v4463
          %v4582 = vpop.permute.xlu0 %4581
          %4585 = vset.pattern.permute.xlu0 0
          %4586 = vperm.xlu0 %4585, %v4464
          %v4587 = vpop.permute.xlu0 %4586
          %4590 = vset.pattern.permute.xlu0 0
          %4591 = vperm.xlu0 %4590, %v4465
          %v4592 = vpop.permute.xlu0 %4591
          %v4594 = vsub.f32 %v4340, %v4517
          %v4595 = vsub.f32 %v4343, %v4522
          %v4596 = vsub.f32 %v4348, %v4527
          %v4597 = vsub.f32 %v4351, %v4532
          %v4598 = vsub.f32 %v4356, %v4537
          %v4599 = vsub.f32 %v4359, %v4542
          %v4600 = vsub.f32 %v4364, %v4547
          %v4601 = vsub.f32 %v4367, %v4552
          %v4602 = vsub.f32 %v4372, %v4557
          %v4603 = vsub.f32 %v4375, %v4562
          %v4604 = vsub.f32 %v4380, %v4567
          %v4605 = vsub.f32 %v4383, %v4572
          %v4606 = vsub.f32 %v4388, %v4577
          %v4607 = vsub.f32 %v4391, %v4582
          %v4608 = vsub.f32 %v4396, %v4587
          %v4609 = vsub.f32 %v4399, %v4592
          %v4610 = vmul.f32 %v4594, 1.442695
          %v4611 = vpow.pop %v4610
          %v4612 = vmul.f32 %v4595, 1.442695
          %v4613 = vpow.pop %v4612
          %v4614 = vmul.f32 %v4596, 1.442695
          %v4615 = vpow.pop %v4614
          %v4616 = vmul.f32 %v4597, 1.442695
          %v4617 = vpow.pop %v4616
          %v4618 = vmul.f32 %v4598, 1.442695
          %v4619 = vpow.pop %v4618
          %v4620 = vmul.f32 %v4599, 1.442695
          %v4621 = vpow.pop %v4620
          %v4622 = vmul.f32 %v4600, 1.442695
          %v4623 = vpow.pop %v4622
          %v4624 = vmul.f32 %v4601, 1.442695
          %v4625 = vpow.pop %v4624
          %v4626 = vmul.f32 %v4602, 1.442695
          %v4627 = vpow.pop %v4626
          %v4628 = vmul.f32 %v4603, 1.442695
          %v4629 = vpow.pop %v4628
          %v4630 = vmul.f32 %v4604, 1.442695
          %v4631 = vpow.pop %v4630
          %v4632 = vmul.f32 %v4605, 1.442695
          %v4633 = vpow.pop %v4632
          %v4634 = vmul.f32 %v4606, 1.442695
          %v4635 = vpow.pop %v4634
          %v4636 = vmul.f32 %v4607, 1.442695
          %v4637 = vpow.pop %v4636
          %v4638 = vmul.f32 %v4608, 1.442695
          %v4639 = vpow.pop %v4638
          %v4640 = vmul.f32 %v4609, 1.442695
          %v4641 = vpow.pop %v4640
          %v4642 = vld [vmem:[#allocation4] sm:$0xff]
          %v4643 = vld [vmem:[#allocation4 + $0x8] sm:$0xff]
          %v4644 = vld [vmem:[#allocation4 + $0x10] sm:$0xff]
          %v4645 = vld [vmem:[#allocation4 + $0x18] sm:$0xff]
          %v4646 = vld [vmem:[#allocation4 + $0x20] sm:$0xff]
          %v4647 = vld [vmem:[#allocation4 + $0x28] sm:$0xff]
          %v4648 = vld [vmem:[#allocation4 + $0x30] sm:$0xff]
          %v4649 = vld [vmem:[#allocation4 + $0x38] sm:$0xff]
          %v4650 = vld [vmem:[#allocation4 + $0x40] sm:$0xff]
          %v4651 = vld [vmem:[#allocation4 + $0x48] sm:$0xff]
          %v4652 = vld [vmem:[#allocation4 + $0x50] sm:$0xff]
          %v4653 = vld [vmem:[#allocation4 + $0x58] sm:$0xff]
          %v4654 = vld [vmem:[#allocation4 + $0x60] sm:$0xff]
          %v4655 = vld [vmem:[#allocation4 + $0x68] sm:$0xff]
          %v4656 = vld [vmem:[#allocation4 + $0x70] sm:$0xff]
          %v4657 = vld [vmem:[#allocation4 + $0x78] sm:$0xff]
          %v4658 = vmul.f32 %v4483, %v4642
          %v4659 = vmul.f32 %v4485, %v4643
          %v4660 = vmul.f32 %v4487, %v4644
          %v4661 = vmul.f32 %v4489, %v4645
          %v4662 = vmul.f32 %v4491, %v4646
          %v4663 = vmul.f32 %v4493, %v4647
          %v4664 = vmul.f32 %v4495, %v4648
          %v4665 = vmul.f32 %v4497, %v4649
          %v4666 = vmul.f32 %v4499, %v4650
          %v4667 = vmul.f32 %v4501, %v4651
          %v4668 = vmul.f32 %v4503, %v4652
          %v4669 = vmul.f32 %v4505, %v4653
          %v4670 = vmul.f32 %v4507, %v4654
          %v4671 = vmul.f32 %v4509, %v4655
          %v4672 = vmul.f32 %v4511, %v4656
          %v4673 = vmul.f32 %v4513, %v4657
          %4674 = vadd.xlane.f32.xlu0 %v4611
          %v4675 = vpop.xlane.xlu0 %4674
          %4676 = vadd.xlane.f32.xlu0 %v4613
          %v4677 = vpop.xlane.xlu0 %4676
          %4678 = vadd.xlane.f32.xlu0 %v4615
          %v4679 = vpop.xlane.xlu0 %4678
          %4680 = vadd.xlane.f32.xlu0 %v4617
          %v4681 = vpop.xlane.xlu0 %4680
          %4682 = vadd.xlane.f32.xlu0 %v4619
          %v4683 = vpop.xlane.xlu0 %4682
          %4684 = vadd.xlane.f32.xlu0 %v4621
          %v4685 = vpop.xlane.xlu0 %4684
          %4686 = vadd.xlane.f32.xlu0 %v4623
          %v4687 = vpop.xlane.xlu0 %4686
          %4688 = vadd.xlane.f32.xlu0 %v4625
          %v4689 = vpop.xlane.xlu0 %4688
          %4690 = vadd.xlane.f32.xlu0 %v4627
          %v4691 = vpop.xlane.xlu0 %4690
          %4692 = vadd.xlane.f32.xlu0 %v4629
          %v4693 = vpop.xlane.xlu0 %4692
          %4694 = vadd.xlane.f32.xlu0 %v4631
          %v4695 = vpop.xlane.xlu0 %4694
          %4696 = vadd.xlane.f32.xlu0 %v4633
          %v4697 = vpop.xlane.xlu0 %4696
          %4698 = vadd.xlane.f32.xlu0 %v4635
          %v4699 = vpop.xlane.xlu0 %4698
          %4700 = vadd.xlane.f32.xlu0 %v4637
          %v4701 = vpop.xlane.xlu0 %4700
          %4702 = vadd.xlane.f32.xlu0 %v4639
          %v4703 = vpop.xlane.xlu0 %4702
          %4704 = vadd.xlane.f32.xlu0 %v4641
          %v4705 = vpop.xlane.xlu0 %4704
          %v4706 = vadd.f32 %v4658, %v4675
          %v4707 = vadd.f32 %v4659, %v4677
          %v4708 = vadd.f32 %v4660, %v4679
          %v4709 = vadd.f32 %v4661, %v4681
          %v4710 = vadd.f32 %v4662, %v4683
          %v4711 = vadd.f32 %v4663, %v4685
          %v4712 = vadd.f32 %v4664, %v4687
          %v4713 = vadd.f32 %v4665, %v4689
          %v4714 = vadd.f32 %v4666, %v4691
          %v4715 = vadd.f32 %v4667, %v4693
          %v4716 = vadd.f32 %v4668, %v4695
          %v4717 = vadd.f32 %v4669, %v4697
          %v4718 = vadd.f32 %v4670, %v4699
          %v4719 = vadd.f32 %v4671, %v4701
          %v4720 = vadd.f32 %v4672, %v4703
          %v4721 = vadd.f32 %v4673, %v4705
          %vm4722 = vcmask 7168
          %4723 = vst.msk [vmem:[#allocation4] sm:$0xff] %vm4722, %v4706
          %4724 = vst.msk [vmem:[#allocation4 + $0x8] sm:$0xff] %vm4722, %v4707
          %4725 = vst.msk [vmem:[#allocation4 + $0x10] sm:$0xff] %vm4722, %v4708
          %4726 = vst.msk [vmem:[#allocation4 + $0x18] sm:$0xff] %vm4722, %v4709
          %4727 = vst.msk [vmem:[#allocation4 + $0x20] sm:$0xff] %vm4722, %v4710
          %4728 = vst.msk [vmem:[#allocation4 + $0x28] sm:$0xff] %vm4722, %v4711
          %4729 = vst.msk [vmem:[#allocation4 + $0x30] sm:$0xff] %vm4722, %v4712
          %4730 = vst.msk [vmem:[#allocation4 + $0x38] sm:$0xff] %vm4722, %v4713
          %4731 = vst.msk [vmem:[#allocation4 + $0x40] sm:$0xff] %vm4722, %v4714
          %4732 = vst.msk [vmem:[#allocation4 + $0x48] sm:$0xff] %vm4722, %v4715
          %4733 = vst.msk [vmem:[#allocation4 + $0x50] sm:$0xff] %vm4722, %v4716
          %4734 = vst.msk [vmem:[#allocation4 + $0x58] sm:$0xff] %vm4722, %v4717
          %4735 = vst.msk [vmem:[#allocation4 + $0x60] sm:$0xff] %vm4722, %v4718
          %4736 = vst.msk [vmem:[#allocation4 + $0x68] sm:$0xff] %vm4722, %v4719
          %4737 = vst.msk [vmem:[#allocation4 + $0x70] sm:$0xff] %vm4722, %v4720
          %4738 = vst.msk [vmem:[#allocation4 + $0x78] sm:$0xff] %vm4722, %v4721
          %v4739 = vld [vmem:[#allocation5] sm:$0xff]
          %v4740 = vld [vmem:[#allocation5 + $0x10] sm:$0xff]
          %v4741 = vld [vmem:[#allocation5 + $0x20] sm:$0xff]
          %v4742 = vld [vmem:[#allocation5 + $0x30] sm:$0xff]
          %v4743 = vld [vmem:[#allocation5 + $0x40] sm:$0xff]
          %v4744 = vld [vmem:[#allocation5 + $0x50] sm:$0xff]
          %v4745 = vld [vmem:[#allocation5 + $0x60] sm:$0xff]
          %v4746 = vld [vmem:[#allocation5 + $0x70] sm:$0xff]
          %v4747 = vld [vmem:[#allocation5 + $0x80] sm:$0xff]
          %v4748 = vld [vmem:[#allocation5 + $0x90] sm:$0xff]
          %v4749 = vld [vmem:[#allocation5 + $0xa0] sm:$0xff]
          %v4750 = vld [vmem:[#allocation5 + $0xb0] sm:$0xff]
          %v4751 = vld [vmem:[#allocation5 + $0xc0] sm:$0xff]
          %v4752 = vld [vmem:[#allocation5 + $0xd0] sm:$0xff]
          %v4753 = vld [vmem:[#allocation5 + $0xe0] sm:$0xff]
          %v4754 = vld [vmem:[#allocation5 + $0xf0] sm:$0xff]
          %4756 = vset.pattern.permute.xlu0 0
          %4757 = vperm.xlu0 %4756, %v4483
          %v4758 = vpop.permute.xlu0 %4757
          %4761 = vset.pattern.permute.xlu0 0
          %4762 = vperm.xlu0 %4761, %v4485
          %v4763 = vpop.permute.xlu0 %4762
          %4766 = vset.pattern.permute.xlu0 0
          %4767 = vperm.xlu0 %4766, %v4487
          %v4768 = vpop.permute.xlu0 %4767
          %4771 = vset.pattern.permute.xlu0 0
          %4772 = vperm.xlu0 %4771, %v4489
          %v4773 = vpop.permute.xlu0 %4772
          %4776 = vset.pattern.permute.xlu0 0
          %4777 = vperm.xlu0 %4776, %v4491
          %v4778 = vpop.permute.xlu0 %4777
          %4781 = vset.pattern.permute.xlu0 0
          %4782 = vperm.xlu0 %4781, %v4493
          %v4783 = vpop.permute.xlu0 %4782
          %4786 = vset.pattern.permute.xlu0 0
          %4787 = vperm.xlu0 %4786, %v4495
          %v4788 = vpop.permute.xlu0 %4787
          %4791 = vset.pattern.permute.xlu0 0
          %4792 = vperm.xlu0 %4791, %v4497
          %v4793 = vpop.permute.xlu0 %4792
          %4796 = vset.pattern.permute.xlu0 0
          %4797 = vperm.xlu0 %4796, %v4499
          %v4798 = vpop.permute.xlu0 %4797
          %4801 = vset.pattern.permute.xlu0 0
          %4802 = vperm.xlu0 %4801, %v4501
          %v4803 = vpop.permute.xlu0 %4802
          %4806 = vset.pattern.permute.xlu0 0
          %4807 = vperm.xlu0 %4806, %v4503
          %v4808 = vpop.permute.xlu0 %4807
          %4811 = vset.pattern.permute.xlu0 0
          %4812 = vperm.xlu0 %4811, %v4505
          %v4813 = vpop.permute.xlu0 %4812
          %4816 = vset.pattern.permute.xlu0 0
          %4817 = vperm.xlu0 %4816, %v4507
          %v4818 = vpop.permute.xlu0 %4817
          %4821 = vset.pattern.permute.xlu0 0
          %4822 = vperm.xlu0 %4821, %v4509
          %v4823 = vpop.permute.xlu0 %4822
          %4826 = vset.pattern.permute.xlu0 0
          %4827 = vperm.xlu0 %4826, %v4511
          %v4828 = vpop.permute.xlu0 %4827
          %4831 = vset.pattern.permute.xlu0 0
          %4832 = vperm.xlu0 %4831, %v4513
          %v4833 = vpop.permute.xlu0 %4832
          %v4835 = vmul.f32 %v4758, %v4739
          %v4836 = vmul.f32 %v4763, %v4740
          %v4837 = vmul.f32 %v4768, %v4741
          %v4838 = vmul.f32 %v4773, %v4742
          %v4839 = vmul.f32 %v4778, %v4743
          %v4840 = vmul.f32 %v4783, %v4744
          %v4841 = vmul.f32 %v4788, %v4745
          %v4842 = vmul.f32 %v4793, %v4746
          %v4843 = vmul.f32 %v4798, %v4747
          %v4844 = vmul.f32 %v4803, %v4748
          %v4845 = vmul.f32 %v4808, %v4749
          %v4846 = vmul.f32 %v4813, %v4750
          %v4847 = vmul.f32 %v4818, %v4751
          %v4848 = vmul.f32 %v4823, %v4752
          %v4849 = vmul.f32 %v4828, %v4753
          %v4850 = vmul.f32 %v4833, %v4754
          %v4851 = vpack.c.bf16 %v4613, %v4611
          %v4852 = vpack.c.bf16 %v4617, %v4615
          %v4853 = vpack.c.bf16 %v4621, %v4619
          %v4854 = vpack.c.bf16 %v4625, %v4623
          %v4855 = vpack.c.bf16 %v4629, %v4627
          %v4856 = vpack.c.bf16 %v4633, %v4631
          %v4857 = vpack.c.bf16 %v4637, %v4635
          %v4858 = vpack.c.bf16 %v4641, %v4639
          %4859 = vmatprep.subr.bf16.mxu0 0
          %4860 = vmatpush1.bf16.msra.mxu0 %v4248
          %4861 = vmatprep.subr.bf16.mxu0 0
          %4862 = vmatpush1.bf16.msra.mxu0 %v4249
          %4863 = vmatprep.subr.bf16.mxu0 0
          %4864 = vmatpush1.bf16.msra.mxu0 %v4250
          %4865 = vmatprep.subr.bf16.mxu0 0
          %4866 = vmatpush1.bf16.msra.mxu0 %v4251
          %4867 = vmatprep.subr.bf16.mxu0 0
          %4868 = vmatpush1.bf16.msra.mxu0 %v4252
          %4869 = vmatprep.subr.bf16.mxu0 0
          %4870 = vmatpush1.bf16.msra.mxu0 %v4253
          %4871 = vmatprep.subr.bf16.mxu0 0
          %4872 = vmatpush1.bf16.msra.mxu0 %v4254
          %4873 = vmatprep.subr.bf16.mxu0 0
          %4874 = vmatpush1.bf16.msra.mxu0 %v4255
          %4875 = vmatprep.subr.bf16.mxu0 0
          %4876 = vmatpush1.bf16.msra.mxu0 0
          %4877 = vmatprep.subr.bf16.mxu0 0
          %4878 = vmatpush1.bf16.msra.mxu0 0
          %4879 = vmatprep.subr.bf16.mxu0 0
          %4880 = vmatpush1.bf16.msra.mxu0 0
          %4881 = vmatprep.subr.bf16.mxu0 0
          %4882 = vmatpush1.bf16.msra.mxu0 0
          %4883 = vmatprep.subr.bf16.mxu0 0
          %4884 = vmatpush1.bf16.msra.mxu0 0
          %4885 = vmatprep.subr.bf16.mxu0 0
          %4886 = vmatpush1.bf16.msra.mxu0 0
          %4887 = vmatprep.subr.bf16.mxu0 0
          %4888 = vmatpush1.bf16.msra.mxu0 0
          %4889 = vmatprep.subr.bf16.mxu0 0
          %4890 = vmatpush1.bf16.msra.mxu0 0
          %4891 = vmatprep.mubr.bf16.mxu0 0
          %4892 = vmatmul.mubr.bf16.gmra.mrb[0].mxu0 %v4851
          %v4893 = vpop.f32.mrb[0].mxu0
          %v4894 = vadd.f32 0.0, %v4893
          %v4895 = vpop.f32.mrb[0].mxu0
          %v4896 = vpop.f32.mrb[0].mxu0
          %v4897 = vadd.f32 0.0, %v4896
          %v4898 = vpop.f32.mrb[0].mxu0
          %4899 = vmatprep.mubr.bf16.mxu0 0
          %4900 = vmatmul.mubr.bf16.gmra.mrb[0].mxu0 %v4852
          %v4901 = vpop.f32.mrb[0].mxu0
          %v4902 = vadd.f32 0.0, %v4901
          %v4903 = vpop.f32.mrb[0].mxu0
          %v4904 = vpop.f32.mrb[0].mxu0
          %v4905 = vadd.f32 0.0, %v4904
          %v4906 = vpop.f32.mrb[0].mxu0
          %4907 = vmatprep.mubr.bf16.mxu0 0
          %4908 = vmatmul.mubr.bf16.gmra.mrb[0].mxu0 %v4853
          %v4909 = vpop.f32.mrb[0].mxu0
          %v4910 = vadd.f32 0.0, %v4909
          %v4911 = vpop.f32.mrb[0].mxu0
          %v4912 = vpop.f32.mrb[0].mxu0
          %v4913 = vadd.f32 0.0, %v4912
          %v4914 = vpop.f32.mrb[0].mxu0
          %4915 = vmatprep.mubr.bf16.mxu0 0
          %4916 = vmatmul.mubr.bf16.gmra.mrb[0].mxu0 %v4854
          %v4917 = vpop.f32.mrb[0].mxu0
          %v4918 = vadd.f32 0.0, %v4917
          %v4919 = vpop.f32.mrb[0].mxu0
          %v4920 = vpop.f32.mrb[0].mxu0
          %v4921 = vadd.f32 0.0, %v4920
          %v4922 = vpop.f32.mrb[0].mxu0
          %4923 = vmatprep.mubr.bf16.mxu0 0
          %4924 = vmatmul.mubr.bf16.gmra.mrb[0].mxu0 %v4855
          %v4925 = vpop.f32.mrb[0].mxu0
          %v4926 = vadd.f32 0.0, %v4925
          %v4927 = vpop.f32.mrb[0].mxu0
          %v4928 = vpop.f32.mrb[0].mxu0
          %v4929 = vadd.f32 0.0, %v4928
          %v4930 = vpop.f32.mrb[0].mxu0
          %4931 = vmatprep.mubr.bf16.mxu0 0
          %4932 = vmatmul.mubr.bf16.gmra.mrb[0].mxu0 %v4856
          %v4933 = vpop.f32.mrb[0].mxu0
          %v4934 = vadd.f32 0.0, %v4933
          %v4935 = vpop.f32.mrb[0].mxu0
          %v4936 = vpop.f32.mrb[0].mxu0
          %v4937 = vadd.f32 0.0, %v4936
          %v4938 = vpop.f32.mrb[0].mxu0
          %4939 = vmatprep.mubr.bf16.mxu0 0
          %4940 = vmatmul.mubr.bf16.gmra.mrb[0].mxu0 %v4857
          %v4941 = vpop.f32.mrb[0].mxu0
          %v4942 = vadd.f32 0.0, %v4941
          %v4943 = vpop.f32.mrb[0].mxu0
          %v4944 = vpop.f32.mrb[0].mxu0
          %v4945 = vadd.f32 0.0, %v4944
          %v4946 = vpop.f32.mrb[0].mxu0
          %4947 = vmatprep.mubr.bf16.mxu0 0
          %4948 = vmatmul.mubr.bf16.gmra.mrb[0].mxu0 %v4858
          %v4949 = vpop.f32.mrb[0].mxu0
          %v4950 = vadd.f32 0.0, %v4949
          %v4951 = vpop.f32.mrb[0].mxu0
          %v4952 = vpop.f32.mrb[0].mxu0
          %v4953 = vadd.f32 0.0, %v4952
          %v4954 = vpop.f32.mrb[0].mxu0
          %4955 = vdwg.mxu0
          %v4956 = vadd.f32 %v4835, %v4894
          %v4957 = vadd.f32 %v4836, %v4897
          %v4958 = vadd.f32 %v4837, %v4902
          %v4959 = vadd.f32 %v4838, %v4905
          %v4960 = vadd.f32 %v4839, %v4910
          %v4961 = vadd.f32 %v4840, %v4913
          %v4962 = vadd.f32 %v4841, %v4918
          %v4963 = vadd.f32 %v4842, %v4921
          %v4964 = vadd.f32 %v4843, %v4926
          %v4965 = vadd.f32 %v4844, %v4929
          %v4966 = vadd.f32 %v4845, %v4934
          %v4967 = vadd.f32 %v4846, %v4937
          %v4968 = vadd.f32 %v4847, %v4942
          %v4969 = vadd.f32 %v4848, %v4945
          %v4970 = vadd.f32 %v4849, %v4950
          %v4971 = vadd.f32 %v4850, %v4953
          %4972 = vst.msk [vmem:[#allocation5] sm:$0xff] %vm4256, %v4956
          %4973 = vst.msk [vmem:[#allocation5 + $0x10] sm:$0xff] %vm4256, %v4957
          %4974 = vst.msk [vmem:[#allocation5 + $0x20] sm:$0xff] %vm4256, %v4958
          %4975 = vst.msk [vmem:[#allocation5 + $0x30] sm:$0xff] %vm4256, %v4959
          %4976 = vst.msk [vmem:[#allocation5 + $0x40] sm:$0xff] %vm4256, %v4960
          %4977 = vst.msk [vmem:[#allocation5 + $0x50] sm:$0xff] %vm4256, %v4961
          %4978 = vst.msk [vmem:[#allocation5 + $0x60] sm:$0xff] %vm4256, %v4962
          %4979 = vst.msk [vmem:[#allocation5 + $0x70] sm:$0xff] %vm4256, %v4963
          %4980 = vst.msk [vmem:[#allocation5 + $0x80] sm:$0xff] %vm4256, %v4964
          %4981 = vst.msk [vmem:[#allocation5 + $0x90] sm:$0xff] %vm4256, %v4965
          %4982 = vst.msk [vmem:[#allocation5 + $0xa0] sm:$0xff] %vm4256, %v4966
          %4983 = vst.msk [vmem:[#allocation5 + $0xb0] sm:$0xff] %vm4256, %v4967
          %4984 = vst.msk [vmem:[#allocation5 + $0xc0] sm:$0xff] %vm4256, %v4968
          %4985 = vst.msk [vmem:[#allocation5 + $0xd0] sm:$0xff] %vm4256, %v4969
          %4986 = vst.msk [vmem:[#allocation5 + $0xe0] sm:$0xff] %vm4256, %v4970
          %4987 = vst.msk [vmem:[#allocation5 + $0xf0] sm:$0xff] %vm4256, %v4971
          %4988 = vst.msk [vmem:[#allocation3] sm:$0xff] %vm4722, %v4450
          %4989 = vst.msk [vmem:[#allocation3 + $0x8] sm:$0xff] %vm4722, %v4451
          %4990 = vst.msk [vmem:[#allocation3 + $0x10] sm:$0xff] %vm4722, %v4452
          %4991 = vst.msk [vmem:[#allocation3 + $0x18] sm:$0xff] %vm4722, %v4453
          %4992 = vst.msk [vmem:[#allocation3 + $0x20] sm:$0xff] %vm4722, %v4454
          %4993 = vst.msk [vmem:[#allocation3 + $0x28] sm:$0xff] %vm4722, %v4455
          %4994 = vst.msk [vmem:[#allocation3 + $0x30] sm:$0xff] %vm4722, %v4456
          %4995 = vst.msk [vmem:[#allocation3 + $0x38] sm:$0xff] %vm4722, %v4457
          %4996 = vst.msk [vmem:[#allocation3 + $0x40] sm:$0xff] %vm4722, %v4458
          %4997 = vst.msk [vmem:[#allocation3 + $0x48] sm:$0xff] %vm4722, %v4459
          %4998 = vst.msk [vmem:[#allocation3 + $0x50] sm:$0xff] %vm4722, %v4460
          %4999 = vst.msk [vmem:[#allocation3 + $0x58] sm:$0xff] %vm4722, %v4461
          %5000 = vst.msk [vmem:[#allocation3 + $0x60] sm:$0xff] %vm4722, %v4462
          %5001 = vst.msk [vmem:[#allocation3 + $0x68] sm:$0xff] %vm4722, %v4463
          %5002 = vst.msk [vmem:[#allocation3 + $0x70] sm:$0xff] %vm4722, %v4464
          %5003 = vst.msk [vmem:[#allocation3 + $0x78] sm:$0xff] %vm4722, %v4465
          %v5004 = vld [vmem:[#allocation2] sm:$0xff]
          %v5005 = vld [vmem:[#allocation2 + $0x10] sm:$0xff]
          %v5006 = vld [vmem:[#allocation2 + $0x20] sm:$0xff]
          %v5007 = vld [vmem:[#allocation2 + $0x30] sm:$0xff]
          %v5008 = vld [vmem:[#allocation2 + $0x40] sm:$0xff]
          %v5009 = vld [vmem:[#allocation2 + $0x50] sm:$0xff]
          %v5010 = vld [vmem:[#allocation2 + $0x60] sm:$0xff]
          %v5011 = vld [vmem:[#allocation2 + $0x70] sm:$0xff]
          %v5012 = vld [vmem:[%s274] sm:$0xff]
          %v5013 = vld [vmem:[%s274 + $0x10] sm:$0xff]
          %v5014 = vld [vmem:[%s274 + $0x20] sm:$0xff]
          %v5015 = vld [vmem:[%s274 + $0x30] sm:$0xff]
          %v5016 = vld [vmem:[%s274 + $0x40] sm:$0xff]
          %v5017 = vld [vmem:[%s274 + $0x50] sm:$0xff]
          %v5018 = vld [vmem:[%s274 + $0x60] sm:$0xff]
          %v5019 = vld [vmem:[%s274 + $0x70] sm:$0xff]
          %v5020 = vld [vmem:[%s274 + $0x80] sm:$0xff]
          %v5021 = vld [vmem:[%s274 + $0x90] sm:$0xff]
          %v5022 = vld [vmem:[%s274 + $0xa0] sm:$0xff]
          %v5023 = vld [vmem:[%s274 + $0xb0] sm:$0xff]
          %v5024 = vld [vmem:[%s274 + $0xc0] sm:$0xff]
          %v5025 = vld [vmem:[%s274 + $0xd0] sm:$0xff]
          %v5026 = vld [vmem:[%s274 + $0xe0] sm:$0xff]
          %v5027 = vld [vmem:[%s274 + $0xf0] sm:$0xff]
          %v5028 = vpack.c.bf16 %v5013, %v5012
          %v5029 = vpack.c.bf16 %v5015, %v5014
          %v5030 = vpack.c.bf16 %v5017, %v5016
          %v5031 = vpack.c.bf16 %v5019, %v5018
          %v5032 = vpack.c.bf16 %v5021, %v5020
          %v5033 = vpack.c.bf16 %v5023, %v5022
          %v5034 = vpack.c.bf16 %v5025, %v5024
          %v5035 = vpack.c.bf16 %v5027, %v5026
          %v5036 = vld [vmem:[%s283] sm:$0xff]
          %v5037 = vld [vmem:[%s283 + $0x10] sm:$0xff]
          %v5038 = vld [vmem:[%s283 + $0x20] sm:$0xff]
          %v5039 = vld [vmem:[%s283 + $0x30] sm:$0xff]
          %v5040 = vld [vmem:[%s283 + $0x40] sm:$0xff]
          %v5041 = vld [vmem:[%s283 + $0x50] sm:$0xff]
          %v5042 = vld [vmem:[%s283 + $0x60] sm:$0xff]
          %v5043 = vld [vmem:[%s283 + $0x70] sm:$0xff]
          %v5044 = vld [vmem:[%s283 + $0x80] sm:$0xff]
          %v5045 = vld [vmem:[%s283 + $0x90] sm:$0xff]
          %v5046 = vld [vmem:[%s283 + $0xa0] sm:$0xff]
          %v5047 = vld [vmem:[%s283 + $0xb0] sm:$0xff]
          %v5048 = vld [vmem:[%s283 + $0xc0] sm:$0xff]
          %v5049 = vld [vmem:[%s283 + $0xd0] sm:$0xff]
          %v5050 = vld [vmem:[%s283 + $0xe0] sm:$0xff]
          %v5051 = vld [vmem:[%s283 + $0xf0] sm:$0xff]
          %v5052 = vpack.c.bf16 %v5037, %v5036
          %v5053 = vpack.c.bf16 %v5039, %v5038
          %v5054 = vpack.c.bf16 %v5041, %v5040
          %v5055 = vpack.c.bf16 %v5043, %v5042
          %v5056 = vpack.c.bf16 %v5045, %v5044
          %v5057 = vpack.c.bf16 %v5047, %v5046
          %v5058 = vpack.c.bf16 %v5049, %v5048
          %v5059 = vpack.c.bf16 %v5051, %v5050
          %5068 = vrot.lane.b32.xlu0 %v5004, 64
          %v5069 = vpop.permute.xlu0 %5068
          %5070 = vrot.lane.b32.xlu0 %v5005, 64
          %v5071 = vpop.permute.xlu0 %5070
          %5072 = vrot.lane.b32.xlu0 %v5006, 64
          %v5073 = vpop.permute.xlu0 %5072
          %5074 = vrot.lane.b32.xlu0 %v5007, 64
          %v5075 = vpop.permute.xlu0 %5074
          %5076 = vrot.lane.b32.xlu0 %v5008, 64
          %v5077 = vpop.permute.xlu0 %5076
          %5078 = vrot.lane.b32.xlu0 %v5009, 64
          %v5079 = vpop.permute.xlu0 %5078
          %5080 = vrot.lane.b32.xlu0 %v5010, 64
          %v5081 = vpop.permute.xlu0 %5080
          %5082 = vrot.lane.b32.xlu0 %v5011, 64
          %v5083 = vpop.permute.xlu0 %5082
          %5092 = vrot.lane.b32.xlu0 %v5028, 64
          %v5093 = vpop.permute.xlu0 %5092
          %5094 = vrot.lane.b32.xlu0 %v5029, 64
          %v5095 = vpop.permute.xlu0 %5094
          %5096 = vrot.lane.b32.xlu0 %v5030, 64
          %v5097 = vpop.permute.xlu0 %5096
          %5098 = vrot.lane.b32.xlu0 %v5031, 64
          %v5099 = vpop.permute.xlu0 %5098
          %5100 = vrot.lane.b32.xlu0 %v5032, 64
          %v5101 = vpop.permute.xlu0 %5100
          %5102 = vrot.lane.b32.xlu0 %v5033, 64
          %v5103 = vpop.permute.xlu0 %5102
          %5104 = vrot.lane.b32.xlu0 %v5034, 64
          %v5105 = vpop.permute.xlu0 %5104
          %5106 = vrot.lane.b32.xlu0 %v5035, 64
          %v5107 = vpop.permute.xlu0 %5106
          %v5109 = vsel %vm4256, %v5069, 0
          %v5112 = vsel %vm4256, %v5071, 0
          %v5115 = vsel %vm4256, %v5073, 0
          %v5118 = vsel %vm4256, %v5075, 0
          %v5121 = vsel %vm4256, %v5077, 0
          %v5124 = vsel %vm4256, %v5079, 0
          %v5127 = vsel %vm4256, %v5081, 0
          %v5130 = vsel %vm4256, %v5083, 0
          %v5133 = vsel %vm4256, %v5093, 0
          %v5136 = vsel %vm4256, %v5095, 0
          %v5139 = vsel %vm4256, %v5097, 0
          %v5142 = vsel %vm4256, %v5099, 0
          %v5145 = vsel %vm4256, %v5101, 0
          %v5148 = vsel %vm4256, %v5103, 0
          %v5151 = vsel %vm4256, %v5105, 0
          %v5154 = vsel %vm4256, %v5107, 0
          %5156 = vmatprep.subr.bf16.mxu0 0
          %5157 = vmatpush1.bf16.xpose.msra.mxu0 %v5133
          %5158 = vmatprep.subr.bf16.mxu0 0
          %5159 = vmatpush1.bf16.xpose.msra.mxu0 %v5136
          %5160 = vmatprep.subr.bf16.mxu0 0
          %5161 = vmatpush1.bf16.xpose.msra.mxu0 %v5139
          %5162 = vmatprep.subr.bf16.mxu0 0
          %5163 = vmatpush1.bf16.xpose.msra.mxu0 %v5142
          %5164 = vmatprep.subr.bf16.mxu0 0
          %5165 = vmatpush1.bf16.xpose.msra.mxu0 %v5145
          %5166 = vmatprep.subr.bf16.mxu0 0
          %5167 = vmatpush1.bf16.xpose.msra.mxu0 %v5148
          %5168 = vmatprep.subr.bf16.mxu0 0
          %5169 = vmatpush1.bf16.xpose.msra.mxu0 %v5151
          %5170 = vmatprep.subr.bf16.mxu0 0
          %5171 = vmatpush1.bf16.xpose.msra.mxu0 %v5154
          %5172 = vmatprep.subr.bf16.mxu0 0
          %5173 = vmatpush1.bf16.xpose.msra.mxu0 0
          %5174 = vmatprep.subr.bf16.mxu0 0
          %5175 = vmatpush1.bf16.xpose.msra.mxu0 0
          %5176 = vmatprep.subr.bf16.mxu0 0
          %5177 = vmatpush1.bf16.xpose.msra.mxu0 0
          %5178 = vmatprep.subr.bf16.mxu0 0
          %5179 = vmatpush1.bf16.xpose.msra.mxu0 0
          %5180 = vmatprep.subr.bf16.mxu0 0
          %5181 = vmatpush1.bf16.xpose.msra.mxu0 0
          %5182 = vmatprep.subr.bf16.mxu0 0
          %5183 = vmatpush1.bf16.xpose.msra.mxu0 0
          %5184 = vmatprep.subr.bf16.mxu0 0
          %5185 = vmatpush1.bf16.xpose.msra.mxu0 0
          %5186 = vmatprep.subr.bf16.mxu0 0
          %5187 = vmatpush1.bf16.xpose.msra.mxu0 0
          %5188 = vmatprep.mubr.bf16.mxu0 0
          %5189 = vmatmul.mubr.bf16.gmra.mrb[0].mxu0 %v5109
          %v5190 = vpop.f32.mrb[0].mxu0
          %v5191 = vadd.f32 0.0, %v5190
          %v5192 = vpop.f32.mrb[0].mxu0
          %v5193 = vpop.f32.mrb[0].mxu0
          %v5194 = vadd.f32 0.0, %v5193
          %v5195 = vpop.f32.mrb[0].mxu0
          %5196 = vmatprep.mubr.bf16.mxu0 0
          %5197 = vmatmul.mubr.bf16.gmra.mrb[0].mxu0 %v5112
          %v5198 = vpop.f32.mrb[0].mxu0
          %v5199 = vadd.f32 0.0, %v5198
          %v5200 = vpop.f32.mrb[0].mxu0
          %v5201 = vpop.f32.mrb[0].mxu0
          %v5202 = vadd.f32 0.0, %v5201
          %v5203 = vpop.f32.mrb[0].mxu0
          %5204 = vmatprep.mubr.bf16.mxu0 0
          %5205 = vmatmul.mubr.bf16.gmra.mrb[0].mxu0 %v5115
          %v5206 = vpop.f32.mrb[0].mxu0
          %v5207 = vadd.f32 0.0, %v5206
          %v5208 = vpop.f32.mrb[0].mxu0
          %v5209 = vpop.f32.mrb[0].mxu0
          %v5210 = vadd.f32 0.0, %v5209
          %v5211 = vpop.f32.mrb[0].mxu0
          %5212 = vmatprep.mubr.bf16.mxu0 0
          %5213 = vmatmul.mubr.bf16.gmra.mrb[0].mxu0 %v5118
          %v5214 = vpop.f32.mrb[0].mxu0
          %v5215 = vadd.f32 0.0, %v5214
          %v5216 = vpop.f32.mrb[0].mxu0
          %v5217 = vpop.f32.mrb[0].mxu0
          %v5218 = vadd.f32 0.0, %v5217
          %v5219 = vpop.f32.mrb[0].mxu0
          %5220 = vmatprep.mubr.bf16.mxu0 0
          %5221 = vmatmul.mubr.bf16.gmra.mrb[0].mxu0 %v5121
          %v5222 = vpop.f32.mrb[0].mxu0
          %v5223 = vadd.f32 0.0, %v5222
          %v5224 = vpop.f32.mrb[0].mxu0
          %v5225 = vpop.f32.mrb[0].mxu0
          %v5226 = vadd.f32 0.0, %v5225
          %v5227 = vpop.f32.mrb[0].mxu0
          %5228 = vmatprep.mubr.bf16.mxu0 0
          %5229 = vmatmul.mubr.bf16.gmra.mrb[0].mxu0 %v5124
          %v5230 = vpop.f32.mrb[0].mxu0
          %v5231 = vadd.f32 0.0, %v5230
          %v5232 = vpop.f32.mrb[0].mxu0
          %v5233 = vpop.f32.mrb[0].mxu0
          %v5234 = vadd.f32 0.0, %v5233
          %v5235 = vpop.f32.mrb[0].mxu0
          %5236 = vmatprep.mubr.bf16.mxu0 0
          %5237 = vmatmul.mubr.bf16.gmra.mrb[0].mxu0 %v5127
          %v5238 = vpop.f32.mrb[0].mxu0
          %v5239 = vadd.f32 0.0, %v5238
          %v5240 = vpop.f32.mrb[0].mxu0
          %v5241 = vpop.f32.mrb[0].mxu0
          %v5242 = vadd.f32 0.0, %v5241
          %v5243 = vpop.f32.mrb[0].mxu0
          %5244 = vmatprep.mubr.bf16.mxu0 0
          %5245 = vmatmul.mubr.bf16.gmra.mrb[0].mxu0 %v5130
          %v5246 = vpop.f32.mrb[0].mxu0
          %v5247 = vadd.f32 0.0, %v5246
          %v5248 = vpop.f32.mrb[0].mxu0
          %v5249 = vpop.f32.mrb[0].mxu0
          %v5250 = vadd.f32 0.0, %v5249
          %v5251 = vpop.f32.mrb[0].mxu0
          %5252 = vdwg.mxu0
          %s5253 = scalar_lea.vmem [#allocation3], 128
          %v5254 = vld [vmem:[%s5253] sm:$0xff]
          %v5255 = vld [vmem:[%s5253 + $0x8] sm:$0xff]
          %v5256 = vld [vmem:[%s5253 + $0x10] sm:$0xff]
          %v5257 = vld [vmem:[%s5253 + $0x18] sm:$0xff]
          %v5258 = vld [vmem:[%s5253 + $0x20] sm:$0xff]
          %v5259 = vld [vmem:[%s5253 + $0x28] sm:$0xff]
          %v5260 = vld [vmem:[%s5253 + $0x30] sm:$0xff]
          %v5261 = vld [vmem:[%s5253 + $0x38] sm:$0xff]
          %v5262 = vld [vmem:[%s5253 + $0x40] sm:$0xff]
          %v5263 = vld [vmem:[%s5253 + $0x48] sm:$0xff]
          %v5264 = vld [vmem:[%s5253 + $0x50] sm:$0xff]
          %v5265 = vld [vmem:[%s5253 + $0x58] sm:$0xff]
          %v5266 = vld [vmem:[%s5253 + $0x60] sm:$0xff]
          %v5267 = vld [vmem:[%s5253 + $0x68] sm:$0xff]
          %v5268 = vld [vmem:[%s5253 + $0x70] sm:$0xff]
          %v5269 = vld [vmem:[%s5253 + $0x78] sm:$0xff]
          %5270 = vmax.xlane.f32.xlu0 %v5191
          %v5271 = vpop.xlane.xlu0 %5270
          %5272 = vmax.xlane.f32.xlu0 %v5194
          %v5273 = vpop.xlane.xlu0 %5272
          %5274 = vmax.xlane.f32.xlu0 %v5199
          %v5275 = vpop.xlane.xlu0 %5274
          %5276 = vmax.xlane.f32.xlu0 %v5202
          %v5277 = vpop.xlane.xlu0 %5276
          %5278 = vmax.xlane.f32.xlu0 %v5207
          %v5279 = vpop.xlane.xlu0 %5278
          %5280 = vmax.xlane.f32.xlu0 %v5210
          %v5281 = vpop.xlane.xlu0 %5280
          %5282 = vmax.xlane.f32.xlu0 %v5215
          %v5283 = vpop.xlane.xlu0 %5282
          %5284 = vmax.xlane.f32.xlu0 %v5218
          %v5285 = vpop.xlane.xlu0 %5284
          %5286 = vmax.xlane.f32.xlu0 %v5223
          %v5287 = vpop.xlane.xlu0 %5286
          %5288 = vmax.xlane.f32.xlu0 %v5226
          %v5289 = vpop.xlane.xlu0 %5288
          %5290 = vmax.xlane.f32.xlu0 %v5231
          %v5291 = vpop.xlane.xlu0 %5290
          %5292 = vmax.xlane.f32.xlu0 %v5234
          %v5293 = vpop.xlane.xlu0 %5292
          %5294 = vmax.xlane.f32.xlu0 %v5239
          %v5295 = vpop.xlane.xlu0 %5294
          %5296 = vmax.xlane.f32.xlu0 %v5242
          %v5297 = vpop.xlane.xlu0 %5296
          %5298 = vmax.xlane.f32.xlu0 %v5247
          %v5299 = vpop.xlane.xlu0 %5298
          %5300 = vmax.xlane.f32.xlu0 %v5250
          %v5301 = vpop.xlane.xlu0 %5300
          %v5302 = vmax.f32 %v5254, %v5271
          %v5303 = vmax.f32 %v5255, %v5273
          %v5304 = vmax.f32 %v5256, %v5275
          %v5305 = vmax.f32 %v5257, %v5277
          %v5306 = vmax.f32 %v5258, %v5279
          %v5307 = vmax.f32 %v5259, %v5281
          %v5308 = vmax.f32 %v5260, %v5283
          %v5309 = vmax.f32 %v5261, %v5285
          %v5310 = vmax.f32 %v5262, %v5287
          %v5311 = vmax.f32 %v5263, %v5289
          %v5312 = vmax.f32 %v5264, %v5291
          %v5313 = vmax.f32 %v5265, %v5293
          %v5314 = vmax.f32 %v5266, %v5295
          %v5315 = vmax.f32 %v5267, %v5297
          %v5316 = vmax.f32 %v5268, %v5299
          %v5317 = vmax.f32 %v5269, %v5301
          %v5318 = vsub.f32 %v5254, %v5302
          %v5319 = vsub.f32 %v5255, %v5303
          %v5320 = vsub.f32 %v5256, %v5304
          %v5321 = vsub.f32 %v5257, %v5305
          %v5322 = vsub.f32 %v5258, %v5306
          %v5323 = vsub.f32 %v5259, %v5307
          %v5324 = vsub.f32 %v5260, %v5308
          %v5325 = vsub.f32 %v5261, %v5309
          %v5326 = vsub.f32 %v5262, %v5310
          %v5327 = vsub.f32 %v5263, %v5311
          %v5328 = vsub.f32 %v5264, %v5312
          %v5329 = vsub.f32 %v5265, %v5313
          %v5330 = vsub.f32 %v5266, %v5314
          %v5331 = vsub.f32 %v5267, %v5315
          %v5332 = vsub.f32 %v5268, %v5316
          %v5333 = vsub.f32 %v5269, %v5317
          %v5334 = vmul.f32 %v5318, 1.442695
          %v5335 = vpow.pop %v5334
          %v5336 = vmul.f32 %v5319, 1.442695
          %v5337 = vpow.pop %v5336
          %v5338 = vmul.f32 %v5320, 1.442695
          %v5339 = vpow.pop %v5338
          %v5340 = vmul.f32 %v5321, 1.442695
          %v5341 = vpow.pop %v5340
          %v5342 = vmul.f32 %v5322, 1.442695
          %v5343 = vpow.pop %v5342
          %v5344 = vmul.f32 %v5323, 1.442695
          %v5345 = vpow.pop %v5344
          %v5346 = vmul.f32 %v5324, 1.442695
          %v5347 = vpow.pop %v5346
          %v5348 = vmul.f32 %v5325, 1.442695
          %v5349 = vpow.pop %v5348
          %v5350 = vmul.f32 %v5326, 1.442695
          %v5351 = vpow.pop %v5350
          %v5352 = vmul.f32 %v5327, 1.442695
          %v5353 = vpow.pop %v5352
          %v5354 = vmul.f32 %v5328, 1.442695
          %v5355 = vpow.pop %v5354
          %v5356 = vmul.f32 %v5329, 1.442695
          %v5357 = vpow.pop %v5356
          %v5358 = vmul.f32 %v5330, 1.442695
          %v5359 = vpow.pop %v5358
          %v5360 = vmul.f32 %v5331, 1.442695
          %v5361 = vpow.pop %v5360
          %v5362 = vmul.f32 %v5332, 1.442695
          %v5363 = vpow.pop %v5362
          %v5364 = vmul.f32 %v5333, 1.442695
          %v5365 = vpow.pop %v5364
          %5367 = vset.pattern.permute.xlu0 0
          %5368 = vperm.xlu0 %5367, %v5302
          %v5369 = vpop.permute.xlu0 %5368
          %5372 = vset.pattern.permute.xlu0 0
          %5373 = vperm.xlu0 %5372, %v5303
          %v5374 = vpop.permute.xlu0 %5373
          %5377 = vset.pattern.permute.xlu0 0
          %5378 = vperm.xlu0 %5377, %v5304
          %v5379 = vpop.permute.xlu0 %5378
          %5382 = vset.pattern.permute.xlu0 0
          %5383 = vperm.xlu0 %5382, %v5305
          %v5384 = vpop.permute.xlu0 %5383
          %5387 = vset.pattern.permute.xlu0 0
          %5388 = vperm.xlu0 %5387, %v5306
          %v5389 = vpop.permute.xlu0 %5388
          %5392 = vset.pattern.permute.xlu0 0
          %5393 = vperm.xlu0 %5392, %v5307
          %v5394 = vpop.permute.xlu0 %5393
          %5397 = vset.pattern.permute.xlu0 0
          %5398 = vperm.xlu0 %5397, %v5308
          %v5399 = vpop.permute.xlu0 %5398
          %5402 = vset.pattern.permute.xlu0 0
          %5403 = vperm.xlu0 %5402, %v5309
          %v5404 = vpop.permute.xlu0 %5403
          %5407 = vset.pattern.permute.xlu0 0
          %5408 = vperm.xlu0 %5407, %v5310
          %v5409 = vpop.permute.xlu0 %5408
          %5412 = vset.pattern.permute.xlu0 0
          %5413 = vperm.xlu0 %5412, %v5311
          %v5414 = vpop.permute.xlu0 %5413
          %5417 = vset.pattern.permute.xlu0 0
          %5418 = vperm.xlu0 %5417, %v5312
          %v5419 = vpop.permute.xlu0 %5418
          %5422 = vset.pattern.permute.xlu0 0
          %5423 = vperm.xlu0 %5422, %v5313
          %v5424 = vpop.permute.xlu0 %5423
          %5427 = vset.pattern.permute.xlu0 0
          %5428 = vperm.xlu0 %5427, %v5314
          %v5429 = vpop.permute.xlu0 %5428
          %5432 = vset.pattern.permute.xlu0 0
          %5433 = vperm.xlu0 %5432, %v5315
          %v5434 = vpop.permute.xlu0 %5433
          %5437 = vset.pattern.permute.xlu0 0
          %5438 = vperm.xlu0 %5437, %v5316
          %v5439 = vpop.permute.xlu0 %5438
          %5442 = vset.pattern.permute.xlu0 0
          %5443 = vperm.xlu0 %5442, %v5317
          %v5444 = vpop.permute.xlu0 %5443
          %v5446 = vsub.f32 %v5191, %v5369
          %v5447 = vsub.f32 %v5194, %v5374
          %v5448 = vsub.f32 %v5199, %v5379
          %v5449 = vsub.f32 %v5202, %v5384
          %v5450 = vsub.f32 %v5207, %v5389
          %v5451 = vsub.f32 %v5210, %v5394
          %v5452 = vsub.f32 %v5215, %v5399
          %v5453 = vsub.f32 %v5218, %v5404
          %v5454 = vsub.f32 %v5223, %v5409
          %v5455 = vsub.f32 %v5226, %v5414
          %v5456 = vsub.f32 %v5231, %v5419
          %v5457 = vsub.f32 %v5234, %v5424
          %v5458 = vsub.f32 %v5239, %v5429
          %v5459 = vsub.f32 %v5242, %v5434
          %v5460 = vsub.f32 %v5247, %v5439
          %v5461 = vsub.f32 %v5250, %v5444
          %v5462 = vmul.f32 %v5446, 1.442695
          %v5463 = vpow.pop %v5462
          %v5464 = vmul.f32 %v5447, 1.442695
          %v5465 = vpow.pop %v5464
          %v5466 = vmul.f32 %v5448, 1.442695
          %v5467 = vpow.pop %v5466
          %v5468 = vmul.f32 %v5449, 1.442695
          %v5469 = vpow.pop %v5468
          %v5470 = vmul.f32 %v5450, 1.442695
          %v5471 = vpow.pop %v5470
          %v5472 = vmul.f32 %v5451, 1.442695
          %v5473 = vpow.pop %v5472
          %v5474 = vmul.f32 %v5452, 1.442695
          %v5475 = vpow.pop %v5474
          %v5476 = vmul.f32 %v5453, 1.442695
          %v5477 = vpow.pop %v5476
          %v5478 = vmul.f32 %v5454, 1.442695
          %v5479 = vpow.pop %v5478
          %v5480 = vmul.f32 %v5455, 1.442695
          %v5481 = vpow.pop %v5480
          %v5482 = vmul.f32 %v5456, 1.442695
          %v5483 = vpow.pop %v5482
          %v5484 = vmul.f32 %v5457, 1.442695
          %v5485 = vpow.pop %v5484
          %v5486 = vmul.f32 %v5458, 1.442695
          %v5487 = vpow.pop %v5486
          %v5488 = vmul.f32 %v5459, 1.442695
          %v5489 = vpow.pop %v5488
          %v5490 = vmul.f32 %v5460, 1.442695
          %v5491 = vpow.pop %v5490
          %v5492 = vmul.f32 %v5461, 1.442695
          %v5493 = vpow.pop %v5492
          %s5494 = scalar_lea.vmem [#allocation4], 128
          %v5495 = vld [vmem:[%s5494] sm:$0xff]
          %v5496 = vld [vmem:[%s5494 + $0x8] sm:$0xff]
          %v5497 = vld [vmem:[%s5494 + $0x10] sm:$0xff]
          %v5498 = vld [vmem:[%s5494 + $0x18] sm:$0xff]
          %v5499 = vld [vmem:[%s5494 + $0x20] sm:$0xff]
          %v5500 = vld [vmem:[%s5494 + $0x28] sm:$0xff]
          %v5501 = vld [vmem:[%s5494 + $0x30] sm:$0xff]
          %v5502 = vld [vmem:[%s5494 + $0x38] sm:$0xff]
          %v5503 = vld [vmem:[%s5494 + $0x40] sm:$0xff]
          %v5504 = vld [vmem:[%s5494 + $0x48] sm:$0xff]
          %v5505 = vld [vmem:[%s5494 + $0x50] sm:$0xff]
          %v5506 = vld [vmem:[%s5494 + $0x58] sm:$0xff]
          %v5507 = vld [vmem:[%s5494 + $0x60] sm:$0xff]
          %v5508 = vld [vmem:[%s5494 + $0x68] sm:$0xff]
          %v5509 = vld [vmem:[%s5494 + $0x70] sm:$0xff]
          %v5510 = vld [vmem:[%s5494 + $0x78] sm:$0xff]
          %v5511 = vmul.f32 %v5335, %v5495
          %v5512 = vmul.f32 %v5337, %v5496
          %v5513 = vmul.f32 %v5339, %v5497
          %v5514 = vmul.f32 %v5341, %v5498
          %v5515 = vmul.f32 %v5343, %v5499
          %v5516 = vmul.f32 %v5345, %v5500
          %v5517 = vmul.f32 %v5347, %v5501
          %v5518 = vmul.f32 %v5349, %v5502
          %v5519 = vmul.f32 %v5351, %v5503
          %v5520 = vmul.f32 %v5353, %v5504
          %v5521 = vmul.f32 %v5355, %v5505
          %v5522 = vmul.f32 %v5357, %v5506
          %v5523 = vmul.f32 %v5359, %v5507
          %v5524 = vmul.f32 %v5361, %v5508
          %v5525 = vmul.f32 %v5363, %v5509
          %v5526 = vmul.f32 %v5365, %v5510
          %5527 = vadd.xlane.f32.xlu0 %v5463
          %v5528 = vpop.xlane.xlu0 %5527
          %5529 = vadd.xlane.f32.xlu0 %v5465
          %v5530 = vpop.xlane.xlu0 %5529
          %5531 = vadd.xlane.f32.xlu0 %v5467
          %v5532 = vpop.xlane.xlu0 %5531
          %5533 = vadd.xlane.f32.xlu0 %v5469
          %v5534 = vpop.xlane.xlu0 %5533
          %5535 = vadd.xlane.f32.xlu0 %v5471
          %v5536 = vpop.xlane.xlu0 %5535
          %5537 = vadd.xlane.f32.xlu0 %v5473
          %v5538 = vpop.xlane.xlu0 %5537
          %5539 = vadd.xlane.f32.xlu0 %v5475
          %v5540 = vpop.xlane.xlu0 %5539
          %5541 = vadd.xlane.f32.xlu0 %v5477
          %v5542 = vpop.xlane.xlu0 %5541
          %5543 = vadd.xlane.f32.xlu0 %v5479
          %v5544 = vpop.xlane.xlu0 %5543
          %5545 = vadd.xlane.f32.xlu0 %v5481
          %v5546 = vpop.xlane.xlu0 %5545
          %5547 = vadd.xlane.f32.xlu0 %v5483
          %v5548 = vpop.xlane.xlu0 %5547
          %5549 = vadd.xlane.f32.xlu0 %v5485
          %v5550 = vpop.xlane.xlu0 %5549
          %5551 = vadd.xlane.f32.xlu0 %v5487
          %v5552 = vpop.xlane.xlu0 %5551
          %5553 = vadd.xlane.f32.xlu0 %v5489
          %v5554 = vpop.xlane.xlu0 %5553
          %5555 = vadd.xlane.f32.xlu0 %v5491
          %v5556 = vpop.xlane.xlu0 %5555
          %5557 = vadd.xlane.f32.xlu0 %v5493
          %v5558 = vpop.xlane.xlu0 %5557
          %v5559 = vadd.f32 %v5511, %v5528
          %v5560 = vadd.f32 %v5512, %v5530
          %v5561 = vadd.f32 %v5513, %v5532
          %v5562 = vadd.f32 %v5514, %v5534
          %v5563 = vadd.f32 %v5515, %v5536
          %v5564 = vadd.f32 %v5516, %v5538
          %v5565 = vadd.f32 %v5517, %v5540
          %v5566 = vadd.f32 %v5518, %v5542
          %v5567 = vadd.f32 %v5519, %v5544
          %v5568 = vadd.f32 %v5520, %v5546
          %v5569 = vadd.f32 %v5521, %v5548
          %v5570 = vadd.f32 %v5522, %v5550
          %v5571 = vadd.f32 %v5523, %v5552
          %v5572 = vadd.f32 %v5524, %v5554
          %v5573 = vadd.f32 %v5525, %v5556
          %v5574 = vadd.f32 %v5526, %v5558
          %5575 = vst.msk [vmem:[%s5494] sm:$0xff] %vm4722, %v5559
          %5576 = vst.msk [vmem:[%s5494 + $0x8] sm:$0xff] %vm4722, %v5560
          %5577 = vst.msk [vmem:[%s5494 + $0x10] sm:$0xff] %vm4722, %v5561
          %5578 = vst.msk [vmem:[%s5494 + $0x18] sm:$0xff] %vm4722, %v5562
          %5579 = vst.msk [vmem:[%s5494 + $0x20] sm:$0xff] %vm4722, %v5563
          %5580 = vst.msk [vmem:[%s5494 + $0x28] sm:$0xff] %vm4722, %v5564
          %5581 = vst.msk [vmem:[%s5494 + $0x30] sm:$0xff] %vm4722, %v5565
          %5582 = vst.msk [vmem:[%s5494 + $0x38] sm:$0xff] %vm4722, %v5566
          %5583 = vst.msk [vmem:[%s5494 + $0x40] sm:$0xff] %vm4722, %v5567
          %5584 = vst.msk [vmem:[%s5494 + $0x48] sm:$0xff] %vm4722, %v5568
          %5585 = vst.msk [vmem:[%s5494 + $0x50] sm:$0xff] %vm4722, %v5569
          %5586 = vst.msk [vmem:[%s5494 + $0x58] sm:$0xff] %vm4722, %v5570
          %5587 = vst.msk [vmem:[%s5494 + $0x60] sm:$0xff] %vm4722, %v5571
          %5588 = vst.msk [vmem:[%s5494 + $0x68] sm:$0xff] %vm4722, %v5572
          %5589 = vst.msk [vmem:[%s5494 + $0x70] sm:$0xff] %vm4722, %v5573
          %5590 = vst.msk [vmem:[%s5494 + $0x78] sm:$0xff] %vm4722, %v5574
          %v5591 = vld [vmem:[#allocation5] sm:$0xff]
          %v5592 = vld [vmem:[#allocation5 + $0x10] sm:$0xff]
          %v5593 = vld [vmem:[#allocation5 + $0x20] sm:$0xff]
          %v5594 = vld [vmem:[#allocation5 + $0x30] sm:$0xff]
          %v5595 = vld [vmem:[#allocation5 + $0x40] sm:$0xff]
          %v5596 = vld [vmem:[#allocation5 + $0x50] sm:$0xff]
          %v5597 = vld [vmem:[#allocation5 + $0x60] sm:$0xff]
          %v5598 = vld [vmem:[#allocation5 + $0x70] sm:$0xff]
          %v5599 = vld [vmem:[#allocation5 + $0x80] sm:$0xff]
          %v5600 = vld [vmem:[#allocation5 + $0x90] sm:$0xff]
          %v5601 = vld [vmem:[#allocation5 + $0xa0] sm:$0xff]
          %v5602 = vld [vmem:[#allocation5 + $0xb0] sm:$0xff]
          %v5603 = vld [vmem:[#allocation5 + $0xc0] sm:$0xff]
          %v5604 = vld [vmem:[#allocation5 + $0xd0] sm:$0xff]
          %v5605 = vld [vmem:[#allocation5 + $0xe0] sm:$0xff]
          %v5606 = vld [vmem:[#allocation5 + $0xf0] sm:$0xff]
          %5608 = vset.pattern.permute.xlu0 0
          %5609 = vperm.xlu0 %5608, %v5335
          %v5610 = vpop.permute.xlu0 %5609
          %5613 = vset.pattern.permute.xlu0 0
          %5614 = vperm.xlu0 %5613, %v5337
          %v5615 = vpop.permute.xlu0 %5614
          %5618 = vset.pattern.permute.xlu0 0
          %5619 = vperm.xlu0 %5618, %v5339
          %v5620 = vpop.permute.xlu0 %5619
          %5623 = vset.pattern.permute.xlu0 0
          %5624 = vperm.xlu0 %5623, %v5341
          %v5625 = vpop.permute.xlu0 %5624
          %5628 = vset.pattern.permute.xlu0 0
          %5629 = vperm.xlu0 %5628, %v5343
          %v5630 = vpop.permute.xlu0 %5629
          %5633 = vset.pattern.permute.xlu0 0
          %5634 = vperm.xlu0 %5633, %v5345
          %v5635 = vpop.permute.xlu0 %5634
          %5638 = vset.pattern.permute.xlu0 0
          %5639 = vperm.xlu0 %5638, %v5347
          %v5640 = vpop.permute.xlu0 %5639
          %5643 = vset.pattern.permute.xlu0 0
          %5644 = vperm.xlu0 %5643, %v5349
          %v5645 = vpop.permute.xlu0 %5644
          %5648 = vset.pattern.permute.xlu0 0
          %5649 = vperm.xlu0 %5648, %v5351
          %v5650 = vpop.permute.xlu0 %5649
          %5653 = vset.pattern.permute.xlu0 0
          %5654 = vperm.xlu0 %5653, %v5353
          %v5655 = vpop.permute.xlu0 %5654
          %5658 = vset.pattern.permute.xlu0 0
          %5659 = vperm.xlu0 %5658, %v5355
          %v5660 = vpop.permute.xlu0 %5659
          %5663 = vset.pattern.permute.xlu0 0
          %5664 = vperm.xlu0 %5663, %v5357
          %v5665 = vpop.permute.xlu0 %5664
          %5668 = vset.pattern.permute.xlu0 0
          %5669 = vperm.xlu0 %5668, %v5359
          %v5670 = vpop.permute.xlu0 %5669
          %5673 = vset.pattern.permute.xlu0 0
          %5674 = vperm.xlu0 %5673, %v5361
          %v5675 = vpop.permute.xlu0 %5674
          %5678 = vset.pattern.permute.xlu0 0
          %5679 = vperm.xlu0 %5678, %v5363
          %v5680 = vpop.permute.xlu0 %5679
          %5683 = vset.pattern.permute.xlu0 0
          %5684 = vperm.xlu0 %5683, %v5365
          %v5685 = vpop.permute.xlu0 %5684
          %v5687 = vmul.f32 %v5610, %v5591
          %v5688 = vmul.f32 %v5615, %v5592
          %v5689 = vmul.f32 %v5620, %v5593
          %v5690 = vmul.f32 %v5625, %v5594
          %v5691 = vmul.f32 %v5630, %v5595
          %v5692 = vmul.f32 %v5635, %v5596
          %v5693 = vmul.f32 %v5640, %v5597
          %v5694 = vmul.f32 %v5645, %v5598
          %v5695 = vmul.f32 %v5650, %v5599
          %v5696 = vmul.f32 %v5655, %v5600
          %v5697 = vmul.f32 %v5660, %v5601
          %v5698 = vmul.f32 %v5665, %v5602
          %v5699 = vmul.f32 %v5670, %v5603
          %v5700 = vmul.f32 %v5675, %v5604
          %v5701 = vmul.f32 %v5680, %v5605
          %v5702 = vmul.f32 %v5685, %v5606
          %v5703 = vpack.c.bf16 %v5465, %v5463
          %v5704 = vpack.c.bf16 %v5469, %v5467
          %v5705 = vpack.c.bf16 %v5473, %v5471
          %v5706 = vpack.c.bf16 %v5477, %v5475
          %v5707 = vpack.c.bf16 %v5481, %v5479
          %v5708 = vpack.c.bf16 %v5485, %v5483
          %v5709 = vpack.c.bf16 %v5489, %v5487
          %v5710 = vpack.c.bf16 %v5493, %v5491
          %5719 = vrot.lane.b32.xlu0 %v5052, 64
          %v5720 = vpop.permute.xlu0 %5719
          %5721 = vrot.lane.b32.xlu0 %v5053, 64
          %v5722 = vpop.permute.xlu0 %5721
          %5723 = vrot.lane.b32.xlu0 %v5054, 64
          %v5724 = vpop.permute.xlu0 %5723
          %5725 = vrot.lane.b32.xlu0 %v5055, 64
          %v5726 = vpop.permute.xlu0 %5725
          %5727 = vrot.lane.b32.xlu0 %v5056, 64
          %v5728 = vpop.permute.xlu0 %5727
          %5729 = vrot.lane.b32.xlu0 %v5057, 64
          %v5730 = vpop.permute.xlu0 %5729
          %5731 = vrot.lane.b32.xlu0 %v5058, 64
          %v5732 = vpop.permute.xlu0 %5731
          %5733 = vrot.lane.b32.xlu0 %v5059, 64
          %v5734 = vpop.permute.xlu0 %5733
          %5743 = vmatprep.subr.bf16.mxu0 0
          %5744 = vmatpush1.bf16.msra.mxu0 %v5720
          %5745 = vmatprep.subr.bf16.mxu0 0
          %5746 = vmatpush1.bf16.msra.mxu0 %v5722
          %5747 = vmatprep.subr.bf16.mxu0 0
          %5748 = vmatpush1.bf16.msra.mxu0 %v5724
          %5749 = vmatprep.subr.bf16.mxu0 0
          %5750 = vmatpush1.bf16.msra.mxu0 %v5726
          %5751 = vmatprep.subr.bf16.mxu0 0
          %5752 = vmatpush1.bf16.msra.mxu0 %v5728
          %5753 = vmatprep.subr.bf16.mxu0 0
          %5754 = vmatpush1.bf16.msra.mxu0 %v5730
          %5755 = vmatprep.subr.bf16.mxu0 0
          %5756 = vmatpush1.bf16.msra.mxu0 %v5732
          %5757 = vmatprep.subr.bf16.mxu0 0
          %5758 = vmatpush1.bf16.msra.mxu0 %v5734
          %5759 = vmatprep.subr.bf16.mxu0 0
          %5760 = vmatpush1.bf16.msra.mxu0 0
          %5761 = vmatprep.subr.bf16.mxu0 0
          %5762 = vmatpush1.bf16.msra.mxu0 0
          %5763 = vmatprep.subr.bf16.mxu0 0
          %5764 = vmatpush1.bf16.msra.mxu0 0
          %5765 = vmatprep.subr.bf16.mxu0 0
          %5766 = vmatpush1.bf16.msra.mxu0 0
          %5767 = vmatprep.subr.bf16.mxu0 0
          %5768 = vmatpush1.bf16.msra.mxu0 0
          %5769 = vmatprep.subr.bf16.mxu0 0
          %5770 = vmatpush1.bf16.msra.mxu0 0
          %5771 = vmatprep.subr.bf16.mxu0 0
          %5772 = vmatpush1.bf16.msra.mxu0 0
          %5773 = vmatprep.subr.bf16.mxu0 0
          %5774 = vmatpush1.bf16.msra.mxu0 0
          %5775 = vmatprep.mubr.bf16.mxu0 0
          %5776 = vmatmul.mubr.bf16.gmra.mrb[0].mxu0 %v5703
          %v5777 = vpop.f32.mrb[0].mxu0
          %v5778 = vadd.f32 0.0, %v5777
          %v5779 = vpop.f32.mrb[0].mxu0
          %v5780 = vpop.f32.mrb[0].mxu0
          %v5781 = vadd.f32 0.0, %v5780
          %v5782 = vpop.f32.mrb[0].mxu0
          %5783 = vmatprep.mubr.bf16.mxu0 0
          %5784 = vmatmul.mubr.bf16.gmra.mrb[0].mxu0 %v5704
          %v5785 = vpop.f32.mrb[0].mxu0
          %v5786 = vadd.f32 0.0, %v5785
          %v5787 = vpop.f32.mrb[0].mxu0
          %v5788 = vpop.f32.mrb[0].mxu0
          %v5789 = vadd.f32 0.0, %v5788
          %v5790 = vpop.f32.mrb[0].mxu0
          %5791 = vmatprep.mubr.bf16.mxu0 0
          %5792 = vmatmul.mubr.bf16.gmra.mrb[0].mxu0 %v5705
          %v5793 = vpop.f32.mrb[0].mxu0
          %v5794 = vadd.f32 0.0, %v5793
          %v5795 = vpop.f32.mrb[0].mxu0
          %v5796 = vpop.f32.mrb[0].mxu0
          %v5797 = vadd.f32 0.0, %v5796
          %v5798 = vpop.f32.mrb[0].mxu0
          %5799 = vmatprep.mubr.bf16.mxu0 0
          %5800 = vmatmul.mubr.bf16.gmra.mrb[0].mxu0 %v5706
          %v5801 = vpop.f32.mrb[0].mxu0
          %v5802 = vadd.f32 0.0, %v5801
          %v5803 = vpop.f32.mrb[0].mxu0
          %v5804 = vpop.f32.mrb[0].mxu0
          %v5805 = vadd.f32 0.0, %v5804
          %v5806 = vpop.f32.mrb[0].mxu0
          %5807 = vmatprep.mubr.bf16.mxu0 0
          %5808 = vmatmul.mubr.bf16.gmra.mrb[0].mxu0 %v5707
          %v5809 = vpop.f32.mrb[0].mxu0
          %v5810 = vadd.f32 0.0, %v5809
          %v5811 = vpop.f32.mrb[0].mxu0
          %v5812 = vpop.f32.mrb[0].mxu0
          %v5813 = vadd.f32 0.0, %v5812
          %v5814 = vpop.f32.mrb[0].mxu0
          %5815 = vmatprep.mubr.bf16.mxu0 0
          %5816 = vmatmul.mubr.bf16.gmra.mrb[0].mxu0 %v5708
          %v5817 = vpop.f32.mrb[0].mxu0
          %v5818 = vadd.f32 0.0, %v5817
          %v5819 = vpop.f32.mrb[0].mxu0
          %v5820 = vpop.f32.mrb[0].mxu0
          %v5821 = vadd.f32 0.0, %v5820
          %v5822 = vpop.f32.mrb[0].mxu0
          %5823 = vmatprep.mubr.bf16.mxu0 0
          %5824 = vmatmul.mubr.bf16.gmra.mrb[0].mxu0 %v5709
          %v5825 = vpop.f32.mrb[0].mxu0
          %v5826 = vadd.f32 0.0, %v5825
          %v5827 = vpop.f32.mrb[0].mxu0
          %v5828 = vpop.f32.mrb[0].mxu0
          %v5829 = vadd.f32 0.0, %v5828
          %v5830 = vpop.f32.mrb[0].mxu0
          %5831 = vmatprep.mubr.bf16.mxu0 0
          %5832 = vmatmul.mubr.bf16.gmra.mrb[0].mxu0 %v5710
          %v5833 = vpop.f32.mrb[0].mxu0
          %v5834 = vadd.f32 0.0, %v5833
          %v5835 = vpop.f32.mrb[0].mxu0
          %v5836 = vpop.f32.mrb[0].mxu0
          %v5837 = vadd.f32 0.0, %v5836
          %v5838 = vpop.f32.mrb[0].mxu0
          %5839 = vdwg.mxu0
          %5856 = vrot.lane.b32.xlu0 %v5778, 64
          %v5857 = vpop.permute.xlu0 %5856
          %5858 = vrot.lane.b32.xlu0 %v5781, 64
          %v5859 = vpop.permute.xlu0 %5858
          %5860 = vrot.lane.b32.xlu0 %v5786, 64
          %v5861 = vpop.permute.xlu0 %5860
          %5862 = vrot.lane.b32.xlu0 %v5789, 64
          %v5863 = vpop.permute.xlu0 %5862
          %5864 = vrot.lane.b32.xlu0 %v5794, 64
          %v5865 = vpop.permute.xlu0 %5864
          %5866 = vrot.lane.b32.xlu0 %v5797, 64
          %v5867 = vpop.permute.xlu0 %5866
          %5868 = vrot.lane.b32.xlu0 %v5802, 64
          %v5869 = vpop.permute.xlu0 %5868
          %5870 = vrot.lane.b32.xlu0 %v5805, 64
          %v5871 = vpop.permute.xlu0 %5870
          %5872 = vrot.lane.b32.xlu0 %v5810, 64
          %v5873 = vpop.permute.xlu0 %5872
          %5874 = vrot.lane.b32.xlu0 %v5813, 64
          %v5875 = vpop.permute.xlu0 %5874
          %5876 = vrot.lane.b32.xlu0 %v5818, 64
          %v5877 = vpop.permute.xlu0 %5876
          %5878 = vrot.lane.b32.xlu0 %v5821, 64
          %v5879 = vpop.permute.xlu0 %5878
          %5880 = vrot.lane.b32.xlu0 %v5826, 64
          %v5881 = vpop.permute.xlu0 %5880
          %5882 = vrot.lane.b32.xlu0 %v5829, 64
          %v5883 = vpop.permute.xlu0 %5882
          %5884 = vrot.lane.b32.xlu0 %v5834, 64
          %v5885 = vpop.permute.xlu0 %5884
          %5886 = vrot.lane.b32.xlu0 %v5837, 64
          %v5887 = vpop.permute.xlu0 %5886
          %v5904 = vadd.f32 %v5687, %v5857
          %v5905 = vadd.f32 %v5688, %v5859
          %v5906 = vadd.f32 %v5689, %v5861
          %v5907 = vadd.f32 %v5690, %v5863
          %v5908 = vadd.f32 %v5691, %v5865
          %v5909 = vadd.f32 %v5692, %v5867
          %v5910 = vadd.f32 %v5693, %v5869
          %v5911 = vadd.f32 %v5694, %v5871
          %v5912 = vadd.f32 %v5695, %v5873
          %v5913 = vadd.f32 %v5696, %v5875
          %v5914 = vadd.f32 %v5697, %v5877
          %v5915 = vadd.f32 %v5698, %v5879
          %v5916 = vadd.f32 %v5699, %v5881
          %v5917 = vadd.f32 %v5700, %v5883
          %v5918 = vadd.f32 %v5701, %v5885
          %v5919 = vadd.f32 %v5702, %v5887
          %vm5920 = vcmask 1048064
          %5921 = vst.msk [vmem:[#allocation5] sm:$0xff] %vm5920, %v5904
          %5922 = vst.msk [vmem:[#allocation5 + $0x10] sm:$0xff] %vm5920, %v5905
          %5923 = vst.msk [vmem:[#allocation5 + $0x20] sm:$0xff] %vm5920, %v5906
          %5924 = vst.msk [vmem:[#allocation5 + $0x30] sm:$0xff] %vm5920, %v5907
          %5925 = vst.msk [vmem:[#allocation5 + $0x40] sm:$0xff] %vm5920, %v5908
          %5926 = vst.msk [vmem:[#allocation5 + $0x50] sm:$0xff] %vm5920, %v5909
          %5927 = vst.msk [vmem:[#allocation5 + $0x60] sm:$0xff] %vm5920, %v5910
          %5928 = vst.msk [vmem:[#allocation5 + $0x70] sm:$0xff] %vm5920, %v5911
          %5929 = vst.msk [vmem:[#allocation5 + $0x80] sm:$0xff] %vm5920, %v5912
          %5930 = vst.msk [vmem:[#allocation5 + $0x90] sm:$0xff] %vm5920, %v5913
          %5931 = vst.msk [vmem:[#allocation5 + $0xa0] sm:$0xff] %vm5920, %v5914
          %5932 = vst.msk [vmem:[#allocation5 + $0xb0] sm:$0xff] %vm5920, %v5915
          %5933 = vst.msk [vmem:[#allocation5 + $0xc0] sm:$0xff] %vm5920, %v5916
          %5934 = vst.msk [vmem:[#allocation5 + $0xd0] sm:$0xff] %vm5920, %v5917
          %5935 = vst.msk [vmem:[#allocation5 + $0xe0] sm:$0xff] %vm5920, %v5918
          %5936 = vst.msk [vmem:[#allocation5 + $0xf0] sm:$0xff] %vm5920, %v5919
          %5937 = vst.msk [vmem:[%s5253] sm:$0xff] %vm4722, %v5302
          %5938 = vst.msk [vmem:[%s5253 + $0x8] sm:$0xff] %vm4722, %v5303
          %5939 = vst.msk [vmem:[%s5253 + $0x10] sm:$0xff] %vm4722, %v5304
          %5940 = vst.msk [vmem:[%s5253 + $0x18] sm:$0xff] %vm4722, %v5305
          %5941 = vst.msk [vmem:[%s5253 + $0x20] sm:$0xff] %vm4722, %v5306
          %5942 = vst.msk [vmem:[%s5253 + $0x28] sm:$0xff] %vm4722, %v5307
          %5943 = vst.msk [vmem:[%s5253 + $0x30] sm:$0xff] %vm4722, %v5308
          %5944 = vst.msk [vmem:[%s5253 + $0x38] sm:$0xff] %vm4722, %v5309
          %5945 = vst.msk [vmem:[%s5253 + $0x40] sm:$0xff] %vm4722, %v5310
          %5946 = vst.msk [vmem:[%s5253 + $0x48] sm:$0xff] %vm4722, %v5311
          %5947 = vst.msk [vmem:[%s5253 + $0x50] sm:$0xff] %vm4722, %v5312
          %5948 = vst.msk [vmem:[%s5253 + $0x58] sm:$0xff] %vm4722, %v5313
          %5949 = vst.msk [vmem:[%s5253 + $0x60] sm:$0xff] %vm4722, %v5314
          %5950 = vst.msk [vmem:[%s5253 + $0x68] sm:$0xff] %vm4722, %v5315
          %5951 = vst.msk [vmem:[%s5253 + $0x70] sm:$0xff] %vm4722, %v5316
          %5952 = vst.msk [vmem:[%s5253 + $0x78] sm:$0xff] %vm4722, %v5317
          %v5953 = vld [vmem:[#allocation2 + $0x8] sm:$0xff]
          %v5954 = vld [vmem:[#allocation2 + $0x18] sm:$0xff]
          %v5955 = vld [vmem:[#allocation2 + $0x28] sm:$0xff]
          %v5956 = vld [vmem:[#allocation2 + $0x38] sm:$0xff]
          %v5957 = vld [vmem:[#allocation2 + $0x48] sm:$0xff]
          %v5958 = vld [vmem:[#allocation2 + $0x58] sm:$0xff]
          %v5959 = vld [vmem:[#allocation2 + $0x68] sm:$0xff]
          %v5960 = vld [vmem:[#allocation2 + $0x78] sm:$0xff]
          %v5961 = vld [vmem:[%s274 + $0x8] sm:$0xff]
          %v5962 = vld [vmem:[%s274 + $0x18] sm:$0xff]
          %v5963 = vld [vmem:[%s274 + $0x28] sm:$0xff]
          %v5964 = vld [vmem:[%s274 + $0x38] sm:$0xff]
          %v5965 = vld [vmem:[%s274 + $0x48] sm:$0xff]
          %v5966 = vld [vmem:[%s274 + $0x58] sm:$0xff]
          %v5967 = vld [vmem:[%s274 + $0x68] sm:$0xff]
          %v5968 = vld [vmem:[%s274 + $0x78] sm:$0xff]
          %v5969 = vld [vmem:[%s274 + $0x88] sm:$0xff]
          %v5970 = vld [vmem:[%s274 + $0x98] sm:$0xff]
          %v5971 = vld [vmem:[%s274 + $0xa8] sm:$0xff]
          %v5972 = vld [vmem:[%s274 + $0xb8] sm:$0xff]
          %v5973 = vld [vmem:[%s274 + $0xc8] sm:$0xff]
          %v5974 = vld [vmem:[%s274 + $0xd8] sm:$0xff]
          %v5975 = vld [vmem:[%s274 + $0xe8] sm:$0xff]
          %v5976 = vld [vmem:[%s274 + $0xf8] sm:$0xff]
          %v5977 = vpack.c.bf16 %v5962, %v5961
          %v5978 = vpack.c.bf16 %v5964, %v5963
          %v5979 = vpack.c.bf16 %v5966, %v5965
          %v5980 = vpack.c.bf16 %v5968, %v5967
          %v5981 = vpack.c.bf16 %v5970, %v5969
          %v5982 = vpack.c.bf16 %v5972, %v5971
          %v5983 = vpack.c.bf16 %v5974, %v5973
          %v5984 = vpack.c.bf16 %v5976, %v5975
          %v5985 = vld [vmem:[%s283 + $0x8] sm:$0xff]
          %v5986 = vld [vmem:[%s283 + $0x18] sm:$0xff]
          %v5987 = vld [vmem:[%s283 + $0x28] sm:$0xff]
          %v5988 = vld [vmem:[%s283 + $0x38] sm:$0xff]
          %v5989 = vld [vmem:[%s283 + $0x48] sm:$0xff]
          %v5990 = vld [vmem:[%s283 + $0x58] sm:$0xff]
          %v5991 = vld [vmem:[%s283 + $0x68] sm:$0xff]
          %v5992 = vld [vmem:[%s283 + $0x78] sm:$0xff]
          %v5993 = vld [vmem:[%s283 + $0x88] sm:$0xff]
          %v5994 = vld [vmem:[%s283 + $0x98] sm:$0xff]
          %v5995 = vld [vmem:[%s283 + $0xa8] sm:$0xff]
          %v5996 = vld [vmem:[%s283 + $0xb8] sm:$0xff]
          %v5997 = vld [vmem:[%s283 + $0xc8] sm:$0xff]
          %v5998 = vld [vmem:[%s283 + $0xd8] sm:$0xff]
          %v5999 = vld [vmem:[%s283 + $0xe8] sm:$0xff]
          %v6000 = vld [vmem:[%s283 + $0xf8] sm:$0xff]
          %v6001 = vpack.c.bf16 %v5986, %v5985
          %v6002 = vpack.c.bf16 %v5988, %v5987
          %v6003 = vpack.c.bf16 %v5990, %v5989
          %v6004 = vpack.c.bf16 %v5992, %v5991
          %v6005 = vpack.c.bf16 %v5994, %v5993
          %v6006 = vpack.c.bf16 %v5996, %v5995
          %v6007 = vpack.c.bf16 %v5998, %v5997
          %v6008 = vpack.c.bf16 %v6000, %v5999
          %v6010 = vsel %vm4256, %v5953, 0
          %v6013 = vsel %vm4256, %v5954, 0
          %v6016 = vsel %vm4256, %v5955, 0
          %v6019 = vsel %vm4256, %v5956, 0
          %v6022 = vsel %vm4256, %v5957, 0
          %v6025 = vsel %vm4256, %v5958, 0
          %v6028 = vsel %vm4256, %v5959, 0
          %v6031 = vsel %vm4256, %v5960, 0
          %v6034 = vsel %vm4256, %v5977, 0
          %v6037 = vsel %vm4256, %v5978, 0
          %v6040 = vsel %vm4256, %v5979, 0
          %v6043 = vsel %vm4256, %v5980, 0
          %v6046 = vsel %vm4256, %v5981, 0
          %v6049 = vsel %vm4256, %v5982, 0
          %v6052 = vsel %vm4256, %v5983, 0
          %v6055 = vsel %vm4256, %v5984, 0
          %6057 = vmatprep.subr.bf16.mxu0 0
          %6058 = vmatpush1.bf16.xpose.msra.mxu0 %v6034
          %6059 = vmatprep.subr.bf16.mxu0 0
          %6060 = vmatpush1.bf16.xpose.msra.mxu0 %v6037
          %6061 = vmatprep.subr.bf16.mxu0 0
          %6062 = vmatpush1.bf16.xpose.msra.mxu0 %v6040
          %6063 = vmatprep.subr.bf16.mxu0 0
          %6064 = vmatpush1.bf16.xpose.msra.mxu0 %v6043
          %6065 = vmatprep.subr.bf16.mxu0 0
          %6066 = vmatpush1.bf16.xpose.msra.mxu0 %v6046
          %6067 = vmatprep.subr.bf16.mxu0 0
          %6068 = vmatpush1.bf16.xpose.msra.mxu0 %v6049
          %6069 = vmatprep.subr.bf16.mxu0 0
          %6070 = vmatpush1.bf16.xpose.msra.mxu0 %v6052
          %6071 = vmatprep.subr.bf16.mxu0 0
          %6072 = vmatpush1.bf16.xpose.msra.mxu0 %v6055
          %6073 = vmatprep.subr.bf16.mxu0 0
          %6074 = vmatpush1.bf16.xpose.msra.mxu0 0
          %6075 = vmatprep.subr.bf16.mxu0 0
          %6076 = vmatpush1.bf16.xpose.msra.mxu0 0
          %6077 = vmatprep.subr.bf16.mxu0 0
          %6078 = vmatpush1.bf16.xpose.msra.mxu0 0
          %6079 = vmatprep.subr.bf16.mxu0 0
          %6080 = vmatpush1.bf16.xpose.msra.mxu0 0
          %6081 = vmatprep.subr.bf16.mxu0 0
          %6082 = vmatpush1.bf16.xpose.msra.mxu0 0
          %6083 = vmatprep.subr.bf16.mxu0 0
          %6084 = vmatpush1.bf16.xpose.msra.mxu0 0
          %6085 = vmatprep.subr.bf16.mxu0 0
          %6086 = vmatpush1.bf16.xpose.msra.mxu0 0
          %6087 = vmatprep.subr.bf16.mxu0 0
          %6088 = vmatpush1.bf16.xpose.msra.mxu0 0
          %6089 = vmatprep.mubr.bf16.mxu0 0
          %6090 = vmatmul.mubr.bf16.gmra.mrb[0].mxu0 %v6010
          %v6091 = vpop.f32.mrb[0].mxu0
          %v6092 = vadd.f32 0.0, %v6091
          %v6093 = vpop.f32.mrb[0].mxu0
          %v6094 = vpop.f32.mrb[0].mxu0
          %v6095 = vadd.f32 0.0, %v6094
          %v6096 = vpop.f32.mrb[0].mxu0
          %6097 = vmatprep.mubr.bf16.mxu0 0
          %6098 = vmatmul.mubr.bf16.gmra.mrb[0].mxu0 %v6013
          %v6099 = vpop.f32.mrb[0].mxu0
          %v6100 = vadd.f32 0.0, %v6099
          %v6101 = vpop.f32.mrb[0].mxu0
          %v6102 = vpop.f32.mrb[0].mxu0
          %v6103 = vadd.f32 0.0, %v6102
          %v6104 = vpop.f32.mrb[0].mxu0
          %6105 = vmatprep.mubr.bf16.mxu0 0
          %6106 = vmatmul.mubr.bf16.gmra.mrb[0].mxu0 %v6016
          %v6107 = vpop.f32.mrb[0].mxu0
          %v6108 = vadd.f32 0.0, %v6107
          %v6109 = vpop.f32.mrb[0].mxu0
          %v6110 = vpop.f32.mrb[0].mxu0
          %v6111 = vadd.f32 0.0, %v6110
          %v6112 = vpop.f32.mrb[0].mxu0
          %6113 = vmatprep.mubr.bf16.mxu0 0
          %6114 = vmatmul.mubr.bf16.gmra.mrb[0].mxu0 %v6019
          %v6115 = vpop.f32.mrb[0].mxu0
          %v6116 = vadd.f32 0.0, %v6115
          %v6117 = vpop.f32.mrb[0].mxu0
          %v6118 = vpop.f32.mrb[0].mxu0
          %v6119 = vadd.f32 0.0, %v6118
          %v6120 = vpop.f32.mrb[0].mxu0
          %6121 = vmatprep.mubr.bf16.mxu0 0
          %6122 = vmatmul.mubr.bf16.gmra.mrb[0].mxu0 %v6022
          %v6123 = vpop.f32.mrb[0].mxu0
          %v6124 = vadd.f32 0.0, %v6123
          %v6125 = vpop.f32.mrb[0].mxu0
          %v6126 = vpop.f32.mrb[0].mxu0
          %v6127 = vadd.f32 0.0, %v6126
          %v6128 = vpop.f32.mrb[0].mxu0
          %6129 = vmatprep.mubr.bf16.mxu0 0
          %6130 = vmatmul.mubr.bf16.gmra.mrb[0].mxu0 %v6025
          %v6131 = vpop.f32.mrb[0].mxu0
          %v6132 = vadd.f32 0.0, %v6131
          %v6133 = vpop.f32.mrb[0].mxu0
          %v6134 = vpop.f32.mrb[0].mxu0
          %v6135 = vadd.f32 0.0, %v6134
          %v6136 = vpop.f32.mrb[0].mxu0
          %6137 = vmatprep.mubr.bf16.mxu0 0
          %6138 = vmatmul.mubr.bf16.gmra.mrb[0].mxu0 %v6028
          %v6139 = vpop.f32.mrb[0].mxu0
          %v6140 = vadd.f32 0.0, %v6139
          %v6141 = vpop.f32.mrb[0].mxu0
          %v6142 = vpop.f32.mrb[0].mxu0
          %v6143 = vadd.f32 0.0, %v6142
          %v6144 = vpop.f32.mrb[0].mxu0
          %6145 = vmatprep.mubr.bf16.mxu0 0
          %6146 = vmatmul.mubr.bf16.gmra.mrb[0].mxu0 %v6031
          %v6147 = vpop.f32.mrb[0].mxu0
          %v6148 = vadd.f32 0.0, %v6147
          %v6149 = vpop.f32.mrb[0].mxu0
          %v6150 = vpop.f32.mrb[0].mxu0
          %v6151 = vadd.f32 0.0, %v6150
          %v6152 = vpop.f32.mrb[0].mxu0
          %6153 = vdwg.mxu0
          %s6154 = scalar_lea.vmem [#allocation3], 256
          %v6155 = vld [vmem:[%s6154] sm:$0xff]
          %v6156 = vld [vmem:[%s6154 + $0x8] sm:$0xff]
          %v6157 = vld [vmem:[%s6154 + $0x10] sm:$0xff]
          %v6158 = vld [vmem:[%s6154 + $0x18] sm:$0xff]
          %v6159 = vld [vmem:[%s6154 + $0x20] sm:$0xff]
          %v6160 = vld [vmem:[%s6154 + $0x28] sm:$0xff]
          %v6161 = vld [vmem:[%s6154 + $0x30] sm:$0xff]
          %v6162 = vld [vmem:[%s6154 + $0x38] sm:$0xff]
          %v6163 = vld [vmem:[%s6154 + $0x40] sm:$0xff]
          %v6164 = vld [vmem:[%s6154 + $0x48] sm:$0xff]
          %v6165 = vld [vmem:[%s6154 + $0x50] sm:$0xff]
          %v6166 = vld [vmem:[%s6154 + $0x58] sm:$0xff]
          %v6167 = vld [vmem:[%s6154 + $0x60] sm:$0xff]
          %v6168 = vld [vmem:[%s6154 + $0x68] sm:$0xff]
          %v6169 = vld [vmem:[%s6154 + $0x70] sm:$0xff]
          %v6170 = vld [vmem:[%s6154 + $0x78] sm:$0xff]
          %6171 = vmax.xlane.f32.xlu0 %v6092
          %v6172 = vpop.xlane.xlu0 %6171
          %6173 = vmax.xlane.f32.xlu0 %v6095
          %v6174 = vpop.xlane.xlu0 %6173
          %6175 = vmax.xlane.f32.xlu0 %v6100
          %v6176 = vpop.xlane.xlu0 %6175
          %6177 = vmax.xlane.f32.xlu0 %v6103
          %v6178 = vpop.xlane.xlu0 %6177
          %6179 = vmax.xlane.f32.xlu0 %v6108
          %v6180 = vpop.xlane.xlu0 %6179
          %6181 = vmax.xlane.f32.xlu0 %v6111
          %v6182 = vpop.xlane.xlu0 %6181
          %6183 = vmax.xlane.f32.xlu0 %v6116
          %v6184 = vpop.xlane.xlu0 %6183
          %6185 = vmax.xlane.f32.xlu0 %v6119
          %v6186 = vpop.xlane.xlu0 %6185
          %6187 = vmax.xlane.f32.xlu0 %v6124
          %v6188 = vpop.xlane.xlu0 %6187
          %6189 = vmax.xlane.f32.xlu0 %v6127
          %v6190 = vpop.xlane.xlu0 %6189
          %6191 = vmax.xlane.f32.xlu0 %v6132
          %v6192 = vpop.xlane.xlu0 %6191
          %6193 = vmax.xlane.f32.xlu0 %v6135
          %v6194 = vpop.xlane.xlu0 %6193
          %6195 = vmax.xlane.f32.xlu0 %v6140
          %v6196 = vpop.xlane.xlu0 %6195
          %6197 = vmax.xlane.f32.xlu0 %v6143
          %v6198 = vpop.xlane.xlu0 %6197
          %6199 = vmax.xlane.f32.xlu0 %v6148
          %v6200 = vpop.xlane.xlu0 %6199
          %6201 = vmax.xlane.f32.xlu0 %v6151
          %v6202 = vpop.xlane.xlu0 %6201
          %v6203 = vmax.f32 %v6155, %v6172
          %v6204 = vmax.f32 %v6156, %v6174
          %v6205 = vmax.f32 %v6157, %v6176
          %v6206 = vmax.f32 %v6158, %v6178
          %v6207 = vmax.f32 %v6159, %v6180
          %v6208 = vmax.f32 %v6160, %v6182
          %v6209 = vmax.f32 %v6161, %v6184
          %v6210 = vmax.f32 %v6162, %v6186
          %v6211 = vmax.f32 %v6163, %v6188
          %v6212 = vmax.f32 %v6164, %v6190
          %v6213 = vmax.f32 %v6165, %v6192
          %v6214 = vmax.f32 %v6166, %v6194
          %v6215 = vmax.f32 %v6167, %v6196
          %v6216 = vmax.f32 %v6168, %v6198
          %v6217 = vmax.f32 %v6169, %v6200
          %v6218 = vmax.f32 %v6170, %v6202
          %v6219 = vsub.f32 %v6155, %v6203
          %v6220 = vsub.f32 %v6156, %v6204
          %v6221 = vsub.f32 %v6157, %v6205
          %v6222 = vsub.f32 %v6158, %v6206
          %v6223 = vsub.f32 %v6159, %v6207
          %v6224 = vsub.f32 %v6160, %v6208
          %v6225 = vsub.f32 %v6161, %v6209
          %v6226 = vsub.f32 %v6162, %v6210
          %v6227 = vsub.f32 %v6163, %v6211
          %v6228 = vsub.f32 %v6164, %v6212
          %v6229 = vsub.f32 %v6165, %v6213
          %v6230 = vsub.f32 %v6166, %v6214
          %v6231 = vsub.f32 %v6167, %v6215
          %v6232 = vsub.f32 %v6168, %v6216
          %v6233 = vsub.f32 %v6169, %v6217
          %v6234 = vsub.f32 %v6170, %v6218
          %v6235 = vmul.f32 %v6219, 1.442695
          %v6236 = vpow.pop %v6235
          %v6237 = vmul.f32 %v6220, 1.442695
          %v6238 = vpow.pop %v6237
          %v6239 = vmul.f32 %v6221, 1.442695
          %v6240 = vpow.pop %v6239
          %v6241 = vmul.f32 %v6222, 1.442695
          %v6242 = vpow.pop %v6241
          %v6243 = vmul.f32 %v6223, 1.442695
          %v6244 = vpow.pop %v6243
          %v6245 = vmul.f32 %v6224, 1.442695
          %v6246 = vpow.pop %v6245
          %v6247 = vmul.f32 %v6225, 1.442695
          %v6248 = vpow.pop %v6247
          %v6249 = vmul.f32 %v6226, 1.442695
          %v6250 = vpow.pop %v6249
          %v6251 = vmul.f32 %v6227, 1.442695
          %v6252 = vpow.pop %v6251
          %v6253 = vmul.f32 %v6228, 1.442695
          %v6254 = vpow.pop %v6253
          %v6255 = vmul.f32 %v6229, 1.442695
          %v6256 = vpow.pop %v6255
          %v6257 = vmul.f32 %v6230, 1.442695
          %v6258 = vpow.pop %v6257
          %v6259 = vmul.f32 %v6231, 1.442695
          %v6260 = vpow.pop %v6259
          %v6261 = vmul.f32 %v6232, 1.442695
          %v6262 = vpow.pop %v6261
          %v6263 = vmul.f32 %v6233, 1.442695
          %v6264 = vpow.pop %v6263
          %v6265 = vmul.f32 %v6234, 1.442695
          %v6266 = vpow.pop %v6265
          %6268 = vset.pattern.permute.xlu0 0
          %6269 = vperm.xlu0 %6268, %v6203
          %v6270 = vpop.permute.xlu0 %6269
          %6273 = vset.pattern.permute.xlu0 0
          %6274 = vperm.xlu0 %6273, %v6204
          %v6275 = vpop.permute.xlu0 %6274
          %6278 = vset.pattern.permute.xlu0 0
          %6279 = vperm.xlu0 %6278, %v6205
          %v6280 = vpop.permute.xlu0 %6279
          %6283 = vset.pattern.permute.xlu0 0
          %6284 = vperm.xlu0 %6283, %v6206
          %v6285 = vpop.permute.xlu0 %6284
          %6288 = vset.pattern.permute.xlu0 0
          %6289 = vperm.xlu0 %6288, %v6207
          %v6290 = vpop.permute.xlu0 %6289
          %6293 = vset.pattern.permute.xlu0 0
          %6294 = vperm.xlu0 %6293, %v6208
          %v6295 = vpop.permute.xlu0 %6294
          %6298 = vset.pattern.permute.xlu0 0
          %6299 = vperm.xlu0 %6298, %v6209
          %v6300 = vpop.permute.xlu0 %6299
          %6303 = vset.pattern.permute.xlu0 0
          %6304 = vperm.xlu0 %6303, %v6210
          %v6305 = vpop.permute.xlu0 %6304
          %6308 = vset.pattern.permute.xlu0 0
          %6309 = vperm.xlu0 %6308, %v6211
          %v6310 = vpop.permute.xlu0 %6309
          %6313 = vset.pattern.permute.xlu0 0
          %6314 = vperm.xlu0 %6313, %v6212
          %v6315 = vpop.permute.xlu0 %6314
          %6318 = vset.pattern.permute.xlu0 0
          %6319 = vperm.xlu0 %6318, %v6213
          %v6320 = vpop.permute.xlu0 %6319
          %6323 = vset.pattern.permute.xlu0 0
          %6324 = vperm.xlu0 %6323, %v6214
          %v6325 = vpop.permute.xlu0 %6324
          %6328 = vset.pattern.permute.xlu0 0
          %6329 = vperm.xlu0 %6328, %v6215
          %v6330 = vpop.permute.xlu0 %6329
          %6333 = vset.pattern.permute.xlu0 0
          %6334 = vperm.xlu0 %6333, %v6216
          %v6335 = vpop.permute.xlu0 %6334
          %6338 = vset.pattern.permute.xlu0 0
          %6339 = vperm.xlu0 %6338, %v6217
          %v6340 = vpop.permute.xlu0 %6339
          %6343 = vset.pattern.permute.xlu0 0
          %6344 = vperm.xlu0 %6343, %v6218
          %v6345 = vpop.permute.xlu0 %6344
          %v6347 = vsub.f32 %v6092, %v6270
          %v6348 = vsub.f32 %v6095, %v6275
          %v6349 = vsub.f32 %v6100, %v6280
          %v6350 = vsub.f32 %v6103, %v6285
          %v6351 = vsub.f32 %v6108, %v6290
          %v6352 = vsub.f32 %v6111, %v6295
          %v6353 = vsub.f32 %v6116, %v6300
          %v6354 = vsub.f32 %v6119, %v6305
          %v6355 = vsub.f32 %v6124, %v6310
          %v6356 = vsub.f32 %v6127, %v6315
          %v6357 = vsub.f32 %v6132, %v6320
          %v6358 = vsub.f32 %v6135, %v6325
          %v6359 = vsub.f32 %v6140, %v6330
          %v6360 = vsub.f32 %v6143, %v6335
          %v6361 = vsub.f32 %v6148, %v6340
          %v6362 = vsub.f32 %v6151, %v6345
          %v6363 = vmul.f32 %v6347, 1.442695
          %v6364 = vpow.pop %v6363
          %v6365 = vmul.f32 %v6348, 1.442695
          %v6366 = vpow.pop %v6365
          %v6367 = vmul.f32 %v6349, 1.442695
          %v6368 = vpow.pop %v6367
          %v6369 = vmul.f32 %v6350, 1.442695
          %v6370 = vpow.pop %v6369
          %v6371 = vmul.f32 %v6351, 1.442695
          %v6372 = vpow.pop %v6371
          %v6373 = vmul.f32 %v6352, 1.442695
          %v6374 = vpow.pop %v6373
          %v6375 = vmul.f32 %v6353, 1.442695
          %v6376 = vpow.pop %v6375
          %v6377 = vmul.f32 %v6354, 1.442695
          %v6378 = vpow.pop %v6377
          %v6379 = vmul.f32 %v6355, 1.442695
          %v6380 = vpow.pop %v6379
          %v6381 = vmul.f32 %v6356, 1.442695
          %v6382 = vpow.pop %v6381
          %v6383 = vmul.f32 %v6357, 1.442695
          %v6384 = vpow.pop %v6383
          %v6385 = vmul.f32 %v6358, 1.442695
          %v6386 = vpow.pop %v6385
          %v6387 = vmul.f32 %v6359, 1.442695
          %v6388 = vpow.pop %v6387
          %v6389 = vmul.f32 %v6360, 1.442695
          %v6390 = vpow.pop %v6389
          %v6391 = vmul.f32 %v6361, 1.442695
          %v6392 = vpow.pop %v6391
          %v6393 = vmul.f32 %v6362, 1.442695
          %v6394 = vpow.pop %v6393
          %s6395 = scalar_lea.vmem [#allocation4], 256
          %v6396 = vld [vmem:[%s6395] sm:$0xff]
          %v6397 = vld [vmem:[%s6395 + $0x8] sm:$0xff]
          %v6398 = vld [vmem:[%s6395 + $0x10] sm:$0xff]
          %v6399 = vld [vmem:[%s6395 + $0x18] sm:$0xff]
          %v6400 = vld [vmem:[%s6395 + $0x20] sm:$0xff]
          %v6401 = vld [vmem:[%s6395 + $0x28] sm:$0xff]
          %v6402 = vld [vmem:[%s6395 + $0x30] sm:$0xff]
          %v6403 = vld [vmem:[%s6395 + $0x38] sm:$0xff]
          %v6404 = vld [vmem:[%s6395 + $0x40] sm:$0xff]
          %v6405 = vld [vmem:[%s6395 + $0x48] sm:$0xff]
          %v6406 = vld [vmem:[%s6395 + $0x50] sm:$0xff]
          %v6407 = vld [vmem:[%s6395 + $0x58] sm:$0xff]
          %v6408 = vld [vmem:[%s6395 + $0x60] sm:$0xff]
          %v6409 = vld [vmem:[%s6395 + $0x68] sm:$0xff]
          %v6410 = vld [vmem:[%s6395 + $0x70] sm:$0xff]
          %v6411 = vld [vmem:[%s6395 + $0x78] sm:$0xff]
          %v6412 = vmul.f32 %v6236, %v6396
          %v6413 = vmul.f32 %v6238, %v6397
          %v6414 = vmul.f32 %v6240, %v6398
          %v6415 = vmul.f32 %v6242, %v6399
          %v6416 = vmul.f32 %v6244, %v6400
          %v6417 = vmul.f32 %v6246, %v6401
          %v6418 = vmul.f32 %v6248, %v6402
          %v6419 = vmul.f32 %v6250, %v6403
          %v6420 = vmul.f32 %v6252, %v6404
          %v6421 = vmul.f32 %v6254, %v6405
          %v6422 = vmul.f32 %v6256, %v6406
          %v6423 = vmul.f32 %v6258, %v6407
          %v6424 = vmul.f32 %v6260, %v6408
          %v6425 = vmul.f32 %v6262, %v6409
          %v6426 = vmul.f32 %v6264, %v6410
          %v6427 = vmul.f32 %v6266, %v6411
          %6428 = vadd.xlane.f32.xlu0 %v6364
          %v6429 = vpop.xlane.xlu0 %6428
          %6430 = vadd.xlane.f32.xlu0 %v6366
          %v6431 = vpop.xlane.xlu0 %6430
          %6432 = vadd.xlane.f32.xlu0 %v6368
          %v6433 = vpop.xlane.xlu0 %6432
          %6434 = vadd.xlane.f32.xlu0 %v6370
          %v6435 = vpop.xlane.xlu0 %6434
          %6436 = vadd.xlane.f32.xlu0 %v6372
          %v6437 = vpop.xlane.xlu0 %6436
          %6438 = vadd.xlane.f32.xlu0 %v6374
          %v6439 = vpop.xlane.xlu0 %6438
          %6440 = vadd.xlane.f32.xlu0 %v6376
          %v6441 = vpop.xlane.xlu0 %6440
          %6442 = vadd.xlane.f32.xlu0 %v6378
          %v6443 = vpop.xlane.xlu0 %6442
          %6444 = vadd.xlane.f32.xlu0 %v6380
          %v6445 = vpop.xlane.xlu0 %6444
          %6446 = vadd.xlane.f32.xlu0 %v6382
          %v6447 = vpop.xlane.xlu0 %6446
          %6448 = vadd.xlane.f32.xlu0 %v6384
          %v6449 = vpop.xlane.xlu0 %6448
          %6450 = vadd.xlane.f32.xlu0 %v6386
          %v6451 = vpop.xlane.xlu0 %6450
          %6452 = vadd.xlane.f32.xlu0 %v6388
          %v6453 = vpop.xlane.xlu0 %6452
          %6454 = vadd.xlane.f32.xlu0 %v6390
          %v6455 = vpop.xlane.xlu0 %6454
          %6456 = vadd.xlane.f32.xlu0 %v6392
          %v6457 = vpop.xlane.xlu0 %6456
          %6458 = vadd.xlane.f32.xlu0 %v6394
          %v6459 = vpop.xlane.xlu0 %6458
          %v6460 = vadd.f32 %v6412, %v6429
          %v6461 = vadd.f32 %v6413, %v6431
          %v6462 = vadd.f32 %v6414, %v6433
          %v6463 = vadd.f32 %v6415, %v6435
          %v6464 = vadd.f32 %v6416, %v6437
          %v6465 = vadd.f32 %v6417, %v6439
          %v6466 = vadd.f32 %v6418, %v6441
          %v6467 = vadd.f32 %v6419, %v6443
          %v6468 = vadd.f32 %v6420, %v6445
          %v6469 = vadd.f32 %v6421, %v6447
          %v6470 = vadd.f32 %v6422, %v6449
          %v6471 = vadd.f32 %v6423, %v6451
          %v6472 = vadd.f32 %v6424, %v6453
          %v6473 = vadd.f32 %v6425, %v6455
          %v6474 = vadd.f32 %v6426, %v6457
          %v6475 = vadd.f32 %v6427, %v6459
          %6476 = vst.msk [vmem:[%s6395] sm:$0xff] %vm4722, %v6460
          %6477 = vst.msk [vmem:[%s6395 + $0x8] sm:$0xff] %vm4722, %v6461
          %6478 = vst.msk [vmem:[%s6395 + $0x10] sm:$0xff] %vm4722, %v6462
          %6479 = vst.msk [vmem:[%s6395 + $0x18] sm:$0xff] %vm4722, %v6463
          %6480 = vst.msk [vmem:[%s6395 + $0x20] sm:$0xff] %vm4722, %v6464
          %6481 = vst.msk [vmem:[%s6395 + $0x28] sm:$0xff] %vm4722, %v6465
          %6482 = vst.msk [vmem:[%s6395 + $0x30] sm:$0xff] %vm4722, %v6466
          %6483 = vst.msk [vmem:[%s6395 + $0x38] sm:$0xff] %vm4722, %v6467
          %6484 = vst.msk [vmem:[%s6395 + $0x40] sm:$0xff] %vm4722, %v6468
          %6485 = vst.msk [vmem:[%s6395 + $0x48] sm:$0xff] %vm4722, %v6469
          %6486 = vst.msk [vmem:[%s6395 + $0x50] sm:$0xff] %vm4722, %v6470
          %6487 = vst.msk [vmem:[%s6395 + $0x58] sm:$0xff] %vm4722, %v6471
          %6488 = vst.msk [vmem:[%s6395 + $0x60] sm:$0xff] %vm4722, %v6472
          %6489 = vst.msk [vmem:[%s6395 + $0x68] sm:$0xff] %vm4722, %v6473
          %6490 = vst.msk [vmem:[%s6395 + $0x70] sm:$0xff] %vm4722, %v6474
          %6491 = vst.msk [vmem:[%s6395 + $0x78] sm:$0xff] %vm4722, %v6475
          %v6492 = vld [vmem:[#allocation5 + $0x8] sm:$0xff]
          %v6493 = vld [vmem:[#allocation5 + $0x18] sm:$0xff]
          %v6494 = vld [vmem:[#allocation5 + $0x28] sm:$0xff]
          %v6495 = vld [vmem:[#allocation5 + $0x38] sm:$0xff]
          %v6496 = vld [vmem:[#allocation5 + $0x48] sm:$0xff]
          %v6497 = vld [vmem:[#allocation5 + $0x58] sm:$0xff]
          %v6498 = vld [vmem:[#allocation5 + $0x68] sm:$0xff]
          %v6499 = vld [vmem:[#allocation5 + $0x78] sm:$0xff]
          %v6500 = vld [vmem:[#allocation5 + $0x88] sm:$0xff]
          %v6501 = vld [vmem:[#allocation5 + $0x98] sm:$0xff]
          %v6502 = vld [vmem:[#allocation5 + $0xa8] sm:$0xff]
          %v6503 = vld [vmem:[#allocation5 + $0xb8] sm:$0xff]
          %v6504 = vld [vmem:[#allocation5 + $0xc8] sm:$0xff]
          %v6505 = vld [vmem:[#allocation5 + $0xd8] sm:$0xff]
          %v6506 = vld [vmem:[#allocation5 + $0xe8] sm:$0xff]
          %v6507 = vld [vmem:[#allocation5 + $0xf8] sm:$0xff]
          %6509 = vset.pattern.permute.xlu0 0
          %6510 = vperm.xlu0 %6509, %v6236
          %v6511 = vpop.permute.xlu0 %6510
          %6514 = vset.pattern.permute.xlu0 0
          %6515 = vperm.xlu0 %6514, %v6238
          %v6516 = vpop.permute.xlu0 %6515
          %6519 = vset.pattern.permute.xlu0 0
          %6520 = vperm.xlu0 %6519, %v6240
          %v6521 = vpop.permute.xlu0 %6520
          %6524 = vset.pattern.permute.xlu0 0
          %6525 = vperm.xlu0 %6524, %v6242
          %v6526 = vpop.permute.xlu0 %6525
          %6529 = vset.pattern.permute.xlu0 0
          %6530 = vperm.xlu0 %6529, %v6244
          %v6531 = vpop.permute.xlu0 %6530
          %6534 = vset.pattern.permute.xlu0 0
          %6535 = vperm.xlu0 %6534, %v6246
          %v6536 = vpop.permute.xlu0 %6535
          %6539 = vset.pattern.permute.xlu0 0
          %6540 = vperm.xlu0 %6539, %v6248
          %v6541 = vpop.permute.xlu0 %6540
          %6544 = vset.pattern.permute.xlu0 0
          %6545 = vperm.xlu0 %6544, %v6250
          %v6546 = vpop.permute.xlu0 %6545
          %6549 = vset.pattern.permute.xlu0 0
          %6550 = vperm.xlu0 %6549, %v6252
          %v6551 = vpop.permute.xlu0 %6550
          %6554 = vset.pattern.permute.xlu0 0
          %6555 = vperm.xlu0 %6554, %v6254
          %v6556 = vpop.permute.xlu0 %6555
          %6559 = vset.pattern.permute.xlu0 0
          %6560 = vperm.xlu0 %6559, %v6256
          %v6561 = vpop.permute.xlu0 %6560
          %6564 = vset.pattern.permute.xlu0 0
          %6565 = vperm.xlu0 %6564, %v6258
          %v6566 = vpop.permute.xlu0 %6565
          %6569 = vset.pattern.permute.xlu0 0
          %6570 = vperm.xlu0 %6569, %v6260
          %v6571 = vpop.permute.xlu0 %6570
          %6574 = vset.pattern.permute.xlu0 0
          %6575 = vperm.xlu0 %6574, %v6262
          %v6576 = vpop.permute.xlu0 %6575
          %6579 = vset.pattern.permute.xlu0 0
          %6580 = vperm.xlu0 %6579, %v6264
          %v6581 = vpop.permute.xlu0 %6580
          %6584 = vset.pattern.permute.xlu0 0
          %6585 = vperm.xlu0 %6584, %v6266
          %v6586 = vpop.permute.xlu0 %6585
          %v6588 = vmul.f32 %v6511, %v6492
          %v6589 = vmul.f32 %v6516, %v6493
          %v6590 = vmul.f32 %v6521, %v6494
          %v6591 = vmul.f32 %v6526, %v6495
          %v6592 = vmul.f32 %v6531, %v6496
          %v6593 = vmul.f32 %v6536, %v6497
          %v6594 = vmul.f32 %v6541, %v6498
          %v6595 = vmul.f32 %v6546, %v6499
          %v6596 = vmul.f32 %v6551, %v6500
          %v6597 = vmul.f32 %v6556, %v6501
          %v6598 = vmul.f32 %v6561, %v6502
          %v6599 = vmul.f32 %v6566, %v6503
          %v6600 = vmul.f32 %v6571, %v6504
          %v6601 = vmul.f32 %v6576, %v6505
          %v6602 = vmul.f32 %v6581, %v6506
          %v6603 = vmul.f32 %v6586, %v6507
          %v6604 = vpack.c.bf16 %v6366, %v6364
          %v6605 = vpack.c.bf16 %v6370, %v6368
          %v6606 = vpack.c.bf16 %v6374, %v6372
          %v6607 = vpack.c.bf16 %v6378, %v6376
          %v6608 = vpack.c.bf16 %v6382, %v6380
          %v6609 = vpack.c.bf16 %v6386, %v6384
          %v6610 = vpack.c.bf16 %v6390, %v6388
          %v6611 = vpack.c.bf16 %v6394, %v6392
          %6612 = vmatprep.subr.bf16.mxu0 0
          %6613 = vmatpush1.bf16.msra.mxu0 %v6001
          %6614 = vmatprep.subr.bf16.mxu0 0
          %6615 = vmatpush1.bf16.msra.mxu0 %v6002
          %6616 = vmatprep.subr.bf16.mxu0 0
          %6617 = vmatpush1.bf16.msra.mxu0 %v6003
          %6618 = vmatprep.subr.bf16.mxu0 0
          %6619 = vmatpush1.bf16.msra.mxu0 %v6004
          %6620 = vmatprep.subr.bf16.mxu0 0
          %6621 = vmatpush1.bf16.msra.mxu0 %v6005
          %6622 = vmatprep.subr.bf16.mxu0 0
          %6623 = vmatpush1.bf16.msra.mxu0 %v6006
          %6624 = vmatprep.subr.bf16.mxu0 0
          %6625 = vmatpush1.bf16.msra.mxu0 %v6007
          %6626 = vmatprep.subr.bf16.mxu0 0
          %6627 = vmatpush1.bf16.msra.mxu0 %v6008
          %6628 = vmatprep.subr.bf16.mxu0 0
          %6629 = vmatpush1.bf16.msra.mxu0 0
          %6630 = vmatprep.subr.bf16.mxu0 0
          %6631 = vmatpush1.bf16.msra.mxu0 0
          %6632 = vmatprep.subr.bf16.mxu0 0
          %6633 = vmatpush1.bf16.msra.mxu0 0
          %6634 = vmatprep.subr.bf16.mxu0 0
          %6635 = vmatpush1.bf16.msra.mxu0 0
          %6636 = vmatprep.subr.bf16.mxu0 0
          %6637 = vmatpush1.bf16.msra.mxu0 0
          %6638 = vmatprep.subr.bf16.mxu0 0
          %6639 = vmatpush1.bf16.msra.mxu0 0
          %6640 = vmatprep.subr.bf16.mxu0 0
          %6641 = vmatpush1.bf16.msra.mxu0 0
          %6642 = vmatprep.subr.bf16.mxu0 0
          %6643 = vmatpush1.bf16.msra.mxu0 0
          %6644 = vmatprep.mubr.bf16.mxu0 0
          %6645 = vmatmul.mubr.bf16.gmra.mrb[0].mxu0 %v6604
          %v6646 = vpop.f32.mrb[0].mxu0
          %v6647 = vadd.f32 0.0, %v6646
          %v6648 = vpop.f32.mrb[0].mxu0
          %v6649 = vpop.f32.mrb[0].mxu0
          %v6650 = vadd.f32 0.0, %v6649
          %v6651 = vpop.f32.mrb[0].mxu0
          %6652 = vmatprep.mubr.bf16.mxu0 0
          %6653 = vmatmul.mubr.bf16.gmra.mrb[0].mxu0 %v6605
          %v6654 = vpop.f32.mrb[0].mxu0
          %v6655 = vadd.f32 0.0, %v6654
          %v6656 = vpop.f32.mrb[0].mxu0
          %v6657 = vpop.f32.mrb[0].mxu0
          %v6658 = vadd.f32 0.0, %v6657
          %v6659 = vpop.f32.mrb[0].mxu0
          %6660 = vmatprep.mubr.bf16.mxu0 0
          %6661 = vmatmul.mubr.bf16.gmra.mrb[0].mxu0 %v6606
          %v6662 = vpop.f32.mrb[0].mxu0
          %v6663 = vadd.f32 0.0, %v6662
          %v6664 = vpop.f32.mrb[0].mxu0
          %v6665 = vpop.f32.mrb[0].mxu0
          %v6666 = vadd.f32 0.0, %v6665
          %v6667 = vpop.f32.mrb[0].mxu0
          %6668 = vmatprep.mubr.bf16.mxu0 0
          %6669 = vmatmul.mubr.bf16.gmra.mrb[0].mxu0 %v6607
          %v6670 = vpop.f32.mrb[0].mxu0
          %v6671 = vadd.f32 0.0, %v6670
          %v6672 = vpop.f32.mrb[0].mxu0
          %v6673 = vpop.f32.mrb[0].mxu0
          %v6674 = vadd.f32 0.0, %v6673
          %v6675 = vpop.f32.mrb[0].mxu0
          %6676 = vmatprep.mubr.bf16.mxu0 0
          %6677 = vmatmul.mubr.bf16.gmra.mrb[0].mxu0 %v6608
          %v6678 = vpop.f32.mrb[0].mxu0
          %v6679 = vadd.f32 0.0, %v6678
          %v6680 = vpop.f32.mrb[0].mxu0
          %v6681 = vpop.f32.mrb[0].mxu0
          %v6682 = vadd.f32 0.0, %v6681
          %v6683 = vpop.f32.mrb[0].mxu0
          %6684 = vmatprep.mubr.bf16.mxu0 0
          %6685 = vmatmul.mubr.bf16.gmra.mrb[0].mxu0 %v6609
          %v6686 = vpop.f32.mrb[0].mxu0
          %v6687 = vadd.f32 0.0, %v6686
          %v6688 = vpop.f32.mrb[0].mxu0
          %v6689 = vpop.f32.mrb[0].mxu0
          %v6690 = vadd.f32 0.0, %v6689
          %v6691 = vpop.f32.mrb[0].mxu0
          %6692 = vmatprep.mubr.bf16.mxu0 0
          %6693 = vmatmul.mubr.bf16.gmra.mrb[0].mxu0 %v6610
          %v6694 = vpop.f32.mrb[0].mxu0
          %v6695 = vadd.f32 0.0, %v6694
          %v6696 = vpop.f32.mrb[0].mxu0
          %v6697 = vpop.f32.mrb[0].mxu0
          %v6698 = vadd.f32 0.0, %v6697
          %v6699 = vpop.f32.mrb[0].mxu0
          %6700 = vmatprep.mubr.bf16.mxu0 0
          %6701 = vmatmul.mubr.bf16.gmra.mrb[0].mxu0 %v6611
          %v6702 = vpop.f32.mrb[0].mxu0
          %v6703 = vadd.f32 0.0, %v6702
          %v6704 = vpop.f32.mrb[0].mxu0
          %v6705 = vpop.f32.mrb[0].mxu0
          %v6706 = vadd.f32 0.0, %v6705
          %v6707 = vpop.f32.mrb[0].mxu0
          %6708 = vdwg.mxu0
          %v6709 = vadd.f32 %v6588, %v6647
          %v6710 = vadd.f32 %v6589, %v6650
          %v6711 = vadd.f32 %v6590, %v6655
          %v6712 = vadd.f32 %v6591, %v6658
          %v6713 = vadd.f32 %v6592, %v6663
          %v6714 = vadd.f32 %v6593, %v6666
          %v6715 = vadd.f32 %v6594, %v6671
          %v6716 = vadd.f32 %v6595, %v6674
          %v6717 = vadd.f32 %v6596, %v6679
          %v6718 = vadd.f32 %v6597, %v6682
          %v6719 = vadd.f32 %v6598, %v6687
          %v6720 = vadd.f32 %v6599, %v6690
          %v6721 = vadd.f32 %v6600, %v6695
          %v6722 = vadd.f32 %v6601, %v6698
          %v6723 = vadd.f32 %v6602, %v6703
          %v6724 = vadd.f32 %v6603, %v6706
          %6725 = vst.msk [vmem:[#allocation5 + $0x8] sm:$0xff] %vm4256, %v6709
          %6726 = vst.msk [vmem:[#allocation5 + $0x18] sm:$0xff] %vm4256, %v6710
          %6727 = vst.msk [vmem:[#allocation5 + $0x28] sm:$0xff] %vm4256, %v6711
          %6728 = vst.msk [vmem:[#allocation5 + $0x38] sm:$0xff] %vm4256, %v6712
          %6729 = vst.msk [vmem:[#allocation5 + $0x48] sm:$0xff] %vm4256, %v6713
          %6730 = vst.msk [vmem:[#allocation5 + $0x58] sm:$0xff] %vm4256, %v6714
          %6731 = vst.msk [vmem:[#allocation5 + $0x68] sm:$0xff] %vm4256, %v6715
          %6732 = vst.msk [vmem:[#allocation5 + $0x78] sm:$0xff] %vm4256, %v6716
          %6733 = vst.msk [vmem:[#allocation5 + $0x88] sm:$0xff] %vm4256, %v6717
          %6734 = vst.msk [vmem:[#allocation5 + $0x98] sm:$0xff] %vm4256, %v6718
          %6735 = vst.msk [vmem:[#allocation5 + $0xa8] sm:$0xff] %vm4256, %v6719
          %6736 = vst.msk [vmem:[#allocation5 + $0xb8] sm:$0xff] %vm4256, %v6720
          %6737 = vst.msk [vmem:[#allocation5 + $0xc8] sm:$0xff] %vm4256, %v6721
          %6738 = vst.msk [vmem:[#allocation5 + $0xd8] sm:$0xff] %vm4256, %v6722
          %6739 = vst.msk [vmem:[#allocation5 + $0xe8] sm:$0xff] %vm4256, %v6723
          %6740 = vst.msk [vmem:[#allocation5 + $0xf8] sm:$0xff] %vm4256, %v6724
          %6741 = vst.msk [vmem:[%s6154] sm:$0xff] %vm4722, %v6203
          %6742 = vst.msk [vmem:[%s6154 + $0x8] sm:$0xff] %vm4722, %v6204
          %6743 = vst.msk [vmem:[%s6154 + $0x10] sm:$0xff] %vm4722, %v6205
          %6744 = vst.msk [vmem:[%s6154 + $0x18] sm:$0xff] %vm4722, %v6206
          %6745 = vst.msk [vmem:[%s6154 + $0x20] sm:$0xff] %vm4722, %v6207
          %6746 = vst.msk [vmem:[%s6154 + $0x28] sm:$0xff] %vm4722, %v6208
          %6747 = vst.msk [vmem:[%s6154 + $0x30] sm:$0xff] %vm4722, %v6209
          %6748 = vst.msk [vmem:[%s6154 + $0x38] sm:$0xff] %vm4722, %v6210
          %6749 = vst.msk [vmem:[%s6154 + $0x40] sm:$0xff] %vm4722, %v6211
          %6750 = vst.msk [vmem:[%s6154 + $0x48] sm:$0xff] %vm4722, %v6212
          %6751 = vst.msk [vmem:[%s6154 + $0x50] sm:$0xff] %vm4722, %v6213
          %6752 = vst.msk [vmem:[%s6154 + $0x58] sm:$0xff] %vm4722, %v6214
          %6753 = vst.msk [vmem:[%s6154 + $0x60] sm:$0xff] %vm4722, %v6215
          %6754 = vst.msk [vmem:[%s6154 + $0x68] sm:$0xff] %vm4722, %v6216
          %6755 = vst.msk [vmem:[%s6154 + $0x70] sm:$0xff] %vm4722, %v6217
          %6756 = vst.msk [vmem:[%s6154 + $0x78] sm:$0xff] %vm4722, %v6218
          %v6757 = vld [vmem:[#allocation2 + $0x8] sm:$0xff]
          %v6758 = vld [vmem:[#allocation2 + $0x18] sm:$0xff]
          %v6759 = vld [vmem:[#allocation2 + $0x28] sm:$0xff]
          %v6760 = vld [vmem:[#allocation2 + $0x38] sm:$0xff]
          %v6761 = vld [vmem:[#allocation2 + $0x48] sm:$0xff]
          %v6762 = vld [vmem:[#allocation2 + $0x58] sm:$0xff]
          %v6763 = vld [vmem:[#allocation2 + $0x68] sm:$0xff]
          %v6764 = vld [vmem:[#allocation2 + $0x78] sm:$0xff]
          %v6765 = vld [vmem:[%s274 + $0x8] sm:$0xff]
          %v6766 = vld [vmem:[%s274 + $0x18] sm:$0xff]
          %v6767 = vld [vmem:[%s274 + $0x28] sm:$0xff]
          %v6768 = vld [vmem:[%s274 + $0x38] sm:$0xff]
          %v6769 = vld [vmem:[%s274 + $0x48] sm:$0xff]
          %v6770 = vld [vmem:[%s274 + $0x58] sm:$0xff]
          %v6771 = vld [vmem:[%s274 + $0x68] sm:$0xff]
          %v6772 = vld [vmem:[%s274 + $0x78] sm:$0xff]
          %v6773 = vld [vmem:[%s274 + $0x88] sm:$0xff]
          %v6774 = vld [vmem:[%s274 + $0x98] sm:$0xff]
          %v6775 = vld [vmem:[%s274 + $0xa8] sm:$0xff]
          %v6776 = vld [vmem:[%s274 + $0xb8] sm:$0xff]
          %v6777 = vld [vmem:[%s274 + $0xc8] sm:$0xff]
          %v6778 = vld [vmem:[%s274 + $0xd8] sm:$0xff]
          %v6779 = vld [vmem:[%s274 + $0xe8] sm:$0xff]
          %v6780 = vld [vmem:[%s274 + $0xf8] sm:$0xff]
          %v6781 = vpack.c.bf16 %v6766, %v6765
          %v6782 = vpack.c.bf16 %v6768, %v6767
          %v6783 = vpack.c.bf16 %v6770, %v6769
          %v6784 = vpack.c.bf16 %v6772, %v6771
          %v6785 = vpack.c.bf16 %v6774, %v6773
          %v6786 = vpack.c.bf16 %v6776, %v6775
          %v6787 = vpack.c.bf16 %v6778, %v6777
          %v6788 = vpack.c.bf16 %v6780, %v6779
          %v6789 = vld [vmem:[%s283 + $0x8] sm:$0xff]
          %v6790 = vld [vmem:[%s283 + $0x18] sm:$0xff]
          %v6791 = vld [vmem:[%s283 + $0x28] sm:$0xff]
          %v6792 = vld [vmem:[%s283 + $0x38] sm:$0xff]
          %v6793 = vld [vmem:[%s283 + $0x48] sm:$0xff]
          %v6794 = vld [vmem:[%s283 + $0x58] sm:$0xff]
          %v6795 = vld [vmem:[%s283 + $0x68] sm:$0xff]
          %v6796 = vld [vmem:[%s283 + $0x78] sm:$0xff]
          %v6797 = vld [vmem:[%s283 + $0x88] sm:$0xff]
          %v6798 = vld [vmem:[%s283 + $0x98] sm:$0xff]
          %v6799 = vld [vmem:[%s283 + $0xa8] sm:$0xff]
          %v6800 = vld [vmem:[%s283 + $0xb8] sm:$0xff]
          %v6801 = vld [vmem:[%s283 + $0xc8] sm:$0xff]
          %v6802 = vld [vmem:[%s283 + $0xd8] sm:$0xff]
          %v6803 = vld [vmem:[%s283 + $0xe8] sm:$0xff]
          %v6804 = vld [vmem:[%s283 + $0xf8] sm:$0xff]
          %v6805 = vpack.c.bf16 %v6790, %v6789
          %v6806 = vpack.c.bf16 %v6792, %v6791
          %v6807 = vpack.c.bf16 %v6794, %v6793
          %v6808 = vpack.c.bf16 %v6796, %v6795
          %v6809 = vpack.c.bf16 %v6798, %v6797
          %v6810 = vpack.c.bf16 %v6800, %v6799
          %v6811 = vpack.c.bf16 %v6802, %v6801
          %v6812 = vpack.c.bf16 %v6804, %v6803
          %6821 = vrot.lane.b32.xlu0 %v6757, 64
          %v6822 = vpop.permute.xlu0 %6821
          %6823 = vrot.lane.b32.xlu0 %v6758, 64
          %v6824 = vpop.permute.xlu0 %6823
          %6825 = vrot.lane.b32.xlu0 %v6759, 64
          %v6826 = vpop.permute.xlu0 %6825
          %6827 = vrot.lane.b32.xlu0 %v6760, 64
          %v6828 = vpop.permute.xlu0 %6827
          %6829 = vrot.lane.b32.xlu0 %v6761, 64
          %v6830 = vpop.permute.xlu0 %6829
          %6831 = vrot.lane.b32.xlu0 %v6762, 64
          %v6832 = vpop.permute.xlu0 %6831
          %6833 = vrot.lane.b32.xlu0 %v6763, 64
          %v6834 = vpop.permute.xlu0 %6833
          %6835 = vrot.lane.b32.xlu0 %v6764, 64
          %v6836 = vpop.permute.xlu0 %6835
          %6845 = vrot.lane.b32.xlu0 %v6781, 64
          %v6846 = vpop.permute.xlu0 %6845
          %6847 = vrot.lane.b32.xlu0 %v6782, 64
          %v6848 = vpop.permute.xlu0 %6847
          %6849 = vrot.lane.b32.xlu0 %v6783, 64
          %v6850 = vpop.permute.xlu0 %6849
          %6851 = vrot.lane.b32.xlu0 %v6784, 64
          %v6852 = vpop.permute.xlu0 %6851
          %6853 = vrot.lane.b32.xlu0 %v6785, 64
          %v6854 = vpop.permute.xlu0 %6853
          %6855 = vrot.lane.b32.xlu0 %v6786, 64
          %v6856 = vpop.permute.xlu0 %6855
          %6857 = vrot.lane.b32.xlu0 %v6787, 64
          %v6858 = vpop.permute.xlu0 %6857
          %6859 = vrot.lane.b32.xlu0 %v6788, 64
          %v6860 = vpop.permute.xlu0 %6859
          %v6862 = vsel %vm4256, %v6822, 0
          %v6865 = vsel %vm4256, %v6824, 0
          %v6868 = vsel %vm4256, %v6826, 0
          %v6871 = vsel %vm4256, %v6828, 0
          %v6874 = vsel %vm4256, %v6830, 0
          %v6877 = vsel %vm4256, %v6832, 0
          %v6880 = vsel %vm4256, %v6834, 0
          %v6883 = vsel %vm4256, %v6836, 0
          %v6886 = vsel %vm4256, %v6846, 0
          %v6889 = vsel %vm4256, %v6848, 0
          %v6892 = vsel %vm4256, %v6850, 0
          %v6895 = vsel %vm4256, %v6852, 0
          %v6898 = vsel %vm4256, %v6854, 0
          %v6901 = vsel %vm4256, %v6856, 0
          %v6904 = vsel %vm4256, %v6858, 0
          %v6907 = vsel %vm4256, %v6860, 0
          %6909 = vmatprep.subr.bf16.mxu0 0
          %6910 = vmatpush1.bf16.xpose.msra.mxu0 %v6886
          %6911 = vmatprep.subr.bf16.mxu0 0
          %6912 = vmatpush1.bf16.xpose.msra.mxu0 %v6889
          %6913 = vmatprep.subr.bf16.mxu0 0
          %6914 = vmatpush1.bf16.xpose.msra.mxu0 %v6892
          %6915 = vmatprep.subr.bf16.mxu0 0
          %6916 = vmatpush1.bf16.xpose.msra.mxu0 %v6895
          %6917 = vmatprep.subr.bf16.mxu0 0
          %6918 = vmatpush1.bf16.xpose.msra.mxu0 %v6898
          %6919 = vmatprep.subr.bf16.mxu0 0
          %6920 = vmatpush1.bf16.xpose.msra.mxu0 %v6901
          %6921 = vmatprep.subr.bf16.mxu0 0
          %6922 = vmatpush1.bf16.xpose.msra.mxu0 %v6904
          %6923 = vmatprep.subr.bf16.mxu0 0
          %6924 = vmatpush1.bf16.xpose.msra.mxu0 %v6907
          %6925 = vmatprep.subr.bf16.mxu0 0
          %6926 = vmatpush1.bf16.xpose.msra.mxu0 0
          %6927 = vmatprep.subr.bf16.mxu0 0
          %6928 = vmatpush1.bf16.xpose.msra.mxu0 0
          %6929 = vmatprep.subr.bf16.mxu0 0
          %6930 = vmatpush1.bf16.xpose.msra.mxu0 0
          %6931 = vmatprep.subr.bf16.mxu0 0
          %6932 = vmatpush1.bf16.xpose.msra.mxu0 0
          %6933 = vmatprep.subr.bf16.mxu0 0
          %6934 = vmatpush1.bf16.xpose.msra.mxu0 0
          %6935 = vmatprep.subr.bf16.mxu0 0
          %6936 = vmatpush1.bf16.xpose.msra.mxu0 0
          %6937 = vmatprep.subr.bf16.mxu0 0
          %6938 = vmatpush1.bf16.xpose.msra.mxu0 0
          %6939 = vmatprep.subr.bf16.mxu0 0
          %6940 = vmatpush1.bf16.xpose.msra.mxu0 0
          %6941 = vmatprep.mubr.bf16.mxu0 0
          %6942 = vmatmul.mubr.bf16.gmra.mrb[0].mxu0 %v6862
          %v6943 = vpop.f32.mrb[0].mxu0
          %v6944 = vadd.f32 0.0, %v6943
          %v6945 = vpop.f32.mrb[0].mxu0
          %v6946 = vpop.f32.mrb[0].mxu0
          %v6947 = vadd.f32 0.0, %v6946
          %v6948 = vpop.f32.mrb[0].mxu0
          %6949 = vmatprep.mubr.bf16.mxu0 0
          %6950 = vmatmul.mubr.bf16.gmra.mrb[0].mxu0 %v6865
          %v6951 = vpop.f32.mrb[0].mxu0
          %v6952 = vadd.f32 0.0, %v6951
          %v6953 = vpop.f32.mrb[0].mxu0
          %v6954 = vpop.f32.mrb[0].mxu0
          %v6955 = vadd.f32 0.0, %v6954
          %v6956 = vpop.f32.mrb[0].mxu0
          %6957 = vmatprep.mubr.bf16.mxu0 0
          %6958 = vmatmul.mubr.bf16.gmra.mrb[0].mxu0 %v6868
          %v6959 = vpop.f32.mrb[0].mxu0
          %v6960 = vadd.f32 0.0, %v6959
          %v6961 = vpop.f32.mrb[0].mxu0
          %v6962 = vpop.f32.mrb[0].mxu0
          %v6963 = vadd.f32 0.0, %v6962
          %v6964 = vpop.f32.mrb[0].mxu0
          %6965 = vmatprep.mubr.bf16.mxu0 0
          %6966 = vmatmul.mubr.bf16.gmra.mrb[0].mxu0 %v6871
          %v6967 = vpop.f32.mrb[0].mxu0
          %v6968 = vadd.f32 0.0, %v6967
          %v6969 = vpop.f32.mrb[0].mxu0
          %v6970 = vpop.f32.mrb[0].mxu0
          %v6971 = vadd.f32 0.0, %v6970
          %v6972 = vpop.f32.mrb[0].mxu0
          %6973 = vmatprep.mubr.bf16.mxu0 0
          %6974 = vmatmul.mubr.bf16.gmra.mrb[0].mxu0 %v6874
          %v6975 = vpop.f32.mrb[0].mxu0
          %v6976 = vadd.f32 0.0, %v6975
          %v6977 = vpop.f32.mrb[0].mxu0
          %v6978 = vpop.f32.mrb[0].mxu0
          %v6979 = vadd.f32 0.0, %v6978
          %v6980 = vpop.f32.mrb[0].mxu0
          %6981 = vmatprep.mubr.bf16.mxu0 0
          %6982 = vmatmul.mubr.bf16.gmra.mrb[0].mxu0 %v6877
          %v6983 = vpop.f32.mrb[0].mxu0
          %v6984 = vadd.f32 0.0, %v6983
          %v6985 = vpop.f32.mrb[0].mxu0
          %v6986 = vpop.f32.mrb[0].mxu0
          %v6987 = vadd.f32 0.0, %v6986
          %v6988 = vpop.f32.mrb[0].mxu0
          %6989 = vmatprep.mubr.bf16.mxu0 0
          %6990 = vmatmul.mubr.bf16.gmra.mrb[0].mxu0 %v6880
          %v6991 = vpop.f32.mrb[0].mxu0
          %v6992 = vadd.f32 0.0, %v6991
          %v6993 = vpop.f32.mrb[0].mxu0
          %v6994 = vpop.f32.mrb[0].mxu0
          %v6995 = vadd.f32 0.0, %v6994
          %v6996 = vpop.f32.mrb[0].mxu0
          %6997 = vmatprep.mubr.bf16.mxu0 0
          %6998 = vmatmul.mubr.bf16.gmra.mrb[0].mxu0 %v6883
          %v6999 = vpop.f32.mrb[0].mxu0
          %v7000 = vadd.f32 0.0, %v6999
          %v7001 = vpop.f32.mrb[0].mxu0
          %v7002 = vpop.f32.mrb[0].mxu0
          %v7003 = vadd.f32 0.0, %v7002
          %v7004 = vpop.f32.mrb[0].mxu0
          %7005 = vdwg.mxu0
          %s7006 = scalar_lea.vmem [#allocation3], 384
          %v7007 = vld [vmem:[%s7006] sm:$0xff]
          %v7008 = vld [vmem:[%s7006 + $0x8] sm:$0xff]
          %v7009 = vld [vmem:[%s7006 + $0x10] sm:$0xff]
          %v7010 = vld [vmem:[%s7006 + $0x18] sm:$0xff]
          %v7011 = vld [vmem:[%s7006 + $0x20] sm:$0xff]
          %v7012 = vld [vmem:[%s7006 + $0x28] sm:$0xff]
          %v7013 = vld [vmem:[%s7006 + $0x30] sm:$0xff]
          %v7014 = vld [vmem:[%s7006 + $0x38] sm:$0xff]
          %v7015 = vld [vmem:[%s7006 + $0x40] sm:$0xff]
          %v7016 = vld [vmem:[%s7006 + $0x48] sm:$0xff]
          %v7017 = vld [vmem:[%s7006 + $0x50] sm:$0xff]
          %v7018 = vld [vmem:[%s7006 + $0x58] sm:$0xff]
          %v7019 = vld [vmem:[%s7006 + $0x60] sm:$0xff]
          %v7020 = vld [vmem:[%s7006 + $0x68] sm:$0xff]
          %v7021 = vld [vmem:[%s7006 + $0x70] sm:$0xff]
          %v7022 = vld [vmem:[%s7006 + $0x78] sm:$0xff]
          %7023 = vmax.xlane.f32.xlu0 %v6944
          %v7024 = vpop.xlane.xlu0 %7023
          %7025 = vmax.xlane.f32.xlu0 %v6947
          %v7026 = vpop.xlane.xlu0 %7025
          %7027 = vmax.xlane.f32.xlu0 %v6952
          %v7028 = vpop.xlane.xlu0 %7027
          %7029 = vmax.xlane.f32.xlu0 %v6955
          %v7030 = vpop.xlane.xlu0 %7029
          %7031 = vmax.xlane.f32.xlu0 %v6960
          %v7032 = vpop.xlane.xlu0 %7031
          %7033 = vmax.xlane.f32.xlu0 %v6963
          %v7034 = vpop.xlane.xlu0 %7033
          %7035 = vmax.xlane.f32.xlu0 %v6968
          %v7036 = vpop.xlane.xlu0 %7035
          %7037 = vmax.xlane.f32.xlu0 %v6971
          %v7038 = vpop.xlane.xlu0 %7037
          %7039 = vmax.xlane.f32.xlu0 %v6976
          %v7040 = vpop.xlane.xlu0 %7039
          %7041 = vmax.xlane.f32.xlu0 %v6979
          %v7042 = vpop.xlane.xlu0 %7041
          %7043 = vmax.xlane.f32.xlu0 %v6984
          %v7044 = vpop.xlane.xlu0 %7043
          %7045 = vmax.xlane.f32.xlu0 %v6987
          %v7046 = vpop.xlane.xlu0 %7045
          %7047 = vmax.xlane.f32.xlu0 %v6992
          %v7048 = vpop.xlane.xlu0 %7047
          %7049 = vmax.xlane.f32.xlu0 %v6995
          %v7050 = vpop.xlane.xlu0 %7049
          %7051 = vmax.xlane.f32.xlu0 %v7000
          %v7052 = vpop.xlane.xlu0 %7051
          %7053 = vmax.xlane.f32.xlu0 %v7003
          %v7054 = vpop.xlane.xlu0 %7053
          %v7055 = vmax.f32 %v7007, %v7024
          %v7056 = vmax.f32 %v7008, %v7026
          %v7057 = vmax.f32 %v7009, %v7028
          %v7058 = vmax.f32 %v7010, %v7030
          %v7059 = vmax.f32 %v7011, %v7032
          %v7060 = vmax.f32 %v7012, %v7034
          %v7061 = vmax.f32 %v7013, %v7036
          %v7062 = vmax.f32 %v7014, %v7038
          %v7063 = vmax.f32 %v7015, %v7040
          %v7064 = vmax.f32 %v7016, %v7042
          %v7065 = vmax.f32 %v7017, %v7044
          %v7066 = vmax.f32 %v7018, %v7046
          %v7067 = vmax.f32 %v7019, %v7048
          %v7068 = vmax.f32 %v7020, %v7050
          %v7069 = vmax.f32 %v7021, %v7052
          %v7070 = vmax.f32 %v7022, %v7054
          %v7071 = vsub.f32 %v7007, %v7055
          %v7072 = vsub.f32 %v7008, %v7056
          %v7073 = vsub.f32 %v7009, %v7057
          %v7074 = vsub.f32 %v7010, %v7058
          %v7075 = vsub.f32 %v7011, %v7059
          %v7076 = vsub.f32 %v7012, %v7060
          %v7077 = vsub.f32 %v7013, %v7061
          %v7078 = vsub.f32 %v7014, %v7062
          %v7079 = vsub.f32 %v7015, %v7063
          %v7080 = vsub.f32 %v7016, %v7064
          %v7081 = vsub.f32 %v7017, %v7065
          %v7082 = vsub.f32 %v7018, %v7066
          %v7083 = vsub.f32 %v7019, %v7067
          %v7084 = vsub.f32 %v7020, %v7068
          %v7085 = vsub.f32 %v7021, %v7069
          %v7086 = vsub.f32 %v7022, %v7070
          %v7087 = vmul.f32 %v7071, 1.442695
          %v7088 = vpow.pop %v7087
          %v7089 = vmul.f32 %v7072, 1.442695
          %v7090 = vpow.pop %v7089
          %v7091 = vmul.f32 %v7073, 1.442695
          %v7092 = vpow.pop %v7091
          %v7093 = vmul.f32 %v7074, 1.442695
          %v7094 = vpow.pop %v7093
          %v7095 = vmul.f32 %v7075, 1.442695
          %v7096 = vpow.pop %v7095
          %v7097 = vmul.f32 %v7076, 1.442695
          %v7098 = vpow.pop %v7097
          %v7099 = vmul.f32 %v7077, 1.442695
          %v7100 = vpow.pop %v7099
          %v7101 = vmul.f32 %v7078, 1.442695
          %v7102 = vpow.pop %v7101
          %v7103 = vmul.f32 %v7079, 1.442695
          %v7104 = vpow.pop %v7103
          %v7105 = vmul.f32 %v7080, 1.442695
          %v7106 = vpow.pop %v7105
          %v7107 = vmul.f32 %v7081, 1.442695
          %v7108 = vpow.pop %v7107
          %v7109 = vmul.f32 %v7082, 1.442695
          %v7110 = vpow.pop %v7109
          %v7111 = vmul.f32 %v7083, 1.442695
          %v7112 = vpow.pop %v7111
          %v7113 = vmul.f32 %v7084, 1.442695
          %v7114 = vpow.pop %v7113
          %v7115 = vmul.f32 %v7085, 1.442695
          %v7116 = vpow.pop %v7115
          %v7117 = vmul.f32 %v7086, 1.442695
          %v7118 = vpow.pop %v7117
          %7120 = vset.pattern.permute.xlu0 0
          %7121 = vperm.xlu0 %7120, %v7055
          %v7122 = vpop.permute.xlu0 %7121
          %7125 = vset.pattern.permute.xlu0 0
          %7126 = vperm.xlu0 %7125, %v7056
          %v7127 = vpop.permute.xlu0 %7126
          %7130 = vset.pattern.permute.xlu0 0
          %7131 = vperm.xlu0 %7130, %v7057
          %v7132 = vpop.permute.xlu0 %7131
          %7135 = vset.pattern.permute.xlu0 0
          %7136 = vperm.xlu0 %7135, %v7058
          %v7137 = vpop.permute.xlu0 %7136
          %7140 = vset.pattern.permute.xlu0 0
          %7141 = vperm.xlu0 %7140, %v7059
          %v7142 = vpop.permute.xlu0 %7141
          %7145 = vset.pattern.permute.xlu0 0
          %7146 = vperm.xlu0 %7145, %v7060
          %v7147 = vpop.permute.xlu0 %7146
          %7150 = vset.pattern.permute.xlu0 0
          %7151 = vperm.xlu0 %7150, %v7061
          %v7152 = vpop.permute.xlu0 %7151
          %7155 = vset.pattern.permute.xlu0 0
          %7156 = vperm.xlu0 %7155, %v7062
          %v7157 = vpop.permute.xlu0 %7156
          %7160 = vset.pattern.permute.xlu0 0
          %7161 = vperm.xlu0 %7160, %v7063
          %v7162 = vpop.permute.xlu0 %7161
          %7165 = vset.pattern.permute.xlu0 0
          %7166 = vperm.xlu0 %7165, %v7064
          %v7167 = vpop.permute.xlu0 %7166
          %7170 = vset.pattern.permute.xlu0 0
          %7171 = vperm.xlu0 %7170, %v7065
          %v7172 = vpop.permute.xlu0 %7171
          %7175 = vset.pattern.permute.xlu0 0
          %7176 = vperm.xlu0 %7175, %v7066
          %v7177 = vpop.permute.xlu0 %7176
          %7180 = vset.pattern.permute.xlu0 0
          %7181 = vperm.xlu0 %7180, %v7067
          %v7182 = vpop.permute.xlu0 %7181
          %7185 = vset.pattern.permute.xlu0 0
          %7186 = vperm.xlu0 %7185, %v7068
          %v7187 = vpop.permute.xlu0 %7186
          %7190 = vset.pattern.permute.xlu0 0
          %7191 = vperm.xlu0 %7190, %v7069
          %v7192 = vpop.permute.xlu0 %7191
          %7195 = vset.pattern.permute.xlu0 0
          %7196 = vperm.xlu0 %7195, %v7070
          %v7197 = vpop.permute.xlu0 %7196
          %v7199 = vsub.f32 %v6944, %v7122
          %v7200 = vsub.f32 %v6947, %v7127
          %v7201 = vsub.f32 %v6952, %v7132
          %v7202 = vsub.f32 %v6955, %v7137
          %v7203 = vsub.f32 %v6960, %v7142
          %v7204 = vsub.f32 %v6963, %v7147
          %v7205 = vsub.f32 %v6968, %v7152
          %v7206 = vsub.f32 %v6971, %v7157
          %v7207 = vsub.f32 %v6976, %v7162
          %v7208 = vsub.f32 %v6979, %v7167
          %v7209 = vsub.f32 %v6984, %v7172
          %v7210 = vsub.f32 %v6987, %v7177
          %v7211 = vsub.f32 %v6992, %v7182
          %v7212 = vsub.f32 %v6995, %v7187
          %v7213 = vsub.f32 %v7000, %v7192
          %v7214 = vsub.f32 %v7003, %v7197
          %v7215 = vmul.f32 %v7199, 1.442695
          %v7216 = vpow.pop %v7215
          %v7217 = vmul.f32 %v7200, 1.442695
          %v7218 = vpow.pop %v7217
          %v7219 = vmul.f32 %v7201, 1.442695
          %v7220 = vpow.pop %v7219
          %v7221 = vmul.f32 %v7202, 1.442695
          %v7222 = vpow.pop %v7221
          %v7223 = vmul.f32 %v7203, 1.442695
          %v7224 = vpow.pop %v7223
          %v7225 = vmul.f32 %v7204, 1.442695
          %v7226 = vpow.pop %v7225
          %v7227 = vmul.f32 %v7205, 1.442695
          %v7228 = vpow.pop %v7227
          %v7229 = vmul.f32 %v7206, 1.442695
          %v7230 = vpow.pop %v7229
          %v7231 = vmul.f32 %v7207, 1.442695
          %v7232 = vpow.pop %v7231
          %v7233 = vmul.f32 %v7208, 1.442695
          %v7234 = vpow.pop %v7233
          %v7235 = vmul.f32 %v7209, 1.442695
          %v7236 = vpow.pop %v7235
          %v7237 = vmul.f32 %v7210, 1.442695
          %v7238 = vpow.pop %v7237
          %v7239 = vmul.f32 %v7211, 1.442695
          %v7240 = vpow.pop %v7239
          %v7241 = vmul.f32 %v7212, 1.442695
          %v7242 = vpow.pop %v7241
          %v7243 = vmul.f32 %v7213, 1.442695
          %v7244 = vpow.pop %v7243
          %v7245 = vmul.f32 %v7214, 1.442695
          %v7246 = vpow.pop %v7245
          %s7247 = scalar_lea.vmem [#allocation4], 384
          %v7248 = vld [vmem:[%s7247] sm:$0xff]
          %v7249 = vld [vmem:[%s7247 + $0x8] sm:$0xff]
          %v7250 = vld [vmem:[%s7247 + $0x10] sm:$0xff]
          %v7251 = vld [vmem:[%s7247 + $0x18] sm:$0xff]
          %v7252 = vld [vmem:[%s7247 + $0x20] sm:$0xff]
          %v7253 = vld [vmem:[%s7247 + $0x28] sm:$0xff]
          %v7254 = vld [vmem:[%s7247 + $0x30] sm:$0xff]
          %v7255 = vld [vmem:[%s7247 + $0x38] sm:$0xff]
          %v7256 = vld [vmem:[%s7247 + $0x40] sm:$0xff]
          %v7257 = vld [vmem:[%s7247 + $0x48] sm:$0xff]
          %v7258 = vld [vmem:[%s7247 + $0x50] sm:$0xff]
          %v7259 = vld [vmem:[%s7247 + $0x58] sm:$0xff]
          %v7260 = vld [vmem:[%s7247 + $0x60] sm:$0xff]
          %v7261 = vld [vmem:[%s7247 + $0x68] sm:$0xff]
          %v7262 = vld [vmem:[%s7247 + $0x70] sm:$0xff]
          %v7263 = vld [vmem:[%s7247 + $0x78] sm:$0xff]
          %v7264 = vmul.f32 %v7088, %v7248
          %v7265 = vmul.f32 %v7090, %v7249
          %v7266 = vmul.f32 %v7092, %v7250
          %v7267 = vmul.f32 %v7094, %v7251
          %v7268 = vmul.f32 %v7096, %v7252
          %v7269 = vmul.f32 %v7098, %v7253
          %v7270 = vmul.f32 %v7100, %v7254
          %v7271 = vmul.f32 %v7102, %v7255
          %v7272 = vmul.f32 %v7104, %v7256
          %v7273 = vmul.f32 %v7106, %v7257
          %v7274 = vmul.f32 %v7108, %v7258
          %v7275 = vmul.f32 %v7110, %v7259
          %v7276 = vmul.f32 %v7112, %v7260
          %v7277 = vmul.f32 %v7114, %v7261
          %v7278 = vmul.f32 %v7116, %v7262
          %v7279 = vmul.f32 %v7118, %v7263
          %7280 = vadd.xlane.f32.xlu0 %v7216
          %v7281 = vpop.xlane.xlu0 %7280
          %7282 = vadd.xlane.f32.xlu0 %v7218
          %v7283 = vpop.xlane.xlu0 %7282
          %7284 = vadd.xlane.f32.xlu0 %v7220
          %v7285 = vpop.xlane.xlu0 %7284
          %7286 = vadd.xlane.f32.xlu0 %v7222
          %v7287 = vpop.xlane.xlu0 %7286
          %7288 = vadd.xlane.f32.xlu0 %v7224
          %v7289 = vpop.xlane.xlu0 %7288
          %7290 = vadd.xlane.f32.xlu0 %v7226
          %v7291 = vpop.xlane.xlu0 %7290
          %7292 = vadd.xlane.f32.xlu0 %v7228
          %v7293 = vpop.xlane.xlu0 %7292
          %7294 = vadd.xlane.f32.xlu0 %v7230
          %v7295 = vpop.xlane.xlu0 %7294
          %7296 = vadd.xlane.f32.xlu0 %v7232
          %v7297 = vpop.xlane.xlu0 %7296
          %7298 = vadd.xlane.f32.xlu0 %v7234
          %v7299 = vpop.xlane.xlu0 %7298
          %7300 = vadd.xlane.f32.xlu0 %v7236
          %v7301 = vpop.xlane.xlu0 %7300
          %7302 = vadd.xlane.f32.xlu0 %v7238
          %v7303 = vpop.xlane.xlu0 %7302
          %7304 = vadd.xlane.f32.xlu0 %v7240
          %v7305 = vpop.xlane.xlu0 %7304
          %7306 = vadd.xlane.f32.xlu0 %v7242
          %v7307 = vpop.xlane.xlu0 %7306
          %7308 = vadd.xlane.f32.xlu0 %v7244
          %v7309 = vpop.xlane.xlu0 %7308
          %7310 = vadd.xlane.f32.xlu0 %v7246
          %v7311 = vpop.xlane.xlu0 %7310
          %v7312 = vadd.f32 %v7264, %v7281
          %v7313 = vadd.f32 %v7265, %v7283
          %v7314 = vadd.f32 %v7266, %v7285
          %v7315 = vadd.f32 %v7267, %v7287
          %v7316 = vadd.f32 %v7268, %v7289
          %v7317 = vadd.f32 %v7269, %v7291
          %v7318 = vadd.f32 %v7270, %v7293
          %v7319 = vadd.f32 %v7271, %v7295
          %v7320 = vadd.f32 %v7272, %v7297
          %v7321 = vadd.f32 %v7273, %v7299
          %v7322 = vadd.f32 %v7274, %v7301
          %v7323 = vadd.f32 %v7275, %v7303
          %v7324 = vadd.f32 %v7276, %v7305
          %v7325 = vadd.f32 %v7277, %v7307
          %v7326 = vadd.f32 %v7278, %v7309
          %v7327 = vadd.f32 %v7279, %v7311
          %7328 = vst.msk [vmem:[%s7247] sm:$0xff] %vm4722, %v7312
          %7329 = vst.msk [vmem:[%s7247 + $0x8] sm:$0xff] %vm4722, %v7313
          %7330 = vst.msk [vmem:[%s7247 + $0x10] sm:$0xff] %vm4722, %v7314
          %7331 = vst.msk [vmem:[%s7247 + $0x18] sm:$0xff] %vm4722, %v7315
          %7332 = vst.msk [vmem:[%s7247 + $0x20] sm:$0xff] %vm4722, %v7316
          %7333 = vst.msk [vmem:[%s7247 + $0x28] sm:$0xff] %vm4722, %v7317
          %7334 = vst.msk [vmem:[%s7247 + $0x30] sm:$0xff] %vm4722, %v7318
          %7335 = vst.msk [vmem:[%s7247 + $0x38] sm:$0xff] %vm4722, %v7319
          %7336 = vst.msk [vmem:[%s7247 + $0x40] sm:$0xff] %vm4722, %v7320
          %7337 = vst.msk [vmem:[%s7247 + $0x48] sm:$0xff] %vm4722, %v7321
          %7338 = vst.msk [vmem:[%s7247 + $0x50] sm:$0xff] %vm4722, %v7322
          %7339 = vst.msk [vmem:[%s7247 + $0x58] sm:$0xff] %vm4722, %v7323
          %7340 = vst.msk [vmem:[%s7247 + $0x60] sm:$0xff] %vm4722, %v7324
          %7341 = vst.msk [vmem:[%s7247 + $0x68] sm:$0xff] %vm4722, %v7325
          %7342 = vst.msk [vmem:[%s7247 + $0x70] sm:$0xff] %vm4722, %v7326
          %7343 = vst.msk [vmem:[%s7247 + $0x78] sm:$0xff] %vm4722, %v7327
          %v7344 = vld [vmem:[#allocation5 + $0x8] sm:$0xff]
          %v7345 = vld [vmem:[#allocation5 + $0x18] sm:$0xff]
          %v7346 = vld [vmem:[#allocation5 + $0x28] sm:$0xff]
          %v7347 = vld [vmem:[#allocation5 + $0x38] sm:$0xff]
          %v7348 = vld [vmem:[#allocation5 + $0x48] sm:$0xff]
          %v7349 = vld [vmem:[#allocation5 + $0x58] sm:$0xff]
          %v7350 = vld [vmem:[#allocation5 + $0x68] sm:$0xff]
          %v7351 = vld [vmem:[#allocation5 + $0x78] sm:$0xff]
          %v7352 = vld [vmem:[#allocation5 + $0x88] sm:$0xff]
          %v7353 = vld [vmem:[#allocation5 + $0x98] sm:$0xff]
          %v7354 = vld [vmem:[#allocation5 + $0xa8] sm:$0xff]
          %v7355 = vld [vmem:[#allocation5 + $0xb8] sm:$0xff]
          %v7356 = vld [vmem:[#allocation5 + $0xc8] sm:$0xff]
          %v7357 = vld [vmem:[#allocation5 + $0xd8] sm:$0xff]
          %v7358 = vld [vmem:[#allocation5 + $0xe8] sm:$0xff]
          %v7359 = vld [vmem:[#allocation5 + $0xf8] sm:$0xff]
          %7361 = vset.pattern.permute.xlu0 0
          %7362 = vperm.xlu0 %7361, %v7088
          %v7363 = vpop.permute.xlu0 %7362
          %7366 = vset.pattern.permute.xlu0 0
          %7367 = vperm.xlu0 %7366, %v7090
          %v7368 = vpop.permute.xlu0 %7367
          %7371 = vset.pattern.permute.xlu0 0
          %7372 = vperm.xlu0 %7371, %v7092
          %v7373 = vpop.permute.xlu0 %7372
          %7376 = vset.pattern.permute.xlu0 0
          %7377 = vperm.xlu0 %7376, %v7094
          %v7378 = vpop.permute.xlu0 %7377
          %7381 = vset.pattern.permute.xlu0 0
          %7382 = vperm.xlu0 %7381, %v7096
          %v7383 = vpop.permute.xlu0 %7382
          %7386 = vset.pattern.permute.xlu0 0
          %7387 = vperm.xlu0 %7386, %v7098
          %v7388 = vpop.permute.xlu0 %7387
          %7391 = vset.pattern.permute.xlu0 0
          %7392 = vperm.xlu0 %7391, %v7100
          %v7393 = vpop.permute.xlu0 %7392
          %7396 = vset.pattern.permute.xlu0 0
          %7397 = vperm.xlu0 %7396, %v7102
          %v7398 = vpop.permute.xlu0 %7397
          %7401 = vset.pattern.permute.xlu0 0
          %7402 = vperm.xlu0 %7401, %v7104
          %v7403 = vpop.permute.xlu0 %7402
          %7406 = vset.pattern.permute.xlu0 0
          %7407 = vperm.xlu0 %7406, %v7106
          %v7408 = vpop.permute.xlu0 %7407
          %7411 = vset.pattern.permute.xlu0 0
          %7412 = vperm.xlu0 %7411, %v7108
          %v7413 = vpop.permute.xlu0 %7412
          %7416 = vset.pattern.permute.xlu0 0
          %7417 = vperm.xlu0 %7416, %v7110
          %v7418 = vpop.permute.xlu0 %7417
          %7421 = vset.pattern.permute.xlu0 0
          %7422 = vperm.xlu0 %7421, %v7112
          %v7423 = vpop.permute.xlu0 %7422
          %7426 = vset.pattern.permute.xlu0 0
          %7427 = vperm.xlu0 %7426, %v7114
          %v7428 = vpop.permute.xlu0 %7427
          %7431 = vset.pattern.permute.xlu0 0
          %7432 = vperm.xlu0 %7431, %v7116
          %v7433 = vpop.permute.xlu0 %7432
          %7436 = vset.pattern.permute.xlu0 0
          %7437 = vperm.xlu0 %7436, %v7118
          %v7438 = vpop.permute.xlu0 %7437
          %v7440 = vmul.f32 %v7363, %v7344
          %v7441 = vmul.f32 %v7368, %v7345
          %v7442 = vmul.f32 %v7373, %v7346
          %v7443 = vmul.f32 %v7378, %v7347
          %v7444 = vmul.f32 %v7383, %v7348
          %v7445 = vmul.f32 %v7388, %v7349
          %v7446 = vmul.f32 %v7393, %v7350
          %v7447 = vmul.f32 %v7398, %v7351
          %v7448 = vmul.f32 %v7403, %v7352
          %v7449 = vmul.f32 %v7408, %v7353
          %v7450 = vmul.f32 %v7413, %v7354
          %v7451 = vmul.f32 %v7418, %v7355
          %v7452 = vmul.f32 %v7423, %v7356
          %v7453 = vmul.f32 %v7428, %v7357
          %v7454 = vmul.f32 %v7433, %v7358
          %v7455 = vmul.f32 %v7438, %v7359
          %v7456 = vpack.c.bf16 %v7218, %v7216
          %v7457 = vpack.c.bf16 %v7222, %v7220
          %v7458 = vpack.c.bf16 %v7226, %v7224
          %v7459 = vpack.c.bf16 %v7230, %v7228
          %v7460 = vpack.c.bf16 %v7234, %v7232
          %v7461 = vpack.c.bf16 %v7238, %v7236
          %v7462 = vpack.c.bf16 %v7242, %v7240
          %v7463 = vpack.c.bf16 %v7246, %v7244
          %7472 = vrot.lane.b32.xlu0 %v6805, 64
          %v7473 = vpop.permute.xlu0 %7472
          %7474 = vrot.lane.b32.xlu0 %v6806, 64
          %v7475 = vpop.permute.xlu0 %7474
          %7476 = vrot.lane.b32.xlu0 %v6807, 64
          %v7477 = vpop.permute.xlu0 %7476
          %7478 = vrot.lane.b32.xlu0 %v6808, 64
          %v7479 = vpop.permute.xlu0 %7478
          %7480 = vrot.lane.b32.xlu0 %v6809, 64
          %v7481 = vpop.permute.xlu0 %7480
          %7482 = vrot.lane.b32.xlu0 %v6810, 64
          %v7483 = vpop.permute.xlu0 %7482
          %7484 = vrot.lane.b32.xlu0 %v6811, 64
          %v7485 = vpop.permute.xlu0 %7484
          %7486 = vrot.lane.b32.xlu0 %v6812, 64
          %v7487 = vpop.permute.xlu0 %7486
          %7496 = vmatprep.subr.bf16.mxu0 0
          %7497 = vmatpush1.bf16.msra.mxu0 %v7473
          %7498 = vmatprep.subr.bf16.mxu0 0
          %7499 = vmatpush1.bf16.msra.mxu0 %v7475
          %7500 = vmatprep.subr.bf16.mxu0 0
          %7501 = vmatpush1.bf16.msra.mxu0 %v7477
          %7502 = vmatprep.subr.bf16.mxu0 0
          %7503 = vmatpush1.bf16.msra.mxu0 %v7479
          %7504 = vmatprep.subr.bf16.mxu0 0
          %7505 = vmatpush1.bf16.msra.mxu0 %v7481
          %7506 = vmatprep.subr.bf16.mxu0 0
          %7507 = vmatpush1.bf16.msra.mxu0 %v7483
          %7508 = vmatprep.subr.bf16.mxu0 0
          %7509 = vmatpush1.bf16.msra.mxu0 %v7485
          %7510 = vmatprep.subr.bf16.mxu0 0
          %7511 = vmatpush1.bf16.msra.mxu0 %v7487
          %7512 = vmatprep.subr.bf16.mxu0 0
          %7513 = vmatpush1.bf16.msra.mxu0 0
          %7514 = vmatprep.subr.bf16.mxu0 0
          %7515 = vmatpush1.bf16.msra.mxu0 0
          %7516 = vmatprep.subr.bf16.mxu0 0
          %7517 = vmatpush1.bf16.msra.mxu0 0
          %7518 = vmatprep.subr.bf16.mxu0 0
          %7519 = vmatpush1.bf16.msra.mxu0 0
          %7520 = vmatprep.subr.bf16.mxu0 0
          %7521 = vmatpush1.bf16.msra.mxu0 0
          %7522 = vmatprep.subr.bf16.mxu0 0
          %7523 = vmatpush1.bf16.msra.mxu0 0
          %7524 = vmatprep.subr.bf16.mxu0 0
          %7525 = vmatpush1.bf16.msra.mxu0 0
          %7526 = vmatprep.subr.bf16.mxu0 0
          %7527 = vmatpush1.bf16.msra.mxu0 0
          %7528 = vmatprep.mubr.bf16.mxu0 0
          %7529 = vmatmul.mubr.bf16.gmra.mrb[0].mxu0 %v7456
          %v7530 = vpop.f32.mrb[0].mxu0
          %v7531 = vadd.f32 0.0, %v7530
          %v7532 = vpop.f32.mrb[0].mxu0
          %v7533 = vpop.f32.mrb[0].mxu0
          %v7534 = vadd.f32 0.0, %v7533
          %v7535 = vpop.f32.mrb[0].mxu0
          %7536 = vmatprep.mubr.bf16.mxu0 0
          %7537 = vmatmul.mubr.bf16.gmra.mrb[0].mxu0 %v7457
          %v7538 = vpop.f32.mrb[0].mxu0
          %v7539 = vadd.f32 0.0, %v7538
          %v7540 = vpop.f32.mrb[0].mxu0
          %v7541 = vpop.f32.mrb[0].mxu0
          %v7542 = vadd.f32 0.0, %v7541
          %v7543 = vpop.f32.mrb[0].mxu0
          %7544 = vmatprep.mubr.bf16.mxu0 0
          %7545 = vmatmul.mubr.bf16.gmra.mrb[0].mxu0 %v7458
          %v7546 = vpop.f32.mrb[0].mxu0
          %v7547 = vadd.f32 0.0, %v7546
          %v7548 = vpop.f32.mrb[0].mxu0
          %v7549 = vpop.f32.mrb[0].mxu0
          %v7550 = vadd.f32 0.0, %v7549
          %v7551 = vpop.f32.mrb[0].mxu0
          %7552 = vmatprep.mubr.bf16.mxu0 0
          %7553 = vmatmul.mubr.bf16.gmra.mrb[0].mxu0 %v7459
          %v7554 = vpop.f32.mrb[0].mxu0
          %v7555 = vadd.f32 0.0, %v7554
          %v7556 = vpop.f32.mrb[0].mxu0
          %v7557 = vpop.f32.mrb[0].mxu0
          %v7558 = vadd.f32 0.0, %v7557
          %v7559 = vpop.f32.mrb[0].mxu0
          %7560 = vmatprep.mubr.bf16.mxu0 0
          %7561 = vmatmul.mubr.bf16.gmra.mrb[0].mxu0 %v7460
          %v7562 = vpop.f32.mrb[0].mxu0
          %v7563 = vadd.f32 0.0, %v7562
          %v7564 = vpop.f32.mrb[0].mxu0
          %v7565 = vpop.f32.mrb[0].mxu0
          %v7566 = vadd.f32 0.0, %v7565
          %v7567 = vpop.f32.mrb[0].mxu0
          %7568 = vmatprep.mubr.bf16.mxu0 0
          %7569 = vmatmul.mubr.bf16.gmra.mrb[0].mxu0 %v7461
          %v7570 = vpop.f32.mrb[0].mxu0
          %v7571 = vadd.f32 0.0, %v7570
          %v7572 = vpop.f32.mrb[0].mxu0
          %v7573 = vpop.f32.mrb[0].mxu0
          %v7574 = vadd.f32 0.0, %v7573
          %v7575 = vpop.f32.mrb[0].mxu0
          %7576 = vmatprep.mubr.bf16.mxu0 0
          %7577 = vmatmul.mubr.bf16.gmra.mrb[0].mxu0 %v7462
          %v7578 = vpop.f32.mrb[0].mxu0
          %v7579 = vadd.f32 0.0, %v7578
          %v7580 = vpop.f32.mrb[0].mxu0
          %v7581 = vpop.f32.mrb[0].mxu0
          %v7582 = vadd.f32 0.0, %v7581
          %v7583 = vpop.f32.mrb[0].mxu0
          %7584 = vmatprep.mubr.bf16.mxu0 0
          %7585 = vmatmul.mubr.bf16.gmra.mrb[0].mxu0 %v7463
          %v7586 = vpop.f32.mrb[0].mxu0
          %v7587 = vadd.f32 0.0, %v7586
          %v7588 = vpop.f32.mrb[0].mxu0
          %v7589 = vpop.f32.mrb[0].mxu0
          %v7590 = vadd.f32 0.0, %v7589
          %v7591 = vpop.f32.mrb[0].mxu0
          %7592 = vdwg.mxu0
          %7609 = vrot.lane.b32.xlu0 %v7531, 64
          %v7610 = vpop.permute.xlu0 %7609
          %7611 = vrot.lane.b32.xlu0 %v7534, 64
          %v7612 = vpop.permute.xlu0 %7611
          %7613 = vrot.lane.b32.xlu0 %v7539, 64
          %v7614 = vpop.permute.xlu0 %7613
          %7615 = vrot.lane.b32.xlu0 %v7542, 64
          %v7616 = vpop.permute.xlu0 %7615
          %7617 = vrot.lane.b32.xlu0 %v7547, 64
          %v7618 = vpop.permute.xlu0 %7617
          %7619 = vrot.lane.b32.xlu0 %v7550, 64
          %v7620 = vpop.permute.xlu0 %7619
          %7621 = vrot.lane.b32.xlu0 %v7555, 64
          %v7622 = vpop.permute.xlu0 %7621
          %7623 = vrot.lane.b32.xlu0 %v7558, 64
          %v7624 = vpop.permute.xlu0 %7623
          %7625 = vrot.lane.b32.xlu0 %v7563, 64
          %v7626 = vpop.permute.xlu0 %7625
          %7627 = vrot.lane.b32.xlu0 %v7566, 64
          %v7628 = vpop.permute.xlu0 %7627
          %7629 = vrot.lane.b32.xlu0 %v7571, 64
          %v7630 = vpop.permute.xlu0 %7629
          %7631 = vrot.lane.b32.xlu0 %v7574, 64
          %v7632 = vpop.permute.xlu0 %7631
          %7633 = vrot.lane.b32.xlu0 %v7579, 64
          %v7634 = vpop.permute.xlu0 %7633
          %7635 = vrot.lane.b32.xlu0 %v7582, 64
          %v7636 = vpop.permute.xlu0 %7635
          %7637 = vrot.lane.b32.xlu0 %v7587, 64
          %v7638 = vpop.permute.xlu0 %7637
          %7639 = vrot.lane.b32.xlu0 %v7590, 64
          %v7640 = vpop.permute.xlu0 %7639
          %v7657 = vadd.f32 %v7440, %v7610
          %v7658 = vadd.f32 %v7441, %v7612
          %v7659 = vadd.f32 %v7442, %v7614
          %v7660 = vadd.f32 %v7443, %v7616
          %v7661 = vadd.f32 %v7444, %v7618
          %v7662 = vadd.f32 %v7445, %v7620
          %v7663 = vadd.f32 %v7446, %v7622
          %v7664 = vadd.f32 %v7447, %v7624
          %v7665 = vadd.f32 %v7448, %v7626
          %v7666 = vadd.f32 %v7449, %v7628
          %v7667 = vadd.f32 %v7450, %v7630
          %v7668 = vadd.f32 %v7451, %v7632
          %v7669 = vadd.f32 %v7452, %v7634
          %v7670 = vadd.f32 %v7453, %v7636
          %v7671 = vadd.f32 %v7454, %v7638
          %v7672 = vadd.f32 %v7455, %v7640
          %7673 = vst.msk [vmem:[#allocation5 + $0x8] sm:$0xff] %vm5920, %v7657
          %7674 = vst.msk [vmem:[#allocation5 + $0x18] sm:$0xff] %vm5920, %v7658
          %7675 = vst.msk [vmem:[#allocation5 + $0x28] sm:$0xff] %vm5920, %v7659
          %7676 = vst.msk [vmem:[#allocation5 + $0x38] sm:$0xff] %vm5920, %v7660
          %7677 = vst.msk [vmem:[#allocation5 + $0x48] sm:$0xff] %vm5920, %v7661
          %7678 = vst.msk [vmem:[#allocation5 + $0x58] sm:$0xff] %vm5920, %v7662
          %7679 = vst.msk [vmem:[#allocation5 + $0x68] sm:$0xff] %vm5920, %v7663
          %7680 = vst.msk [vmem:[#allocation5 + $0x78] sm:$0xff] %vm5920, %v7664
          %7681 = vst.msk [vmem:[#allocation5 + $0x88] sm:$0xff] %vm5920, %v7665
          %7682 = vst.msk [vmem:[#allocation5 + $0x98] sm:$0xff] %vm5920, %v7666
          %7683 = vst.msk [vmem:[#allocation5 + $0xa8] sm:$0xff] %vm5920, %v7667
          %7684 = vst.msk [vmem:[#allocation5 + $0xb8] sm:$0xff] %vm5920, %v7668
          %7685 = vst.msk [vmem:[#allocation5 + $0xc8] sm:$0xff] %vm5920, %v7669
          %7686 = vst.msk [vmem:[#allocation5 + $0xd8] sm:$0xff] %vm5920, %v7670
          %7687 = vst.msk [vmem:[#allocation5 + $0xe8] sm:$0xff] %vm5920, %v7671
          %7688 = vst.msk [vmem:[#allocation5 + $0xf8] sm:$0xff] %vm5920, %v7672
          %7689 = vst.msk [vmem:[%s7006] sm:$0xff] %vm4722, %v7055
          %7690 = vst.msk [vmem:[%s7006 + $0x8] sm:$0xff] %vm4722, %v7056
          %7691 = vst.msk [vmem:[%s7006 + $0x10] sm:$0xff] %vm4722, %v7057
          %7692 = vst.msk [vmem:[%s7006 + $0x18] sm:$0xff] %vm4722, %v7058
          %7693 = vst.msk [vmem:[%s7006 + $0x20] sm:$0xff] %vm4722, %v7059
          %7694 = vst.msk [vmem:[%s7006 + $0x28] sm:$0xff] %vm4722, %v7060
          %7695 = vst.msk [vmem:[%s7006 + $0x30] sm:$0xff] %vm4722, %v7061
          %7696 = vst.msk [vmem:[%s7006 + $0x38] sm:$0xff] %vm4722, %v7062
          %7697 = vst.msk [vmem:[%s7006 + $0x40] sm:$0xff] %vm4722, %v7063
          %7698 = vst.msk [vmem:[%s7006 + $0x48] sm:$0xff] %vm4722, %v7064
          %7699 = vst.msk [vmem:[%s7006 + $0x50] sm:$0xff] %vm4722, %v7065
          %7700 = vst.msk [vmem:[%s7006 + $0x58] sm:$0xff] %vm4722, %v7066
          %7701 = vst.msk [vmem:[%s7006 + $0x60] sm:$0xff] %vm4722, %v7067
          %7702 = vst.msk [vmem:[%s7006 + $0x68] sm:$0xff] %vm4722, %v7068
          %7703 = vst.msk [vmem:[%s7006 + $0x70] sm:$0xff] %vm4722, %v7069
          %7704 = vst.msk [vmem:[%s7006 + $0x78] sm:$0xff] %vm4722, %v7070
        $region56: #{tpu_custom_call.1} parent=31 // pred_fallthru
          _
        // Predicated region
        $region57: #{tpu_custom_call.1} parent=31 // pred_check
          %p7705 = pneg %p327
        $region58: #{tpu_custom_call.1} parent=31 // pred_check_branch
          %7707 = sbr.rel (%p7705) target = $region60
        $region59: #{tpu_custom_call.1} parent=31 // pred_region
          %v7708 = vld [vmem:[#allocation4] sm:$0xff]
          %v7709 = vld [vmem:[#allocation4 + $0x8] sm:$0xff]
          %v7710 = vld [vmem:[#allocation4 + $0x10] sm:$0xff]
          %v7711 = vld [vmem:[#allocation4 + $0x18] sm:$0xff]
          %v7712 = vld [vmem:[#allocation4 + $0x20] sm:$0xff]
          %v7713 = vld [vmem:[#allocation4 + $0x28] sm:$0xff]
          %v7714 = vld [vmem:[#allocation4 + $0x30] sm:$0xff]
          %v7715 = vld [vmem:[#allocation4 + $0x38] sm:$0xff]
          %v7716 = vld [vmem:[#allocation4 + $0x40] sm:$0xff]
          %v7717 = vld [vmem:[#allocation4 + $0x48] sm:$0xff]
          %v7718 = vld [vmem:[#allocation4 + $0x50] sm:$0xff]
          %v7719 = vld [vmem:[#allocation4 + $0x58] sm:$0xff]
          %v7720 = vld [vmem:[#allocation4 + $0x60] sm:$0xff]
          %v7721 = vld [vmem:[#allocation4 + $0x68] sm:$0xff]
          %v7722 = vld [vmem:[#allocation4 + $0x70] sm:$0xff]
          %v7723 = vld [vmem:[#allocation4 + $0x78] sm:$0xff]
          %v7724 = vrcp.pop %v7708
          %v7725 = vrcp.pop %v7709
          %v7726 = vrcp.pop %v7710
          %v7727 = vrcp.pop %v7711
          %v7728 = vrcp.pop %v7712
          %v7729 = vrcp.pop %v7713
          %v7730 = vrcp.pop %v7714
          %v7731 = vrcp.pop %v7715
          %v7732 = vrcp.pop %v7716
          %v7733 = vrcp.pop %v7717
          %v7734 = vrcp.pop %v7718
          %v7735 = vrcp.pop %v7719
          %v7736 = vrcp.pop %v7720
          %v7737 = vrcp.pop %v7721
          %v7738 = vrcp.pop %v7722
          %v7739 = vrcp.pop %v7723
          %v7740 = vld [vmem:[#allocation5] sm:$0xff]
          %v7741 = vld [vmem:[#allocation5 + $0x10] sm:$0xff]
          %v7742 = vld [vmem:[#allocation5 + $0x20] sm:$0xff]
          %v7743 = vld [vmem:[#allocation5 + $0x30] sm:$0xff]
          %v7744 = vld [vmem:[#allocation5 + $0x40] sm:$0xff]
          %v7745 = vld [vmem:[#allocation5 + $0x50] sm:$0xff]
          %v7746 = vld [vmem:[#allocation5 + $0x60] sm:$0xff]
          %v7747 = vld [vmem:[#allocation5 + $0x70] sm:$0xff]
          %v7748 = vld [vmem:[#allocation5 + $0x80] sm:$0xff]
          %v7749 = vld [vmem:[#allocation5 + $0x90] sm:$0xff]
          %v7750 = vld [vmem:[#allocation5 + $0xa0] sm:$0xff]
          %v7751 = vld [vmem:[#allocation5 + $0xb0] sm:$0xff]
          %v7752 = vld [vmem:[#allocation5 + $0xc0] sm:$0xff]
          %v7753 = vld [vmem:[#allocation5 + $0xd0] sm:$0xff]
          %v7754 = vld [vmem:[#allocation5 + $0xe0] sm:$0xff]
          %v7755 = vld [vmem:[#allocation5 + $0xf0] sm:$0xff]
          %7757 = vset.pattern.permute.xlu0 0
          %7758 = vperm.xlu0 %7757, %v7724
          %v7759 = vpop.permute.xlu0 %7758
          %7762 = vset.pattern.permute.xlu0 0
          %7763 = vperm.xlu0 %7762, %v7725
          %v7764 = vpop.permute.xlu0 %7763
          %7767 = vset.pattern.permute.xlu0 0
          %7768 = vperm.xlu0 %7767, %v7726
          %v7769 = vpop.permute.xlu0 %7768
          %7772 = vset.pattern.permute.xlu0 0
          %7773 = vperm.xlu0 %7772, %v7727
          %v7774 = vpop.permute.xlu0 %7773
          %7777 = vset.pattern.permute.xlu0 0
          %7778 = vperm.xlu0 %7777, %v7728
          %v7779 = vpop.permute.xlu0 %7778
          %7782 = vset.pattern.permute.xlu0 0
          %7783 = vperm.xlu0 %7782, %v7729
          %v7784 = vpop.permute.xlu0 %7783
          %7787 = vset.pattern.permute.xlu0 0
          %7788 = vperm.xlu0 %7787, %v7730
          %v7789 = vpop.permute.xlu0 %7788
          %7792 = vset.pattern.permute.xlu0 0
          %7793 = vperm.xlu0 %7792, %v7731
          %v7794 = vpop.permute.xlu0 %7793
          %7797 = vset.pattern.permute.xlu0 0
          %7798 = vperm.xlu0 %7797, %v7732
          %v7799 = vpop.permute.xlu0 %7798
          %7802 = vset.pattern.permute.xlu0 0
          %7803 = vperm.xlu0 %7802, %v7733
          %v7804 = vpop.permute.xlu0 %7803
          %7807 = vset.pattern.permute.xlu0 0
          %7808 = vperm.xlu0 %7807, %v7734
          %v7809 = vpop.permute.xlu0 %7808
          %7812 = vset.pattern.permute.xlu0 0
          %7813 = vperm.xlu0 %7812, %v7735
          %v7814 = vpop.permute.xlu0 %7813
          %7817 = vset.pattern.permute.xlu0 0
          %7818 = vperm.xlu0 %7817, %v7736
          %v7819 = vpop.permute.xlu0 %7818
          %7822 = vset.pattern.permute.xlu0 0
          %7823 = vperm.xlu0 %7822, %v7737
          %v7824 = vpop.permute.xlu0 %7823
          %7827 = vset.pattern.permute.xlu0 0
          %7828 = vperm.xlu0 %7827, %v7738
          %v7829 = vpop.permute.xlu0 %7828
          %7832 = vset.pattern.permute.xlu0 0
          %7833 = vperm.xlu0 %7832, %v7739
          %v7834 = vpop.permute.xlu0 %7833
          %v7836 = vmul.f32 %v7740, %v7759
          %v7837 = vmul.f32 %v7741, %v7764
          %v7838 = vmul.f32 %v7742, %v7769
          %v7839 = vmul.f32 %v7743, %v7774
          %v7840 = vmul.f32 %v7744, %v7779
          %v7841 = vmul.f32 %v7745, %v7784
          %v7842 = vmul.f32 %v7746, %v7789
          %v7843 = vmul.f32 %v7747, %v7794
          %v7844 = vmul.f32 %v7748, %v7799
          %v7845 = vmul.f32 %v7749, %v7804
          %v7846 = vmul.f32 %v7750, %v7809
          %v7847 = vmul.f32 %v7751, %v7814
          %v7848 = vmul.f32 %v7752, %v7819
          %v7849 = vmul.f32 %v7753, %v7824
          %v7850 = vmul.f32 %v7754, %v7829
          %v7851 = vmul.f32 %v7755, %v7834
          %s7852 = scalar_lea.vmem [#allocation4], 128
          %v7853 = vld [vmem:[%s7852] sm:$0xff]
          %v7854 = vld [vmem:[%s7852 + $0x8] sm:$0xff]
          %v7855 = vld [vmem:[%s7852 + $0x10] sm:$0xff]
          %v7856 = vld [vmem:[%s7852 + $0x18] sm:$0xff]
          %v7857 = vld [vmem:[%s7852 + $0x20] sm:$0xff]
          %v7858 = vld [vmem:[%s7852 + $0x28] sm:$0xff]
          %v7859 = vld [vmem:[%s7852 + $0x30] sm:$0xff]
          %v7860 = vld [vmem:[%s7852 + $0x38] sm:$0xff]
          %v7861 = vld [vmem:[%s7852 + $0x40] sm:$0xff]
          %v7862 = vld [vmem:[%s7852 + $0x48] sm:$0xff]
          %v7863 = vld [vmem:[%s7852 + $0x50] sm:$0xff]
          %v7864 = vld [vmem:[%s7852 + $0x58] sm:$0xff]
          %v7865 = vld [vmem:[%s7852 + $0x60] sm:$0xff]
          %v7866 = vld [vmem:[%s7852 + $0x68] sm:$0xff]
          %v7867 = vld [vmem:[%s7852 + $0x70] sm:$0xff]
          %v7868 = vld [vmem:[%s7852 + $0x78] sm:$0xff]
          %v7869 = vrcp.pop %v7853
          %v7870 = vrcp.pop %v7854
          %v7871 = vrcp.pop %v7855
          %v7872 = vrcp.pop %v7856
          %v7873 = vrcp.pop %v7857
          %v7874 = vrcp.pop %v7858
          %v7875 = vrcp.pop %v7859
          %v7876 = vrcp.pop %v7860
          %v7877 = vrcp.pop %v7861
          %v7878 = vrcp.pop %v7862
          %v7879 = vrcp.pop %v7863
          %v7880 = vrcp.pop %v7864
          %v7881 = vrcp.pop %v7865
          %v7882 = vrcp.pop %v7866
          %v7883 = vrcp.pop %v7867
          %v7884 = vrcp.pop %v7868
          %7886 = vset.pattern.permute.xlu0 0
          %7887 = vperm.xlu0 %7886, %v7869
          %v7888 = vpop.permute.xlu0 %7887
          %7891 = vset.pattern.permute.xlu0 0
          %7892 = vperm.xlu0 %7891, %v7870
          %v7893 = vpop.permute.xlu0 %7892
          %7896 = vset.pattern.permute.xlu0 0
          %7897 = vperm.xlu0 %7896, %v7871
          %v7898 = vpop.permute.xlu0 %7897
          %7901 = vset.pattern.permute.xlu0 0
          %7902 = vperm.xlu0 %7901, %v7872
          %v7903 = vpop.permute.xlu0 %7902
          %7906 = vset.pattern.permute.xlu0 0
          %7907 = vperm.xlu0 %7906, %v7873
          %v7908 = vpop.permute.xlu0 %7907
          %7911 = vset.pattern.permute.xlu0 0
          %7912 = vperm.xlu0 %7911, %v7874
          %v7913 = vpop.permute.xlu0 %7912
          %7916 = vset.pattern.permute.xlu0 0
          %7917 = vperm.xlu0 %7916, %v7875
          %v7918 = vpop.permute.xlu0 %7917
          %7921 = vset.pattern.permute.xlu0 0
          %7922 = vperm.xlu0 %7921, %v7876
          %v7923 = vpop.permute.xlu0 %7922
          %7926 = vset.pattern.permute.xlu0 0
          %7927 = vperm.xlu0 %7926, %v7877
          %v7928 = vpop.permute.xlu0 %7927
          %7931 = vset.pattern.permute.xlu0 0
          %7932 = vperm.xlu0 %7931, %v7878
          %v7933 = vpop.permute.xlu0 %7932
          %7936 = vset.pattern.permute.xlu0 0
          %7937 = vperm.xlu0 %7936, %v7879
          %v7938 = vpop.permute.xlu0 %7937
          %7941 = vset.pattern.permute.xlu0 0
          %7942 = vperm.xlu0 %7941, %v7880
          %v7943 = vpop.permute.xlu0 %7942
          %7946 = vset.pattern.permute.xlu0 0
          %7947 = vperm.xlu0 %7946, %v7881
          %v7948 = vpop.permute.xlu0 %7947
          %7951 = vset.pattern.permute.xlu0 0
          %7952 = vperm.xlu0 %7951, %v7882
          %v7953 = vpop.permute.xlu0 %7952
          %7956 = vset.pattern.permute.xlu0 0
          %7957 = vperm.xlu0 %7956, %v7883
          %v7958 = vpop.permute.xlu0 %7957
          %7961 = vset.pattern.permute.xlu0 0
          %7962 = vperm.xlu0 %7961, %v7884
          %v7963 = vpop.permute.xlu0 %7962
          %v7965 = vmul.f32 %v7740, %v7888
          %v7966 = vmul.f32 %v7741, %v7893
          %v7967 = vmul.f32 %v7742, %v7898
          %v7968 = vmul.f32 %v7743, %v7903
          %v7969 = vmul.f32 %v7744, %v7908
          %v7970 = vmul.f32 %v7745, %v7913
          %v7971 = vmul.f32 %v7746, %v7918
          %v7972 = vmul.f32 %v7747, %v7923
          %v7973 = vmul.f32 %v7748, %v7928
          %v7974 = vmul.f32 %v7749, %v7933
          %v7975 = vmul.f32 %v7750, %v7938
          %v7976 = vmul.f32 %v7751, %v7943
          %v7977 = vmul.f32 %v7752, %v7948
          %v7978 = vmul.f32 %v7753, %v7953
          %v7979 = vmul.f32 %v7754, %v7958
          %v7980 = vmul.f32 %v7755, %v7963
          %s7981 = scalar_lea.vmem [#allocation4], 256
          %v7982 = vld [vmem:[%s7981] sm:$0xff]
          %v7983 = vld [vmem:[%s7981 + $0x8] sm:$0xff]
          %v7984 = vld [vmem:[%s7981 + $0x10] sm:$0xff]
          %v7985 = vld [vmem:[%s7981 + $0x18] sm:$0xff]
          %v7986 = vld [vmem:[%s7981 + $0x20] sm:$0xff]
          %v7987 = vld [vmem:[%s7981 + $0x28] sm:$0xff]
          %v7988 = vld [vmem:[%s7981 + $0x30] sm:$0xff]
          %v7989 = vld [vmem:[%s7981 + $0x38] sm:$0xff]
          %v7990 = vld [vmem:[%s7981 + $0x40] sm:$0xff]
          %v7991 = vld [vmem:[%s7981 + $0x48] sm:$0xff]
          %v7992 = vld [vmem:[%s7981 + $0x50] sm:$0xff]
          %v7993 = vld [vmem:[%s7981 + $0x58] sm:$0xff]
          %v7994 = vld [vmem:[%s7981 + $0x60] sm:$0xff]
          %v7995 = vld [vmem:[%s7981 + $0x68] sm:$0xff]
          %v7996 = vld [vmem:[%s7981 + $0x70] sm:$0xff]
          %v7997 = vld [vmem:[%s7981 + $0x78] sm:$0xff]
          %v7998 = vrcp.pop %v7982
          %v7999 = vrcp.pop %v7983
          %v8000 = vrcp.pop %v7984
          %v8001 = vrcp.pop %v7985
          %v8002 = vrcp.pop %v7986
          %v8003 = vrcp.pop %v7987
          %v8004 = vrcp.pop %v7988
          %v8005 = vrcp.pop %v7989
          %v8006 = vrcp.pop %v7990
          %v8007 = vrcp.pop %v7991
          %v8008 = vrcp.pop %v7992
          %v8009 = vrcp.pop %v7993
          %v8010 = vrcp.pop %v7994
          %v8011 = vrcp.pop %v7995
          %v8012 = vrcp.pop %v7996
          %v8013 = vrcp.pop %v7997
          %v8014 = vld [vmem:[#allocation5 + $0x8] sm:$0xff]
          %v8015 = vld [vmem:[#allocation5 + $0x18] sm:$0xff]
          %v8016 = vld [vmem:[#allocation5 + $0x28] sm:$0xff]
          %v8017 = vld [vmem:[#allocation5 + $0x38] sm:$0xff]
          %v8018 = vld [vmem:[#allocation5 + $0x48] sm:$0xff]
          %v8019 = vld [vmem:[#allocation5 + $0x58] sm:$0xff]
          %v8020 = vld [vmem:[#allocation5 + $0x68] sm:$0xff]
          %v8021 = vld [vmem:[#allocation5 + $0x78] sm:$0xff]
          %v8022 = vld [vmem:[#allocation5 + $0x88] sm:$0xff]
          %v8023 = vld [vmem:[#allocation5 + $0x98] sm:$0xff]
          %v8024 = vld [vmem:[#allocation5 + $0xa8] sm:$0xff]
          %v8025 = vld [vmem:[#allocation5 + $0xb8] sm:$0xff]
          %v8026 = vld [vmem:[#allocation5 + $0xc8] sm:$0xff]
          %v8027 = vld [vmem:[#allocation5 + $0xd8] sm:$0xff]
          %v8028 = vld [vmem:[#allocation5 + $0xe8] sm:$0xff]
          %v8029 = vld [vmem:[#allocation5 + $0xf8] sm:$0xff]
          %8031 = vset.pattern.permute.xlu0 0
          %8032 = vperm.xlu0 %8031, %v7998
          %v8033 = vpop.permute.xlu0 %8032
          %8036 = vset.pattern.permute.xlu0 0
          %8037 = vperm.xlu0 %8036, %v7999
          %v8038 = vpop.permute.xlu0 %8037
          %8041 = vset.pattern.permute.xlu0 0
          %8042 = vperm.xlu0 %8041, %v8000
          %v8043 = vpop.permute.xlu0 %8042
          %8046 = vset.pattern.permute.xlu0 0
          %8047 = vperm.xlu0 %8046, %v8001
          %v8048 = vpop.permute.xlu0 %8047
          %8051 = vset.pattern.permute.xlu0 0
          %8052 = vperm.xlu0 %8051, %v8002
          %v8053 = vpop.permute.xlu0 %8052
          %8056 = vset.pattern.permute.xlu0 0
          %8057 = vperm.xlu0 %8056, %v8003
          %v8058 = vpop.permute.xlu0 %8057
          %8061 = vset.pattern.permute.xlu0 0
          %8062 = vperm.xlu0 %8061, %v8004
          %v8063 = vpop.permute.xlu0 %8062
          %8066 = vset.pattern.permute.xlu0 0
          %8067 = vperm.xlu0 %8066, %v8005
          %v8068 = vpop.permute.xlu0 %8067
          %8071 = vset.pattern.permute.xlu0 0
          %8072 = vperm.xlu0 %8071, %v8006
          %v8073 = vpop.permute.xlu0 %8072
          %8076 = vset.pattern.permute.xlu0 0
          %8077 = vperm.xlu0 %8076, %v8007
          %v8078 = vpop.permute.xlu0 %8077
          %8081 = vset.pattern.permute.xlu0 0
          %8082 = vperm.xlu0 %8081, %v8008
          %v8083 = vpop.permute.xlu0 %8082
          %8086 = vset.pattern.permute.xlu0 0
          %8087 = vperm.xlu0 %8086, %v8009
          %v8088 = vpop.permute.xlu0 %8087
          %8091 = vset.pattern.permute.xlu0 0
          %8092 = vperm.xlu0 %8091, %v8010
          %v8093 = vpop.permute.xlu0 %8092
          %8096 = vset.pattern.permute.xlu0 0
          %8097 = vperm.xlu0 %8096, %v8011
          %v8098 = vpop.permute.xlu0 %8097
          %8101 = vset.pattern.permute.xlu0 0
          %8102 = vperm.xlu0 %8101, %v8012
          %v8103 = vpop.permute.xlu0 %8102
          %8106 = vset.pattern.permute.xlu0 0
          %8107 = vperm.xlu0 %8106, %v8013
          %v8108 = vpop.permute.xlu0 %8107
          %v8110 = vmul.f32 %v8014, %v8033
          %v8111 = vmul.f32 %v8015, %v8038
          %v8112 = vmul.f32 %v8016, %v8043
          %v8113 = vmul.f32 %v8017, %v8048
          %v8114 = vmul.f32 %v8018, %v8053
          %v8115 = vmul.f32 %v8019, %v8058
          %v8116 = vmul.f32 %v8020, %v8063
          %v8117 = vmul.f32 %v8021, %v8068
          %v8118 = vmul.f32 %v8022, %v8073
          %v8119 = vmul.f32 %v8023, %v8078
          %v8120 = vmul.f32 %v8024, %v8083
          %v8121 = vmul.f32 %v8025, %v8088
          %v8122 = vmul.f32 %v8026, %v8093
          %v8123 = vmul.f32 %v8027, %v8098
          %v8124 = vmul.f32 %v8028, %v8103
          %v8125 = vmul.f32 %v8029, %v8108
          %s8126 = scalar_lea.vmem [#allocation4], 384
          %v8127 = vld [vmem:[%s8126] sm:$0xff]
          %v8128 = vld [vmem:[%s8126 + $0x8] sm:$0xff]
          %v8129 = vld [vmem:[%s8126 + $0x10] sm:$0xff]
          %v8130 = vld [vmem:[%s8126 + $0x18] sm:$0xff]
          %v8131 = vld [vmem:[%s8126 + $0x20] sm:$0xff]
          %v8132 = vld [vmem:[%s8126 + $0x28] sm:$0xff]
          %v8133 = vld [vmem:[%s8126 + $0x30] sm:$0xff]
          %v8134 = vld [vmem:[%s8126 + $0x38] sm:$0xff]
          %v8135 = vld [vmem:[%s8126 + $0x40] sm:$0xff]
          %v8136 = vld [vmem:[%s8126 + $0x48] sm:$0xff]
          %v8137 = vld [vmem:[%s8126 + $0x50] sm:$0xff]
          %v8138 = vld [vmem:[%s8126 + $0x58] sm:$0xff]
          %v8139 = vld [vmem:[%s8126 + $0x60] sm:$0xff]
          %v8140 = vld [vmem:[%s8126 + $0x68] sm:$0xff]
          %v8141 = vld [vmem:[%s8126 + $0x70] sm:$0xff]
          %v8142 = vld [vmem:[%s8126 + $0x78] sm:$0xff]
          %v8143 = vrcp.pop %v8127
          %v8144 = vrcp.pop %v8128
          %v8145 = vrcp.pop %v8129
          %v8146 = vrcp.pop %v8130
          %v8147 = vrcp.pop %v8131
          %v8148 = vrcp.pop %v8132
          %v8149 = vrcp.pop %v8133
          %v8150 = vrcp.pop %v8134
          %v8151 = vrcp.pop %v8135
          %v8152 = vrcp.pop %v8136
          %v8153 = vrcp.pop %v8137
          %v8154 = vrcp.pop %v8138
          %v8155 = vrcp.pop %v8139
          %v8156 = vrcp.pop %v8140
          %v8157 = vrcp.pop %v8141
          %v8158 = vrcp.pop %v8142
          %8160 = vset.pattern.permute.xlu0 0
          %8161 = vperm.xlu0 %8160, %v8143
          %v8162 = vpop.permute.xlu0 %8161
          %8165 = vset.pattern.permute.xlu0 0
          %8166 = vperm.xlu0 %8165, %v8144
          %v8167 = vpop.permute.xlu0 %8166
          %8170 = vset.pattern.permute.xlu0 0
          %8171 = vperm.xlu0 %8170, %v8145
          %v8172 = vpop.permute.xlu0 %8171
          %8175 = vset.pattern.permute.xlu0 0
          %8176 = vperm.xlu0 %8175, %v8146
          %v8177 = vpop.permute.xlu0 %8176
          %8180 = vset.pattern.permute.xlu0 0
          %8181 = vperm.xlu0 %8180, %v8147
          %v8182 = vpop.permute.xlu0 %8181
          %8185 = vset.pattern.permute.xlu0 0
          %8186 = vperm.xlu0 %8185, %v8148
          %v8187 = vpop.permute.xlu0 %8186
          %8190 = vset.pattern.permute.xlu0 0
          %8191 = vperm.xlu0 %8190, %v8149
          %v8192 = vpop.permute.xlu0 %8191
          %8195 = vset.pattern.permute.xlu0 0
          %8196 = vperm.xlu0 %8195, %v8150
          %v8197 = vpop.permute.xlu0 %8196
          %8200 = vset.pattern.permute.xlu0 0
          %8201 = vperm.xlu0 %8200, %v8151
          %v8202 = vpop.permute.xlu0 %8201
          %8205 = vset.pattern.permute.xlu0 0
          %8206 = vperm.xlu0 %8205, %v8152
          %v8207 = vpop.permute.xlu0 %8206
          %8210 = vset.pattern.permute.xlu0 0
          %8211 = vperm.xlu0 %8210, %v8153
          %v8212 = vpop.permute.xlu0 %8211
          %8215 = vset.pattern.permute.xlu0 0
          %8216 = vperm.xlu0 %8215, %v8154
          %v8217 = vpop.permute.xlu0 %8216
          %8220 = vset.pattern.permute.xlu0 0
          %8221 = vperm.xlu0 %8220, %v8155
          %v8222 = vpop.permute.xlu0 %8221
          %8225 = vset.pattern.permute.xlu0 0
          %8226 = vperm.xlu0 %8225, %v8156
          %v8227 = vpop.permute.xlu0 %8226
          %8230 = vset.pattern.permute.xlu0 0
          %8231 = vperm.xlu0 %8230, %v8157
          %v8232 = vpop.permute.xlu0 %8231
          %8235 = vset.pattern.permute.xlu0 0
          %8236 = vperm.xlu0 %8235, %v8158
          %v8237 = vpop.permute.xlu0 %8236
          %v8239 = vmul.f32 %v8014, %v8162
          %v8240 = vmul.f32 %v8015, %v8167
          %v8241 = vmul.f32 %v8016, %v8172
          %v8242 = vmul.f32 %v8017, %v8177
          %v8243 = vmul.f32 %v8018, %v8182
          %v8244 = vmul.f32 %v8019, %v8187
          %v8245 = vmul.f32 %v8020, %v8192
          %v8246 = vmul.f32 %v8021, %v8197
          %v8247 = vmul.f32 %v8022, %v8202
          %v8248 = vmul.f32 %v8023, %v8207
          %v8249 = vmul.f32 %v8024, %v8212
          %v8250 = vmul.f32 %v8025, %v8217
          %v8251 = vmul.f32 %v8026, %v8222
          %v8252 = vmul.f32 %v8027, %v8227
          %v8253 = vmul.f32 %v8028, %v8232
          %v8254 = vmul.f32 %v8029, %v8237
          %vm8255 = vcmask 523264
          %v8256 = vsel %vm8255, %v7836, %v7965
          %v8257 = vsel %vm8255, %v7837, %v7966
          %v8258 = vsel %vm8255, %v7838, %v7967
          %v8259 = vsel %vm8255, %v7839, %v7968
          %v8260 = vsel %vm8255, %v7840, %v7969
          %v8261 = vsel %vm8255, %v7841, %v7970
          %v8262 = vsel %vm8255, %v7842, %v7971
          %v8263 = vsel %vm8255, %v7843, %v7972
          %v8264 = vsel %vm8255, %v7844, %v7973
          %v8265 = vsel %vm8255, %v7845, %v7974
          %v8266 = vsel %vm8255, %v7846, %v7975
          %v8267 = vsel %vm8255, %v7847, %v7976
          %v8268 = vsel %vm8255, %v7848, %v7977
          %v8269 = vsel %vm8255, %v7849, %v7978
          %v8270 = vsel %vm8255, %v7850, %v7979
          %v8271 = vsel %vm8255, %v7851, %v7980
          %v8272 = vsel %vm8255, %v8110, %v8239
          %v8273 = vsel %vm8255, %v8111, %v8240
          %v8274 = vsel %vm8255, %v8112, %v8241
          %v8275 = vsel %vm8255, %v8113, %v8242
          %v8276 = vsel %vm8255, %v8114, %v8243
          %v8277 = vsel %vm8255, %v8115, %v8244
          %v8278 = vsel %vm8255, %v8116, %v8245
          %v8279 = vsel %vm8255, %v8117, %v8246
          %v8280 = vsel %vm8255, %v8118, %v8247
          %v8281 = vsel %vm8255, %v8119, %v8248
          %v8282 = vsel %vm8255, %v8120, %v8249
          %v8283 = vsel %vm8255, %v8121, %v8250
          %v8284 = vsel %vm8255, %v8122, %v8251
          %v8285 = vsel %vm8255, %v8123, %v8252
          %v8286 = vsel %vm8255, %v8124, %v8253
          %v8287 = vsel %vm8255, %v8125, %v8254
          %8288 = vst [vmem:[%s315] sm:$0xff] %v8256
          %8289 = vst [vmem:[%s315 + $0x8] sm:$0xff] %v8272
          %8290 = vst [vmem:[%s315 + $0x10] sm:$0xff] %v8257
          %8291 = vst [vmem:[%s315 + $0x18] sm:$0xff] %v8273
          %8292 = vst [vmem:[%s315 + $0x20] sm:$0xff] %v8258
          %8293 = vst [vmem:[%s315 + $0x28] sm:$0xff] %v8274
          %8294 = vst [vmem:[%s315 + $0x30] sm:$0xff] %v8259
          %8295 = vst [vmem:[%s315 + $0x38] sm:$0xff] %v8275
          %8296 = vst [vmem:[%s315 + $0x40] sm:$0xff] %v8260
          %8297 = vst [vmem:[%s315 + $0x48] sm:$0xff] %v8276
          %8298 = vst [vmem:[%s315 + $0x50] sm:$0xff] %v8261
          %8299 = vst [vmem:[%s315 + $0x58] sm:$0xff] %v8277
          %8300 = vst [vmem:[%s315 + $0x60] sm:$0xff] %v8262
          %8301 = vst [vmem:[%s315 + $0x68] sm:$0xff] %v8278
          %8302 = vst [vmem:[%s315 + $0x70] sm:$0xff] %v8263
          %8303 = vst [vmem:[%s315 + $0x78] sm:$0xff] %v8279
          %8304 = vst [vmem:[%s315 + $0x80] sm:$0xff] %v8264
          %8305 = vst [vmem:[%s315 + $0x88] sm:$0xff] %v8280
          %8306 = vst [vmem:[%s315 + $0x90] sm:$0xff] %v8265
          %8307 = vst [vmem:[%s315 + $0x98] sm:$0xff] %v8281
          %8308 = vst [vmem:[%s315 + $0xa0] sm:$0xff] %v8266
          %8309 = vst [vmem:[%s315 + $0xa8] sm:$0xff] %v8282
          %8310 = vst [vmem:[%s315 + $0xb0] sm:$0xff] %v8267
          %8311 = vst [vmem:[%s315 + $0xb8] sm:$0xff] %v8283
          %8312 = vst [vmem:[%s315 + $0xc0] sm:$0xff] %v8268
          %8313 = vst [vmem:[%s315 + $0xc8] sm:$0xff] %v8284
          %8314 = vst [vmem:[%s315 + $0xd0] sm:$0xff] %v8269
          %8315 = vst [vmem:[%s315 + $0xd8] sm:$0xff] %v8285
          %8316 = vst [vmem:[%s315 + $0xe0] sm:$0xff] %v8270
          %8317 = vst [vmem:[%s315 + $0xe8] sm:$0xff] %v8286
          %8318 = vst [vmem:[%s315 + $0xf0] sm:$0xff] %v8271
          %8319 = vst [vmem:[%s315 + $0xf8] sm:$0xff] %v8287
        $region60: #{tpu_custom_call.1} parent=31 // pred_fallthru
          _
        %s8320 = sand.u32 %s147, 1
        %s8321 = scalar_lea.sflag [#allocation11], %s8320
        %s8322 = sand.u32 %s147, 1
        %s8323 = smul.addr %s8322, 256
        %s8324 = scalar_lea.vmem [#allocation15], %s8323
        // Predicated region
        $region61: #{tpu_custom_call.1} parent=31 // pred_check
          %p8325 = pneg %p157
        $region62: #{tpu_custom_call.1} parent=31 // pred_check_branch
          %8327 = sbr.rel (%p8325) target = $region64
        $region63: #{tpu_custom_call.1} parent=31 // pred_region
          %s8328 = sld [smem:[#allocation7 + %s38]]
          %s8329 = smul.u32 16, %s8328
          %s8331 = ssub.s32 4096, 4096
          %8332 = vsyncadd %s8321, %s8331
          %s8333 = smul.addr %s8329, 2
          %s8334 = smul.addr %s37, 64
          %s8335 = sadd.s32 %s8333, %s8334
          %s8336 = smul.addr %s8335, 128
          %s8337 = scalar_lea.hbm %s5, %s8336
          %s8338 = sshll.u32 %s8324, 4
          %s8339 = int_to_ptr.vmem [resolvable:$true] %s8338
          %8344 = dma.vmem_to_hbm [thread:$0]  %s8339, 4096, %s8337, %s8321, 256, 256, 16
        $region64: #{tpu_custom_call.1} parent=31 // pred_fallthru
          _
      $region32: #{tpu_custom_call.1} parent=5 // pred_fallthru
        _
      %p8345 = scmp.le.s32.totalorder 2, %s28
      // Predicated region
      $region65: #{tpu_custom_call.1} parent=5 // pred_check
        %p8346 = pneg %p8345
      $region66: #{tpu_custom_call.1} parent=5 // pred_check_branch
        %8348 = sbr.rel (%p8346) target = $region68
      $region67: #{tpu_custom_call.1} parent=5 // pred_region
        %s8349 = ssub.s32 %s28, 2
        // Predicated region
        $region69: #{tpu_custom_call.1} parent=67 // pred_check
          %p8350 = pneg %p163
        $region70: #{tpu_custom_call.1} parent=67 // pred_check_branch
          %8352 = sbr.rel (%p8350) target = $region72
        $region71: #{tpu_custom_call.1} parent=67 // pred_region
          %s8353 = sand.u32 %s148, 1
          %s8354 = scalar_lea.sflag [#allocation11], %s8353
          %s8355 = sand.u32 %s148, 1
          %s8356 = smul.addr %s8355, 256
          %s8357 = scalar_lea.vmem [#allocation15], %s8356
          %8358 = dma.done %s8354, 4096
        $region72: #{tpu_custom_call.1} parent=67 // pred_fallthru
          _
      $region68: #{tpu_custom_call.1} parent=5 // pred_fallthru
        _
    $region6: #{tpu_custom_call.1} parent=1 // loop_footer
      %s32 = sadd.s32 1, %s28
    $region7: #{tpu_custom_call.1} parent=1 // loop_footer_branch
      %27 = sbr.rel target = $region3
    $region8: #{tpu_custom_call.1} parent=1 // loop_exit
      _
    %8359 = vsyncpa [#allocation10], 1
    %s8360 = scalar_lea.sflag [#allocation10], 1
    %8361 = vsyncpa %s8360, 1
    %8362 = vsyncpa [#allocation13], 1
    %s8363 = scalar_lea.sflag [#allocation13], 1
    %8364 = vsyncpa %s8363, 1
    %8365 = vsyncpa [#allocation11], 1
    %s8366 = scalar_lea.sflag [#allocation11], 1
    %8367 = vsyncpa %s8366, 1

</llo_original>
